<compile_context>
chip_gen: v7x
topology: tpu7x:2x2x1
jax: 0.10.0
libtpu: 0.0.40
codegen_flags: <defaults>
</compile_context>

<pallas_src>
import functools
import numpy as np

import jax
import jax.numpy as jnp
from jax.experimental import pallas as pl
from jax.experimental.pallas import tpu as pltpu


# MXU input dtype: bf16 inputs, fp32 accumulation (fp32 MXU is a multi-pass
# penalty on all of v5e/v6e/v7x).  Elementwise math stays fp32 throughout.
MXU_DTYPE = jnp.bfloat16


# ----------------------------------------------------------------------------
# In-kernel math helpers (fp32 elementwise path)
# ----------------------------------------------------------------------------
def _erf(x):
    # Abramowitz & Stegun 7.1.26 (|err| <= 1.5e-7); only exp/mul/add/where.
    a1, a2, a3, a4, a5 = 0.254829592, -0.284496736, 1.421413741, -1.453152027, 1.061405429
    p = 0.3275911
    sign = jnp.where(x >= 0.0, 1.0, -1.0)
    ax = jnp.abs(x)
    t = 1.0 / (1.0 + p * ax)
    poly = ((((a5 * t + a4) * t + a3) * t + a2) * t + a1) * t
    return sign * (1.0 - poly * jnp.exp(-ax * ax))


def _gelu_exact(x):
    # PyTorch nn.GELU() default (exact, erf-based).
    return 0.5 * x * (1.0 + _erf(x * 0.7071067811865476))


def _layernorm(x, w, b, eps=1e-5):
    mu = jnp.mean(x, axis=-1, keepdims=True)
    var = jnp.mean((x - mu) ** 2, axis=-1, keepdims=True)
    return (x - mu) * jax.lax.rsqrt(var + eps) * w + b


# ----------------------------------------------------------------------------
# Fused ViT kernel: patch-embed + depth x transformer block + masked mean pool
# ----------------------------------------------------------------------------
def vit_fused_kernel(patches_ref, w_pe_ref, tok0_ref,
                     wq_ref, wk_ref, wv_ref, wo_ref,
                     vecs_ref, w1_ref, w2_ref, out_ref, *, n_tok):
    D = w_pe_ref.shape[1]
    n_pad = tok0_ref.shape[1]
    depth, H, _, dh = wq_ref.shape
    mlp = w1_ref.shape[2]
    M, patch_dim = patches_ref.shape          # patches pre-flattened: M = Bt*n_pad
    Bt = M // n_pad
    G = H * Bt

    # ---- patch embedding + cls token + positional embedding -----------------
    # Patches are pre-padded (zero cls row, zero tail rows); cls, pos and the
    # patch-embed bias are all folded into tok0, so this is one matmul + add.
    emb = jnp.dot(patches_ref[...], w_pe_ref[...],
                  preferred_element_type=jnp.float32)              # (M, D) fp32
    x = (emb.reshape(Bt, n_pad, D) + tok0_ref[...]).reshape(M, D)

    # Additive key mask for padded token columns (hoisted out of the layer loop).
    kbias = jnp.where(
        jax.lax.broadcasted_iota(jnp.int32, (1, n_pad, n_pad), 2) < n_tok,
        0.0, -1e30).astype(jnp.float32)

    # ---- transformer layers: short static loop, weights VMEM-resident -------
    for l in range(depth):
        vec = vecs_ref[l]                       # (8, P) packed per-layer vectors
        ln1w, ln1b = vec[0:1, :D], vec[1:2, :D]
        bo = vec[2:3, :D]
        ln2w, ln2b = vec[3:4, :D], vec[4:5, :D]
        b1 = vec[5:6, :mlp]
        b2 = vec[6:7, :D]

        # ----- attention (PreNorm); scale pre-folded into Wq -----------------
        xn = _layernorm(x, ln1w, ln1b).astype(MXU_DTYPE)            # (M, D)
        xn_h = jnp.broadcast_to(xn[None], (H, M, D))                # head batch
        q = jnp.einsum('hmd,hde->hme', xn_h, wq_ref[l],
                       preferred_element_type=jnp.float32)
        k = jnp.einsum('hmd,hde->hme', xn_h, wk_ref[l],
                       preferred_element_type=jnp.float32)
        v = jnp.einsum('hmd,hde->hme', xn_h, wv_ref[l],
                       preferred_element_type=jnp.float32)
        # fp32 reshapes (leading / multiple-of-8 sublane splits), then cast.
        q = q.reshape(G, n_pad, dh).astype(MXU_DTYPE)
        k = k.reshape(G, n_pad, dh).astype(MXU_DTYPE)
        v = v.reshape(G, n_pad, dh).astype(MXU_DTYPE)

        s = jnp.einsum('gqd,gkd->gqk', q, k,
                       preferred_element_type=jnp.float32) + kbias  # (G, np, np)
        s = s - jnp.max(s, axis=-1, keepdims=True)                  # keep paired w/ mask
        e = jnp.exp(s)
        p_attn = e * pl.reciprocal(jnp.sum(e, axis=-1, keepdims=True), approx=True)
        o = jnp.einsum('gqk,gkd->gqd', p_attn.astype(MXU_DTYPE), v,
                       preferred_element_type=jnp.float32)          # (G, np, dh)

        # Per-head output projection + sum over heads == concat(heads) @ Wo.
        o = o.reshape(H, M, dh).astype(MXU_DTYPE)
        proj = jnp.einsum('hmd,hdo->hmo', o, wo_ref[l],
                          preferred_element_type=jnp.float32)       # (H, M, D)
        x = x + jnp.sum(proj, axis=0) + bo

        # ----- feed-forward (PreNorm, exact GELU) ----------------------------
        xn2 = _layernorm(x, ln2w, ln2b).astype(MXU_DTYPE)
        h1 = _gelu_exact(jnp.dot(xn2, w1_ref[l],
                                 preferred_element_type=jnp.float32) + b1)
        x = x + jnp.dot(h1.astype(MXU_DTYPE), w2_ref[l],
                        preferred_element_type=jnp.float32) + b2

    # ---- masked mean pool over the real tokens (pool='mean') ----------------
    x3 = x.reshape(Bt, n_pad, D)
    rmask = (jax.lax.broadcasted_iota(jnp.int32, (1, n_pad, D), 1)
             < n_tok).astype(jnp.float32)
    out_ref[...] = (jnp.sum(x3 * rmask, axis=1) * (1.0 / n_tok)).astype(out_ref.dtype)


# ----------------------------------------------------------------------------
# Wrapper (glue in plain JAX; all hot-path compute in the fused kernel)
# ----------------------------------------------------------------------------
def rearrange_patches(x_nchw, patch_size):
    # einops: 'b c (h p1) (w p2) -> b (h w) (p1 p2 c)'
    B, C, H, W = x_nchw.shape
    p = patch_size
    h, w = H // p, W // p
    x = x_nchw.reshape(B, C, h, p, w, p).transpose(0, 2, 4, 3, 5, 1)
    return x.reshape(B, h * w, p * p * C)


def vit_backbone_forward(x_nchw, params, *, patch_size, heads, dim_head,
                         batch_block=None):
    """Fused ViT forward pass.  Returns (B, dim) mean-pooled features."""
    patches = rearrange_patches(x_nchw, patch_size)                # (B, Np, Pd)
    B, n_patches, patch_dim = patches.shape
    D = params["w_pe"].shape[1]
    layers = params["layers"]
    depth = len(layers)
    inner = heads * dim_head
    mlp = layers[0]["w1"].shape[1]
    n_tok = n_patches + 1
    n_pad = ((n_tok + 7) // 8) * 8                                 # sublane multiple of 8
    P = max(D, mlp)

    if batch_block is None:
        batch_block = B          # v7x: pass B // 2 to feed both TensorCores
    assert B % batch_block == 0
    # (8,128) rule on the 2-D (B, D) output when the batch axis is tiled.
    assert batch_block == B or batch_block % 8 == 0

    # ---- parameter prep (traced once per call) ------------------------------
    scale = dim_head ** -0.5

    def head_major(w, fold_scale=False):       # (D, inner) -> (heads, D, dh)
        w = w.reshape(D, heads, dim_head).transpose(1, 0, 2)
        return w * scale if fold_scale else w

    wq = jnp.stack([head_major(lp["wqkv"][:, :inner], True) for lp in layers]).astype(MXU_DTYPE)
    wk = jnp.stack([head_major(lp["wqkv"][:, inner:2 * inner]) for lp in layers]).astype(MXU_DTYPE)
    wv = jnp.stack([head_major(lp["wqkv"][:, 2 * inner:]) for lp in layers]).astype(MXU_DTYPE)
    wo = jnp.stack([lp["wo"].reshape(heads, dim_head, D) for lp in layers]).astype(MXU_DTYPE)
    w1 = jnp.stack([lp["w1"] for lp in layers]).astype(MXU_DTYPE)
    w2 = jnp.stack([lp["w2"] for lp in layers]).astype(MXU_DTYPE)
    w_pe = params["w_pe"].astype(MXU_DTYPE)

    # Pack the seven tiny per-layer vectors into one (depth, 8, P) tensor.
    def row(v):
        v = v.reshape(1, -1).astype(jnp.float32)
        return jnp.pad(v, ((0, 0), (0, P - v.shape[1])))
    vecs = jnp.stack([
        jnp.concatenate([row(lp["ln1w"]), row(lp["ln1b"]), row(lp["bo"]),
                         row(lp["ln2w"]), row(lp["ln2b"]), row(lp["b1"]),
                         row(lp["b2"]), jnp.zeros((1, P), jnp.float32)], axis=0)
        for lp in layers])                                          # (depth, 8, P)

    # cls token + positional embedding + patch-embed bias folded into tok0.
    cls = params["cls_token"].reshape(1, 1, D).astype(jnp.float32)
    pos = params["pos_emb"].astype(jnp.float32)                     # (1, n_tok, D)
    b_pe = params["b_pe"].reshape(1, 1, D).astype(jnp.float32)
    pieces = [cls + pos[:, :1, :], pos[:, 1:, :] + b_pe]
    if n_pad > n_tok:
        pieces.append(jnp.zeros((1, n_pad - n_tok, D), jnp.float32))
    tok0 = jnp.concatenate(pieces, axis=1)                          # (1, n_pad, D)

    # Pre-pad patches (zero cls row + zero tail rows) and pre-flatten so the
    # kernel never reshapes a bf16 tensor.
    patches_pad = jnp.pad(patches, ((0, 0), (1, n_pad - n_tok), (0, 0)))
    patches_flat = patches_pad.reshape(B * n_pad, patch_dim).astype(MXU_DTYPE)

    full = lambda a: pl.BlockSpec(a.shape, lambda b, _n=a.ndim: (0,) * _n)
    grid = (B // batch_block,)

    out = pl.pallas_call(
        functools.partial(vit_fused_kernel, n_tok=n_tok),
        out_shape=jax.ShapeDtypeStruct((B, D), jnp.float32),
        grid=grid,
        in_specs=[
            pl.BlockSpec((batch_block * n_pad, patch_dim), lambda b: (b, 0)),
            full(w_pe), full(tok0),
            full(wq), full(wk), full(wv), full(wo),
            full(vecs), full(w1), full(w2),
        ],
        out_specs=pl.BlockSpec((batch_block, D), lambda b: (b, 0)),
        compiler_params=pltpu.CompilerParams(
            dimension_semantics=("parallel",)),
    )(patches_flat, w_pe, tok0, wq, wk, wv, wo, vecs, w1, w2)
    # NOTE: D=64 keeps every tile at <=50% lane width; that is the module's
    # feature_dims and cannot be changed here.
    return out                                                      # (B, D)


# ----------------------------------------------------------------------------
# Pure-JAX reference (fp32, for verification)
# ----------------------------------------------------------------------------
def ref_forward(x_nchw, params, *, patch_size, heads, dim_head):
    patches = rearrange_patches(x_nchw, patch_size)
    emb = patches @ params["w_pe"] + params["b_pe"]
    B, Np, D = emb.shape
    cls = jnp.broadcast_to(params["cls_token"], (B, 1, D))
    x = jnp.concatenate([cls, emb], axis=1) + params["pos_emb"]
    inner = heads * dim_head
    scale = dim_head ** -0.5
    for lp in params["layers"]:
        xn = _layernorm(x, lp["ln1w"], lp["ln1b"])
        qkv = xn @ lp["wqkv"]
        q, k, v = qkv[..., :inner], qkv[..., inner:2 * inner], qkv[..., 2 * inner:]
        def split_heads(t):
            return t.reshape(B, -1, heads, dim_head).transpose(0, 2, 1, 3)
        q, k, v = split_heads(q), split_heads(k), split_heads(v)
        attn = jax.nn.softmax(jnp.einsum("bhnd,bhmd->bhnm", q, k) * scale, axis=-1)
        o = jnp.einsum("bhnm,bhmd->bhnd", attn, v).transpose(0, 2, 1, 3).reshape(B, -1, inner)
        x = x + o @ lp["wo"] + lp["bo"]
        xn2 = _layernorm(x, lp["ln2w"], lp["ln2b"])
        h1 = jax.nn.gelu(xn2 @ lp["w1"] + lp["b1"], approximate=False)
        x = x + h1 @ lp["w2"] + lp["b2"]
    return jnp.mean(x, axis=1)


# ----------------------------------------------------------------------------
# Deterministic parameter init (shapes follow the module __init__)
# ----------------------------------------------------------------------------
def init_params(key, *, patch_dim, dim, depth, heads, dim_head, mlp_dim, num_tokens):
    inner = heads * dim_head
    ks = iter(jax.random.split(key, 16 + depth * 16))
    nrm = lambda shape, s=0.02: (s * jax.random.normal(next(ks), shape)).astype(jnp.float32)

    params = {
        "w_pe": nrm((patch_dim, dim)),
        "b_pe": nrm((1, dim), 0.01),
        "cls_token": nrm((1, 1, dim)),
        "pos_emb": nrm((1, num_tokens, dim)),
        "layers": [],
    }
    for _ in range(depth):
        params["layers"].append({
            "ln1w": 1.0 + nrm((1, dim), 0.1), "ln1b": nrm((1, dim), 0.1),
            "wqkv": nrm((dim, 3 * inner)),
            "wo": nrm((inner, dim)), "bo": nrm((1, dim), 0.01),
            "ln2w": 1.0 + nrm((1, dim), 0.1), "ln2b": nrm((1, dim), 0.1),
            "w1": nrm((dim, mlp_dim)), "b1": nrm((1, mlp_dim), 0.01),
            "w2": nrm((mlp_dim, dim)), "b2": nrm((1, dim), 0.01),
        })
    return params


# ----------------------------------------------------------------------------
if __name__ == "__main__":
    # Small shapes consistent with VitBackbone(image_size=16, patch_size=4,
    # feature_dims=64, ViT_depth=2, heads=4, channels=3, dim_head=16).
    B, C, IMG = 2, 3, 16
    PATCH, DIM, DEPTH, HEADS, DIM_HEAD = 4, 64, 2, 4, 16
    MLP_DIM = DIM                       # module passes mlp_dim=feature_dims
    NP = (IMG // PATCH) ** 2
    NTOK = NP + 1

    key = jax.random.PRNGKey(0)
    kx, kp = jax.random.split(key)
    x = jax.random.normal(kx, (B, C, IMG, IMG), dtype=jnp.float32)

    params = init_params(kp, patch_dim=PATCH * PATCH * C, dim=DIM, depth=DEPTH,
                         heads=HEADS, dim_head=DIM_HEAD, mlp_dim=MLP_DIM,
                         num_tokens=NTOK)

    fwd = jax.jit(functools.partial(vit_backbone_forward, patch_size=PATCH,
                                    heads=HEADS, dim_head=DIM_HEAD))
    out = jax.block_until_ready(fwd(x, params))

    ref = ref_forward(x, params, patch_size=PATCH, heads=HEADS, dim_head=DIM_HEAD)
    assert out.shape == (B, DIM), out.shape
    # bf16 MXU inputs (fp32 accumulation) + approx EUP reciprocal in softmax:
    # parity vs. the fp32 reference is well within 2e-2.
    np.testing.assert_allclose(np.asarray(out), np.asarray(ref), atol=2e-2, rtol=2e-2)

    print("KERNEL_OK")
</pallas_src>

<mosaic_0001>
module attributes {stable_mosaic.version = 11 : i64} {
  func.func @vit_fused_kernel(%arg0: i32, %arg1: memref<48x48xbf16, #tpu.memory_space<vmem>>, %arg2: memref<48x64xbf16, #tpu.memory_space<vmem>>, %arg3: memref<1x24x64xf32, #tpu.memory_space<vmem>>, %arg4: memref<2x4x64x16xbf16, #tpu.memory_space<vmem>>, %arg5: memref<2x4x64x16xbf16, #tpu.memory_space<vmem>>, %arg6: memref<2x4x64x16xbf16, #tpu.memory_space<vmem>>, %arg7: memref<2x4x16x64xbf16, #tpu.memory_space<vmem>>, %arg8: memref<2x8x64xf32, #tpu.memory_space<vmem>>, %arg9: memref<2x64x64xbf16, #tpu.memory_space<vmem>>, %arg10: memref<2x64x64xbf16, #tpu.memory_space<vmem>>, %arg11: memref<2x64xf32, #tpu.memory_space<vmem>>) attributes {dimension_semantics = [#tpu.dimension_semantics<parallel>], iteration_bounds = array<i64: 1>, scalar_prefetch = 0 : i64, scratch_operands = 0 : i64, tpu.core_type = #tpu.core_type<tc>, window_params = [{transform_indices = @transform_0, window_bounds = array<i64: 48, 48>}, {pipeline_mode = #tpu.pipeline_mode<synchronous>, transform_indices = @transform_1, window_bounds = array<i64: 48, 64>}, {pipeline_mode = #tpu.pipeline_mode<synchronous>, transform_indices = @transform_2, window_bounds = array<i64: 1, 24, 64>}, {pipeline_mode = #tpu.pipeline_mode<synchronous>, transform_indices = @transform_3, window_bounds = array<i64: 2, 4, 64, 16>}, {pipeline_mode = #tpu.pipeline_mode<synchronous>, transform_indices = @transform_4, window_bounds = array<i64: 2, 4, 64, 16>}, {pipeline_mode = #tpu.pipeline_mode<synchronous>, transform_indices = @transform_5, window_bounds = array<i64: 2, 4, 64, 16>}, {pipeline_mode = #tpu.pipeline_mode<synchronous>, transform_indices = @transform_6, window_bounds = array<i64: 2, 4, 16, 64>}, {pipeline_mode = #tpu.pipeline_mode<synchronous>, transform_indices = @transform_7, window_bounds = array<i64: 2, 8, 64>}, {pipeline_mode = #tpu.pipeline_mode<synchronous>, transform_indices = @transform_8, window_bounds = array<i64: 2, 64, 64>}, {pipeline_mode = #tpu.pipeline_mode<synchronous>, transform_indices = @transform_9, window_bounds = array<i64: 2, 64, 64>}, {transform_indices = @transform_10, window_bounds = array<i64: 2, 64>}]} {
    %c0 = arith.constant 0 : index
    %c0_0 = arith.constant 0 : index
    %0 = vector.load %arg1[%c0, %c0_0] : memref<48x48xbf16, #tpu.memory_space<vmem>>, vector<48x48xbf16>
    %c0_1 = arith.constant 0 : index
    %c0_2 = arith.constant 0 : index
    %1 = vector.load %arg2[%c0_1, %c0_2] : memref<48x64xbf16, #tpu.memory_space<vmem>>, vector<48x64xbf16>
    %cst = arith.constant dense<0.000000e+00> : vector<48x64xf32>
    %2 = tpu.matmul %0, %1, %cst {dimension_numbers = #tpu.dot_dimension_numbers<[1], [0], [0], [1], [0, 0, 1, 1], [], []>} : vector<48x48xbf16>, vector<48x64xbf16>, vector<48x64xf32> -> vector<48x64xf32>
    %3 = vector.shape_cast %2 : vector<48x64xf32> to vector<2x24x64xf32>
    %c0_3 = arith.constant 0 : index
    %c0_4 = arith.constant 0 : index
    %c0_5 = arith.constant 0 : index
    %4 = vector.load %arg3[%c0_3, %c0_4, %c0_5] : memref<1x24x64xf32, #tpu.memory_space<vmem>>, vector<1x24x64xf32>
    %5 = vector.broadcast %4 : vector<1x24x64xf32> to vector<2x24x64xf32>
    %6 = arith.addf %3, %5 : vector<2x24x64xf32>
    %7 = vector.shape_cast %6 : vector<2x24x64xf32> to vector<48x64xf32>
    %8 = tpu.iota {dimensions = array<i32: 2>} : vector<1x24x24xi32>
    %c17_i32 = arith.constant 17 : i32
    %9 = vector.broadcast %c17_i32 : i32 to vector<1x24x24xi32>
    %10 = arith.cmpi slt, %8, %9 : vector<1x24x24xi32>
    %cst_6 = arith.constant 0.000000e+00 : f32
    %cst_7 = arith.constant -1.000000e+30 : f32
    %11 = vector.broadcast %cst_6 : f32 to vector<1x24x24xf32>
    %12 = vector.broadcast %cst_7 : f32 to vector<1x24x24xf32>
    %13 = arith.select %10, %11, %12 : vector<1x24x24xi1>, vector<1x24x24xf32>
    %c0_8 = arith.constant 0 : index
    %c0_9 = arith.constant 0 : index
    %c0_10 = arith.constant 0 : index
    %14 = vector.load %arg8[%c0_8, %c0_9, %c0_10] : memref<2x8x64xf32, #tpu.memory_space<vmem>>, vector<1x8x64xf32>
    %15 = vector.shape_cast %14 : vector<1x8x64xf32> to vector<8x64xf32>
    %16 = vector.extract_strided_slice %15 {offsets = [0, 0], sizes = [1, 64], strides = [1, 1]} : vector<8x64xf32> to vector<1x64xf32>
    %17 = vector.extract_strided_slice %15 {offsets = [1, 0], sizes = [1, 64], strides = [1, 1]} : vector<8x64xf32> to vector<1x64xf32>
    %18 = vector.extract_strided_slice %15 {offsets = [2, 0], sizes = [1, 64], strides = [1, 1]} : vector<8x64xf32> to vector<1x64xf32>
    %19 = vector.extract_strided_slice %15 {offsets = [3, 0], sizes = [1, 64], strides = [1, 1]} : vector<8x64xf32> to vector<1x64xf32>
    %20 = vector.extract_strided_slice %15 {offsets = [4, 0], sizes = [1, 64], strides = [1, 1]} : vector<8x64xf32> to vector<1x64xf32>
    %21 = vector.extract_strided_slice %15 {offsets = [5, 0], sizes = [1, 64], strides = [1, 1]} : vector<8x64xf32> to vector<1x64xf32>
    %22 = vector.extract_strided_slice %15 {offsets = [6, 0], sizes = [1, 64], strides = [1, 1]} : vector<8x64xf32> to vector<1x64xf32>
    %cst_11 = arith.constant dense<0.000000e+00> : vector<48xf32>
    %23 = vector.multi_reduction <add>, %7, %cst_11 [1] : vector<48x64xf32> to vector<48xf32>
    %24 = vector.shape_cast %23 : vector<48xf32> to vector<48x1xf32>
    %cst_12 = arith.constant 6.400000e+01 : f32
    %25 = vector.broadcast %cst_12 : f32 to vector<48x1xf32>
    %26 = arith.divf %24, %25 : vector<48x1xf32>
    %27 = vector.broadcast %26 : vector<48x1xf32> to vector<48x64xf32>
    %28 = arith.subf %7, %27 : vector<48x64xf32>
    %29 = arith.mulf %28, %28 : vector<48x64xf32>
    %cst_13 = arith.constant dense<0.000000e+00> : vector<48xf32>
    %30 = vector.multi_reduction <add>, %29, %cst_13 [1] : vector<48x64xf32> to vector<48xf32>
    %31 = vector.shape_cast %30 : vector<48xf32> to vector<48x1xf32>
    %cst_14 = arith.constant 6.400000e+01 : f32
    %32 = vector.broadcast %cst_14 : f32 to vector<48x1xf32>
    %33 = arith.divf %31, %32 : vector<48x1xf32>
    %34 = vector.broadcast %26 : vector<48x1xf32> to vector<48x64xf32>
    %35 = arith.subf %7, %34 : vector<48x64xf32>
    %cst_15 = arith.constant 9.99999974E-6 : f32
    %36 = vector.broadcast %cst_15 : f32 to vector<48x1xf32>
    %37 = arith.addf %33, %36 : vector<48x1xf32>
    %38 = math.rsqrt %37 : vector<48x1xf32>
    %39 = vector.broadcast %38 : vector<48x1xf32> to vector<48x64xf32>
    %40 = arith.mulf %35, %39 : vector<48x64xf32>
    %41 = vector.broadcast %16 : vector<1x64xf32> to vector<48x64xf32>
    %42 = arith.mulf %40, %41 : vector<48x64xf32>
    %43 = vector.broadcast %17 : vector<1x64xf32> to vector<48x64xf32>
    %44 = arith.addf %42, %43 : vector<48x64xf32>
    %45 = arith.truncf %44 : vector<48x64xf32> to vector<48x64xbf16>
    %46 = vector.shape_cast %45 : vector<48x64xbf16> to vector<1x48x64xbf16>
    %47 = vector.shape_cast %46 : vector<1x48x64xbf16> to vector<1x48x64xbf16>
    %48 = vector.broadcast %47 : vector<1x48x64xbf16> to vector<4x48x64xbf16>
    %c0_16 = arith.constant 0 : index
    %c0_17 = arith.constant 0 : index
    %c0_18 = arith.constant 0 : index
    %c0_19 = arith.constant 0 : index
    %49 = vector.load %arg4[%c0_16, %c0_17, %c0_18, %c0_19] : memref<2x4x64x16xbf16, #tpu.memory_space<vmem>>, vector<1x4x64x16xbf16>
    %50 = vector.shape_cast %49 : vector<1x4x64x16xbf16> to vector<4x64x16xbf16>
    "tpu.trace_start"() <{level = 10 : i32, message = "hmd,hde->hme"}> : () -> ()
    %cst_20 = arith.constant dense<0.000000e+00> : vector<4x48x16xf32>
    %51 = tpu.matmul %48, %50, %cst_20 {dimension_numbers = #tpu.dot_dimension_numbers<[2], [1], [1], [2], [0, 0, 0, 1, 1, 2], [0], [0]>} : vector<4x48x64xbf16>, vector<4x64x16xbf16>, vector<4x48x16xf32> -> vector<4x48x16xf32>
    "tpu.trace_stop"() : () -> ()
    %c0_21 = arith.constant 0 : index
    %c0_22 = arith.constant 0 : index
    %c0_23 = arith.constant 0 : index
    %c0_24 = arith.constant 0 : index
    %52 = vector.load %arg5[%c0_21, %c0_22, %c0_23, %c0_24] : memref<2x4x64x16xbf16, #tpu.memory_space<vmem>>, vector<1x4x64x16xbf16>
    %53 = vector.shape_cast %52 : vector<1x4x64x16xbf16> to vector<4x64x16xbf16>
    "tpu.trace_start"() <{level = 10 : i32, message = "hmd,hde->hme"}> : () -> ()
    %cst_25 = arith.constant dense<0.000000e+00> : vector<4x48x16xf32>
    %54 = tpu.matmul %48, %53, %cst_25 {dimension_numbers = #tpu.dot_dimension_numbers<[2], [1], [1], [2], [0, 0, 0, 1, 1, 2], [0], [0]>} : vector<4x48x64xbf16>, vector<4x64x16xbf16>, vector<4x48x16xf32> -> vector<4x48x16xf32>
    "tpu.trace_stop"() : () -> ()
    %c0_26 = arith.constant 0 : index
    %c0_27 = arith.constant 0 : index
    %c0_28 = arith.constant 0 : index
    %c0_29 = arith.constant 0 : index
    %55 = vector.load %arg6[%c0_26, %c0_27, %c0_28, %c0_29] : memref<2x4x64x16xbf16, #tpu.memory_space<vmem>>, vector<1x4x64x16xbf16>
    %56 = vector.shape_cast %55 : vector<1x4x64x16xbf16> to vector<4x64x16xbf16>
    "tpu.trace_start"() <{level = 10 : i32, message = "hmd,hde->hme"}> : () -> ()
    %cst_30 = arith.constant dense<0.000000e+00> : vector<4x48x16xf32>
    %57 = tpu.matmul %48, %56, %cst_30 {dimension_numbers = #tpu.dot_dimension_numbers<[2], [1], [1], [2], [0, 0, 0, 1, 1, 2], [0], [0]>} : vector<4x48x64xbf16>, vector<4x64x16xbf16>, vector<4x48x16xf32> -> vector<4x48x16xf32>
    "tpu.trace_stop"() : () -> ()
    %58 = vector.shape_cast %51 : vector<4x48x16xf32> to vector<8x24x16xf32>
    %59 = arith.truncf %58 : vector<8x24x16xf32> to vector<8x24x16xbf16>
    %60 = vector.shape_cast %54 : vector<4x48x16xf32> to vector<8x24x16xf32>
    %61 = arith.truncf %60 : vector<8x24x16xf32> to vector<8x24x16xbf16>
    %62 = vector.shape_cast %57 : vector<4x48x16xf32> to vector<8x24x16xf32>
    %63 = arith.truncf %62 : vector<8x24x16xf32> to vector<8x24x16xbf16>
    "tpu.trace_start"() <{level = 10 : i32, message = "gqd,gkd->gqk"}> : () -> ()
    %cst_31 = arith.constant dense<0.000000e+00> : vector<8x24x24xf32>
    %64 = tpu.matmul %59, %61, %cst_31 {dimension_numbers = #tpu.dot_dimension_numbers<[2], [2], [1], [1], [0, 0, 0, 1, 1, 1], [0], [0]>} : vector<8x24x16xbf16>, vector<8x24x16xbf16>, vector<8x24x24xf32> -> vector<8x24x24xf32>
    "tpu.trace_stop"() : () -> ()
    %65 = vector.broadcast %13 : vector<1x24x24xf32> to vector<8x24x24xf32>
    %66 = arith.addf %64, %65 : vector<8x24x24xf32>
    %cst_32 = arith.constant dense<0xFF800000> : vector<8x24xf32>
    %67 = vector.multi_reduction <maximumf>, %66, %cst_32 [2] : vector<8x24x24xf32> to vector<8x24xf32>
    %68 = vector.shape_cast %67 : vector<8x24xf32> to vector<8x24x1xf32>
    %69 = vector.broadcast %68 : vector<8x24x1xf32> to vector<8x24x24xf32>
    %70 = arith.subf %66, %69 : vector<8x24x24xf32>
    %71 = math.exp %70 : vector<8x24x24xf32>
    %cst_33 = arith.constant dense<0.000000e+00> : vector<8x24xf32>
    %72 = vector.multi_reduction <add>, %71, %cst_33 [2] : vector<8x24x24xf32> to vector<8x24xf32>
    %73 = vector.shape_cast %72 : vector<8x24xf32> to vector<8x24x1xf32>
    %74 = tpu.reciprocal %73 {approx = true} : vector<8x24x1xf32> -> vector<8x24x1xf32>
    %75 = vector.broadcast %74 : vector<8x24x1xf32> to vector<8x24x24xf32>
    %76 = arith.mulf %71, %75 : vector<8x24x24xf32>
    %77 = arith.truncf %76 : vector<8x24x24xf32> to vector<8x24x24xbf16>
    "tpu.trace_start"() <{level = 10 : i32, message = "gqk,gkd->gqd"}> : () -> ()
    %cst_34 = arith.constant dense<0.000000e+00> : vector<8x24x16xf32>
    %78 = tpu.matmul %77, %63, %cst_34 {dimension_numbers = #tpu.dot_dimension_numbers<[2], [1], [1], [2], [0, 0, 0, 1, 1, 2], [0], [0]>} : vector<8x24x24xbf16>, vector<8x24x16xbf16>, vector<8x24x16xf32> -> vector<8x24x16xf32>
    "tpu.trace_stop"() : () -> ()
    %79 = vector.shape_cast %78 : vector<8x24x16xf32> to vector<4x48x16xf32>
    %80 = arith.truncf %79 : vector<4x48x16xf32> to vector<4x48x16xbf16>
    %c0_35 = arith.constant 0 : index
    %c0_36 = arith.constant 0 : index
    %c0_37 = arith.constant 0 : index
    %c0_38 = arith.constant 0 : index
    %81 = vector.load %arg7[%c0_35, %c0_36, %c0_37, %c0_38] : memref<2x4x16x64xbf16, #tpu.memory_space<vmem>>, vector<1x4x16x64xbf16>
    %82 = vector.shape_cast %81 : vector<1x4x16x64xbf16> to vector<4x16x64xbf16>
    "tpu.trace_start"() <{level = 10 : i32, message = "hmd,hdo->hmo"}> : () -> ()
    %cst_39 = arith.constant dense<0.000000e+00> : vector<4x48x64xf32>
    %83 = tpu.matmul %80, %82, %cst_39 {dimension_numbers = #tpu.dot_dimension_numbers<[2], [1], [1], [2], [0, 0, 0, 1, 1, 2], [0], [0]>} : vector<4x48x16xbf16>, vector<4x16x64xbf16>, vector<4x48x64xf32> -> vector<4x48x64xf32>
    "tpu.trace_stop"() : () -> ()
    %cst_40 = arith.constant dense<0.000000e+00> : vector<48x64xf32>
    %84 = vector.multi_reduction <add>, %83, %cst_40 [0] : vector<4x48x64xf32> to vector<48x64xf32>
    %85 = arith.addf %7, %84 : vector<48x64xf32>
    %86 = vector.broadcast %18 : vector<1x64xf32> to vector<48x64xf32>
    %87 = arith.addf %85, %86 : vector<48x64xf32>
    %cst_41 = arith.constant dense<0.000000e+00> : vector<48xf32>
    %88 = vector.multi_reduction <add>, %87, %cst_41 [1] : vector<48x64xf32> to vector<48xf32>
    %89 = vector.shape_cast %88 : vector<48xf32> to vector<48x1xf32>
    %cst_42 = arith.constant 6.400000e+01 : f32
    %90 = vector.broadcast %cst_42 : f32 to vector<48x1xf32>
    %91 = arith.divf %89, %90 : vector<48x1xf32>
    %92 = vector.broadcast %91 : vector<48x1xf32> to vector<48x64xf32>
    %93 = arith.subf %87, %92 : vector<48x64xf32>
    %94 = arith.mulf %93, %93 : vector<48x64xf32>
    %cst_43 = arith.constant dense<0.000000e+00> : vector<48xf32>
    %95 = vector.multi_reduction <add>, %94, %cst_43 [1] : vector<48x64xf32> to vector<48xf32>
    %96 = vector.shape_cast %95 : vector<48xf32> to vector<48x1xf32>
    %cst_44 = arith.constant 6.400000e+01 : f32
    %97 = vector.broadcast %cst_44 : f32 to vector<48x1xf32>
    %98 = arith.divf %96, %97 : vector<48x1xf32>
    %99 = vector.broadcast %91 : vector<48x1xf32> to vector<48x64xf32>
    %100 = arith.subf %87, %99 : vector<48x64xf32>
    %cst_45 = arith.constant 9.99999974E-6 : f32
    %101 = vector.broadcast %cst_45 : f32 to vector<48x1xf32>
    %102 = arith.addf %98, %101 : vector<48x1xf32>
    %103 = math.rsqrt %102 : vector<48x1xf32>
    %104 = vector.broadcast %103 : vector<48x1xf32> to vector<48x64xf32>
    %105 = arith.mulf %100, %104 : vector<48x64xf32>
    %106 = vector.broadcast %19 : vector<1x64xf32> to vector<48x64xf32>
    %107 = arith.mulf %105, %106 : vector<48x64xf32>
    %108 = vector.broadcast %20 : vector<1x64xf32> to vector<48x64xf32>
    %109 = arith.addf %107, %108 : vector<48x64xf32>
    %110 = arith.truncf %109 : vector<48x64xf32> to vector<48x64xbf16>
    %c0_46 = arith.constant 0 : index
    %c0_47 = arith.constant 0 : index
    %c0_48 = arith.constant 0 : index
    %111 = vector.load %arg9[%c0_46, %c0_47, %c0_48] : memref<2x64x64xbf16, #tpu.memory_space<vmem>>, vector<1x64x64xbf16>
    %112 = vector.shape_cast %111 : vector<1x64x64xbf16> to vector<64x64xbf16>
    %cst_49 = arith.constant dense<0.000000e+00> : vector<48x64xf32>
    %113 = tpu.matmul %110, %112, %cst_49 {dimension_numbers = #tpu.dot_dimension_numbers<[1], [0], [0], [1], [0, 0, 1, 1], [], []>} : vector<48x64xbf16>, vector<64x64xbf16>, vector<48x64xf32> -> vector<48x64xf32>
    %114 = vector.broadcast %21 : vector<1x64xf32> to vector<48x64xf32>
    %115 = arith.addf %113, %114 : vector<48x64xf32>
    %cst_50 = arith.constant 5.000000e-01 : f32
    %116 = vector.broadcast %cst_50 : f32 to vector<48x64xf32>
    %117 = arith.mulf %116, %115 : vector<48x64xf32>
    %cst_51 = arith.constant 0.707106769 : f32
    %118 = vector.broadcast %cst_51 : f32 to vector<48x64xf32>
    %119 = arith.mulf %115, %118 : vector<48x64xf32>
    %cst_52 = arith.constant 0.000000e+00 : f32
    %120 = vector.broadcast %cst_52 : f32 to vector<48x64xf32>
    %121 = arith.cmpf oge, %119, %120 : vector<48x64xf32>
    %cst_53 = arith.constant 1.000000e+00 : f32
    %cst_54 = arith.constant -1.000000e+00 : f32
    %122 = vector.broadcast %cst_53 : f32 to vector<48x64xf32>
    %123 = vector.broadcast %cst_54 : f32 to vector<48x64xf32>
    %124 = arith.select %121, %122, %123 : vector<48x64xi1>, vector<48x64xf32>
    %125 = math.absf %119 : vector<48x64xf32>
    %cst_55 = arith.constant 0.327591091 : f32
    %126 = vector.broadcast %cst_55 : f32 to vector<48x64xf32>
    %127 = arith.mulf %126, %125 : vector<48x64xf32>
    %cst_56 = arith.constant 1.000000e+00 : f32
    %128 = vector.broadcast %cst_56 : f32 to vector<48x64xf32>
    %129 = arith.addf %128, %127 : vector<48x64xf32>
    %cst_57 = arith.constant 1.000000e+00 : f32
    %130 = vector.broadcast %cst_57 : f32 to vector<48x64xf32>
    %131 = arith.divf %130, %129 : vector<48x64xf32>
    %cst_58 = arith.constant 1.06140542 : f32
    %132 = vector.broadcast %cst_58 : f32 to vector<48x64xf32>
    %133 = arith.mulf %132, %131 : vector<48x64xf32>
    %cst_59 = arith.constant -1.45315206 : f32
    %134 = vector.broadcast %cst_59 : f32 to vector<48x64xf32>
    %135 = arith.addf %133, %134 : vector<48x64xf32>
    %136 = arith.mulf %135, %131 : vector<48x64xf32>
    %cst_60 = arith.constant 1.42141378 : f32
    %137 = vector.broadcast %cst_60 : f32 to vector<48x64xf32>
    %138 = arith.addf %136, %137 : vector<48x64xf32>
    %139 = arith.mulf %138, %131 : vector<48x64xf32>
    %cst_61 = arith.constant -0.284496725 : f32
    %140 = vector.broadcast %cst_61 : f32 to vector<48x64xf32>
    %141 = arith.addf %139, %140 : vector<48x64xf32>
    %142 = arith.mulf %141, %131 : vector<48x64xf32>
    %cst_62 = arith.constant 0.254829586 : f32
    %143 = vector.broadcast %cst_62 : f32 to vector<48x64xf32>
    %144 = arith.addf %142, %143 : vector<48x64xf32>
    %145 = arith.mulf %144, %131 : vector<48x64xf32>
    %cst_63 = arith.constant 0.000000e+00 : f32
    %146 = vector.broadcast %cst_63 : f32 to vector<48x64xf32>
    %147 = arith.subf %146, %125 : vector<48x64xf32>
    %148 = arith.mulf %147, %125 : vector<48x64xf32>
    %149 = math.exp %148 : vector<48x64xf32>
    %150 = arith.mulf %145, %149 : vector<48x64xf32>
    %cst_64 = arith.constant 1.000000e+00 : f32
    %151 = vector.broadcast %cst_64 : f32 to vector<48x64xf32>
    %152 = arith.subf %151, %150 : vector<48x64xf32>
    %153 = arith.mulf %124, %152 : vector<48x64xf32>
    %cst_65 = arith.constant 1.000000e+00 : f32
    %154 = vector.broadcast %cst_65 : f32 to vector<48x64xf32>
    %155 = arith.addf %154, %153 : vector<48x64xf32>
    %156 = arith.mulf %117, %155 : vector<48x64xf32>
    %157 = arith.truncf %156 : vector<48x64xf32> to vector<48x64xbf16>
    %c0_66 = arith.constant 0 : index
    %c0_67 = arith.constant 0 : index
    %c0_68 = arith.constant 0 : index
    %158 = vector.load %arg10[%c0_66, %c0_67, %c0_68] : memref<2x64x64xbf16, #tpu.memory_space<vmem>>, vector<1x64x64xbf16>
    %159 = vector.shape_cast %158 : vector<1x64x64xbf16> to vector<64x64xbf16>
    %cst_69 = arith.constant dense<0.000000e+00> : vector<48x64xf32>
    %160 = tpu.matmul %157, %159, %cst_69 {dimension_numbers = #tpu.dot_dimension_numbers<[1], [0], [0], [1], [0, 0, 1, 1], [], []>} : vector<48x64xbf16>, vector<64x64xbf16>, vector<48x64xf32> -> vector<48x64xf32>
    %161 = arith.addf %87, %160 : vector<48x64xf32>
    %162 = vector.broadcast %22 : vector<1x64xf32> to vector<48x64xf32>
    %163 = arith.addf %161, %162 : vector<48x64xf32>
    %c1 = arith.constant 1 : index
    %c0_70 = arith.constant 0 : index
    %c0_71 = arith.constant 0 : index
    %164 = vector.load %arg8[%c1, %c0_70, %c0_71] : memref<2x8x64xf32, #tpu.memory_space<vmem>>, vector<1x8x64xf32>
    %165 = vector.shape_cast %164 : vector<1x8x64xf32> to vector<8x64xf32>
    %166 = vector.extract_strided_slice %165 {offsets = [0, 0], sizes = [1, 64], strides = [1, 1]} : vector<8x64xf32> to vector<1x64xf32>
    %167 = vector.extract_strided_slice %165 {offsets = [1, 0], sizes = [1, 64], strides = [1, 1]} : vector<8x64xf32> to vector<1x64xf32>
    %168 = vector.extract_strided_slice %165 {offsets = [2, 0], sizes = [1, 64], strides = [1, 1]} : vector<8x64xf32> to vector<1x64xf32>
    %169 = vector.extract_strided_slice %165 {offsets = [3, 0], sizes = [1, 64], strides = [1, 1]} : vector<8x64xf32> to vector<1x64xf32>
    %170 = vector.extract_strided_slice %165 {offsets = [4, 0], sizes = [1, 64], strides = [1, 1]} : vector<8x64xf32> to vector<1x64xf32>
    %171 = vector.extract_strided_slice %165 {offsets = [5, 0], sizes = [1, 64], strides = [1, 1]} : vector<8x64xf32> to vector<1x64xf32>
    %172 = vector.extract_strided_slice %165 {offsets = [6, 0], sizes = [1, 64], strides = [1, 1]} : vector<8x64xf32> to vector<1x64xf32>
    %cst_72 = arith.constant dense<0.000000e+00> : vector<48xf32>
    %173 = vector.multi_reduction <add>, %163, %cst_72 [1] : vector<48x64xf32> to vector<48xf32>
    %174 = vector.shape_cast %173 : vector<48xf32> to vector<48x1xf32>
    %cst_73 = arith.constant 6.400000e+01 : f32
    %175 = vector.broadcast %cst_73 : f32 to vector<48x1xf32>
    %176 = arith.divf %174, %175 : vector<48x1xf32>
    %177 = vector.broadcast %176 : vector<48x1xf32> to vector<48x64xf32>
    %178 = arith.subf %163, %177 : vector<48x64xf32>
    %179 = arith.mulf %178, %178 : vector<48x64xf32>
    %cst_74 = arith.constant dense<0.000000e+00> : vector<48xf32>
    %180 = vector.multi_reduction <add>, %179, %cst_74 [1] : vector<48x64xf32> to vector<48xf32>
    %181 = vector.shape_cast %180 : vector<48xf32> to vector<48x1xf32>
    %cst_75 = arith.constant 6.400000e+01 : f32
    %182 = vector.broadcast %cst_75 : f32 to vector<48x1xf32>
    %183 = arith.divf %181, %182 : vector<48x1xf32>
    %184 = vector.broadcast %176 : vector<48x1xf32> to vector<48x64xf32>
    %185 = arith.subf %163, %184 : vector<48x64xf32>
    %cst_76 = arith.constant 9.99999974E-6 : f32
    %186 = vector.broadcast %cst_76 : f32 to vector<48x1xf32>
    %187 = arith.addf %183, %186 : vector<48x1xf32>
    %188 = math.rsqrt %187 : vector<48x1xf32>
    %189 = vector.broadcast %188 : vector<48x1xf32> to vector<48x64xf32>
    %190 = arith.mulf %185, %189 : vector<48x64xf32>
    %191 = vector.broadcast %166 : vector<1x64xf32> to vector<48x64xf32>
    %192 = arith.mulf %190, %191 : vector<48x64xf32>
    %193 = vector.broadcast %167 : vector<1x64xf32> to vector<48x64xf32>
    %194 = arith.addf %192, %193 : vector<48x64xf32>
    %195 = arith.truncf %194 : vector<48x64xf32> to vector<48x64xbf16>
    %196 = vector.shape_cast %195 : vector<48x64xbf16> to vector<1x48x64xbf16>
    %197 = vector.shape_cast %196 : vector<1x48x64xbf16> to vector<1x48x64xbf16>
    %198 = vector.broadcast %197 : vector<1x48x64xbf16> to vector<4x48x64xbf16>
    %c1_77 = arith.constant 1 : index
    %c0_78 = arith.constant 0 : index
    %c0_79 = arith.constant 0 : index
    %c0_80 = arith.constant 0 : index
    %199 = vector.load %arg4[%c1_77, %c0_78, %c0_79, %c0_80] : memref<2x4x64x16xbf16, #tpu.memory_space<vmem>>, vector<1x4x64x16xbf16>
    %200 = vector.shape_cast %199 : vector<1x4x64x16xbf16> to vector<4x64x16xbf16>
    "tpu.trace_start"() <{level = 10 : i32, message = "hmd,hde->hme"}> : () -> ()
    %cst_81 = arith.constant dense<0.000000e+00> : vector<4x48x16xf32>
    %201 = tpu.matmul %198, %200, %cst_81 {dimension_numbers = #tpu.dot_dimension_numbers<[2], [1], [1], [2], [0, 0, 0, 1, 1, 2], [0], [0]>} : vector<4x48x64xbf16>, vector<4x64x16xbf16>, vector<4x48x16xf32> -> vector<4x48x16xf32>
    "tpu.trace_stop"() : () -> ()
    %c1_82 = arith.constant 1 : index
    %c0_83 = arith.constant 0 : index
    %c0_84 = arith.constant 0 : index
    %c0_85 = arith.constant 0 : index
    %202 = vector.load %arg5[%c1_82, %c0_83, %c0_84, %c0_85] : memref<2x4x64x16xbf16, #tpu.memory_space<vmem>>, vector<1x4x64x16xbf16>
    %203 = vector.shape_cast %202 : vector<1x4x64x16xbf16> to vector<4x64x16xbf16>
    "tpu.trace_start"() <{level = 10 : i32, message = "hmd,hde->hme"}> : () -> ()
    %cst_86 = arith.constant dense<0.000000e+00> : vector<4x48x16xf32>
    %204 = tpu.matmul %198, %203, %cst_86 {dimension_numbers = #tpu.dot_dimension_numbers<[2], [1], [1], [2], [0, 0, 0, 1, 1, 2], [0], [0]>} : vector<4x48x64xbf16>, vector<4x64x16xbf16>, vector<4x48x16xf32> -> vector<4x48x16xf32>
    "tpu.trace_stop"() : () -> ()
    %c1_87 = arith.constant 1 : index
    %c0_88 = arith.constant 0 : index
    %c0_89 = arith.constant 0 : index
    %c0_90 = arith.constant 0 : index
    %205 = vector.load %arg6[%c1_87, %c0_88, %c0_89, %c0_90] : memref<2x4x64x16xbf16, #tpu.memory_space<vmem>>, vector<1x4x64x16xbf16>
    %206 = vector.shape_cast %205 : vector<1x4x64x16xbf16> to vector<4x64x16xbf16>
    "tpu.trace_start"() <{level = 10 : i32, message = "hmd,hde->hme"}> : () -> ()
    %cst_91 = arith.constant dense<0.000000e+00> : vector<4x48x16xf32>
    %207 = tpu.matmul %198, %206, %cst_91 {dimension_numbers = #tpu.dot_dimension_numbers<[2], [1], [1], [2], [0, 0, 0, 1, 1, 2], [0], [0]>} : vector<4x48x64xbf16>, vector<4x64x16xbf16>, vector<4x48x16xf32> -> vector<4x48x16xf32>
    "tpu.trace_stop"() : () -> ()
    %208 = vector.shape_cast %201 : vector<4x48x16xf32> to vector<8x24x16xf32>
    %209 = arith.truncf %208 : vector<8x24x16xf32> to vector<8x24x16xbf16>
    %210 = vector.shape_cast %204 : vector<4x48x16xf32> to vector<8x24x16xf32>
    %211 = arith.truncf %210 : vector<8x24x16xf32> to vector<8x24x16xbf16>
    %212 = vector.shape_cast %207 : vector<4x48x16xf32> to vector<8x24x16xf32>
    %213 = arith.truncf %212 : vector<8x24x16xf32> to vector<8x24x16xbf16>
    "tpu.trace_start"() <{level = 10 : i32, message = "gqd,gkd->gqk"}> : () -> ()
    %cst_92 = arith.constant dense<0.000000e+00> : vector<8x24x24xf32>
    %214 = tpu.matmul %209, %211, %cst_92 {dimension_numbers = #tpu.dot_dimension_numbers<[2], [2], [1], [1], [0, 0, 0, 1, 1, 1], [0], [0]>} : vector<8x24x16xbf16>, vector<8x24x16xbf16>, vector<8x24x24xf32> -> vector<8x24x24xf32>
    "tpu.trace_stop"() : () -> ()
    %215 = vector.broadcast %13 : vector<1x24x24xf32> to vector<8x24x24xf32>
    %216 = arith.addf %214, %215 : vector<8x24x24xf32>
    %cst_93 = arith.constant dense<0xFF800000> : vector<8x24xf32>
    %217 = vector.multi_reduction <maximumf>, %216, %cst_93 [2] : vector<8x24x24xf32> to vector<8x24xf32>
    %218 = vector.shape_cast %217 : vector<8x24xf32> to vector<8x24x1xf32>
    %219 = vector.broadcast %218 : vector<8x24x1xf32> to vector<8x24x24xf32>
    %220 = arith.subf %216, %219 : vector<8x24x24xf32>
    %221 = math.exp %220 : vector<8x24x24xf32>
    %cst_94 = arith.constant dense<0.000000e+00> : vector<8x24xf32>
    %222 = vector.multi_reduction <add>, %221, %cst_94 [2] : vector<8x24x24xf32> to vector<8x24xf32>
    %223 = vector.shape_cast %222 : vector<8x24xf32> to vector<8x24x1xf32>
    %224 = tpu.reciprocal %223 {approx = true} : vector<8x24x1xf32> -> vector<8x24x1xf32>
    %225 = vector.broadcast %224 : vector<8x24x1xf32> to vector<8x24x24xf32>
    %226 = arith.mulf %221, %225 : vector<8x24x24xf32>
    %227 = arith.truncf %226 : vector<8x24x24xf32> to vector<8x24x24xbf16>
    "tpu.trace_start"() <{level = 10 : i32, message = "gqk,gkd->gqd"}> : () -> ()
    %cst_95 = arith.constant dense<0.000000e+00> : vector<8x24x16xf32>
    %228 = tpu.matmul %227, %213, %cst_95 {dimension_numbers = #tpu.dot_dimension_numbers<[2], [1], [1], [2], [0, 0, 0, 1, 1, 2], [0], [0]>} : vector<8x24x24xbf16>, vector<8x24x16xbf16>, vector<8x24x16xf32> -> vector<8x24x16xf32>
    "tpu.trace_stop"() : () -> ()
    %229 = vector.shape_cast %228 : vector<8x24x16xf32> to vector<4x48x16xf32>
    %230 = arith.truncf %229 : vector<4x48x16xf32> to vector<4x48x16xbf16>
    %c1_96 = arith.constant 1 : index
    %c0_97 = arith.constant 0 : index
    %c0_98 = arith.constant 0 : index
    %c0_99 = arith.constant 0 : index
    %231 = vector.load %arg7[%c1_96, %c0_97, %c0_98, %c0_99] : memref<2x4x16x64xbf16, #tpu.memory_space<vmem>>, vector<1x4x16x64xbf16>
    %232 = vector.shape_cast %231 : vector<1x4x16x64xbf16> to vector<4x16x64xbf16>
    "tpu.trace_start"() <{level = 10 : i32, message = "hmd,hdo->hmo"}> : () -> ()
    %cst_100 = arith.constant dense<0.000000e+00> : vector<4x48x64xf32>
    %233 = tpu.matmul %230, %232, %cst_100 {dimension_numbers = #tpu.dot_dimension_numbers<[2], [1], [1], [2], [0, 0, 0, 1, 1, 2], [0], [0]>} : vector<4x48x16xbf16>, vector<4x16x64xbf16>, vector<4x48x64xf32> -> vector<4x48x64xf32>
    "tpu.trace_stop"() : () -> ()
    %cst_101 = arith.constant dense<0.000000e+00> : vector<48x64xf32>
    %234 = vector.multi_reduction <add>, %233, %cst_101 [0] : vector<4x48x64xf32> to vector<48x64xf32>
    %235 = arith.addf %163, %234 : vector<48x64xf32>
    %236 = vector.broadcast %168 : vector<1x64xf32> to vector<48x64xf32>
    %237 = arith.addf %235, %236 : vector<48x64xf32>
    %cst_102 = arith.constant dense<0.000000e+00> : vector<48xf32>
    %238 = vector.multi_reduction <add>, %237, %cst_102 [1] : vector<48x64xf32> to vector<48xf32>
    %239 = vector.shape_cast %238 : vector<48xf32> to vector<48x1xf32>
    %cst_103 = arith.constant 6.400000e+01 : f32
    %240 = vector.broadcast %cst_103 : f32 to vector<48x1xf32>
    %241 = arith.divf %239, %240 : vector<48x1xf32>
    %242 = vector.broadcast %241 : vector<48x1xf32> to vector<48x64xf32>
    %243 = arith.subf %237, %242 : vector<48x64xf32>
    %244 = arith.mulf %243, %243 : vector<48x64xf32>
    %cst_104 = arith.constant dense<0.000000e+00> : vector<48xf32>
    %245 = vector.multi_reduction <add>, %244, %cst_104 [1] : vector<48x64xf32> to vector<48xf32>
    %246 = vector.shape_cast %245 : vector<48xf32> to vector<48x1xf32>
    %cst_105 = arith.constant 6.400000e+01 : f32
    %247 = vector.broadcast %cst_105 : f32 to vector<48x1xf32>
    %248 = arith.divf %246, %247 : vector<48x1xf32>
    %249 = vector.broadcast %241 : vector<48x1xf32> to vector<48x64xf32>
    %250 = arith.subf %237, %249 : vector<48x64xf32>
    %cst_106 = arith.constant 9.99999974E-6 : f32
    %251 = vector.broadcast %cst_106 : f32 to vector<48x1xf32>
    %252 = arith.addf %248, %251 : vector<48x1xf32>
    %253 = math.rsqrt %252 : vector<48x1xf32>
    %254 = vector.broadcast %253 : vector<48x1xf32> to vector<48x64xf32>
    %255 = arith.mulf %250, %254 : vector<48x64xf32>
    %256 = vector.broadcast %169 : vector<1x64xf32> to vector<48x64xf32>
    %257 = arith.mulf %255, %256 : vector<48x64xf32>
    %258 = vector.broadcast %170 : vector<1x64xf32> to vector<48x64xf32>
    %259 = arith.addf %257, %258 : vector<48x64xf32>
    %260 = arith.truncf %259 : vector<48x64xf32> to vector<48x64xbf16>
    %c1_107 = arith.constant 1 : index
    %c0_108 = arith.constant 0 : index
    %c0_109 = arith.constant 0 : index
    %261 = vector.load %arg9[%c1_107, %c0_108, %c0_109] : memref<2x64x64xbf16, #tpu.memory_space<vmem>>, vector<1x64x64xbf16>
    %262 = vector.shape_cast %261 : vector<1x64x64xbf16> to vector<64x64xbf16>
    %cst_110 = arith.constant dense<0.000000e+00> : vector<48x64xf32>
    %263 = tpu.matmul %260, %262, %cst_110 {dimension_numbers = #tpu.dot_dimension_numbers<[1], [0], [0], [1], [0, 0, 1, 1], [], []>} : vector<48x64xbf16>, vector<64x64xbf16>, vector<48x64xf32> -> vector<48x64xf32>
    %264 = vector.broadcast %171 : vector<1x64xf32> to vector<48x64xf32>
    %265 = arith.addf %263, %264 : vector<48x64xf32>
    %cst_111 = arith.constant 5.000000e-01 : f32
    %266 = vector.broadcast %cst_111 : f32 to vector<48x64xf32>
    %267 = arith.mulf %266, %265 : vector<48x64xf32>
    %cst_112 = arith.constant 0.707106769 : f32
    %268 = vector.broadcast %cst_112 : f32 to vector<48x64xf32>
    %269 = arith.mulf %265, %268 : vector<48x64xf32>
    %cst_113 = arith.constant 0.000000e+00 : f32
    %270 = vector.broadcast %cst_113 : f32 to vector<48x64xf32>
    %271 = arith.cmpf oge, %269, %270 : vector<48x64xf32>
    %cst_114 = arith.constant 1.000000e+00 : f32
    %cst_115 = arith.constant -1.000000e+00 : f32
    %272 = vector.broadcast %cst_114 : f32 to vector<48x64xf32>
    %273 = vector.broadcast %cst_115 : f32 to vector<48x64xf32>
    %274 = arith.select %271, %272, %273 : vector<48x64xi1>, vector<48x64xf32>
    %275 = math.absf %269 : vector<48x64xf32>
    %cst_116 = arith.constant 0.327591091 : f32
    %276 = vector.broadcast %cst_116 : f32 to vector<48x64xf32>
    %277 = arith.mulf %276, %275 : vector<48x64xf32>
    %cst_117 = arith.constant 1.000000e+00 : f32
    %278 = vector.broadcast %cst_117 : f32 to vector<48x64xf32>
    %279 = arith.addf %278, %277 : vector<48x64xf32>
    %cst_118 = arith.constant 1.000000e+00 : f32
    %280 = vector.broadcast %cst_118 : f32 to vector<48x64xf32>
    %281 = arith.divf %280, %279 : vector<48x64xf32>
    %cst_119 = arith.constant 1.06140542 : f32
    %282 = vector.broadcast %cst_119 : f32 to vector<48x64xf32>
    %283 = arith.mulf %282, %281 : vector<48x64xf32>
    %cst_120 = arith.constant -1.45315206 : f32
    %284 = vector.broadcast %cst_120 : f32 to vector<48x64xf32>
    %285 = arith.addf %283, %284 : vector<48x64xf32>
    %286 = arith.mulf %285, %281 : vector<48x64xf32>
    %cst_121 = arith.constant 1.42141378 : f32
    %287 = vector.broadcast %cst_121 : f32 to vector<48x64xf32>
    %288 = arith.addf %286, %287 : vector<48x64xf32>
    %289 = arith.mulf %288, %281 : vector<48x64xf32>
    %cst_122 = arith.constant -0.284496725 : f32
    %290 = vector.broadcast %cst_122 : f32 to vector<48x64xf32>
    %291 = arith.addf %289, %290 : vector<48x64xf32>
    %292 = arith.mulf %291, %281 : vector<48x64xf32>
    %cst_123 = arith.constant 0.254829586 : f32
    %293 = vector.broadcast %cst_123 : f32 to vector<48x64xf32>
    %294 = arith.addf %292, %293 : vector<48x64xf32>
    %295 = arith.mulf %294, %281 : vector<48x64xf32>
    %cst_124 = arith.constant 0.000000e+00 : f32
    %296 = vector.broadcast %cst_124 : f32 to vector<48x64xf32>
    %297 = arith.subf %296, %275 : vector<48x64xf32>
    %298 = arith.mulf %297, %275 : vector<48x64xf32>
    %299 = math.exp %298 : vector<48x64xf32>
    %300 = arith.mulf %295, %299 : vector<48x64xf32>
    %cst_125 = arith.constant 1.000000e+00 : f32
    %301 = vector.broadcast %cst_125 : f32 to vector<48x64xf32>
    %302 = arith.subf %301, %300 : vector<48x64xf32>
    %303 = arith.mulf %274, %302 : vector<48x64xf32>
    %cst_126 = arith.constant 1.000000e+00 : f32
    %304 = vector.broadcast %cst_126 : f32 to vector<48x64xf32>
    %305 = arith.addf %304, %303 : vector<48x64xf32>
    %306 = arith.mulf %267, %305 : vector<48x64xf32>
    %307 = arith.truncf %306 : vector<48x64xf32> to vector<48x64xbf16>
    %c1_127 = arith.constant 1 : index
    %c0_128 = arith.constant 0 : index
    %c0_129 = arith.constant 0 : index
    %308 = vector.load %arg10[%c1_127, %c0_128, %c0_129] : memref<2x64x64xbf16, #tpu.memory_space<vmem>>, vector<1x64x64xbf16>
    %309 = vector.shape_cast %308 : vector<1x64x64xbf16> to vector<64x64xbf16>
    %cst_130 = arith.constant dense<0.000000e+00> : vector<48x64xf32>
    %310 = tpu.matmul %307, %309, %cst_130 {dimension_numbers = #tpu.dot_dimension_numbers<[1], [0], [0], [1], [0, 0, 1, 1], [], []>} : vector<48x64xbf16>, vector<64x64xbf16>, vector<48x64xf32> -> vector<48x64xf32>
    %311 = arith.addf %237, %310 : vector<48x64xf32>
    %312 = vector.broadcast %172 : vector<1x64xf32> to vector<48x64xf32>
    %313 = arith.addf %311, %312 : vector<48x64xf32>
    %314 = vector.shape_cast %313 : vector<48x64xf32> to vector<2x24x64xf32>
    %315 = tpu.iota {dimensions = array<i32: 1>} : vector<1x24x64xi32>
    %c17_i32_131 = arith.constant 17 : i32
    %316 = vector.broadcast %c17_i32_131 : i32 to vector<1x24x64xi32>
    %317 = arith.cmpi slt, %315, %316 : vector<1x24x64xi32>
    %318 = arith.extui %317 : vector<1x24x64xi1> to vector<1x24x64xi32>
    %319 = arith.sitofp %318 : vector<1x24x64xi32> to vector<1x24x64xf32>
    %320 = vector.broadcast %319 : vector<1x24x64xf32> to vector<2x24x64xf32>
    %321 = arith.mulf %314, %320 : vector<2x24x64xf32>
    %cst_132 = arith.constant dense<0.000000e+00> : vector<2x64xf32>
    %322 = vector.multi_reduction <add>, %321, %cst_132 [1] : vector<2x24x64xf32> to vector<2x64xf32>
    %cst_133 = arith.constant 0.0588235296 : f32
    %323 = vector.broadcast %cst_133 : f32 to vector<2x64xf32>
    %324 = arith.mulf %322, %323 : vector<2x64xf32>
    %c0_134 = arith.constant 0 : index
    %c0_135 = arith.constant 0 : index
    %325 = vector.load %arg11[%c0_134, %c0_135] : memref<2x64xf32, #tpu.memory_space<vmem>>, vector<2x64xf32>
    tpu.vector_store %arg11[%c0_134, %c0_135], %324 {strides = array<i32>} : memref<2x64xf32, #tpu.memory_space<vmem>>, vector<2x64xf32>,
    return
  }
  func.func @transform_0(%arg0: i32) -> (i32, i32) {
    %c0_i32 = arith.constant 0 : i32
    %c0_i32_0 = arith.constant 0 : i32
    return %arg0, %c0_i32 : i32, i32
  }
  func.func @transform_1(%arg0: i32) -> (i32, i32) {
    %c0_i32 = arith.constant 0 : i32
    %c0_i32_0 = arith.constant 0 : i32
    %c0_i32_1 = arith.constant 0 : i32
    return %c0_i32, %c0_i32_0 : i32, i32
  }
  func.func @transform_2(%arg0: i32) -> (i32, i32, i32) {
    %c0_i32 = arith.constant 0 : i32
    %c0_i32_0 = arith.constant 0 : i32
    %c0_i32_1 = arith.constant 0 : i32
    %c0_i32_2 = arith.constant 0 : i32
    return %c0_i32, %c0_i32_0, %c0_i32_1 : i32, i32, i32
  }
  func.func @transform_3(%arg0: i32) -> (i32, i32, i32, i32) {
    %c0_i32 = arith.constant 0 : i32
    %c0_i32_0 = arith.constant 0 : i32
    %c0_i32_1 = arith.constant 0 : i32
    %c0_i32_2 = arith.constant 0 : i32
    %c0_i32_3 = arith.constant 0 : i32
    return %c0_i32, %c0_i32_0, %c0_i32_1, %c0_i32_2 : i32, i32, i32, i32
  }
  func.func @transform_4(%arg0: i32) -> (i32, i32, i32, i32) {
    %c0_i32 = arith.constant 0 : i32
    %c0_i32_0 = arith.constant 0 : i32
    %c0_i32_1 = arith.constant 0 : i32
    %c0_i32_2 = arith.constant 0 : i32
    %c0_i32_3 = arith.constant 0 : i32
    return %c0_i32, %c0_i32_0, %c0_i32_1, %c0_i32_2 : i32, i32, i32, i32
  }
  func.func @transform_5(%arg0: i32) -> (i32, i32, i32, i32) {
    %c0_i32 = arith.constant 0 : i32
    %c0_i32_0 = arith.constant 0 : i32
    %c0_i32_1 = arith.constant 0 : i32
    %c0_i32_2 = arith.constant 0 : i32
    %c0_i32_3 = arith.constant 0 : i32
    return %c0_i32, %c0_i32_0, %c0_i32_1, %c0_i32_2 : i32, i32, i32, i32
  }
  func.func @transform_6(%arg0: i32) -> (i32, i32, i32, i32) {
    %c0_i32 = arith.constant 0 : i32
    %c0_i32_0 = arith.constant 0 : i32
    %c0_i32_1 = arith.constant 0 : i32
    %c0_i32_2 = arith.constant 0 : i32
    %c0_i32_3 = arith.constant 0 : i32
    return %c0_i32, %c0_i32_0, %c0_i32_1, %c0_i32_2 : i32, i32, i32, i32
  }
  func.func @transform_7(%arg0: i32) -> (i32, i32, i32) {
    %c0_i32 = arith.constant 0 : i32
    %c0_i32_0 = arith.constant 0 : i32
    %c0_i32_1 = arith.constant 0 : i32
    %c0_i32_2 = arith.constant 0 : i32
    return %c0_i32, %c0_i32_0, %c0_i32_1 : i32, i32, i32
  }
  func.func @transform_8(%arg0: i32) -> (i32, i32, i32) {
    %c0_i32 = arith.constant 0 : i32
    %c0_i32_0 = arith.constant 0 : i32
    %c0_i32_1 = arith.constant 0 : i32
    %c0_i32_2 = arith.constant 0 : i32
    return %c0_i32, %c0_i32_0, %c0_i32_1 : i32, i32, i32
  }
  func.func @transform_9(%arg0: i32) -> (i32, i32, i32) {
    %c0_i32 = arith.constant 0 : i32
    %c0_i32_0 = arith.constant 0 : i32
    %c0_i32_1 = arith.constant 0 : i32
    %c0_i32_2 = arith.constant 0 : i32
    return %c0_i32, %c0_i32_0, %c0_i32_1 : i32, i32, i32
  }
  func.func @transform_10(%arg0: i32) -> (i32, i32) {
    %c0_i32 = arith.constant 0 : i32
    %c0_i32_0 = arith.constant 0 : i32
    return %arg0, %c0_i32 : i32, i32
  }
}

</mosaic_0001>

<llo_original>
// kernel: vit_backbone_forward.1
$region0: #{vit_backbone_forward.1}
  #allocation0 [shape = 'u32[]', space=smem, size = 0x4, offset = 0x4, fixed_abs, tag = 'smem constant byte address 0x4 - core index']
  #allocation1 [shape = 'u32[144,128]{1,0:T(1,128)}', space=vmem, size = 0x12000, scoped, tag = 'internal scratch']
  %s0 = inlined_call_operand.vmem [shape: bf16[48,48], index: 0, kind: input, shape index: {}]
  %s1 = inlined_call_operand.vmem [shape: bf16[48,64], index: 1, kind: input, shape index: {}]
  %s2 = inlined_call_operand.vmem [shape: f32[1,24,64], index: 2, kind: input, shape index: {}]
  %s3 = inlined_call_operand.vmem [shape: bf16[2,4,64,16], index: 3, kind: input, shape index: {}]
  %s4 = inlined_call_operand.vmem [shape: bf16[2,4,64,16], index: 4, kind: input, shape index: {}]
  %s5 = inlined_call_operand.vmem [shape: bf16[2,4,64,16], index: 5, kind: input, shape index: {}]
  %s6 = inlined_call_operand.vmem [shape: bf16[2,4,16,64], index: 6, kind: input, shape index: {}]
  %s7 = inlined_call_operand.vmem [shape: f32[2,8,64], index: 7, kind: input, shape index: {}]
  %s8 = inlined_call_operand.vmem [shape: bf16[2,64,64], index: 8, kind: input, shape index: {}]
  %s9 = inlined_call_operand.vmem [shape: bf16[2,64,64], index: 9, kind: input, shape index: {}]
  %s10 = inlined_call_operand.hbm [shape: f32[2,64], index: 10, kind: output, shape index: {}]
  %s11 = sld [smem:[#allocation0]]
  $region50: #{vit_backbone_forward.1} parent=0
    _
  %s13 = ssub.s32 1, %s11
  %s14 = scalar_select 0, %s13, %s11
  $region1: #{vit_backbone_forward.1} parent=0
    #allocation2 [shape = 'u8[1024]{0}', space=vmem, size = 0x400, scoped, tag = 'output window, operand 0, single buffered']
    #allocation3 [shape = 's32[1]{0}', space=sflag, size = 0x4, scoped, tag = 'scoped memory for vit_backbone_forward.1']
    %15 = vsyncpa [#allocation3], 0
    // Predicated region
    $region2: #{vit_backbone_forward.1} parent=1 // pred_check
      _
    $region3: #{vit_backbone_forward.1} parent=1 // pred_check_branch
      %17 = sbr.rel (0) target = $region5
    $region4: #{vit_backbone_forward.1} parent=1 // pred_region
      _
    $region5: #{vit_backbone_forward.1} parent=1 // pred_fallthru
      _
    // Predicated region
    $region6: #{vit_backbone_forward.1} parent=1 // pred_check
      _
    $region7: #{vit_backbone_forward.1} parent=1 // pred_check_branch
      %19 = sbr.rel (0) target = $region9
    $region8: #{vit_backbone_forward.1} parent=1 // pred_region
      _
    $region9: #{vit_backbone_forward.1} parent=1 // pred_fallthru
      _
    // Predicated region
    $region10: #{vit_backbone_forward.1} parent=1 // pred_check
      _
    $region11: #{vit_backbone_forward.1} parent=1 // pred_check_branch
      %21 = sbr.rel (0) target = $region13
    $region12: #{vit_backbone_forward.1} parent=1 // pred_region
      _
    $region13: #{vit_backbone_forward.1} parent=1 // pred_fallthru
      _
    // Predicated region
    $region14: #{vit_backbone_forward.1} parent=1 // pred_check
      _
    $region15: #{vit_backbone_forward.1} parent=1 // pred_check_branch
      %23 = sbr.rel (0) target = $region17
    $region16: #{vit_backbone_forward.1} parent=1 // pred_region
      _
    $region17: #{vit_backbone_forward.1} parent=1 // pred_fallthru
      _
    // Predicated region
    $region18: #{vit_backbone_forward.1} parent=1 // pred_check
      _
    $region19: #{vit_backbone_forward.1} parent=1 // pred_check_branch
      %25 = sbr.rel (0) target = $region21
    $region20: #{vit_backbone_forward.1} parent=1 // pred_region
      _
    $region21: #{vit_backbone_forward.1} parent=1 // pred_fallthru
      _
    // Predicated region
    $region22: #{vit_backbone_forward.1} parent=1 // pred_check
      _
    $region23: #{vit_backbone_forward.1} parent=1 // pred_check_branch
      %27 = sbr.rel (0) target = $region25
    $region24: #{vit_backbone_forward.1} parent=1 // pred_region
      _
    $region25: #{vit_backbone_forward.1} parent=1 // pred_fallthru
      _
    // Predicated region
    $region26: #{vit_backbone_forward.1} parent=1 // pred_check
      _
    $region27: #{vit_backbone_forward.1} parent=1 // pred_check_branch
      %29 = sbr.rel (0) target = $region29
    $region28: #{vit_backbone_forward.1} parent=1 // pred_region
      _
    $region29: #{vit_backbone_forward.1} parent=1 // pred_fallthru
      _
    // Predicated region
    $region30: #{vit_backbone_forward.1} parent=1 // pred_check
      _
    $region31: #{vit_backbone_forward.1} parent=1 // pred_check_branch
      %31 = sbr.rel (0) target = $region33
    $region32: #{vit_backbone_forward.1} parent=1 // pred_region
      _
    $region33: #{vit_backbone_forward.1} parent=1 // pred_fallthru
      _
    // Predicated region
    $region34: #{vit_backbone_forward.1} parent=1 // pred_check
      _
    $region35: #{vit_backbone_forward.1} parent=1 // pred_check_branch
      %33 = sbr.rel (0) target = $region37
    $region36: #{vit_backbone_forward.1} parent=1 // pred_region
      _
    $region37: #{vit_backbone_forward.1} parent=1 // pred_fallthru
      _
    // Predicated region
    $region38: #{vit_backbone_forward.1} parent=1 // pred_check
      _
    $region39: #{vit_backbone_forward.1} parent=1 // pred_check_branch
      %35 = sbr.rel (0) target = $region41
    $region40: #{vit_backbone_forward.1} parent=1 // pred_region
      _
    $region41: #{vit_backbone_forward.1} parent=1 // pred_fallthru
      _
    %v37 = vld [vmem:[%s0] sm:$0xf]
    %v38 = vld [vmem:[%s0 + $0x4] sm:$0xf]
    %v39 = vld [vmem:[%s0 + $0x8] sm:$0xf]
    %v40 = vld [vmem:[%s0 + $0xc] sm:$0xf]
    %v41 = vld [vmem:[%s0 + $0x10] sm:$0xf]
    %v42 = vld [vmem:[%s0 + $0x14] sm:$0xf]
    %v43 = vld [vmem:[%s1] sm:$0xf]
    %v44 = vld [vmem:[%s1 + $0x4] sm:$0xf]
    %v45 = vld [vmem:[%s1 + $0x8] sm:$0xf]
    %v46 = vld [vmem:[%s1 + $0xc] sm:$0xf]
    %v47 = vld [vmem:[%s1 + $0x10] sm:$0xf]
    %v48 = vld [vmem:[%s1 + $0x14] sm:$0xf]
    %v55 = vunpack.c.l.b16 %v37
    %v56 = vunpack.c.l.b16 %v38
    %v57 = vunpack.c.l.b16 %v39
    %v58 = vunpack.c.l.b16 %v40
    %v59 = vunpack.c.l.b16 %v41
    %v60 = vunpack.c.l.b16 %v42
    %v61 = vpack.c.b16 %v56, %v55
    %v62 = vpack.c.b16 %v58, %v57
    %v63 = vpack.c.b16 %v60, %v59
    %v70 = vunpack.c.l.b16 %v43
    %v71 = vunpack.c.l.b16 %v44
    %v72 = vunpack.c.l.b16 %v45
    %v73 = vunpack.c.l.b16 %v46
    %v74 = vunpack.c.l.b16 %v47
    %v75 = vunpack.c.l.b16 %v48
    %v76 = vpack.c.b16 %v71, %v70
    %v77 = vpack.c.b16 %v73, %v72
    %v78 = vpack.c.b16 %v75, %v74
    %vm82 = vcmask 392192
    %v84 = vsel %vm82, %v61, 0
    %v87 = vsel %vm82, %v62, 0
    %v90 = vsel %vm82, %v63, 0
    %92 = vmatprep.subr.bf16.mxu0 0
    %93 = vmatpush1.bf16.msra.mxu0 %v76
    %94 = vmatprep.subr.bf16.mxu0 0
    %95 = vmatpush1.bf16.msra.mxu0 %v77
    %96 = vmatprep.subr.bf16.mxu0 0
    %97 = vmatpush1.bf16.msra.mxu0 %v78
    %98 = vmatprep.subr.bf16.mxu0 0
    %99 = vmatpush1.bf16.msra.mxu0 0
    %100 = vmatprep.subr.bf16.mxu0 0
    %101 = vmatpush1.bf16.msra.mxu0 0
    %102 = vmatprep.subr.bf16.mxu0 0
    %103 = vmatpush1.bf16.msra.mxu0 0
    %104 = vmatprep.subr.bf16.mxu0 0
    %105 = vmatpush1.bf16.msra.mxu0 0
    %106 = vmatprep.subr.bf16.mxu0 0
    %107 = vmatpush1.bf16.msra.mxu0 0
    %108 = vmatprep.subr.bf16.mxu0 0
    %109 = vmatpush1.bf16.msra.mxu0 0
    %110 = vmatprep.subr.bf16.mxu0 0
    %111 = vmatpush1.bf16.msra.mxu0 0
    %112 = vmatprep.subr.bf16.mxu0 0
    %113 = vmatpush1.bf16.msra.mxu0 0
    %114 = vmatprep.subr.bf16.mxu0 0
    %115 = vmatpush1.bf16.msra.mxu0 0
    %116 = vmatprep.subr.bf16.mxu0 0
    %117 = vmatpush1.bf16.msra.mxu0 0
    %118 = vmatprep.subr.bf16.mxu0 0
    %119 = vmatpush1.bf16.msra.mxu0 0
    %120 = vmatprep.subr.bf16.mxu0 0
    %121 = vmatpush1.bf16.msra.mxu0 0
    %122 = vmatprep.subr.bf16.mxu0 0
    %123 = vmatpush1.bf16.msra.mxu0 0
    %124 = vmatprep.mubr.bf16.mxu0 0
    %125 = vmatmul.mubr.bf16.gmra.mrb[0].mxu0 %v84
    %v126 = vpop.f32.mrb[0].mxu0
    %v127 = vadd.f32 0.0, %v126
    %v128 = vpop.f32.mrb[0].mxu0
    %v129 = vpop.f32.mrb[0].mxu0
    %v130 = vadd.f32 0.0, %v129
    %v131 = vpop.f32.mrb[0].mxu0
    %132 = vmatprep.mubr.bf16.mxu0 0
    %133 = vmatmul.mubr.bf16.gmra.mrb[0].mxu0 %v87
    %v134 = vpop.f32.mrb[0].mxu0
    %v135 = vadd.f32 0.0, %v134
    %v136 = vpop.f32.mrb[0].mxu0
    %v137 = vpop.f32.mrb[0].mxu0
    %v138 = vadd.f32 0.0, %v137
    %v139 = vpop.f32.mrb[0].mxu0
    %140 = vmatprep.mubr.bf16.mxu0 0
    %141 = vmatmul.mubr.bf16.gmra.mrb[0].mxu0 %v90
    %v142 = vpop.f32.mrb[0].mxu0
    %v143 = vadd.f32 0.0, %v142
    %v144 = vpop.f32.mrb[0].mxu0
    %v145 = vpop.f32.mrb[0].mxu0
    %v146 = vadd.f32 0.0, %v145
    %v147 = vpop.f32.mrb[0].mxu0
    %148 = vdwg.mxu0
    %v149 = vld [vmem:[%s2] sm:$0xff]
    %v150 = vld [vmem:[%s2 + $0x8] sm:$0xff]
    %v151 = vld [vmem:[%s2 + $0x10] sm:$0xff]
    %v152 = vadd.f32 %v127, %v149
    %v153 = vadd.f32 %v130, %v150
    %v154 = vadd.f32 %v135, %v151
    %v155 = vadd.f32 %v138, %v149
    %v156 = vadd.f32 %v143, %v150
    %v157 = vadd.f32 %v146, %v151
    %v158 = vlaneseq
    %v159 = vand.u32 %v158, 127
    %vm160 = vcmp.lt.s32.totalorder %v159, 17
    %v161 = vsel %vm160, 0.0, -1e+30
    %v162 = vld [vmem:[%s7] sm:$0xff]
    %vm163 = vcmask 523264
    %v164 = vsel %vm163, %v152, 0.0
    %165 = vadd.xlane.f32.xlu0 %v164
    %v166 = vpop.xlane.xlu0 %165
    %v167 = vsel %vm163, %v153, 0.0
    %168 = vadd.xlane.f32.xlu0 %v167
    %v169 = vpop.xlane.xlu0 %168
    %v170 = vsel %vm163, %v154, 0.0
    %171 = vadd.xlane.f32.xlu0 %v170
    %v172 = vpop.xlane.xlu0 %171
    %v173 = vsel %vm163, %v155, 0.0
    %174 = vadd.xlane.f32.xlu0 %v173
    %v175 = vpop.xlane.xlu0 %174
    %v176 = vsel %vm163, %v156, 0.0
    %177 = vadd.xlane.f32.xlu0 %v176
    %v178 = vpop.xlane.xlu0 %177
    %v179 = vsel %vm163, %v157, 0.0
    %180 = vadd.xlane.f32.xlu0 %v179
    %v181 = vpop.xlane.xlu0 %180
    %v182 = vrcp.pop 64.0
    %v183 = vmul.f32 %v166, %v182
    %v184 = vmul.f32 %v169, %v182
    %v185 = vmul.f32 %v172, %v182
    %v186 = vmul.f32 %v175, %v182
    %v187 = vmul.f32 %v178, %v182
    %v188 = vmul.f32 %v181, %v182
    %v189 = vsub.f32 %v152, %v183
    %v190 = vsub.f32 %v153, %v184
    %v191 = vsub.f32 %v154, %v185
    %v192 = vsub.f32 %v155, %v186
    %v193 = vsub.f32 %v156, %v187
    %v194 = vsub.f32 %v157, %v188
    %v195 = vmul.f32 %v189, %v189
    %v196 = vmul.f32 %v190, %v190
    %v197 = vmul.f32 %v191, %v191
    %v198 = vmul.f32 %v192, %v192
    %v199 = vmul.f32 %v193, %v193
    %v200 = vmul.f32 %v194, %v194
    %v201 = vsel %vm163, %v195, 0.0
    %202 = vadd.xlane.f32.xlu0 %v201
    %v203 = vpop.xlane.xlu0 %202
    %v204 = vsel %vm163, %v196, 0.0
    %205 = vadd.xlane.f32.xlu0 %v204
    %v206 = vpop.xlane.xlu0 %205
    %v207 = vsel %vm163, %v197, 0.0
    %208 = vadd.xlane.f32.xlu0 %v207
    %v209 = vpop.xlane.xlu0 %208
    %v210 = vsel %vm163, %v198, 0.0
    %211 = vadd.xlane.f32.xlu0 %v210
    %v212 = vpop.xlane.xlu0 %211
    %v213 = vsel %vm163, %v199, 0.0
    %214 = vadd.xlane.f32.xlu0 %v213
    %v215 = vpop.xlane.xlu0 %214
    %v216 = vsel %vm163, %v200, 0.0
    %217 = vadd.xlane.f32.xlu0 %v216
    %v218 = vpop.xlane.xlu0 %217
    %v219 = vmul.f32 %v203, %v182
    %v220 = vmul.f32 %v206, %v182
    %v221 = vmul.f32 %v209, %v182
    %v222 = vmul.f32 %v212, %v182
    %v223 = vmul.f32 %v215, %v182
    %v224 = vmul.f32 %v218, %v182
    %v225 = vadd.f32 %v219, 1e-05
    %v226 = vadd.f32 %v220, 1e-05
    %v227 = vadd.f32 %v221, 1e-05
    %v228 = vadd.f32 %v222, 1e-05
    %v229 = vadd.f32 %v223, 1e-05
    %v230 = vadd.f32 %v224, 1e-05
    %v231 = vrsqrt.pop %v225
    %v232 = vrsqrt.pop %v226
    %v233 = vrsqrt.pop %v227
    %v234 = vrsqrt.pop %v228
    %v235 = vrsqrt.pop %v229
    %v236 = vrsqrt.pop %v230
    %v237 = vmul.f32 %v189, %v231
    %v238 = vmul.f32 %v190, %v232
    %v239 = vmul.f32 %v191, %v233
    %v240 = vmul.f32 %v192, %v234
    %v241 = vmul.f32 %v193, %v235
    %v242 = vmul.f32 %v194, %v236
    %v243 = vlaneseq
    %v244 = vshrl.u32 %v243, 7
    %v245 = vsub.s32 0, %v244
    %v246 = vrot.slane %v162, %v245
    %v247 = vmul.f32 %v237, %v246
    %v248 = vmul.f32 %v238, %v246
    %v249 = vmul.f32 %v239, %v246
    %v250 = vmul.f32 %v240, %v246
    %v251 = vmul.f32 %v241, %v246
    %v252 = vmul.f32 %v242, %v246
    %v253 = vlaneseq
    %v254 = vshrl.u32 %v253, 7
    %v255 = vsub.s32 1, %v254
    %v256 = vrot.slane %v162, %v255
    %v257 = vadd.f32 %v247, %v256
    %v258 = vadd.f32 %v248, %v256
    %v259 = vadd.f32 %v249, %v256
    %v260 = vadd.f32 %v250, %v256
    %v261 = vadd.f32 %v251, %v256
    %v262 = vadd.f32 %v252, %v256
    %v263 = vpack.c.bf16 %v258, %v257
    %v264 = vpack.c.bf16 %v260, %v259
    %v265 = vpack.c.bf16 %v262, %v261
    %v266 = vld [vmem:[%s3] sm:$0xf]
    %v267 = vld [vmem:[%s3 + $0x4] sm:$0xf]
    %v268 = vld [vmem:[%s3 + $0x8] sm:$0xf]
    %v269 = vld [vmem:[%s3 + $0xc] sm:$0xf]
    %v270 = vld [vmem:[%s3 + $0x10] sm:$0xf]
    %v271 = vld [vmem:[%s3 + $0x14] sm:$0xf]
    %v272 = vld [vmem:[%s3 + $0x18] sm:$0xf]
    %v273 = vld [vmem:[%s3 + $0x1c] sm:$0xf]
    %v274 = vld [vmem:[%s3 + $0x20] sm:$0xf]
    %v275 = vld [vmem:[%s3 + $0x24] sm:$0xf]
    %v276 = vld [vmem:[%s3 + $0x28] sm:$0xf]
    %v277 = vld [vmem:[%s3 + $0x2c] sm:$0xf]
    %v278 = vld [vmem:[%s3 + $0x30] sm:$0xf]
    %v279 = vld [vmem:[%s3 + $0x34] sm:$0xf]
    %v280 = vld [vmem:[%s3 + $0x38] sm:$0xf]
    %v281 = vld [vmem:[%s3 + $0x3c] sm:$0xf]
    %v282 = vld [vmem:[%s3 + $0x40] sm:$0xf]
    %v283 = vld [vmem:[%s3 + $0x44] sm:$0xf]
    %v284 = vld [vmem:[%s3 + $0x48] sm:$0xf]
    %v285 = vld [vmem:[%s3 + $0x4c] sm:$0xf]
    %v286 = vld [vmem:[%s3 + $0x50] sm:$0xf]
    %v287 = vld [vmem:[%s3 + $0x54] sm:$0xf]
    %v288 = vld [vmem:[%s3 + $0x58] sm:$0xf]
    %v289 = vld [vmem:[%s3 + $0x5c] sm:$0xf]
    %v290 = vld [vmem:[%s3 + $0x60] sm:$0xf]
    %v291 = vld [vmem:[%s3 + $0x64] sm:$0xf]
    %v292 = vld [vmem:[%s3 + $0x68] sm:$0xf]
    %v293 = vld [vmem:[%s3 + $0x6c] sm:$0xf]
    %v294 = vld [vmem:[%s3 + $0x70] sm:$0xf]
    %v295 = vld [vmem:[%s3 + $0x74] sm:$0xf]
    %v296 = vld [vmem:[%s3 + $0x78] sm:$0xf]
    %v297 = vld [vmem:[%s3 + $0x7c] sm:$0xf]
    %v306 = vunpack.c.l.b16 %v266
    %v307 = vunpack.c.l.b16 %v267
    %v308 = vunpack.c.l.b16 %v268
    %v309 = vunpack.c.l.b16 %v269
    %v310 = vunpack.c.l.b16 %v270
    %v311 = vunpack.c.l.b16 %v271
    %v312 = vunpack.c.l.b16 %v272
    %v313 = vunpack.c.l.b16 %v273
    %v314 = vpack.c.b16 %v307, %v306
    %v315 = vpack.c.b16 %v309, %v308
    %v316 = vpack.c.b16 %v311, %v310
    %v317 = vpack.c.b16 %v313, %v312
    %v323 = vsel %vm163, %v263, 0
    %v326 = vsel %vm163, %v264, 0
    %v329 = vsel %vm163, %v265, 0
    %331 = vmatprep.subr.bf16.mxu0 0
    %332 = vmatpush1.bf16.msra.mxu0 %v314
    %333 = vmatprep.subr.bf16.mxu0 0
    %334 = vmatpush1.bf16.msra.mxu0 %v315
    %335 = vmatprep.subr.bf16.mxu0 0
    %336 = vmatpush1.bf16.msra.mxu0 %v316
    %337 = vmatprep.subr.bf16.mxu0 0
    %338 = vmatpush1.bf16.msra.mxu0 %v317
    %339 = vmatprep.subr.bf16.mxu0 0
    %340 = vmatpush1.bf16.msra.mxu0 0
    %341 = vmatprep.subr.bf16.mxu0 0
    %342 = vmatpush1.bf16.msra.mxu0 0
    %343 = vmatprep.subr.bf16.mxu0 0
    %344 = vmatpush1.bf16.msra.mxu0 0
    %345 = vmatprep.subr.bf16.mxu0 0
    %346 = vmatpush1.bf16.msra.mxu0 0
    %347 = vmatprep.subr.bf16.mxu0 0
    %348 = vmatpush1.bf16.msra.mxu0 0
    %349 = vmatprep.subr.bf16.mxu0 0
    %350 = vmatpush1.bf16.msra.mxu0 0
    %351 = vmatprep.subr.bf16.mxu0 0
    %352 = vmatpush1.bf16.msra.mxu0 0
    %353 = vmatprep.subr.bf16.mxu0 0
    %354 = vmatpush1.bf16.msra.mxu0 0
    %355 = vmatprep.subr.bf16.mxu0 0
    %356 = vmatpush1.bf16.msra.mxu0 0
    %357 = vmatprep.subr.bf16.mxu0 0
    %358 = vmatpush1.bf16.msra.mxu0 0
    %359 = vmatprep.subr.bf16.mxu0 0
    %360 = vmatpush1.bf16.msra.mxu0 0
    %361 = vmatprep.subr.bf16.mxu0 0
    %362 = vmatpush1.bf16.msra.mxu0 0
    %363 = vmatprep.mubr.bf16.mxu0 0
    %364 = vmatmul.mubr.bf16.gmra.mrb[0].mxu0 %v323
    %v365 = vpop.f32.mrb[0].mxu0
    %v366 = vadd.f32 0.0, %v365
    %v367 = vpop.f32.mrb[0].mxu0
    %v368 = vpop.f32.mrb[0].mxu0
    %v369 = vadd.f32 0.0, %v368
    %v370 = vpop.f32.mrb[0].mxu0
    %371 = vmatprep.mubr.bf16.mxu0 0
    %372 = vmatmul.mubr.bf16.gmra.mrb[0].mxu0 %v326
    %v373 = vpop.f32.mrb[0].mxu0
    %v374 = vadd.f32 0.0, %v373
    %v375 = vpop.f32.mrb[0].mxu0
    %v376 = vpop.f32.mrb[0].mxu0
    %v377 = vadd.f32 0.0, %v376
    %v378 = vpop.f32.mrb[0].mxu0
    %379 = vmatprep.mubr.bf16.mxu0 0
    %380 = vmatmul.mubr.bf16.gmra.mrb[0].mxu0 %v329
    %v381 = vpop.f32.mrb[0].mxu0
    %v382 = vadd.f32 0.0, %v381
    %v383 = vpop.f32.mrb[0].mxu0
    %v384 = vpop.f32.mrb[0].mxu0
    %v385 = vadd.f32 0.0, %v384
    %v386 = vpop.f32.mrb[0].mxu0
    %387 = vdwg.mxu0
    %v396 = vunpack.c.l.b16 %v274
    %v397 = vunpack.c.l.b16 %v275
    %v398 = vunpack.c.l.b16 %v276
    %v399 = vunpack.c.l.b16 %v277
    %v400 = vunpack.c.l.b16 %v278
    %v401 = vunpack.c.l.b16 %v279
    %v402 = vunpack.c.l.b16 %v280
    %v403 = vunpack.c.l.b16 %v281
    %v404 = vpack.c.b16 %v397, %v396
    %v405 = vpack.c.b16 %v399, %v398
    %v406 = vpack.c.b16 %v401, %v400
    %v407 = vpack.c.b16 %v403, %v402
    %412 = vmatprep.subr.bf16.mxu0 0
    %413 = vmatpush1.bf16.msra.mxu0 %v404
    %414 = vmatprep.subr.bf16.mxu0 0
    %415 = vmatpush1.bf16.msra.mxu0 %v405
    %416 = vmatprep.subr.bf16.mxu0 0
    %417 = vmatpush1.bf16.msra.mxu0 %v406
    %418 = vmatprep.subr.bf16.mxu0 0
    %419 = vmatpush1.bf16.msra.mxu0 %v407
    %420 = vmatprep.subr.bf16.mxu0 0
    %421 = vmatpush1.bf16.msra.mxu0 0
    %422 = vmatprep.subr.bf16.mxu0 0
    %423 = vmatpush1.bf16.msra.mxu0 0
    %424 = vmatprep.subr.bf16.mxu0 0
    %425 = vmatpush1.bf16.msra.mxu0 0
    %426 = vmatprep.subr.bf16.mxu0 0
    %427 = vmatpush1.bf16.msra.mxu0 0
    %428 = vmatprep.subr.bf16.mxu0 0
    %429 = vmatpush1.bf16.msra.mxu0 0
    %430 = vmatprep.subr.bf16.mxu0 0
    %431 = vmatpush1.bf16.msra.mxu0 0
    %432 = vmatprep.subr.bf16.mxu0 0
    %433 = vmatpush1.bf16.msra.mxu0 0
    %434 = vmatprep.subr.bf16.mxu0 0
    %435 = vmatpush1.bf16.msra.mxu0 0
    %436 = vmatprep.subr.bf16.mxu0 0
    %437 = vmatpush1.bf16.msra.mxu0 0
    %438 = vmatprep.subr.bf16.mxu0 0
    %439 = vmatpush1.bf16.msra.mxu0 0
    %440 = vmatprep.subr.bf16.mxu0 0
    %441 = vmatpush1.bf16.msra.mxu0 0
    %442 = vmatprep.subr.bf16.mxu0 0
    %443 = vmatpush1.bf16.msra.mxu0 0
    %444 = vmatprep.mubr.bf16.mxu0 0
    %445 = vmatmul.mubr.bf16.gmra.mrb[0].mxu0 %v323
    %v446 = vpop.f32.mrb[0].mxu0
    %v447 = vadd.f32 0.0, %v446
    %v448 = vpop.f32.mrb[0].mxu0
    %v449 = vpop.f32.mrb[0].mxu0
    %v450 = vadd.f32 0.0, %v449
    %v451 = vpop.f32.mrb[0].mxu0
    %452 = vmatprep.mubr.bf16.mxu0 0
    %453 = vmatmul.mubr.bf16.gmra.mrb[0].mxu0 %v326
    %v454 = vpop.f32.mrb[0].mxu0
    %v455 = vadd.f32 0.0, %v454
    %v456 = vpop.f32.mrb[0].mxu0
    %v457 = vpop.f32.mrb[0].mxu0
    %v458 = vadd.f32 0.0, %v457
    %v459 = vpop.f32.mrb[0].mxu0
    %460 = vmatprep.mubr.bf16.mxu0 0
    %461 = vmatmul.mubr.bf16.gmra.mrb[0].mxu0 %v329
    %v462 = vpop.f32.mrb[0].mxu0
    %v463 = vadd.f32 0.0, %v462
    %v464 = vpop.f32.mrb[0].mxu0
    %v465 = vpop.f32.mrb[0].mxu0
    %v466 = vadd.f32 0.0, %v465
    %v467 = vpop.f32.mrb[0].mxu0
    %468 = vdwg.mxu0
    %v477 = vunpack.c.l.b16 %v282
    %v478 = vunpack.c.l.b16 %v283
    %v479 = vunpack.c.l.b16 %v284
    %v480 = vunpack.c.l.b16 %v285
    %v481 = vunpack.c.l.b16 %v286
    %v482 = vunpack.c.l.b16 %v287
    %v483 = vunpack.c.l.b16 %v288
    %v484 = vunpack.c.l.b16 %v289
    %v485 = vpack.c.b16 %v478, %v477
    %v486 = vpack.c.b16 %v480, %v479
    %v487 = vpack.c.b16 %v482, %v481
    %v488 = vpack.c.b16 %v484, %v483
    %493 = vmatprep.subr.bf16.mxu0 0
    %494 = vmatpush1.bf16.msra.mxu0 %v485
    %495 = vmatprep.subr.bf16.mxu0 0
    %496 = vmatpush1.bf16.msra.mxu0 %v486
    %497 = vmatprep.subr.bf16.mxu0 0
    %498 = vmatpush1.bf16.msra.mxu0 %v487
    %499 = vmatprep.subr.bf16.mxu0 0
    %500 = vmatpush1.bf16.msra.mxu0 %v488
    %501 = vmatprep.subr.bf16.mxu0 0
    %502 = vmatpush1.bf16.msra.mxu0 0
    %503 = vmatprep.subr.bf16.mxu0 0
    %504 = vmatpush1.bf16.msra.mxu0 0
    %505 = vmatprep.subr.bf16.mxu0 0
    %506 = vmatpush1.bf16.msra.mxu0 0
    %507 = vmatprep.subr.bf16.mxu0 0
    %508 = vmatpush1.bf16.msra.mxu0 0
    %509 = vmatprep.subr.bf16.mxu0 0
    %510 = vmatpush1.bf16.msra.mxu0 0
    %511 = vmatprep.subr.bf16.mxu0 0
    %512 = vmatpush1.bf16.msra.mxu0 0
    %513 = vmatprep.subr.bf16.mxu0 0
    %514 = vmatpush1.bf16.msra.mxu0 0
    %515 = vmatprep.subr.bf16.mxu0 0
    %516 = vmatpush1.bf16.msra.mxu0 0
    %517 = vmatprep.subr.bf16.mxu0 0
    %518 = vmatpush1.bf16.msra.mxu0 0
    %519 = vmatprep.subr.bf16.mxu0 0
    %520 = vmatpush1.bf16.msra.mxu0 0
    %521 = vmatprep.subr.bf16.mxu0 0
    %522 = vmatpush1.bf16.msra.mxu0 0
    %523 = vmatprep.subr.bf16.mxu0 0
    %524 = vmatpush1.bf16.msra.mxu0 0
    %525 = vmatprep.mubr.bf16.mxu0 0
    %526 = vmatmul.mubr.bf16.gmra.mrb[0].mxu0 %v323
    %v527 = vpop.f32.mrb[0].mxu0
    %v528 = vadd.f32 0.0, %v527
    %v529 = vpop.f32.mrb[0].mxu0
    %v530 = vpop.f32.mrb[0].mxu0
    %v531 = vadd.f32 0.0, %v530
    %v532 = vpop.f32.mrb[0].mxu0
    %533 = vmatprep.mubr.bf16.mxu0 0
    %534 = vmatmul.mubr.bf16.gmra.mrb[0].mxu0 %v326
    %v535 = vpop.f32.mrb[0].mxu0
    %v536 = vadd.f32 0.0, %v535
    %v537 = vpop.f32.mrb[0].mxu0
    %v538 = vpop.f32.mrb[0].mxu0
    %v539 = vadd.f32 0.0, %v538
    %v540 = vpop.f32.mrb[0].mxu0
    %541 = vmatprep.mubr.bf16.mxu0 0
    %542 = vmatmul.mubr.bf16.gmra.mrb[0].mxu0 %v329
    %v543 = vpop.f32.mrb[0].mxu0
    %v544 = vadd.f32 0.0, %v543
    %v545 = vpop.f32.mrb[0].mxu0
    %v546 = vpop.f32.mrb[0].mxu0
    %v547 = vadd.f32 0.0, %v546
    %v548 = vpop.f32.mrb[0].mxu0
    %549 = vdwg.mxu0
    %v558 = vunpack.c.l.b16 %v290
    %v559 = vunpack.c.l.b16 %v291
    %v560 = vunpack.c.l.b16 %v292
    %v561 = vunpack.c.l.b16 %v293
    %v562 = vunpack.c.l.b16 %v294
    %v563 = vunpack.c.l.b16 %v295
    %v564 = vunpack.c.l.b16 %v296
    %v565 = vunpack.c.l.b16 %v297
    %v566 = vpack.c.b16 %v559, %v558
    %v567 = vpack.c.b16 %v561, %v560
    %v568 = vpack.c.b16 %v563, %v562
    %v569 = vpack.c.b16 %v565, %v564
    %574 = vmatprep.subr.bf16.mxu0 0
    %575 = vmatpush1.bf16.msra.mxu0 %v566
    %576 = vmatprep.subr.bf16.mxu0 0
    %577 = vmatpush1.bf16.msra.mxu0 %v567
    %578 = vmatprep.subr.bf16.mxu0 0
    %579 = vmatpush1.bf16.msra.mxu0 %v568
    %580 = vmatprep.subr.bf16.mxu0 0
    %581 = vmatpush1.bf16.msra.mxu0 %v569
    %582 = vmatprep.subr.bf16.mxu0 0
    %583 = vmatpush1.bf16.msra.mxu0 0
    %584 = vmatprep.subr.bf16.mxu0 0
    %585 = vmatpush1.bf16.msra.mxu0 0
    %586 = vmatprep.subr.bf16.mxu0 0
    %587 = vmatpush1.bf16.msra.mxu0 0
    %588 = vmatprep.subr.bf16.mxu0 0
    %589 = vmatpush1.bf16.msra.mxu0 0
    %590 = vmatprep.subr.bf16.mxu0 0
    %591 = vmatpush1.bf16.msra.mxu0 0
    %592 = vmatprep.subr.bf16.mxu0 0
    %593 = vmatpush1.bf16.msra.mxu0 0
    %594 = vmatprep.subr.bf16.mxu0 0
    %595 = vmatpush1.bf16.msra.mxu0 0
    %596 = vmatprep.subr.bf16.mxu0 0
    %597 = vmatpush1.bf16.msra.mxu0 0
    %598 = vmatprep.subr.bf16.mxu0 0
    %599 = vmatpush1.bf16.msra.mxu0 0
    %600 = vmatprep.subr.bf16.mxu0 0
    %601 = vmatpush1.bf16.msra.mxu0 0
    %602 = vmatprep.subr.bf16.mxu0 0
    %603 = vmatpush1.bf16.msra.mxu0 0
    %604 = vmatprep.subr.bf16.mxu0 0
    %605 = vmatpush1.bf16.msra.mxu0 0
    %606 = vmatprep.mubr.bf16.mxu0 0
    %607 = vmatmul.mubr.bf16.gmra.mrb[0].mxu0 %v323
    %v608 = vpop.f32.mrb[0].mxu0
    %v609 = vadd.f32 0.0, %v608
    %v610 = vpop.f32.mrb[0].mxu0
    %v611 = vpop.f32.mrb[0].mxu0
    %v612 = vadd.f32 0.0, %v611
    %v613 = vpop.f32.mrb[0].mxu0
    %614 = vmatprep.mubr.bf16.mxu0 0
    %615 = vmatmul.mubr.bf16.gmra.mrb[0].mxu0 %v326
    %v616 = vpop.f32.mrb[0].mxu0
    %v617 = vadd.f32 0.0, %v616
    %v618 = vpop.f32.mrb[0].mxu0
    %v619 = vpop.f32.mrb[0].mxu0
    %v620 = vadd.f32 0.0, %v619
    %v621 = vpop.f32.mrb[0].mxu0
    %622 = vmatprep.mubr.bf16.mxu0 0
    %623 = vmatmul.mubr.bf16.gmra.mrb[0].mxu0 %v329
    %v624 = vpop.f32.mrb[0].mxu0
    %v625 = vadd.f32 0.0, %v624
    %v626 = vpop.f32.mrb[0].mxu0
    %v627 = vpop.f32.mrb[0].mxu0
    %v628 = vadd.f32 0.0, %v627
    %v629 = vpop.f32.mrb[0].mxu0
    %630 = vdwg.mxu0
    %v631 = vld [vmem:[%s4] sm:$0xf]
    %v632 = vld [vmem:[%s4 + $0x4] sm:$0xf]
    %v633 = vld [vmem:[%s4 + $0x8] sm:$0xf]
    %v634 = vld [vmem:[%s4 + $0xc] sm:$0xf]
    %v635 = vld [vmem:[%s4 + $0x10] sm:$0xf]
    %v636 = vld [vmem:[%s4 + $0x14] sm:$0xf]
    %v637 = vld [vmem:[%s4 + $0x18] sm:$0xf]
    %v638 = vld [vmem:[%s4 + $0x1c] sm:$0xf]
    %v639 = vld [vmem:[%s4 + $0x20] sm:$0xf]
    %v640 = vld [vmem:[%s4 + $0x24] sm:$0xf]
    %v641 = vld [vmem:[%s4 + $0x28] sm:$0xf]
    %v642 = vld [vmem:[%s4 + $0x2c] sm:$0xf]
    %v643 = vld [vmem:[%s4 + $0x30] sm:$0xf]
    %v644 = vld [vmem:[%s4 + $0x34] sm:$0xf]
    %v645 = vld [vmem:[%s4 + $0x38] sm:$0xf]
    %v646 = vld [vmem:[%s4 + $0x3c] sm:$0xf]
    %v647 = vld [vmem:[%s4 + $0x40] sm:$0xf]
    %v648 = vld [vmem:[%s4 + $0x44] sm:$0xf]
    %v649 = vld [vmem:[%s4 + $0x48] sm:$0xf]
    %v650 = vld [vmem:[%s4 + $0x4c] sm:$0xf]
    %v651 = vld [vmem:[%s4 + $0x50] sm:$0xf]
    %v652 = vld [vmem:[%s4 + $0x54] sm:$0xf]
    %v653 = vld [vmem:[%s4 + $0x58] sm:$0xf]
    %v654 = vld [vmem:[%s4 + $0x5c] sm:$0xf]
    %v655 = vld [vmem:[%s4 + $0x60] sm:$0xf]
    %v656 = vld [vmem:[%s4 + $0x64] sm:$0xf]
    %v657 = vld [vmem:[%s4 + $0x68] sm:$0xf]
    %v658 = vld [vmem:[%s4 + $0x6c] sm:$0xf]
    %v659 = vld [vmem:[%s4 + $0x70] sm:$0xf]
    %v660 = vld [vmem:[%s4 + $0x74] sm:$0xf]
    %v661 = vld [vmem:[%s4 + $0x78] sm:$0xf]
    %v662 = vld [vmem:[%s4 + $0x7c] sm:$0xf]
    %v671 = vunpack.c.l.b16 %v631
    %v672 = vunpack.c.l.b16 %v632
    %v673 = vunpack.c.l.b16 %v633
    %v674 = vunpack.c.l.b16 %v634
    %v675 = vunpack.c.l.b16 %v635
    %v676 = vunpack.c.l.b16 %v636
    %v677 = vunpack.c.l.b16 %v637
    %v678 = vunpack.c.l.b16 %v638
    %v679 = vpack.c.b16 %v672, %v671
    %v680 = vpack.c.b16 %v674, %v673
    %v681 = vpack.c.b16 %v676, %v675
    %v682 = vpack.c.b16 %v678, %v677
    %687 = vmatprep.subr.bf16.mxu0 0
    %688 = vmatpush1.bf16.msra.mxu0 %v679
    %689 = vmatprep.subr.bf16.mxu0 0
    %690 = vmatpush1.bf16.msra.mxu0 %v680
    %691 = vmatprep.subr.bf16.mxu0 0
    %692 = vmatpush1.bf16.msra.mxu0 %v681
    %693 = vmatprep.subr.bf16.mxu0 0
    %694 = vmatpush1.bf16.msra.mxu0 %v682
    %695 = vmatprep.subr.bf16.mxu0 0
    %696 = vmatpush1.bf16.msra.mxu0 0
    %697 = vmatprep.subr.bf16.mxu0 0
    %698 = vmatpush1.bf16.msra.mxu0 0
    %699 = vmatprep.subr.bf16.mxu0 0
    %700 = vmatpush1.bf16.msra.mxu0 0
    %701 = vmatprep.subr.bf16.mxu0 0
    %702 = vmatpush1.bf16.msra.mxu0 0
    %703 = vmatprep.subr.bf16.mxu0 0
    %704 = vmatpush1.bf16.msra.mxu0 0
    %705 = vmatprep.subr.bf16.mxu0 0
    %706 = vmatpush1.bf16.msra.mxu0 0
    %707 = vmatprep.subr.bf16.mxu0 0
    %708 = vmatpush1.bf16.msra.mxu0 0
    %709 = vmatprep.subr.bf16.mxu0 0
    %710 = vmatpush1.bf16.msra.mxu0 0
    %711 = vmatprep.subr.bf16.mxu0 0
    %712 = vmatpush1.bf16.msra.mxu0 0
    %713 = vmatprep.subr.bf16.mxu0 0
    %714 = vmatpush1.bf16.msra.mxu0 0
    %715 = vmatprep.subr.bf16.mxu0 0
    %716 = vmatpush1.bf16.msra.mxu0 0
    %717 = vmatprep.subr.bf16.mxu0 0
    %718 = vmatpush1.bf16.msra.mxu0 0
    %719 = vmatprep.mubr.bf16.mxu0 0
    %720 = vmatmul.mubr.bf16.gmra.mrb[0].mxu0 %v323
    %v721 = vpop.f32.mrb[0].mxu0
    %v722 = vadd.f32 0.0, %v721
    %v723 = vpop.f32.mrb[0].mxu0
    %v724 = vpop.f32.mrb[0].mxu0
    %v725 = vadd.f32 0.0, %v724
    %v726 = vpop.f32.mrb[0].mxu0
    %727 = vmatprep.mubr.bf16.mxu0 0
    %728 = vmatmul.mubr.bf16.gmra.mrb[0].mxu0 %v326
    %v729 = vpop.f32.mrb[0].mxu0
    %v730 = vadd.f32 0.0, %v729
    %v731 = vpop.f32.mrb[0].mxu0
    %v732 = vpop.f32.mrb[0].mxu0
    %v733 = vadd.f32 0.0, %v732
    %v734 = vpop.f32.mrb[0].mxu0
    %735 = vmatprep.mubr.bf16.mxu0 0
    %736 = vmatmul.mubr.bf16.gmra.mrb[0].mxu0 %v329
    %v737 = vpop.f32.mrb[0].mxu0
    %v738 = vadd.f32 0.0, %v737
    %v739 = vpop.f32.mrb[0].mxu0
    %v740 = vpop.f32.mrb[0].mxu0
    %v741 = vadd.f32 0.0, %v740
    %v742 = vpop.f32.mrb[0].mxu0
    %743 = vdwg.mxu0
    %v752 = vunpack.c.l.b16 %v639
    %v753 = vunpack.c.l.b16 %v640
    %v754 = vunpack.c.l.b16 %v641
    %v755 = vunpack.c.l.b16 %v642
    %v756 = vunpack.c.l.b16 %v643
    %v757 = vunpack.c.l.b16 %v644
    %v758 = vunpack.c.l.b16 %v645
    %v759 = vunpack.c.l.b16 %v646
    %v760 = vpack.c.b16 %v753, %v752
    %v761 = vpack.c.b16 %v755, %v754
    %v762 = vpack.c.b16 %v757, %v756
    %v763 = vpack.c.b16 %v759, %v758
    %768 = vmatprep.subr.bf16.mxu0 0
    %769 = vmatpush1.bf16.msra.mxu0 %v760
    %770 = vmatprep.subr.bf16.mxu0 0
    %771 = vmatpush1.bf16.msra.mxu0 %v761
    %772 = vmatprep.subr.bf16.mxu0 0
    %773 = vmatpush1.bf16.msra.mxu0 %v762
    %774 = vmatprep.subr.bf16.mxu0 0
    %775 = vmatpush1.bf16.msra.mxu0 %v763
    %776 = vmatprep.subr.bf16.mxu0 0
    %777 = vmatpush1.bf16.msra.mxu0 0
    %778 = vmatprep.subr.bf16.mxu0 0
    %779 = vmatpush1.bf16.msra.mxu0 0
    %780 = vmatprep.subr.bf16.mxu0 0
    %781 = vmatpush1.bf16.msra.mxu0 0
    %782 = vmatprep.subr.bf16.mxu0 0
    %783 = vmatpush1.bf16.msra.mxu0 0
    %784 = vmatprep.subr.bf16.mxu0 0
    %785 = vmatpush1.bf16.msra.mxu0 0
    %786 = vmatprep.subr.bf16.mxu0 0
    %787 = vmatpush1.bf16.msra.mxu0 0
    %788 = vmatprep.subr.bf16.mxu0 0
    %789 = vmatpush1.bf16.msra.mxu0 0
    %790 = vmatprep.subr.bf16.mxu0 0
    %791 = vmatpush1.bf16.msra.mxu0 0
    %792 = vmatprep.subr.bf16.mxu0 0
    %793 = vmatpush1.bf16.msra.mxu0 0
    %794 = vmatprep.subr.bf16.mxu0 0
    %795 = vmatpush1.bf16.msra.mxu0 0
    %796 = vmatprep.subr.bf16.mxu0 0
    %797 = vmatpush1.bf16.msra.mxu0 0
    %798 = vmatprep.subr.bf16.mxu0 0
    %799 = vmatpush1.bf16.msra.mxu0 0
    %800 = vmatprep.mubr.bf16.mxu0 0
    %801 = vmatmul.mubr.bf16.gmra.mrb[0].mxu0 %v323
    %v802 = vpop.f32.mrb[0].mxu0
    %v803 = vadd.f32 0.0, %v802
    %v804 = vpop.f32.mrb[0].mxu0
    %v805 = vpop.f32.mrb[0].mxu0
    %v806 = vadd.f32 0.0, %v805
    %v807 = vpop.f32.mrb[0].mxu0
    %808 = vmatprep.mubr.bf16.mxu0 0
    %809 = vmatmul.mubr.bf16.gmra.mrb[0].mxu0 %v326
    %v810 = vpop.f32.mrb[0].mxu0
    %v811 = vadd.f32 0.0, %v810
    %v812 = vpop.f32.mrb[0].mxu0
    %v813 = vpop.f32.mrb[0].mxu0
    %v814 = vadd.f32 0.0, %v813
    %v815 = vpop.f32.mrb[0].mxu0
    %816 = vmatprep.mubr.bf16.mxu0 0
    %817 = vmatmul.mubr.bf16.gmra.mrb[0].mxu0 %v329
    %v818 = vpop.f32.mrb[0].mxu0
    %v819 = vadd.f32 0.0, %v818
    %v820 = vpop.f32.mrb[0].mxu0
    %v821 = vpop.f32.mrb[0].mxu0
    %v822 = vadd.f32 0.0, %v821
    %v823 = vpop.f32.mrb[0].mxu0
    %824 = vdwg.mxu0
    %v833 = vunpack.c.l.b16 %v647
    %v834 = vunpack.c.l.b16 %v648
    %v835 = vunpack.c.l.b16 %v649
    %v836 = vunpack.c.l.b16 %v650
    %v837 = vunpack.c.l.b16 %v651
    %v838 = vunpack.c.l.b16 %v652
    %v839 = vunpack.c.l.b16 %v653
    %v840 = vunpack.c.l.b16 %v654
    %v841 = vpack.c.b16 %v834, %v833
    %v842 = vpack.c.b16 %v836, %v835
    %v843 = vpack.c.b16 %v838, %v837
    %v844 = vpack.c.b16 %v840, %v839
    %849 = vmatprep.subr.bf16.mxu0 0
    %850 = vmatpush1.bf16.msra.mxu0 %v841
    %851 = vmatprep.subr.bf16.mxu0 0
    %852 = vmatpush1.bf16.msra.mxu0 %v842
    %853 = vmatprep.subr.bf16.mxu0 0
    %854 = vmatpush1.bf16.msra.mxu0 %v843
    %855 = vmatprep.subr.bf16.mxu0 0
    %856 = vmatpush1.bf16.msra.mxu0 %v844
    %857 = vmatprep.subr.bf16.mxu0 0
    %858 = vmatpush1.bf16.msra.mxu0 0
    %859 = vmatprep.subr.bf16.mxu0 0
    %860 = vmatpush1.bf16.msra.mxu0 0
    %861 = vmatprep.subr.bf16.mxu0 0
    %862 = vmatpush1.bf16.msra.mxu0 0
    %863 = vmatprep.subr.bf16.mxu0 0
    %864 = vmatpush1.bf16.msra.mxu0 0
    %865 = vmatprep.subr.bf16.mxu0 0
    %866 = vmatpush1.bf16.msra.mxu0 0
    %867 = vmatprep.subr.bf16.mxu0 0
    %868 = vmatpush1.bf16.msra.mxu0 0
    %869 = vmatprep.subr.bf16.mxu0 0
    %870 = vmatpush1.bf16.msra.mxu0 0
    %871 = vmatprep.subr.bf16.mxu0 0
    %872 = vmatpush1.bf16.msra.mxu0 0
    %873 = vmatprep.subr.bf16.mxu0 0
    %874 = vmatpush1.bf16.msra.mxu0 0
    %875 = vmatprep.subr.bf16.mxu0 0
    %876 = vmatpush1.bf16.msra.mxu0 0
    %877 = vmatprep.subr.bf16.mxu0 0
    %878 = vmatpush1.bf16.msra.mxu0 0
    %879 = vmatprep.subr.bf16.mxu0 0
    %880 = vmatpush1.bf16.msra.mxu0 0
    %881 = vmatprep.mubr.bf16.mxu0 0
    %882 = vmatmul.mubr.bf16.gmra.mrb[0].mxu0 %v323
    %v883 = vpop.f32.mrb[0].mxu0
    %v884 = vadd.f32 0.0, %v883
    %v885 = vpop.f32.mrb[0].mxu0
    %v886 = vpop.f32.mrb[0].mxu0
    %v887 = vadd.f32 0.0, %v886
    %v888 = vpop.f32.mrb[0].mxu0
    %889 = vmatprep.mubr.bf16.mxu0 0
    %890 = vmatmul.mubr.bf16.gmra.mrb[0].mxu0 %v326
    %v891 = vpop.f32.mrb[0].mxu0
    %v892 = vadd.f32 0.0, %v891
    %v893 = vpop.f32.mrb[0].mxu0
    %v894 = vpop.f32.mrb[0].mxu0
    %v895 = vadd.f32 0.0, %v894
    %v896 = vpop.f32.mrb[0].mxu0
    %897 = vmatprep.mubr.bf16.mxu0 0
    %898 = vmatmul.mubr.bf16.gmra.mrb[0].mxu0 %v329
    %v899 = vpop.f32.mrb[0].mxu0
    %v900 = vadd.f32 0.0, %v899
    %v901 = vpop.f32.mrb[0].mxu0
    %v902 = vpop.f32.mrb[0].mxu0
    %v903 = vadd.f32 0.0, %v902
    %v904 = vpop.f32.mrb[0].mxu0
    %905 = vdwg.mxu0
    %v914 = vunpack.c.l.b16 %v655
    %v915 = vunpack.c.l.b16 %v656
    %v916 = vunpack.c.l.b16 %v657
    %v917 = vunpack.c.l.b16 %v658
    %v918 = vunpack.c.l.b16 %v659
    %v919 = vunpack.c.l.b16 %v660
    %v920 = vunpack.c.l.b16 %v661
    %v921 = vunpack.c.l.b16 %v662
    %v922 = vpack.c.b16 %v915, %v914
    %v923 = vpack.c.b16 %v917, %v916
    %v924 = vpack.c.b16 %v919, %v918
    %v925 = vpack.c.b16 %v921, %v920
    %930 = vmatprep.subr.bf16.mxu0 0
    %931 = vmatpush1.bf16.msra.mxu0 %v922
    %932 = vmatprep.subr.bf16.mxu0 0
    %933 = vmatpush1.bf16.msra.mxu0 %v923
    %934 = vmatprep.subr.bf16.mxu0 0
    %935 = vmatpush1.bf16.msra.mxu0 %v924
    %936 = vmatprep.subr.bf16.mxu0 0
    %937 = vmatpush1.bf16.msra.mxu0 %v925
    %938 = vmatprep.subr.bf16.mxu0 0
    %939 = vmatpush1.bf16.msra.mxu0 0
    %940 = vmatprep.subr.bf16.mxu0 0
    %941 = vmatpush1.bf16.msra.mxu0 0
    %942 = vmatprep.subr.bf16.mxu0 0
    %943 = vmatpush1.bf16.msra.mxu0 0
    %944 = vmatprep.subr.bf16.mxu0 0
    %945 = vmatpush1.bf16.msra.mxu0 0
    %946 = vmatprep.subr.bf16.mxu0 0
    %947 = vmatpush1.bf16.msra.mxu0 0
    %948 = vmatprep.subr.bf16.mxu0 0
    %949 = vmatpush1.bf16.msra.mxu0 0
    %950 = vmatprep.subr.bf16.mxu0 0
    %951 = vmatpush1.bf16.msra.mxu0 0
    %952 = vmatprep.subr.bf16.mxu0 0
    %953 = vmatpush1.bf16.msra.mxu0 0
    %954 = vmatprep.subr.bf16.mxu0 0
    %955 = vmatpush1.bf16.msra.mxu0 0
    %956 = vmatprep.subr.bf16.mxu0 0
    %957 = vmatpush1.bf16.msra.mxu0 0
    %958 = vmatprep.subr.bf16.mxu0 0
    %959 = vmatpush1.bf16.msra.mxu0 0
    %960 = vmatprep.subr.bf16.mxu0 0
    %961 = vmatpush1.bf16.msra.mxu0 0
    %962 = vmatprep.mubr.bf16.mxu0 0
    %963 = vmatmul.mubr.bf16.gmra.mrb[0].mxu0 %v323
    %v964 = vpop.f32.mrb[0].mxu0
    %v965 = vadd.f32 0.0, %v964
    %v966 = vpop.f32.mrb[0].mxu0
    %v967 = vpop.f32.mrb[0].mxu0
    %v968 = vadd.f32 0.0, %v967
    %v969 = vpop.f32.mrb[0].mxu0
    %970 = vmatprep.mubr.bf16.mxu0 0
    %971 = vmatmul.mubr.bf16.gmra.mrb[0].mxu0 %v326
    %v972 = vpop.f32.mrb[0].mxu0
    %v973 = vadd.f32 0.0, %v972
    %v974 = vpop.f32.mrb[0].mxu0
    %v975 = vpop.f32.mrb[0].mxu0
    %v976 = vadd.f32 0.0, %v975
    %v977 = vpop.f32.mrb[0].mxu0
    %978 = vmatprep.mubr.bf16.mxu0 0
    %979 = vmatmul.mubr.bf16.gmra.mrb[0].mxu0 %v329
    %v980 = vpop.f32.mrb[0].mxu0
    %v981 = vadd.f32 0.0, %v980
    %v982 = vpop.f32.mrb[0].mxu0
    %v983 = vpop.f32.mrb[0].mxu0
    %v984 = vadd.f32 0.0, %v983
    %v985 = vpop.f32.mrb[0].mxu0
    %986 = vdwg.mxu0
    %v987 = vld [vmem:[%s5] sm:$0xf]
    %v988 = vld [vmem:[%s5 + $0x4] sm:$0xf]
    %v989 = vld [vmem:[%s5 + $0x8] sm:$0xf]
    %v990 = vld [vmem:[%s5 + $0xc] sm:$0xf]
    %v991 = vld [vmem:[%s5 + $0x10] sm:$0xf]
    %v992 = vld [vmem:[%s5 + $0x14] sm:$0xf]
    %v993 = vld [vmem:[%s5 + $0x18] sm:$0xf]
    %v994 = vld [vmem:[%s5 + $0x1c] sm:$0xf]
    %v995 = vld [vmem:[%s5 + $0x20] sm:$0xf]
    %v996 = vld [vmem:[%s5 + $0x24] sm:$0xf]
    %v997 = vld [vmem:[%s5 + $0x28] sm:$0xf]
    %v998 = vld [vmem:[%s5 + $0x2c] sm:$0xf]
    %v999 = vld [vmem:[%s5 + $0x30] sm:$0xf]
    %v1000 = vld [vmem:[%s5 + $0x34] sm:$0xf]
    %v1001 = vld [vmem:[%s5 + $0x38] sm:$0xf]
    %v1002 = vld [vmem:[%s5 + $0x3c] sm:$0xf]
    %v1003 = vld [vmem:[%s5 + $0x40] sm:$0xf]
    %v1004 = vld [vmem:[%s5 + $0x44] sm:$0xf]
    %v1005 = vld [vmem:[%s5 + $0x48] sm:$0xf]
    %v1006 = vld [vmem:[%s5 + $0x4c] sm:$0xf]
    %v1007 = vld [vmem:[%s5 + $0x50] sm:$0xf]
    %v1008 = vld [vmem:[%s5 + $0x54] sm:$0xf]
    %v1009 = vld [vmem:[%s5 + $0x58] sm:$0xf]
    %v1010 = vld [vmem:[%s5 + $0x5c] sm:$0xf]
    %v1011 = vld [vmem:[%s5 + $0x60] sm:$0xf]
    %v1012 = vld [vmem:[%s5 + $0x64] sm:$0xf]
    %v1013 = vld [vmem:[%s5 + $0x68] sm:$0xf]
    %v1014 = vld [vmem:[%s5 + $0x6c] sm:$0xf]
    %v1015 = vld [vmem:[%s5 + $0x70] sm:$0xf]
    %v1016 = vld [vmem:[%s5 + $0x74] sm:$0xf]
    %v1017 = vld [vmem:[%s5 + $0x78] sm:$0xf]
    %v1018 = vld [vmem:[%s5 + $0x7c] sm:$0xf]
    %v1027 = vunpack.c.l.b16 %v987
    %v1028 = vunpack.c.l.b16 %v988
    %v1029 = vunpack.c.l.b16 %v989
    %v1030 = vunpack.c.l.b16 %v990
    %v1031 = vunpack.c.l.b16 %v991
    %v1032 = vunpack.c.l.b16 %v992
    %v1033 = vunpack.c.l.b16 %v993
    %v1034 = vunpack.c.l.b16 %v994
    %v1035 = vpack.c.b16 %v1028, %v1027
    %v1036 = vpack.c.b16 %v1030, %v1029
    %v1037 = vpack.c.b16 %v1032, %v1031
    %v1038 = vpack.c.b16 %v1034, %v1033
    %1043 = vmatprep.subr.bf16.mxu0 0
    %1044 = vmatpush1.bf16.msra.mxu0 %v1035
    %1045 = vmatprep.subr.bf16.mxu0 0
    %1046 = vmatpush1.bf16.msra.mxu0 %v1036
    %1047 = vmatprep.subr.bf16.mxu0 0
    %1048 = vmatpush1.bf16.msra.mxu0 %v1037
    %1049 = vmatprep.subr.bf16.mxu0 0
    %1050 = vmatpush1.bf16.msra.mxu0 %v1038
    %1051 = vmatprep.subr.bf16.mxu0 0
    %1052 = vmatpush1.bf16.msra.mxu0 0
    %1053 = vmatprep.subr.bf16.mxu0 0
    %1054 = vmatpush1.bf16.msra.mxu0 0
    %1055 = vmatprep.subr.bf16.mxu0 0
    %1056 = vmatpush1.bf16.msra.mxu0 0
    %1057 = vmatprep.subr.bf16.mxu0 0
    %1058 = vmatpush1.bf16.msra.mxu0 0
    %1059 = vmatprep.subr.bf16.mxu0 0
    %1060 = vmatpush1.bf16.msra.mxu0 0
    %1061 = vmatprep.subr.bf16.mxu0 0
    %1062 = vmatpush1.bf16.msra.mxu0 0
    %1063 = vmatprep.subr.bf16.mxu0 0
    %1064 = vmatpush1.bf16.msra.mxu0 0
    %1065 = vmatprep.subr.bf16.mxu0 0
    %1066 = vmatpush1.bf16.msra.mxu0 0
    %1067 = vmatprep.subr.bf16.mxu0 0
    %1068 = vmatpush1.bf16.msra.mxu0 0
    %1069 = vmatprep.subr.bf16.mxu0 0
    %1070 = vmatpush1.bf16.msra.mxu0 0
    %1071 = vmatprep.subr.bf16.mxu0 0
    %1072 = vmatpush1.bf16.msra.mxu0 0
    %1073 = vmatprep.subr.bf16.mxu0 0
    %1074 = vmatpush1.bf16.msra.mxu0 0
    %1075 = vmatprep.mubr.bf16.mxu0 0
    %1076 = vmatmul.mubr.bf16.gmra.mrb[0].mxu0 %v323
    %v1077 = vpop.f32.mrb[0].mxu0
    %v1078 = vadd.f32 0.0, %v1077
    %v1079 = vpop.f32.mrb[0].mxu0
    %v1080 = vpop.f32.mrb[0].mxu0
    %v1081 = vadd.f32 0.0, %v1080
    %v1082 = vpop.f32.mrb[0].mxu0
    %1083 = vmatprep.mubr.bf16.mxu0 0
    %1084 = vmatmul.mubr.bf16.gmra.mrb[0].mxu0 %v326
    %v1085 = vpop.f32.mrb[0].mxu0
    %v1086 = vadd.f32 0.0, %v1085
    %v1087 = vpop.f32.mrb[0].mxu0
    %v1088 = vpop.f32.mrb[0].mxu0
    %v1089 = vadd.f32 0.0, %v1088
    %v1090 = vpop.f32.mrb[0].mxu0
    %1091 = vmatprep.mubr.bf16.mxu0 0
    %1092 = vmatmul.mubr.bf16.gmra.mrb[0].mxu0 %v329
    %v1093 = vpop.f32.mrb[0].mxu0
    %v1094 = vadd.f32 0.0, %v1093
    %v1095 = vpop.f32.mrb[0].mxu0
    %v1096 = vpop.f32.mrb[0].mxu0
    %v1097 = vadd.f32 0.0, %v1096
    %v1098 = vpop.f32.mrb[0].mxu0
    %1099 = vdwg.mxu0
    %v1108 = vunpack.c.l.b16 %v995
    %v1109 = vunpack.c.l.b16 %v996
    %v1110 = vunpack.c.l.b16 %v997
    %v1111 = vunpack.c.l.b16 %v998
    %v1112 = vunpack.c.l.b16 %v999
    %v1113 = vunpack.c.l.b16 %v1000
    %v1114 = vunpack.c.l.b16 %v1001
    %v1115 = vunpack.c.l.b16 %v1002
    %v1116 = vpack.c.b16 %v1109, %v1108
    %v1117 = vpack.c.b16 %v1111, %v1110
    %v1118 = vpack.c.b16 %v1113, %v1112
    %v1119 = vpack.c.b16 %v1115, %v1114
    %1124 = vmatprep.subr.bf16.mxu0 0
    %1125 = vmatpush1.bf16.msra.mxu0 %v1116
    %1126 = vmatprep.subr.bf16.mxu0 0
    %1127 = vmatpush1.bf16.msra.mxu0 %v1117
    %1128 = vmatprep.subr.bf16.mxu0 0
    %1129 = vmatpush1.bf16.msra.mxu0 %v1118
    %1130 = vmatprep.subr.bf16.mxu0 0
    %1131 = vmatpush1.bf16.msra.mxu0 %v1119
    %1132 = vmatprep.subr.bf16.mxu0 0
    %1133 = vmatpush1.bf16.msra.mxu0 0
    %1134 = vmatprep.subr.bf16.mxu0 0
    %1135 = vmatpush1.bf16.msra.mxu0 0
    %1136 = vmatprep.subr.bf16.mxu0 0
    %1137 = vmatpush1.bf16.msra.mxu0 0
    %1138 = vmatprep.subr.bf16.mxu0 0
    %1139 = vmatpush1.bf16.msra.mxu0 0
    %1140 = vmatprep.subr.bf16.mxu0 0
    %1141 = vmatpush1.bf16.msra.mxu0 0
    %1142 = vmatprep.subr.bf16.mxu0 0
    %1143 = vmatpush1.bf16.msra.mxu0 0
    %1144 = vmatprep.subr.bf16.mxu0 0
    %1145 = vmatpush1.bf16.msra.mxu0 0
    %1146 = vmatprep.subr.bf16.mxu0 0
    %1147 = vmatpush1.bf16.msra.mxu0 0
    %1148 = vmatprep.subr.bf16.mxu0 0
    %1149 = vmatpush1.bf16.msra.mxu0 0
    %1150 = vmatprep.subr.bf16.mxu0 0
    %1151 = vmatpush1.bf16.msra.mxu0 0
    %1152 = vmatprep.subr.bf16.mxu0 0
    %1153 = vmatpush1.bf16.msra.mxu0 0
    %1154 = vmatprep.subr.bf16.mxu0 0
    %1155 = vmatpush1.bf16.msra.mxu0 0
    %1156 = vmatprep.mubr.bf16.mxu0 0
    %1157 = vmatmul.mubr.bf16.gmra.mrb[0].mxu0 %v323
    %v1158 = vpop.f32.mrb[0].mxu0
    %v1159 = vadd.f32 0.0, %v1158
    %v1160 = vpop.f32.mrb[0].mxu0
    %v1161 = vpop.f32.mrb[0].mxu0
    %v1162 = vadd.f32 0.0, %v1161
    %v1163 = vpop.f32.mrb[0].mxu0
    %1164 = vmatprep.mubr.bf16.mxu0 0
    %1165 = vmatmul.mubr.bf16.gmra.mrb[0].mxu0 %v326
    %v1166 = vpop.f32.mrb[0].mxu0
    %v1167 = vadd.f32 0.0, %v1166
    %v1168 = vpop.f32.mrb[0].mxu0
    %v1169 = vpop.f32.mrb[0].mxu0
    %v1170 = vadd.f32 0.0, %v1169
    %v1171 = vpop.f32.mrb[0].mxu0
    %1172 = vmatprep.mubr.bf16.mxu0 0
    %1173 = vmatmul.mubr.bf16.gmra.mrb[0].mxu0 %v329
    %v1174 = vpop.f32.mrb[0].mxu0
    %v1175 = vadd.f32 0.0, %v1174
    %v1176 = vpop.f32.mrb[0].mxu0
    %v1177 = vpop.f32.mrb[0].mxu0
    %v1178 = vadd.f32 0.0, %v1177
    %v1179 = vpop.f32.mrb[0].mxu0
    %1180 = vdwg.mxu0
    %v1189 = vunpack.c.l.b16 %v1003
    %v1190 = vunpack.c.l.b16 %v1004
    %v1191 = vunpack.c.l.b16 %v1005
    %v1192 = vunpack.c.l.b16 %v1006
    %v1193 = vunpack.c.l.b16 %v1007
    %v1194 = vunpack.c.l.b16 %v1008
    %v1195 = vunpack.c.l.b16 %v1009
    %v1196 = vunpack.c.l.b16 %v1010
    %v1197 = vpack.c.b16 %v1190, %v1189
    %v1198 = vpack.c.b16 %v1192, %v1191
    %v1199 = vpack.c.b16 %v1194, %v1193
    %v1200 = vpack.c.b16 %v1196, %v1195
    %1205 = vmatprep.subr.bf16.mxu0 0
    %1206 = vmatpush1.bf16.msra.mxu0 %v1197
    %1207 = vmatprep.subr.bf16.mxu0 0
    %1208 = vmatpush1.bf16.msra.mxu0 %v1198
    %1209 = vmatprep.subr.bf16.mxu0 0
    %1210 = vmatpush1.bf16.msra.mxu0 %v1199
    %1211 = vmatprep.subr.bf16.mxu0 0
    %1212 = vmatpush1.bf16.msra.mxu0 %v1200
    %1213 = vmatprep.subr.bf16.mxu0 0
    %1214 = vmatpush1.bf16.msra.mxu0 0
    %1215 = vmatprep.subr.bf16.mxu0 0
    %1216 = vmatpush1.bf16.msra.mxu0 0
    %1217 = vmatprep.subr.bf16.mxu0 0
    %1218 = vmatpush1.bf16.msra.mxu0 0
    %1219 = vmatprep.subr.bf16.mxu0 0
    %1220 = vmatpush1.bf16.msra.mxu0 0
    %1221 = vmatprep.subr.bf16.mxu0 0
    %1222 = vmatpush1.bf16.msra.mxu0 0
    %1223 = vmatprep.subr.bf16.mxu0 0
    %1224 = vmatpush1.bf16.msra.mxu0 0
    %1225 = vmatprep.subr.bf16.mxu0 0
    %1226 = vmatpush1.bf16.msra.mxu0 0
    %1227 = vmatprep.subr.bf16.mxu0 0
    %1228 = vmatpush1.bf16.msra.mxu0 0
    %1229 = vmatprep.subr.bf16.mxu0 0
    %1230 = vmatpush1.bf16.msra.mxu0 0
    %1231 = vmatprep.subr.bf16.mxu0 0
    %1232 = vmatpush1.bf16.msra.mxu0 0
    %1233 = vmatprep.subr.bf16.mxu0 0
    %1234 = vmatpush1.bf16.msra.mxu0 0
    %1235 = vmatprep.subr.bf16.mxu0 0
    %1236 = vmatpush1.bf16.msra.mxu0 0
    %1237 = vmatprep.mubr.bf16.mxu0 0
    %1238 = vmatmul.mubr.bf16.gmra.mrb[0].mxu0 %v323
    %v1239 = vpop.f32.mrb[0].mxu0
    %v1240 = vadd.f32 0.0, %v1239
    %v1241 = vpop.f32.mrb[0].mxu0
    %v1242 = vpop.f32.mrb[0].mxu0
    %v1243 = vadd.f32 0.0, %v1242
    %v1244 = vpop.f32.mrb[0].mxu0
    %1245 = vmatprep.mubr.bf16.mxu0 0
    %1246 = vmatmul.mubr.bf16.gmra.mrb[0].mxu0 %v326
    %v1247 = vpop.f32.mrb[0].mxu0
    %v1248 = vadd.f32 0.0, %v1247
    %v1249 = vpop.f32.mrb[0].mxu0
    %v1250 = vpop.f32.mrb[0].mxu0
    %v1251 = vadd.f32 0.0, %v1250
    %v1252 = vpop.f32.mrb[0].mxu0
    %1253 = vmatprep.mubr.bf16.mxu0 0
    %1254 = vmatmul.mubr.bf16.gmra.mrb[0].mxu0 %v329
    %v1255 = vpop.f32.mrb[0].mxu0
    %v1256 = vadd.f32 0.0, %v1255
    %v1257 = vpop.f32.mrb[0].mxu0
    %v1258 = vpop.f32.mrb[0].mxu0
    %v1259 = vadd.f32 0.0, %v1258
    %v1260 = vpop.f32.mrb[0].mxu0
    %1261 = vdwg.mxu0
    %v1270 = vunpack.c.l.b16 %v1011
    %v1271 = vunpack.c.l.b16 %v1012
    %v1272 = vunpack.c.l.b16 %v1013
    %v1273 = vunpack.c.l.b16 %v1014
    %v1274 = vunpack.c.l.b16 %v1015
    %v1275 = vunpack.c.l.b16 %v1016
    %v1276 = vunpack.c.l.b16 %v1017
    %v1277 = vunpack.c.l.b16 %v1018
    %v1278 = vpack.c.b16 %v1271, %v1270
    %v1279 = vpack.c.b16 %v1273, %v1272
    %v1280 = vpack.c.b16 %v1275, %v1274
    %v1281 = vpack.c.b16 %v1277, %v1276
    %1286 = vmatprep.subr.bf16.mxu0 0
    %1287 = vmatpush1.bf16.msra.mxu0 %v1278
    %1288 = vmatprep.subr.bf16.mxu0 0
    %1289 = vmatpush1.bf16.msra.mxu0 %v1279
    %1290 = vmatprep.subr.bf16.mxu0 0
    %1291 = vmatpush1.bf16.msra.mxu0 %v1280
    %1292 = vmatprep.subr.bf16.mxu0 0
    %1293 = vmatpush1.bf16.msra.mxu0 %v1281
    %1294 = vmatprep.subr.bf16.mxu0 0
    %1295 = vmatpush1.bf16.msra.mxu0 0
    %1296 = vmatprep.subr.bf16.mxu0 0
    %1297 = vmatpush1.bf16.msra.mxu0 0
    %1298 = vmatprep.subr.bf16.mxu0 0
    %1299 = vmatpush1.bf16.msra.mxu0 0
    %1300 = vmatprep.subr.bf16.mxu0 0
    %1301 = vmatpush1.bf16.msra.mxu0 0
    %1302 = vmatprep.subr.bf16.mxu0 0
    %1303 = vmatpush1.bf16.msra.mxu0 0
    %1304 = vmatprep.subr.bf16.mxu0 0
    %1305 = vmatpush1.bf16.msra.mxu0 0
    %1306 = vmatprep.subr.bf16.mxu0 0
    %1307 = vmatpush1.bf16.msra.mxu0 0
    %1308 = vmatprep.subr.bf16.mxu0 0
    %1309 = vmatpush1.bf16.msra.mxu0 0
    %1310 = vmatprep.subr.bf16.mxu0 0
    %1311 = vmatpush1.bf16.msra.mxu0 0
    %1312 = vmatprep.subr.bf16.mxu0 0
    %1313 = vmatpush1.bf16.msra.mxu0 0
    %1314 = vmatprep.subr.bf16.mxu0 0
    %1315 = vmatpush1.bf16.msra.mxu0 0
    %1316 = vmatprep.subr.bf16.mxu0 0
    %1317 = vmatpush1.bf16.msra.mxu0 0
    %1318 = vmatprep.mubr.bf16.mxu0 0
    %1319 = vmatmul.mubr.bf16.gmra.mrb[0].mxu0 %v323
    %v1320 = vpop.f32.mrb[0].mxu0
    %v1321 = vadd.f32 0.0, %v1320
    %v1322 = vpop.f32.mrb[0].mxu0
    %v1323 = vpop.f32.mrb[0].mxu0
    %v1324 = vadd.f32 0.0, %v1323
    %v1325 = vpop.f32.mrb[0].mxu0
    %1326 = vmatprep.mubr.bf16.mxu0 0
    %1327 = vmatmul.mubr.bf16.gmra.mrb[0].mxu0 %v326
    %v1328 = vpop.f32.mrb[0].mxu0
    %v1329 = vadd.f32 0.0, %v1328
    %v1330 = vpop.f32.mrb[0].mxu0
    %v1331 = vpop.f32.mrb[0].mxu0
    %v1332 = vadd.f32 0.0, %v1331
    %v1333 = vpop.f32.mrb[0].mxu0
    %1334 = vmatprep.mubr.bf16.mxu0 0
    %1335 = vmatmul.mubr.bf16.gmra.mrb[0].mxu0 %v329
    %v1336 = vpop.f32.mrb[0].mxu0
    %v1337 = vadd.f32 0.0, %v1336
    %v1338 = vpop.f32.mrb[0].mxu0
    %v1339 = vpop.f32.mrb[0].mxu0
    %v1340 = vadd.f32 0.0, %v1339
    %v1341 = vpop.f32.mrb[0].mxu0
    %1342 = vdwg.mxu0
    %v1343 = vpack.c.bf16 %v369, %v366
    %v1344 = vpack.c.bf16 %v374, %v374
    %v1345 = vpack.c.bf16 %v382, %v377
    %v1346 = vpack.c.bf16 %v385, %v385
    %v1347 = vpack.c.bf16 %v450, %v447
    %v1348 = vpack.c.bf16 %v455, %v455
    %v1349 = vpack.c.bf16 %v463, %v458
    %v1350 = vpack.c.bf16 %v466, %v466
    %v1351 = vpack.c.bf16 %v531, %v528
    %v1352 = vpack.c.bf16 %v536, %v536
    %v1353 = vpack.c.bf16 %v544, %v539
    %v1354 = vpack.c.bf16 %v547, %v547
    %v1355 = vpack.c.bf16 %v612, %v609
    %v1356 = vpack.c.bf16 %v617, %v617
    %v1357 = vpack.c.bf16 %v625, %v620
    %v1358 = vpack.c.bf16 %v628, %v628
    %v1359 = vpack.c.bf16 %v725, %v722
    %v1360 = vpack.c.bf16 %v730, %v730
    %v1361 = vpack.c.bf16 %v738, %v733
    %v1362 = vpack.c.bf16 %v741, %v741
    %v1363 = vpack.c.bf16 %v806, %v803
    %v1364 = vpack.c.bf16 %v811, %v811
    %v1365 = vpack.c.bf16 %v819, %v814
    %v1366 = vpack.c.bf16 %v822, %v822
    %v1367 = vpack.c.bf16 %v887, %v884
    %v1368 = vpack.c.bf16 %v892, %v892
    %v1369 = vpack.c.bf16 %v900, %v895
    %v1370 = vpack.c.bf16 %v903, %v903
    %v1371 = vpack.c.bf16 %v968, %v965
    %v1372 = vpack.c.bf16 %v973, %v973
    %v1373 = vpack.c.bf16 %v981, %v976
    %v1374 = vpack.c.bf16 %v984, %v984
    %v1375 = vpack.c.bf16 %v1081, %v1078
    %v1376 = vpack.c.bf16 %v1086, %v1086
    %v1377 = vpack.c.bf16 %v1094, %v1089
    %v1378 = vpack.c.bf16 %v1097, %v1097
    %v1379 = vpack.c.bf16 %v1162, %v1159
    %v1380 = vpack.c.bf16 %v1167, %v1167
    %v1381 = vpack.c.bf16 %v1175, %v1170
    %v1382 = vpack.c.bf16 %v1178, %v1178
    %v1383 = vpack.c.bf16 %v1243, %v1240
    %v1384 = vpack.c.bf16 %v1248, %v1248
    %v1385 = vpack.c.bf16 %v1256, %v1251
    %v1386 = vpack.c.bf16 %v1259, %v1259
    %v1387 = vpack.c.bf16 %v1324, %v1321
    %v1388 = vpack.c.bf16 %v1329, %v1329
    %v1389 = vpack.c.bf16 %v1337, %v1332
    %v1390 = vpack.c.bf16 %v1340, %v1340
    %vm1391 = vcmask 130048
    %v1393 = vsel %vm1391, %v1343, 0
    %v1396 = vsel %vm1391, %v1344, 0
    %v1399 = vsel %vm1391, %v1359, 0
    %v1402 = vsel %vm1391, %v1360, 0
    %1404 = vmatprep.subr.bf16.mxu0 0
    %1405 = vmatpush1.bf16.xpose.msra.mxu0 %v1399
    %1406 = vmatprep.subr.bf16.mxu0 0
    %1407 = vmatpush1.bf16.xpose.msra.mxu0 %v1402
    %1408 = vmatprep.subr.bf16.mxu0 0
    %1409 = vmatpush1.bf16.xpose.msra.mxu0 0
    %1410 = vmatprep.subr.bf16.mxu0 0
    %1411 = vmatpush1.bf16.xpose.msra.mxu0 0
    %1412 = vmatprep.subr.bf16.mxu0 0
    %1413 = vmatpush1.bf16.xpose.msra.mxu0 0
    %1414 = vmatprep.subr.bf16.mxu0 0
    %1415 = vmatpush1.bf16.xpose.msra.mxu0 0
    %1416 = vmatprep.subr.bf16.mxu0 0
    %1417 = vmatpush1.bf16.xpose.msra.mxu0 0
    %1418 = vmatprep.subr.bf16.mxu0 0
    %1419 = vmatpush1.bf16.xpose.msra.mxu0 0
    %1420 = vmatprep.subr.bf16.mxu0 0
    %1421 = vmatpush1.bf16.xpose.msra.mxu0 0
    %1422 = vmatprep.subr.bf16.mxu0 0
    %1423 = vmatpush1.bf16.xpose.msra.mxu0 0
    %1424 = vmatprep.subr.bf16.mxu0 0
    %1425 = vmatpush1.bf16.xpose.msra.mxu0 0
    %1426 = vmatprep.subr.bf16.mxu0 0
    %1427 = vmatpush1.bf16.xpose.msra.mxu0 0
    %1428 = vmatprep.subr.bf16.mxu0 0
    %1429 = vmatpush1.bf16.xpose.msra.mxu0 0
    %1430 = vmatprep.subr.bf16.mxu0 0
    %1431 = vmatpush1.bf16.xpose.msra.mxu0 0
    %1432 = vmatprep.subr.bf16.mxu0 0
    %1433 = vmatpush1.bf16.xpose.msra.mxu0 0
    %1434 = vmatprep.subr.bf16.mxu0 0
    %1435 = vmatpush1.bf16.xpose.msra.mxu0 0
    %1436 = vmatprep.mubr.bf16.mxu0 0
    %1437 = vmatmul.mubr.bf16.gmra.mrb[0].mxu0 %v1393
    %v1438 = vpop.f32.mrb[0].mxu0
    %v1439 = vadd.f32 %v161, %v1438
    %v1440 = vpop.f32.mrb[0].mxu0
    %v1441 = vpop.f32.mrb[0].mxu0
    %v1442 = vadd.f32 %v161, %v1441
    %v1443 = vpop.f32.mrb[0].mxu0
    %1444 = vmatprep.mubr.bf16.mxu0 0
    %1445 = vmatmul.mubr.bf16.gmra.mrb[0].mxu0 %v1396
    %v1446 = vpop.f32.mrb[0].mxu0
    %v1447 = vadd.f32 %v161, %v1446
    %v1448 = vpop.f32.mrb[0].mxu0
    %v1449 = vpop.f32.mrb[0].mxu0
    %v1450 = vpop.f32.mrb[0].mxu0
    %1451 = vdwg.mxu0
    %v1453 = vsel %vm1391, %v1345, 0
    %v1456 = vsel %vm1391, %v1346, 0
    %v1459 = vsel %vm1391, %v1361, 0
    %v1462 = vsel %vm1391, %v1362, 0
    %1464 = vmatprep.subr.bf16.mxu0 0
    %1465 = vmatpush1.bf16.xpose.msra.mxu0 %v1459
    %1466 = vmatprep.subr.bf16.mxu0 0
    %1467 = vmatpush1.bf16.xpose.msra.mxu0 %v1462
    %1468 = vmatprep.subr.bf16.mxu0 0
    %1469 = vmatpush1.bf16.xpose.msra.mxu0 0
    %1470 = vmatprep.subr.bf16.mxu0 0
    %1471 = vmatpush1.bf16.xpose.msra.mxu0 0
    %1472 = vmatprep.subr.bf16.mxu0 0
    %1473 = vmatpush1.bf16.xpose.msra.mxu0 0
    %1474 = vmatprep.subr.bf16.mxu0 0
    %1475 = vmatpush1.bf16.xpose.msra.mxu0 0
    %1476 = vmatprep.subr.bf16.mxu0 0
    %1477 = vmatpush1.bf16.xpose.msra.mxu0 0
    %1478 = vmatprep.subr.bf16.mxu0 0
    %1479 = vmatpush1.bf16.xpose.msra.mxu0 0
    %1480 = vmatprep.subr.bf16.mxu0 0
    %1481 = vmatpush1.bf16.xpose.msra.mxu0 0
    %1482 = vmatprep.subr.bf16.mxu0 0
    %1483 = vmatpush1.bf16.xpose.msra.mxu0 0
    %1484 = vmatprep.subr.bf16.mxu0 0
    %1485 = vmatpush1.bf16.xpose.msra.mxu0 0
    %1486 = vmatprep.subr.bf16.mxu0 0
    %1487 = vmatpush1.bf16.xpose.msra.mxu0 0
    %1488 = vmatprep.subr.bf16.mxu0 0
    %1489 = vmatpush1.bf16.xpose.msra.mxu0 0
    %1490 = vmatprep.subr.bf16.mxu0 0
    %1491 = vmatpush1.bf16.xpose.msra.mxu0 0
    %1492 = vmatprep.subr.bf16.mxu0 0
    %1493 = vmatpush1.bf16.xpose.msra.mxu0 0
    %1494 = vmatprep.subr.bf16.mxu0 0
    %1495 = vmatpush1.bf16.xpose.msra.mxu0 0
    %1496 = vmatprep.mubr.bf16.mxu0 0
    %1497 = vmatmul.mubr.bf16.gmra.mrb[0].mxu0 %v1453
    %v1498 = vpop.f32.mrb[0].mxu0
    %v1499 = vadd.f32 %v161, %v1498
    %v1500 = vpop.f32.mrb[0].mxu0
    %v1501 = vpop.f32.mrb[0].mxu0
    %v1502 = vadd.f32 %v161, %v1501
    %v1503 = vpop.f32.mrb[0].mxu0
    %1504 = vmatprep.mubr.bf16.mxu0 0
    %1505 = vmatmul.mubr.bf16.gmra.mrb[0].mxu0 %v1456
    %v1506 = vpop.f32.mrb[0].mxu0
    %v1507 = vadd.f32 %v161, %v1506
    %v1508 = vpop.f32.mrb[0].mxu0
    %v1509 = vpop.f32.mrb[0].mxu0
    %v1510 = vpop.f32.mrb[0].mxu0
    %1511 = vdwg.mxu0
    %v1513 = vsel %vm1391, %v1347, 0
    %v1516 = vsel %vm1391, %v1348, 0
    %v1519 = vsel %vm1391, %v1363, 0
    %v1522 = vsel %vm1391, %v1364, 0
    %1524 = vmatprep.subr.bf16.mxu0 0
    %1525 = vmatpush1.bf16.xpose.msra.mxu0 %v1519
    %1526 = vmatprep.subr.bf16.mxu0 0
    %1527 = vmatpush1.bf16.xpose.msra.mxu0 %v1522
    %1528 = vmatprep.subr.bf16.mxu0 0
    %1529 = vmatpush1.bf16.xpose.msra.mxu0 0
    %1530 = vmatprep.subr.bf16.mxu0 0
    %1531 = vmatpush1.bf16.xpose.msra.mxu0 0
    %1532 = vmatprep.subr.bf16.mxu0 0
    %1533 = vmatpush1.bf16.xpose.msra.mxu0 0
    %1534 = vmatprep.subr.bf16.mxu0 0
    %1535 = vmatpush1.bf16.xpose.msra.mxu0 0
    %1536 = vmatprep.subr.bf16.mxu0 0
    %1537 = vmatpush1.bf16.xpose.msra.mxu0 0
    %1538 = vmatprep.subr.bf16.mxu0 0
    %1539 = vmatpush1.bf16.xpose.msra.mxu0 0
    %1540 = vmatprep.subr.bf16.mxu0 0
    %1541 = vmatpush1.bf16.xpose.msra.mxu0 0
    %1542 = vmatprep.subr.bf16.mxu0 0
    %1543 = vmatpush1.bf16.xpose.msra.mxu0 0
    %1544 = vmatprep.subr.bf16.mxu0 0
    %1545 = vmatpush1.bf16.xpose.msra.mxu0 0
    %1546 = vmatprep.subr.bf16.mxu0 0
    %1547 = vmatpush1.bf16.xpose.msra.mxu0 0
    %1548 = vmatprep.subr.bf16.mxu0 0
    %1549 = vmatpush1.bf16.xpose.msra.mxu0 0
    %1550 = vmatprep.subr.bf16.mxu0 0
    %1551 = vmatpush1.bf16.xpose.msra.mxu0 0
    %1552 = vmatprep.subr.bf16.mxu0 0
    %1553 = vmatpush1.bf16.xpose.msra.mxu0 0
    %1554 = vmatprep.subr.bf16.mxu0 0
    %1555 = vmatpush1.bf16.xpose.msra.mxu0 0
    %1556 = vmatprep.mubr.bf16.mxu0 0
    %1557 = vmatmul.mubr.bf16.gmra.mrb[0].mxu0 %v1513
    %v1558 = vpop.f32.mrb[0].mxu0
    %v1559 = vadd.f32 %v161, %v1558
    %v1560 = vpop.f32.mrb[0].mxu0
    %v1561 = vpop.f32.mrb[0].mxu0
    %v1562 = vadd.f32 %v161, %v1561
    %v1563 = vpop.f32.mrb[0].mxu0
    %1564 = vmatprep.mubr.bf16.mxu0 0
    %1565 = vmatmul.mubr.bf16.gmra.mrb[0].mxu0 %v1516
    %v1566 = vpop.f32.mrb[0].mxu0
    %v1567 = vadd.f32 %v161, %v1566
    %v1568 = vpop.f32.mrb[0].mxu0
    %v1569 = vpop.f32.mrb[0].mxu0
    %v1570 = vpop.f32.mrb[0].mxu0
    %1571 = vdwg.mxu0
    %v1573 = vsel %vm1391, %v1349, 0
    %v1576 = vsel %vm1391, %v1350, 0
    %v1579 = vsel %vm1391, %v1365, 0
    %v1582 = vsel %vm1391, %v1366, 0
    %1584 = vmatprep.subr.bf16.mxu0 0
    %1585 = vmatpush1.bf16.xpose.msra.mxu0 %v1579
    %1586 = vmatprep.subr.bf16.mxu0 0
    %1587 = vmatpush1.bf16.xpose.msra.mxu0 %v1582
    %1588 = vmatprep.subr.bf16.mxu0 0
    %1589 = vmatpush1.bf16.xpose.msra.mxu0 0
    %1590 = vmatprep.subr.bf16.mxu0 0
    %1591 = vmatpush1.bf16.xpose.msra.mxu0 0
    %1592 = vmatprep.subr.bf16.mxu0 0
    %1593 = vmatpush1.bf16.xpose.msra.mxu0 0
    %1594 = vmatprep.subr.bf16.mxu0 0
    %1595 = vmatpush1.bf16.xpose.msra.mxu0 0
    %1596 = vmatprep.subr.bf16.mxu0 0
    %1597 = vmatpush1.bf16.xpose.msra.mxu0 0
    %1598 = vmatprep.subr.bf16.mxu0 0
    %1599 = vmatpush1.bf16.xpose.msra.mxu0 0
    %1600 = vmatprep.subr.bf16.mxu0 0
    %1601 = vmatpush1.bf16.xpose.msra.mxu0 0
    %1602 = vmatprep.subr.bf16.mxu0 0
    %1603 = vmatpush1.bf16.xpose.msra.mxu0 0
    %1604 = vmatprep.subr.bf16.mxu0 0
    %1605 = vmatpush1.bf16.xpose.msra.mxu0 0
    %1606 = vmatprep.subr.bf16.mxu0 0
    %1607 = vmatpush1.bf16.xpose.msra.mxu0 0
    %1608 = vmatprep.subr.bf16.mxu0 0
    %1609 = vmatpush1.bf16.xpose.msra.mxu0 0
    %1610 = vmatprep.subr.bf16.mxu0 0
    %1611 = vmatpush1.bf16.xpose.msra.mxu0 0
    %1612 = vmatprep.subr.bf16.mxu0 0
    %1613 = vmatpush1.bf16.xpose.msra.mxu0 0
    %1614 = vmatprep.subr.bf16.mxu0 0
    %1615 = vmatpush1.bf16.xpose.msra.mxu0 0
    %1616 = vmatprep.mubr.bf16.mxu0 0
    %1617 = vmatmul.mubr.bf16.gmra.mrb[0].mxu0 %v1573
    %v1618 = vpop.f32.mrb[0].mxu0
    %v1619 = vadd.f32 %v161, %v1618
    %v1620 = vpop.f32.mrb[0].mxu0
    %v1621 = vpop.f32.mrb[0].mxu0
    %v1622 = vadd.f32 %v161, %v1621
    %v1623 = vpop.f32.mrb[0].mxu0
    %1624 = vmatprep.mubr.bf16.mxu0 0
    %1625 = vmatmul.mubr.bf16.gmra.mrb[0].mxu0 %v1576
    %v1626 = vpop.f32.mrb[0].mxu0
    %v1627 = vadd.f32 %v161, %v1626
    %v1628 = vpop.f32.mrb[0].mxu0
    %v1629 = vpop.f32.mrb[0].mxu0
    %v1630 = vpop.f32.mrb[0].mxu0
    %1631 = vdwg.mxu0
    %v1633 = vsel %vm1391, %v1351, 0
    %v1636 = vsel %vm1391, %v1352, 0
    %v1639 = vsel %vm1391, %v1367, 0
    %v1642 = vsel %vm1391, %v1368, 0
    %1644 = vmatprep.subr.bf16.mxu0 0
    %1645 = vmatpush1.bf16.xpose.msra.mxu0 %v1639
    %1646 = vmatprep.subr.bf16.mxu0 0
    %1647 = vmatpush1.bf16.xpose.msra.mxu0 %v1642
    %1648 = vmatprep.subr.bf16.mxu0 0
    %1649 = vmatpush1.bf16.xpose.msra.mxu0 0
    %1650 = vmatprep.subr.bf16.mxu0 0
    %1651 = vmatpush1.bf16.xpose.msra.mxu0 0
    %1652 = vmatprep.subr.bf16.mxu0 0
    %1653 = vmatpush1.bf16.xpose.msra.mxu0 0
    %1654 = vmatprep.subr.bf16.mxu0 0
    %1655 = vmatpush1.bf16.xpose.msra.mxu0 0
    %1656 = vmatprep.subr.bf16.mxu0 0
    %1657 = vmatpush1.bf16.xpose.msra.mxu0 0
    %1658 = vmatprep.subr.bf16.mxu0 0
    %1659 = vmatpush1.bf16.xpose.msra.mxu0 0
    %1660 = vmatprep.subr.bf16.mxu0 0
    %1661 = vmatpush1.bf16.xpose.msra.mxu0 0
    %1662 = vmatprep.subr.bf16.mxu0 0
    %1663 = vmatpush1.bf16.xpose.msra.mxu0 0
    %1664 = vmatprep.subr.bf16.mxu0 0
    %1665 = vmatpush1.bf16.xpose.msra.mxu0 0
    %1666 = vmatprep.subr.bf16.mxu0 0
    %1667 = vmatpush1.bf16.xpose.msra.mxu0 0
    %1668 = vmatprep.subr.bf16.mxu0 0
    %1669 = vmatpush1.bf16.xpose.msra.mxu0 0
    %1670 = vmatprep.subr.bf16.mxu0 0
    %1671 = vmatpush1.bf16.xpose.msra.mxu0 0
    %1672 = vmatprep.subr.bf16.mxu0 0
    %1673 = vmatpush1.bf16.xpose.msra.mxu0 0
    %1674 = vmatprep.subr.bf16.mxu0 0
    %1675 = vmatpush1.bf16.xpose.msra.mxu0 0
    %1676 = vmatprep.mubr.bf16.mxu0 0
    %1677 = vmatmul.mubr.bf16.gmra.mrb[0].mxu0 %v1633
    %v1678 = vpop.f32.mrb[0].mxu0
    %v1679 = vadd.f32 %v161, %v1678
    %v1680 = vpop.f32.mrb[0].mxu0
    %v1681 = vpop.f32.mrb[0].mxu0
    %v1682 = vadd.f32 %v161, %v1681
    %v1683 = vpop.f32.mrb[0].mxu0
    %1684 = vmatprep.mubr.bf16.mxu0 0
    %1685 = vmatmul.mubr.bf16.gmra.mrb[0].mxu0 %v1636
    %v1686 = vpop.f32.mrb[0].mxu0
    %v1687 = vadd.f32 %v161, %v1686
    %v1688 = vpop.f32.mrb[0].mxu0
    %v1689 = vpop.f32.mrb[0].mxu0
    %v1690 = vpop.f32.mrb[0].mxu0
    %1691 = vdwg.mxu0
    %v1693 = vsel %vm1391, %v1353, 0
    %v1696 = vsel %vm1391, %v1354, 0
    %v1699 = vsel %vm1391, %v1369, 0
    %v1702 = vsel %vm1391, %v1370, 0
    %1704 = vmatprep.subr.bf16.mxu0 0
    %1705 = vmatpush1.bf16.xpose.msra.mxu0 %v1699
    %1706 = vmatprep.subr.bf16.mxu0 0
    %1707 = vmatpush1.bf16.xpose.msra.mxu0 %v1702
    %1708 = vmatprep.subr.bf16.mxu0 0
    %1709 = vmatpush1.bf16.xpose.msra.mxu0 0
    %1710 = vmatprep.subr.bf16.mxu0 0
    %1711 = vmatpush1.bf16.xpose.msra.mxu0 0
    %1712 = vmatprep.subr.bf16.mxu0 0
    %1713 = vmatpush1.bf16.xpose.msra.mxu0 0
    %1714 = vmatprep.subr.bf16.mxu0 0
    %1715 = vmatpush1.bf16.xpose.msra.mxu0 0
    %1716 = vmatprep.subr.bf16.mxu0 0
    %1717 = vmatpush1.bf16.xpose.msra.mxu0 0
    %1718 = vmatprep.subr.bf16.mxu0 0
    %1719 = vmatpush1.bf16.xpose.msra.mxu0 0
    %1720 = vmatprep.subr.bf16.mxu0 0
    %1721 = vmatpush1.bf16.xpose.msra.mxu0 0
    %1722 = vmatprep.subr.bf16.mxu0 0
    %1723 = vmatpush1.bf16.xpose.msra.mxu0 0
    %1724 = vmatprep.subr.bf16.mxu0 0
    %1725 = vmatpush1.bf16.xpose.msra.mxu0 0
    %1726 = vmatprep.subr.bf16.mxu0 0
    %1727 = vmatpush1.bf16.xpose.msra.mxu0 0
    %1728 = vmatprep.subr.bf16.mxu0 0
    %1729 = vmatpush1.bf16.xpose.msra.mxu0 0
    %1730 = vmatprep.subr.bf16.mxu0 0
    %1731 = vmatpush1.bf16.xpose.msra.mxu0 0
    %1732 = vmatprep.subr.bf16.mxu0 0
    %1733 = vmatpush1.bf16.xpose.msra.mxu0 0
    %1734 = vmatprep.subr.bf16.mxu0 0
    %1735 = vmatpush1.bf16.xpose.msra.mxu0 0
    %1736 = vmatprep.mubr.bf16.mxu0 0
    %1737 = vmatmul.mubr.bf16.gmra.mrb[0].mxu0 %v1693
    %v1738 = vpop.f32.mrb[0].mxu0
    %v1739 = vadd.f32 %v161, %v1738
    %v1740 = vpop.f32.mrb[0].mxu0
    %v1741 = vpop.f32.mrb[0].mxu0
    %v1742 = vadd.f32 %v161, %v1741
    %v1743 = vpop.f32.mrb[0].mxu0
    %1744 = vmatprep.mubr.bf16.mxu0 0
    %1745 = vmatmul.mubr.bf16.gmra.mrb[0].mxu0 %v1696
    %v1746 = vpop.f32.mrb[0].mxu0
    %v1747 = vadd.f32 %v161, %v1746
    %v1748 = vpop.f32.mrb[0].mxu0
    %v1749 = vpop.f32.mrb[0].mxu0
    %v1750 = vpop.f32.mrb[0].mxu0
    %1751 = vdwg.mxu0
    %v1753 = vsel %vm1391, %v1355, 0
    %v1756 = vsel %vm1391, %v1356, 0
    %v1759 = vsel %vm1391, %v1371, 0
    %v1762 = vsel %vm1391, %v1372, 0
    %1764 = vmatprep.subr.bf16.mxu0 0
    %1765 = vmatpush1.bf16.xpose.msra.mxu0 %v1759
    %1766 = vmatprep.subr.bf16.mxu0 0
    %1767 = vmatpush1.bf16.xpose.msra.mxu0 %v1762
    %1768 = vmatprep.subr.bf16.mxu0 0
    %1769 = vmatpush1.bf16.xpose.msra.mxu0 0
    %1770 = vmatprep.subr.bf16.mxu0 0
    %1771 = vmatpush1.bf16.xpose.msra.mxu0 0
    %1772 = vmatprep.subr.bf16.mxu0 0
    %1773 = vmatpush1.bf16.xpose.msra.mxu0 0
    %1774 = vmatprep.subr.bf16.mxu0 0
    %1775 = vmatpush1.bf16.xpose.msra.mxu0 0
    %1776 = vmatprep.subr.bf16.mxu0 0
    %1777 = vmatpush1.bf16.xpose.msra.mxu0 0
    %1778 = vmatprep.subr.bf16.mxu0 0
    %1779 = vmatpush1.bf16.xpose.msra.mxu0 0
    %1780 = vmatprep.subr.bf16.mxu0 0
    %1781 = vmatpush1.bf16.xpose.msra.mxu0 0
    %1782 = vmatprep.subr.bf16.mxu0 0
    %1783 = vmatpush1.bf16.xpose.msra.mxu0 0
    %1784 = vmatprep.subr.bf16.mxu0 0
    %1785 = vmatpush1.bf16.xpose.msra.mxu0 0
    %1786 = vmatprep.subr.bf16.mxu0 0
    %1787 = vmatpush1.bf16.xpose.msra.mxu0 0
    %1788 = vmatprep.subr.bf16.mxu0 0
    %1789 = vmatpush1.bf16.xpose.msra.mxu0 0
    %1790 = vmatprep.subr.bf16.mxu0 0
    %1791 = vmatpush1.bf16.xpose.msra.mxu0 0
    %1792 = vmatprep.subr.bf16.mxu0 0
    %1793 = vmatpush1.bf16.xpose.msra.mxu0 0
    %1794 = vmatprep.subr.bf16.mxu0 0
    %1795 = vmatpush1.bf16.xpose.msra.mxu0 0
    %1796 = vmatprep.mubr.bf16.mxu0 0
    %1797 = vmatmul.mubr.bf16.gmra.mrb[0].mxu0 %v1753
    %v1798 = vpop.f32.mrb[0].mxu0
    %v1799 = vadd.f32 %v161, %v1798
    %v1800 = vpop.f32.mrb[0].mxu0
    %v1801 = vpop.f32.mrb[0].mxu0
    %v1802 = vadd.f32 %v161, %v1801
    %v1803 = vpop.f32.mrb[0].mxu0
    %1804 = vmatprep.mubr.bf16.mxu0 0
    %1805 = vmatmul.mubr.bf16.gmra.mrb[0].mxu0 %v1756
    %v1806 = vpop.f32.mrb[0].mxu0
    %v1807 = vadd.f32 %v161, %v1806
    %v1808 = vpop.f32.mrb[0].mxu0
    %v1809 = vpop.f32.mrb[0].mxu0
    %v1810 = vpop.f32.mrb[0].mxu0
    %1811 = vdwg.mxu0
    %v1813 = vsel %vm1391, %v1357, 0
    %v1816 = vsel %vm1391, %v1358, 0
    %v1819 = vsel %vm1391, %v1373, 0
    %v1822 = vsel %vm1391, %v1374, 0
    %1824 = vmatprep.subr.bf16.mxu0 0
    %1825 = vmatpush1.bf16.xpose.msra.mxu0 %v1819
    %1826 = vmatprep.subr.bf16.mxu0 0
    %1827 = vmatpush1.bf16.xpose.msra.mxu0 %v1822
    %1828 = vmatprep.subr.bf16.mxu0 0
    %1829 = vmatpush1.bf16.xpose.msra.mxu0 0
    %1830 = vmatprep.subr.bf16.mxu0 0
    %1831 = vmatpush1.bf16.xpose.msra.mxu0 0
    %1832 = vmatprep.subr.bf16.mxu0 0
    %1833 = vmatpush1.bf16.xpose.msra.mxu0 0
    %1834 = vmatprep.subr.bf16.mxu0 0
    %1835 = vmatpush1.bf16.xpose.msra.mxu0 0
    %1836 = vmatprep.subr.bf16.mxu0 0
    %1837 = vmatpush1.bf16.xpose.msra.mxu0 0
    %1838 = vmatprep.subr.bf16.mxu0 0
    %1839 = vmatpush1.bf16.xpose.msra.mxu0 0
    %1840 = vmatprep.subr.bf16.mxu0 0
    %1841 = vmatpush1.bf16.xpose.msra.mxu0 0
    %1842 = vmatprep.subr.bf16.mxu0 0
    %1843 = vmatpush1.bf16.xpose.msra.mxu0 0
    %1844 = vmatprep.subr.bf16.mxu0 0
    %1845 = vmatpush1.bf16.xpose.msra.mxu0 0
    %1846 = vmatprep.subr.bf16.mxu0 0
    %1847 = vmatpush1.bf16.xpose.msra.mxu0 0
    %1848 = vmatprep.subr.bf16.mxu0 0
    %1849 = vmatpush1.bf16.xpose.msra.mxu0 0
    %1850 = vmatprep.subr.bf16.mxu0 0
    %1851 = vmatpush1.bf16.xpose.msra.mxu0 0
    %1852 = vmatprep.subr.bf16.mxu0 0
    %1853 = vmatpush1.bf16.xpose.msra.mxu0 0
    %1854 = vmatprep.subr.bf16.mxu0 0
    %1855 = vmatpush1.bf16.xpose.msra.mxu0 0
    %1856 = vmatprep.mubr.bf16.mxu0 0
    %1857 = vmatmul.mubr.bf16.gmra.mrb[0].mxu0 %v1813
    %v1858 = vpop.f32.mrb[0].mxu0
    %v1859 = vadd.f32 %v161, %v1858
    %v1860 = vpop.f32.mrb[0].mxu0
    %v1861 = vpop.f32.mrb[0].mxu0
    %v1862 = vadd.f32 %v161, %v1861
    %v1863 = vpop.f32.mrb[0].mxu0
    %1864 = vmatprep.mubr.bf16.mxu0 0
    %1865 = vmatmul.mubr.bf16.gmra.mrb[0].mxu0 %v1816
    %v1866 = vpop.f32.mrb[0].mxu0
    %v1867 = vadd.f32 %v161, %v1866
    %v1868 = vpop.f32.mrb[0].mxu0
    %v1869 = vpop.f32.mrb[0].mxu0
    %v1870 = vpop.f32.mrb[0].mxu0
    %1871 = vdwg.mxu0
    %vm1872 = vcmask 195584
    %v1873 = vsel %vm1872, %v1439, -inf
    %1874 = vmax.xlane.f32.xlu0 %v1873
    %v1875 = vpop.xlane.xlu0 %1874
    %v1876 = vsel %vm1872, %v1442, -inf
    %1877 = vmax.xlane.f32.xlu0 %v1876
    %v1878 = vpop.xlane.xlu0 %1877
    %v1879 = vsel %vm1872, %v1447, -inf
    %1880 = vmax.xlane.f32.xlu0 %v1879
    %v1881 = vpop.xlane.xlu0 %1880
    %v1882 = vsel %vm1872, %v1499, -inf
    %1883 = vmax.xlane.f32.xlu0 %v1882
    %v1884 = vpop.xlane.xlu0 %1883
    %v1885 = vsel %vm1872, %v1502, -inf
    %1886 = vmax.xlane.f32.xlu0 %v1885
    %v1887 = vpop.xlane.xlu0 %1886
    %v1888 = vsel %vm1872, %v1507, -inf
    %1889 = vmax.xlane.f32.xlu0 %v1888
    %v1890 = vpop.xlane.xlu0 %1889
    %v1891 = vsel %vm1872, %v1559, -inf
    %1892 = vmax.xlane.f32.xlu0 %v1891
    %v1893 = vpop.xlane.xlu0 %1892
    %v1894 = vsel %vm1872, %v1562, -inf
    %1895 = vmax.xlane.f32.xlu0 %v1894
    %v1896 = vpop.xlane.xlu0 %1895
    %v1897 = vsel %vm1872, %v1567, -inf
    %1898 = vmax.xlane.f32.xlu0 %v1897
    %v1899 = vpop.xlane.xlu0 %1898
    %v1900 = vsel %vm1872, %v1619, -inf
    %1901 = vmax.xlane.f32.xlu0 %v1900
    %v1902 = vpop.xlane.xlu0 %1901
    %v1903 = vsel %vm1872, %v1622, -inf
    %1904 = vmax.xlane.f32.xlu0 %v1903
    %v1905 = vpop.xlane.xlu0 %1904
    %v1906 = vsel %vm1872, %v1627, -inf
    %1907 = vmax.xlane.f32.xlu0 %v1906
    %v1908 = vpop.xlane.xlu0 %1907
    %v1909 = vsel %vm1872, %v1679, -inf
    %1910 = vmax.xlane.f32.xlu0 %v1909
    %v1911 = vpop.xlane.xlu0 %1910
    %v1912 = vsel %vm1872, %v1682, -inf
    %1913 = vmax.xlane.f32.xlu0 %v1912
    %v1914 = vpop.xlane.xlu0 %1913
    %v1915 = vsel %vm1872, %v1687, -inf
    %1916 = vmax.xlane.f32.xlu0 %v1915
    %v1917 = vpop.xlane.xlu0 %1916
    %v1918 = vsel %vm1872, %v1739, -inf
    %1919 = vmax.xlane.f32.xlu0 %v1918
    %v1920 = vpop.xlane.xlu0 %1919
    %v1921 = vsel %vm1872, %v1742, -inf
    %1922 = vmax.xlane.f32.xlu0 %v1921
    %v1923 = vpop.xlane.xlu0 %1922
    %v1924 = vsel %vm1872, %v1747, -inf
    %1925 = vmax.xlane.f32.xlu0 %v1924
    %v1926 = vpop.xlane.xlu0 %1925
    %v1927 = vsel %vm1872, %v1799, -inf
    %1928 = vmax.xlane.f32.xlu0 %v1927
    %v1929 = vpop.xlane.xlu0 %1928
    %v1930 = vsel %vm1872, %v1802, -inf
    %1931 = vmax.xlane.f32.xlu0 %v1930
    %v1932 = vpop.xlane.xlu0 %1931
    %v1933 = vsel %vm1872, %v1807, -inf
    %1934 = vmax.xlane.f32.xlu0 %v1933
    %v1935 = vpop.xlane.xlu0 %1934
    %v1936 = vsel %vm1872, %v1859, -inf
    %1937 = vmax.xlane.f32.xlu0 %v1936
    %v1938 = vpop.xlane.xlu0 %1937
    %v1939 = vsel %vm1872, %v1862, -inf
    %1940 = vmax.xlane.f32.xlu0 %v1939
    %v1941 = vpop.xlane.xlu0 %1940
    %v1942 = vsel %vm1872, %v1867, -inf
    %1943 = vmax.xlane.f32.xlu0 %v1942
    %v1944 = vpop.xlane.xlu0 %1943
    %v1945 = vsub.f32 %v1439, %v1875
    %v1946 = vsub.f32 %v1442, %v1878
    %v1947 = vsub.f32 %v1447, %v1881
    %v1948 = vsub.f32 %v1499, %v1884
    %v1949 = vsub.f32 %v1502, %v1887
    %v1950 = vsub.f32 %v1507, %v1890
    %v1951 = vsub.f32 %v1559, %v1893
    %v1952 = vsub.f32 %v1562, %v1896
    %v1953 = vsub.f32 %v1567, %v1899
    %v1954 = vsub.f32 %v1619, %v1902
    %v1955 = vsub.f32 %v1622, %v1905
    %v1956 = vsub.f32 %v1627, %v1908
    %v1957 = vsub.f32 %v1679, %v1911
    %v1958 = vsub.f32 %v1682, %v1914
    %v1959 = vsub.f32 %v1687, %v1917
    %v1960 = vsub.f32 %v1739, %v1920
    %v1961 = vsub.f32 %v1742, %v1923
    %v1962 = vsub.f32 %v1747, %v1926
    %v1963 = vsub.f32 %v1799, %v1929
    %v1964 = vsub.f32 %v1802, %v1932
    %v1965 = vsub.f32 %v1807, %v1935
    %v1966 = vsub.f32 %v1859, %v1938
    %v1967 = vsub.f32 %v1862, %v1941
    %v1968 = vsub.f32 %v1867, %v1944
    %v1969 = vmul.f32 %v1945, 1.442695
    %v1970 = vpow.pop %v1969
    %v1971 = vmul.f32 %v1946, 1.442695
    %v1972 = vpow.pop %v1971
    %v1973 = vmul.f32 %v1947, 1.442695
    %v1974 = vpow.pop %v1973
    %v1975 = vmul.f32 %v1948, 1.442695
    %v1976 = vpow.pop %v1975
    %v1977 = vmul.f32 %v1949, 1.442695
    %v1978 = vpow.pop %v1977
    %v1979 = vmul.f32 %v1950, 1.442695
    %v1980 = vpow.pop %v1979
    %v1981 = vmul.f32 %v1951, 1.442695
    %v1982 = vpow.pop %v1981
    %v1983 = vmul.f32 %v1952, 1.442695
    %v1984 = vpow.pop %v1983
    %v1985 = vmul.f32 %v1953, 1.442695
    %v1986 = vpow.pop %v1985
    %v1987 = vmul.f32 %v1954, 1.442695
    %v1988 = vpow.pop %v1987
    %v1989 = vmul.f32 %v1955, 1.442695
    %v1990 = vpow.pop %v1989
    %v1991 = vmul.f32 %v1956, 1.442695
    %v1992 = vpow.pop %v1991
    %v1993 = vmul.f32 %v1957, 1.442695
    %v1994 = vpow.pop %v1993
    %v1995 = vmul.f32 %v1958, 1.442695
    %v1996 = vpow.pop %v1995
    %v1997 = vmul.f32 %v1959, 1.442695
    %v1998 = vpow.pop %v1997
    %v1999 = vmul.f32 %v1960, 1.442695
    %v2000 = vpow.pop %v1999
    %v2001 = vmul.f32 %v1961, 1.442695
    %v2002 = vpow.pop %v2001
    %v2003 = vmul.f32 %v1962, 1.442695
    %v2004 = vpow.pop %v2003
    %v2005 = vmul.f32 %v1963, 1.442695
    %v2006 = vpow.pop %v2005
    %v2007 = vmul.f32 %v1964, 1.442695
    %v2008 = vpow.pop %v2007
    %v2009 = vmul.f32 %v1965, 1.442695
    %v2010 = vpow.pop %v2009
    %v2011 = vmul.f32 %v1966, 1.442695
    %v2012 = vpow.pop %v2011
    %v2013 = vmul.f32 %v1967, 1.442695
    %v2014 = vpow.pop %v2013
    %v2015 = vmul.f32 %v1968, 1.442695
    %v2016 = vpow.pop %v2015
    %v2017 = vsel %vm1872, %v1970, 0.0
    %2018 = vadd.xlane.f32.xlu0 %v2017
    %v2019 = vpop.xlane.xlu0 %2018
    %v2020 = vsel %vm1872, %v1972, 0.0
    %2021 = vadd.xlane.f32.xlu0 %v2020
    %v2022 = vpop.xlane.xlu0 %2021
    %v2023 = vsel %vm1872, %v1974, 0.0
    %2024 = vadd.xlane.f32.xlu0 %v2023
    %v2025 = vpop.xlane.xlu0 %2024
    %v2026 = vsel %vm1872, %v1976, 0.0
    %2027 = vadd.xlane.f32.xlu0 %v2026
    %v2028 = vpop.xlane.xlu0 %2027
    %v2029 = vsel %vm1872, %v1978, 0.0
    %2030 = vadd.xlane.f32.xlu0 %v2029
    %v2031 = vpop.xlane.xlu0 %2030
    %v2032 = vsel %vm1872, %v1980, 0.0
    %2033 = vadd.xlane.f32.xlu0 %v2032
    %v2034 = vpop.xlane.xlu0 %2033
    %v2035 = vsel %vm1872, %v1982, 0.0
    %2036 = vadd.xlane.f32.xlu0 %v2035
    %v2037 = vpop.xlane.xlu0 %2036
    %v2038 = vsel %vm1872, %v1984, 0.0
    %2039 = vadd.xlane.f32.xlu0 %v2038
    %v2040 = vpop.xlane.xlu0 %2039
    %v2041 = vsel %vm1872, %v1986, 0.0
    %2042 = vadd.xlane.f32.xlu0 %v2041
    %v2043 = vpop.xlane.xlu0 %2042
    %v2044 = vsel %vm1872, %v1988, 0.0
    %2045 = vadd.xlane.f32.xlu0 %v2044
    %v2046 = vpop.xlane.xlu0 %2045
    %v2047 = vsel %vm1872, %v1990, 0.0
    %2048 = vadd.xlane.f32.xlu0 %v2047
    %v2049 = vpop.xlane.xlu0 %2048
    %v2050 = vsel %vm1872, %v1992, 0.0
    %2051 = vadd.xlane.f32.xlu0 %v2050
    %v2052 = vpop.xlane.xlu0 %2051
    %v2053 = vsel %vm1872, %v1994, 0.0
    %2054 = vadd.xlane.f32.xlu0 %v2053
    %v2055 = vpop.xlane.xlu0 %2054
    %v2056 = vsel %vm1872, %v1996, 0.0
    %2057 = vadd.xlane.f32.xlu0 %v2056
    %v2058 = vpop.xlane.xlu0 %2057
    %v2059 = vsel %vm1872, %v1998, 0.0
    %2060 = vadd.xlane.f32.xlu0 %v2059
    %v2061 = vpop.xlane.xlu0 %2060
    %v2062 = vsel %vm1872, %v2000, 0.0
    %2063 = vadd.xlane.f32.xlu0 %v2062
    %v2064 = vpop.xlane.xlu0 %2063
    %v2065 = vsel %vm1872, %v2002, 0.0
    %2066 = vadd.xlane.f32.xlu0 %v2065
    %v2067 = vpop.xlane.xlu0 %2066
    %v2068 = vsel %vm1872, %v2004, 0.0
    %2069 = vadd.xlane.f32.xlu0 %v2068
    %v2070 = vpop.xlane.xlu0 %2069
    %v2071 = vsel %vm1872, %v2006, 0.0
    %2072 = vadd.xlane.f32.xlu0 %v2071
    %v2073 = vpop.xlane.xlu0 %2072
    %v2074 = vsel %vm1872, %v2008, 0.0
    %2075 = vadd.xlane.f32.xlu0 %v2074
    %v2076 = vpop.xlane.xlu0 %2075
    %v2077 = vsel %vm1872, %v2010, 0.0
    %2078 = vadd.xlane.f32.xlu0 %v2077
    %v2079 = vpop.xlane.xlu0 %2078
    %v2080 = vsel %vm1872, %v2012, 0.0
    %2081 = vadd.xlane.f32.xlu0 %v2080
    %v2082 = vpop.xlane.xlu0 %2081
    %v2083 = vsel %vm1872, %v2014, 0.0
    %2084 = vadd.xlane.f32.xlu0 %v2083
    %v2085 = vpop.xlane.xlu0 %2084
    %v2086 = vsel %vm1872, %v2016, 0.0
    %2087 = vadd.xlane.f32.xlu0 %v2086
    %v2088 = vpop.xlane.xlu0 %2087
    %v2089 = vrcp.pop %v2019
    %v2090 = vrcp.pop %v2022
    %v2091 = vrcp.pop %v2025
    %v2092 = vrcp.pop %v2028
    %v2093 = vrcp.pop %v2031
    %v2094 = vrcp.pop %v2034
    %v2095 = vrcp.pop %v2037
    %v2096 = vrcp.pop %v2040
    %v2097 = vrcp.pop %v2043
    %v2098 = vrcp.pop %v2046
    %v2099 = vrcp.pop %v2049
    %v2100 = vrcp.pop %v2052
    %v2101 = vrcp.pop %v2055
    %v2102 = vrcp.pop %v2058
    %v2103 = vrcp.pop %v2061
    %v2104 = vrcp.pop %v2064
    %v2105 = vrcp.pop %v2067
    %v2106 = vrcp.pop %v2070
    %v2107 = vrcp.pop %v2073
    %v2108 = vrcp.pop %v2076
    %v2109 = vrcp.pop %v2079
    %v2110 = vrcp.pop %v2082
    %v2111 = vrcp.pop %v2085
    %v2112 = vrcp.pop %v2088
    %v2113 = vmul.f32 %v1970, %v2089
    %v2114 = vmul.f32 %v1972, %v2090
    %v2115 = vmul.f32 %v1974, %v2091
    %v2116 = vmul.f32 %v1976, %v2092
    %v2117 = vmul.f32 %v1978, %v2093
    %v2118 = vmul.f32 %v1980, %v2094
    %v2119 = vmul.f32 %v1982, %v2095
    %v2120 = vmul.f32 %v1984, %v2096
    %v2121 = vmul.f32 %v1986, %v2097
    %v2122 = vmul.f32 %v1988, %v2098
    %v2123 = vmul.f32 %v1990, %v2099
    %v2124 = vmul.f32 %v1992, %v2100
    %v2125 = vmul.f32 %v1994, %v2101
    %v2126 = vmul.f32 %v1996, %v2102
    %v2127 = vmul.f32 %v1998, %v2103
    %v2128 = vmul.f32 %v2000, %v2104
    %v2129 = vmul.f32 %v2002, %v2105
    %v2130 = vmul.f32 %v2004, %v2106
    %v2131 = vmul.f32 %v2006, %v2107
    %v2132 = vmul.f32 %v2008, %v2108
    %v2133 = vmul.f32 %v2010, %v2109
    %v2134 = vmul.f32 %v2012, %v2110
    %v2135 = vmul.f32 %v2014, %v2111
    %v2136 = vmul.f32 %v2016, %v2112
    %v2137 = vpack.c.bf16 %v2114, %v2113
    %v2138 = vpack.c.bf16 %v2115, %v2115
    %v2139 = vpack.c.bf16 %v2117, %v2116
    %v2140 = vpack.c.bf16 %v2118, %v2118
    %v2141 = vpack.c.bf16 %v2120, %v2119
    %v2142 = vpack.c.bf16 %v2121, %v2121
    %v2143 = vpack.c.bf16 %v2123, %v2122
    %v2144 = vpack.c.bf16 %v2124, %v2124
    %v2145 = vpack.c.bf16 %v2126, %v2125
    %v2146 = vpack.c.bf16 %v2127, %v2127
    %v2147 = vpack.c.bf16 %v2129, %v2128
    %v2148 = vpack.c.bf16 %v2130, %v2130
    %v2149 = vpack.c.bf16 %v2132, %v2131
    %v2150 = vpack.c.bf16 %v2133, %v2133
    %v2151 = vpack.c.bf16 %v2135, %v2134
    %v2152 = vpack.c.bf16 %v2136, %v2136
    %v2154 = vsel %vm1872, %v2137, 0
    %v2157 = vsel %vm1872, %v2138, 0
    %vm2159 = vcmask 1043456
    %v2161 = vsel %vm2159, %v1376, 0
    %2163 = vmatprep.subr.bf16.mxu0 0
    %2164 = vmatpush1.bf16.msra.mxu0 %v1375
    %2165 = vmatprep.subr.bf16.mxu0 0
    %2166 = vmatpush1.bf16.msra.mxu0 %v2161
    %2167 = vmatprep.subr.bf16.mxu0 0
    %2168 = vmatpush1.bf16.msra.mxu0 0
    %2169 = vmatprep.subr.bf16.mxu0 0
    %2170 = vmatpush1.bf16.msra.mxu0 0
    %2171 = vmatprep.subr.bf16.mxu0 0
    %2172 = vmatpush1.bf16.msra.mxu0 0
    %2173 = vmatprep.subr.bf16.mxu0 0
    %2174 = vmatpush1.bf16.msra.mxu0 0
    %2175 = vmatprep.subr.bf16.mxu0 0
    %2176 = vmatpush1.bf16.msra.mxu0 0
    %2177 = vmatprep.subr.bf16.mxu0 0
    %2178 = vmatpush1.bf16.msra.mxu0 0
    %2179 = vmatprep.subr.bf16.mxu0 0
    %2180 = vmatpush1.bf16.msra.mxu0 0
    %2181 = vmatprep.subr.bf16.mxu0 0
    %2182 = vmatpush1.bf16.msra.mxu0 0
    %2183 = vmatprep.subr.bf16.mxu0 0
    %2184 = vmatpush1.bf16.msra.mxu0 0
    %2185 = vmatprep.subr.bf16.mxu0 0
    %2186 = vmatpush1.bf16.msra.mxu0 0
    %2187 = vmatprep.subr.bf16.mxu0 0
    %2188 = vmatpush1.bf16.msra.mxu0 0
    %2189 = vmatprep.subr.bf16.mxu0 0
    %2190 = vmatpush1.bf16.msra.mxu0 0
    %2191 = vmatprep.subr.bf16.mxu0 0
    %2192 = vmatpush1.bf16.msra.mxu0 0
    %2193 = vmatprep.subr.bf16.mxu0 0
    %2194 = vmatpush1.bf16.msra.mxu0 0
    %2195 = vmatprep.mubr.bf16.mxu0 0
    %2196 = vmatmul.mubr.bf16.gmra.mrb[0].mxu0 %v2154
    %v2197 = vpop.f32.mrb[0].mxu0
    %v2198 = vadd.f32 0.0, %v2197
    %v2199 = vpop.f32.mrb[0].mxu0
    %v2200 = vpop.f32.mrb[0].mxu0
    %v2201 = vadd.f32 0.0, %v2200
    %v2202 = vpop.f32.mrb[0].mxu0
    %2203 = vmatprep.mubr.bf16.mxu0 0
    %2204 = vmatmul.mubr.bf16.gmra.mrb[0].mxu0 %v2157
    %v2205 = vpop.f32.mrb[0].mxu0
    %v2206 = vadd.f32 0.0, %v2205
    %v2207 = vpop.f32.mrb[0].mxu0
    %v2208 = vpop.f32.mrb[0].mxu0
    %v2209 = vpop.f32.mrb[0].mxu0
    %2210 = vdwg.mxu0
    %v2212 = vsel %vm1872, %v2139, 0
    %v2215 = vsel %vm1872, %v2140, 0
    %v2218 = vsel %vm2159, %v1378, 0
    %2220 = vmatprep.subr.bf16.mxu0 0
    %2221 = vmatpush1.bf16.msra.mxu0 %v1377
    %2222 = vmatprep.subr.bf16.mxu0 0
    %2223 = vmatpush1.bf16.msra.mxu0 %v2218
    %2224 = vmatprep.subr.bf16.mxu0 0
    %2225 = vmatpush1.bf16.msra.mxu0 0
    %2226 = vmatprep.subr.bf16.mxu0 0
    %2227 = vmatpush1.bf16.msra.mxu0 0
    %2228 = vmatprep.subr.bf16.mxu0 0
    %2229 = vmatpush1.bf16.msra.mxu0 0
    %2230 = vmatprep.subr.bf16.mxu0 0
    %2231 = vmatpush1.bf16.msra.mxu0 0
    %2232 = vmatprep.subr.bf16.mxu0 0
    %2233 = vmatpush1.bf16.msra.mxu0 0
    %2234 = vmatprep.subr.bf16.mxu0 0
    %2235 = vmatpush1.bf16.msra.mxu0 0
    %2236 = vmatprep.subr.bf16.mxu0 0
    %2237 = vmatpush1.bf16.msra.mxu0 0
    %2238 = vmatprep.subr.bf16.mxu0 0
    %2239 = vmatpush1.bf16.msra.mxu0 0
    %2240 = vmatprep.subr.bf16.mxu0 0
    %2241 = vmatpush1.bf16.msra.mxu0 0
    %2242 = vmatprep.subr.bf16.mxu0 0
    %2243 = vmatpush1.bf16.msra.mxu0 0
    %2244 = vmatprep.subr.bf16.mxu0 0
    %2245 = vmatpush1.bf16.msra.mxu0 0
    %2246 = vmatprep.subr.bf16.mxu0 0
    %2247 = vmatpush1.bf16.msra.mxu0 0
    %2248 = vmatprep.subr.bf16.mxu0 0
    %2249 = vmatpush1.bf16.msra.mxu0 0
    %2250 = vmatprep.subr.bf16.mxu0 0
    %2251 = vmatpush1.bf16.msra.mxu0 0
    %2252 = vmatprep.mubr.bf16.mxu0 0
    %2253 = vmatmul.mubr.bf16.gmra.mrb[0].mxu0 %v2212
    %v2254 = vpop.f32.mrb[0].mxu0
    %v2255 = vadd.f32 0.0, %v2254
    %v2256 = vpop.f32.mrb[0].mxu0
    %v2257 = vpop.f32.mrb[0].mxu0
    %v2258 = vadd.f32 0.0, %v2257
    %v2259 = vpop.f32.mrb[0].mxu0
    %2260 = vmatprep.mubr.bf16.mxu0 0
    %2261 = vmatmul.mubr.bf16.gmra.mrb[0].mxu0 %v2215
    %v2262 = vpop.f32.mrb[0].mxu0
    %v2263 = vadd.f32 0.0, %v2262
    %v2264 = vpop.f32.mrb[0].mxu0
    %v2265 = vpop.f32.mrb[0].mxu0
    %v2266 = vpop.f32.mrb[0].mxu0
    %2267 = vdwg.mxu0
    %v2269 = vsel %vm1872, %v2141, 0
    %v2272 = vsel %vm1872, %v2142, 0
    %v2275 = vsel %vm2159, %v1380, 0
    %2277 = vmatprep.subr.bf16.mxu0 0
    %2278 = vmatpush1.bf16.msra.mxu0 %v1379
    %2279 = vmatprep.subr.bf16.mxu0 0
    %2280 = vmatpush1.bf16.msra.mxu0 %v2275
    %2281 = vmatprep.subr.bf16.mxu0 0
    %2282 = vmatpush1.bf16.msra.mxu0 0
    %2283 = vmatprep.subr.bf16.mxu0 0
    %2284 = vmatpush1.bf16.msra.mxu0 0
    %2285 = vmatprep.subr.bf16.mxu0 0
    %2286 = vmatpush1.bf16.msra.mxu0 0
    %2287 = vmatprep.subr.bf16.mxu0 0
    %2288 = vmatpush1.bf16.msra.mxu0 0
    %2289 = vmatprep.subr.bf16.mxu0 0
    %2290 = vmatpush1.bf16.msra.mxu0 0
    %2291 = vmatprep.subr.bf16.mxu0 0
    %2292 = vmatpush1.bf16.msra.mxu0 0
    %2293 = vmatprep.subr.bf16.mxu0 0
    %2294 = vmatpush1.bf16.msra.mxu0 0
    %2295 = vmatprep.subr.bf16.mxu0 0
    %2296 = vmatpush1.bf16.msra.mxu0 0
    %2297 = vmatprep.subr.bf16.mxu0 0
    %2298 = vmatpush1.bf16.msra.mxu0 0
    %2299 = vmatprep.subr.bf16.mxu0 0
    %2300 = vmatpush1.bf16.msra.mxu0 0
    %2301 = vmatprep.subr.bf16.mxu0 0
    %2302 = vmatpush1.bf16.msra.mxu0 0
    %2303 = vmatprep.subr.bf16.mxu0 0
    %2304 = vmatpush1.bf16.msra.mxu0 0
    %2305 = vmatprep.subr.bf16.mxu0 0
    %2306 = vmatpush1.bf16.msra.mxu0 0
    %2307 = vmatprep.subr.bf16.mxu0 0
    %2308 = vmatpush1.bf16.msra.mxu0 0
    %2309 = vmatprep.mubr.bf16.mxu0 0
    %2310 = vmatmul.mubr.bf16.gmra.mrb[0].mxu0 %v2269
    %v2311 = vpop.f32.mrb[0].mxu0
    %v2312 = vadd.f32 0.0, %v2311
    %v2313 = vpop.f32.mrb[0].mxu0
    %v2314 = vpop.f32.mrb[0].mxu0
    %v2315 = vadd.f32 0.0, %v2314
    %v2316 = vpop.f32.mrb[0].mxu0
    %2317 = vmatprep.mubr.bf16.mxu0 0
    %2318 = vmatmul.mubr.bf16.gmra.mrb[0].mxu0 %v2272
    %v2319 = vpop.f32.mrb[0].mxu0
    %v2320 = vadd.f32 0.0, %v2319
    %v2321 = vpop.f32.mrb[0].mxu0
    %v2322 = vpop.f32.mrb[0].mxu0
    %v2323 = vpop.f32.mrb[0].mxu0
    %2324 = vdwg.mxu0
    %v2326 = vsel %vm1872, %v2143, 0
    %v2329 = vsel %vm1872, %v2144, 0
    %v2332 = vsel %vm2159, %v1382, 0
    %2334 = vmatprep.subr.bf16.mxu0 0
    %2335 = vmatpush1.bf16.msra.mxu0 %v1381
    %2336 = vmatprep.subr.bf16.mxu0 0
    %2337 = vmatpush1.bf16.msra.mxu0 %v2332
    %2338 = vmatprep.subr.bf16.mxu0 0
    %2339 = vmatpush1.bf16.msra.mxu0 0
    %2340 = vmatprep.subr.bf16.mxu0 0
    %2341 = vmatpush1.bf16.msra.mxu0 0
    %2342 = vmatprep.subr.bf16.mxu0 0
    %2343 = vmatpush1.bf16.msra.mxu0 0
    %2344 = vmatprep.subr.bf16.mxu0 0
    %2345 = vmatpush1.bf16.msra.mxu0 0
    %2346 = vmatprep.subr.bf16.mxu0 0
    %2347 = vmatpush1.bf16.msra.mxu0 0
    %2348 = vmatprep.subr.bf16.mxu0 0
    %2349 = vmatpush1.bf16.msra.mxu0 0
    %2350 = vmatprep.subr.bf16.mxu0 0
    %2351 = vmatpush1.bf16.msra.mxu0 0
    %2352 = vmatprep.subr.bf16.mxu0 0
    %2353 = vmatpush1.bf16.msra.mxu0 0
    %2354 = vmatprep.subr.bf16.mxu0 0
    %2355 = vmatpush1.bf16.msra.mxu0 0
    %2356 = vmatprep.subr.bf16.mxu0 0
    %2357 = vmatpush1.bf16.msra.mxu0 0
    %2358 = vmatprep.subr.bf16.mxu0 0
    %2359 = vmatpush1.bf16.msra.mxu0 0
    %2360 = vmatprep.subr.bf16.mxu0 0
    %2361 = vmatpush1.bf16.msra.mxu0 0
    %2362 = vmatprep.subr.bf16.mxu0 0
    %2363 = vmatpush1.bf16.msra.mxu0 0
    %2364 = vmatprep.subr.bf16.mxu0 0
    %2365 = vmatpush1.bf16.msra.mxu0 0
    %2366 = vmatprep.mubr.bf16.mxu0 0
    %2367 = vmatmul.mubr.bf16.gmra.mrb[0].mxu0 %v2326
    %v2368 = vpop.f32.mrb[0].mxu0
    %v2369 = vadd.f32 0.0, %v2368
    %v2370 = vpop.f32.mrb[0].mxu0
    %v2371 = vpop.f32.mrb[0].mxu0
    %v2372 = vadd.f32 0.0, %v2371
    %v2373 = vpop.f32.mrb[0].mxu0
    %2374 = vmatprep.mubr.bf16.mxu0 0
    %2375 = vmatmul.mubr.bf16.gmra.mrb[0].mxu0 %v2329
    %v2376 = vpop.f32.mrb[0].mxu0
    %v2377 = vadd.f32 0.0, %v2376
    %v2378 = vpop.f32.mrb[0].mxu0
    %v2379 = vpop.f32.mrb[0].mxu0
    %v2380 = vpop.f32.mrb[0].mxu0
    %2381 = vdwg.mxu0
    %v2383 = vsel %vm1872, %v2145, 0
    %v2386 = vsel %vm1872, %v2146, 0
    %v2389 = vsel %vm2159, %v1384, 0
    %2391 = vmatprep.subr.bf16.mxu0 0
    %2392 = vmatpush1.bf16.msra.mxu0 %v1383
    %2393 = vmatprep.subr.bf16.mxu0 0
    %2394 = vmatpush1.bf16.msra.mxu0 %v2389
    %2395 = vmatprep.subr.bf16.mxu0 0
    %2396 = vmatpush1.bf16.msra.mxu0 0
    %2397 = vmatprep.subr.bf16.mxu0 0
    %2398 = vmatpush1.bf16.msra.mxu0 0
    %2399 = vmatprep.subr.bf16.mxu0 0
    %2400 = vmatpush1.bf16.msra.mxu0 0
    %2401 = vmatprep.subr.bf16.mxu0 0
    %2402 = vmatpush1.bf16.msra.mxu0 0
    %2403 = vmatprep.subr.bf16.mxu0 0
    %2404 = vmatpush1.bf16.msra.mxu0 0
    %2405 = vmatprep.subr.bf16.mxu0 0
    %2406 = vmatpush1.bf16.msra.mxu0 0
    %2407 = vmatprep.subr.bf16.mxu0 0
    %2408 = vmatpush1.bf16.msra.mxu0 0
    %2409 = vmatprep.subr.bf16.mxu0 0
    %2410 = vmatpush1.bf16.msra.mxu0 0
    %2411 = vmatprep.subr.bf16.mxu0 0
    %2412 = vmatpush1.bf16.msra.mxu0 0
    %2413 = vmatprep.subr.bf16.mxu0 0
    %2414 = vmatpush1.bf16.msra.mxu0 0
    %2415 = vmatprep.subr.bf16.mxu0 0
    %2416 = vmatpush1.bf16.msra.mxu0 0
    %2417 = vmatprep.subr.bf16.mxu0 0
    %2418 = vmatpush1.bf16.msra.mxu0 0
    %2419 = vmatprep.subr.bf16.mxu0 0
    %2420 = vmatpush1.bf16.msra.mxu0 0
    %2421 = vmatprep.subr.bf16.mxu0 0
    %2422 = vmatpush1.bf16.msra.mxu0 0
    %2423 = vmatprep.mubr.bf16.mxu0 0
    %2424 = vmatmul.mubr.bf16.gmra.mrb[0].mxu0 %v2383
    %v2425 = vpop.f32.mrb[0].mxu0
    %v2426 = vadd.f32 0.0, %v2425
    %v2427 = vpop.f32.mrb[0].mxu0
    %v2428 = vpop.f32.mrb[0].mxu0
    %v2429 = vadd.f32 0.0, %v2428
    %v2430 = vpop.f32.mrb[0].mxu0
    %2431 = vmatprep.mubr.bf16.mxu0 0
    %2432 = vmatmul.mubr.bf16.gmra.mrb[0].mxu0 %v2386
    %v2433 = vpop.f32.mrb[0].mxu0
    %v2434 = vadd.f32 0.0, %v2433
    %v2435 = vpop.f32.mrb[0].mxu0
    %v2436 = vpop.f32.mrb[0].mxu0
    %v2437 = vpop.f32.mrb[0].mxu0
    %2438 = vdwg.mxu0
    %v2440 = vsel %vm1872, %v2147, 0
    %v2443 = vsel %vm1872, %v2148, 0
    %v2446 = vsel %vm2159, %v1386, 0
    %2448 = vmatprep.subr.bf16.mxu0 0
    %2449 = vmatpush1.bf16.msra.mxu0 %v1385
    %2450 = vmatprep.subr.bf16.mxu0 0
    %2451 = vmatpush1.bf16.msra.mxu0 %v2446
    %2452 = vmatprep.subr.bf16.mxu0 0
    %2453 = vmatpush1.bf16.msra.mxu0 0
    %2454 = vmatprep.subr.bf16.mxu0 0
    %2455 = vmatpush1.bf16.msra.mxu0 0
    %2456 = vmatprep.subr.bf16.mxu0 0
    %2457 = vmatpush1.bf16.msra.mxu0 0
    %2458 = vmatprep.subr.bf16.mxu0 0
    %2459 = vmatpush1.bf16.msra.mxu0 0
    %2460 = vmatprep.subr.bf16.mxu0 0
    %2461 = vmatpush1.bf16.msra.mxu0 0
    %2462 = vmatprep.subr.bf16.mxu0 0
    %2463 = vmatpush1.bf16.msra.mxu0 0
    %2464 = vmatprep.subr.bf16.mxu0 0
    %2465 = vmatpush1.bf16.msra.mxu0 0
    %2466 = vmatprep.subr.bf16.mxu0 0
    %2467 = vmatpush1.bf16.msra.mxu0 0
    %2468 = vmatprep.subr.bf16.mxu0 0
    %2469 = vmatpush1.bf16.msra.mxu0 0
    %2470 = vmatprep.subr.bf16.mxu0 0
    %2471 = vmatpush1.bf16.msra.mxu0 0
    %2472 = vmatprep.subr.bf16.mxu0 0
    %2473 = vmatpush1.bf16.msra.mxu0 0
    %2474 = vmatprep.subr.bf16.mxu0 0
    %2475 = vmatpush1.bf16.msra.mxu0 0
    %2476 = vmatprep.subr.bf16.mxu0 0
    %2477 = vmatpush1.bf16.msra.mxu0 0
    %2478 = vmatprep.subr.bf16.mxu0 0
    %2479 = vmatpush1.bf16.msra.mxu0 0
    %2480 = vmatprep.mubr.bf16.mxu0 0
    %2481 = vmatmul.mubr.bf16.gmra.mrb[0].mxu0 %v2440
    %v2482 = vpop.f32.mrb[0].mxu0
    %v2483 = vadd.f32 0.0, %v2482
    %v2484 = vpop.f32.mrb[0].mxu0
    %v2485 = vpop.f32.mrb[0].mxu0
    %v2486 = vadd.f32 0.0, %v2485
    %v2487 = vpop.f32.mrb[0].mxu0
    %2488 = vmatprep.mubr.bf16.mxu0 0
    %2489 = vmatmul.mubr.bf16.gmra.mrb[0].mxu0 %v2443
    %v2490 = vpop.f32.mrb[0].mxu0
    %v2491 = vadd.f32 0.0, %v2490
    %v2492 = vpop.f32.mrb[0].mxu0
    %v2493 = vpop.f32.mrb[0].mxu0
    %v2494 = vpop.f32.mrb[0].mxu0
    %2495 = vdwg.mxu0
    %v2497 = vsel %vm1872, %v2149, 0
    %v2500 = vsel %vm1872, %v2150, 0
    %v2503 = vsel %vm2159, %v1388, 0
    %2505 = vmatprep.subr.bf16.mxu0 0
    %2506 = vmatpush1.bf16.msra.mxu0 %v1387
    %2507 = vmatprep.subr.bf16.mxu0 0
    %2508 = vmatpush1.bf16.msra.mxu0 %v2503
    %2509 = vmatprep.subr.bf16.mxu0 0
    %2510 = vmatpush1.bf16.msra.mxu0 0
    %2511 = vmatprep.subr.bf16.mxu0 0
    %2512 = vmatpush1.bf16.msra.mxu0 0
    %2513 = vmatprep.subr.bf16.mxu0 0
    %2514 = vmatpush1.bf16.msra.mxu0 0
    %2515 = vmatprep.subr.bf16.mxu0 0
    %2516 = vmatpush1.bf16.msra.mxu0 0
    %2517 = vmatprep.subr.bf16.mxu0 0
    %2518 = vmatpush1.bf16.msra.mxu0 0
    %2519 = vmatprep.subr.bf16.mxu0 0
    %2520 = vmatpush1.bf16.msra.mxu0 0
    %2521 = vmatprep.subr.bf16.mxu0 0
    %2522 = vmatpush1.bf16.msra.mxu0 0
    %2523 = vmatprep.subr.bf16.mxu0 0
    %2524 = vmatpush1.bf16.msra.mxu0 0
    %2525 = vmatprep.subr.bf16.mxu0 0
    %2526 = vmatpush1.bf16.msra.mxu0 0
    %2527 = vmatprep.subr.bf16.mxu0 0
    %2528 = vmatpush1.bf16.msra.mxu0 0
    %2529 = vmatprep.subr.bf16.mxu0 0
    %2530 = vmatpush1.bf16.msra.mxu0 0
    %2531 = vmatprep.subr.bf16.mxu0 0
    %2532 = vmatpush1.bf16.msra.mxu0 0
    %2533 = vmatprep.subr.bf16.mxu0 0
    %2534 = vmatpush1.bf16.msra.mxu0 0
    %2535 = vmatprep.subr.bf16.mxu0 0
    %2536 = vmatpush1.bf16.msra.mxu0 0
    %2537 = vmatprep.mubr.bf16.mxu0 0
    %2538 = vmatmul.mubr.bf16.gmra.mrb[0].mxu0 %v2497
    %v2539 = vpop.f32.mrb[0].mxu0
    %v2540 = vadd.f32 0.0, %v2539
    %v2541 = vpop.f32.mrb[0].mxu0
    %v2542 = vpop.f32.mrb[0].mxu0
    %v2543 = vadd.f32 0.0, %v2542
    %v2544 = vpop.f32.mrb[0].mxu0
    %2545 = vmatprep.mubr.bf16.mxu0 0
    %2546 = vmatmul.mubr.bf16.gmra.mrb[0].mxu0 %v2500
    %v2547 = vpop.f32.mrb[0].mxu0
    %v2548 = vadd.f32 0.0, %v2547
    %v2549 = vpop.f32.mrb[0].mxu0
    %v2550 = vpop.f32.mrb[0].mxu0
    %v2551 = vpop.f32.mrb[0].mxu0
    %2552 = vdwg.mxu0
    %v2554 = vsel %vm1872, %v2151, 0
    %v2557 = vsel %vm1872, %v2152, 0
    %v2560 = vsel %vm2159, %v1390, 0
    %2562 = vmatprep.subr.bf16.mxu0 0
    %2563 = vmatpush1.bf16.msra.mxu0 %v1389
    %2564 = vmatprep.subr.bf16.mxu0 0
    %2565 = vmatpush1.bf16.msra.mxu0 %v2560
    %2566 = vmatprep.subr.bf16.mxu0 0
    %2567 = vmatpush1.bf16.msra.mxu0 0
    %2568 = vmatprep.subr.bf16.mxu0 0
    %2569 = vmatpush1.bf16.msra.mxu0 0
    %2570 = vmatprep.subr.bf16.mxu0 0
    %2571 = vmatpush1.bf16.msra.mxu0 0
    %2572 = vmatprep.subr.bf16.mxu0 0
    %2573 = vmatpush1.bf16.msra.mxu0 0
    %2574 = vmatprep.subr.bf16.mxu0 0
    %2575 = vmatpush1.bf16.msra.mxu0 0
    %2576 = vmatprep.subr.bf16.mxu0 0
    %2577 = vmatpush1.bf16.msra.mxu0 0
    %2578 = vmatprep.subr.bf16.mxu0 0
    %2579 = vmatpush1.bf16.msra.mxu0 0
    %2580 = vmatprep.subr.bf16.mxu0 0
    %2581 = vmatpush1.bf16.msra.mxu0 0
    %2582 = vmatprep.subr.bf16.mxu0 0
    %2583 = vmatpush1.bf16.msra.mxu0 0
    %2584 = vmatprep.subr.bf16.mxu0 0
    %2585 = vmatpush1.bf16.msra.mxu0 0
    %2586 = vmatprep.subr.bf16.mxu0 0
    %2587 = vmatpush1.bf16.msra.mxu0 0
    %2588 = vmatprep.subr.bf16.mxu0 0
    %2589 = vmatpush1.bf16.msra.mxu0 0
    %2590 = vmatprep.subr.bf16.mxu0 0
    %2591 = vmatpush1.bf16.msra.mxu0 0
    %2592 = vmatprep.subr.bf16.mxu0 0
    %2593 = vmatpush1.bf16.msra.mxu0 0
    %2594 = vmatprep.mubr.bf16.mxu0 0
    %2595 = vmatmul.mubr.bf16.gmra.mrb[0].mxu0 %v2554
    %v2596 = vpop.f32.mrb[0].mxu0
    %v2597 = vadd.f32 0.0, %v2596
    %v2598 = vpop.f32.mrb[0].mxu0
    %v2599 = vpop.f32.mrb[0].mxu0
    %v2600 = vadd.f32 0.0, %v2599
    %v2601 = vpop.f32.mrb[0].mxu0
    %2602 = vmatprep.mubr.bf16.mxu0 0
    %2603 = vmatmul.mubr.bf16.gmra.mrb[0].mxu0 %v2557
    %v2604 = vpop.f32.mrb[0].mxu0
    %v2605 = vadd.f32 0.0, %v2604
    %v2606 = vpop.f32.mrb[0].mxu0
    %v2607 = vpop.f32.mrb[0].mxu0
    %v2608 = vpop.f32.mrb[0].mxu0
    %2609 = vdwg.mxu0
    %v2610 = vpack.c.bf16 %v2201, %v2198
    %v2611 = vpack.c.bf16 %v2255, %v2206
    %v2612 = vpack.c.bf16 %v2263, %v2258
    %v2613 = vpack.c.bf16 %v2315, %v2312
    %v2614 = vpack.c.bf16 %v2369, %v2320
    %v2615 = vpack.c.bf16 %v2377, %v2372
    %v2616 = vpack.c.bf16 %v2429, %v2426
    %v2617 = vpack.c.bf16 %v2483, %v2434
    %v2618 = vpack.c.bf16 %v2491, %v2486
    %v2619 = vpack.c.bf16 %v2543, %v2540
    %v2620 = vpack.c.bf16 %v2597, %v2548
    %v2621 = vpack.c.bf16 %v2605, %v2600
    %v2622 = vld [vmem:[%s6] sm:$0xf]
    %v2623 = vld [vmem:[%s6 + $0x4] sm:$0xf]
    %v2624 = vld [vmem:[%s6 + $0x8] sm:$0xf]
    %v2625 = vld [vmem:[%s6 + $0xc] sm:$0xf]
    %v2626 = vld [vmem:[%s6 + $0x10] sm:$0xf]
    %v2627 = vld [vmem:[%s6 + $0x14] sm:$0xf]
    %v2628 = vld [vmem:[%s6 + $0x18] sm:$0xf]
    %v2629 = vld [vmem:[%s6 + $0x1c] sm:$0xf]
    %v2632 = vunpack.c.l.b16 %v2622
    %v2633 = vunpack.c.l.b16 %v2623
    %v2634 = vpack.c.b16 %v2633, %v2632
    %v2637 = vsel %vm1391, %v2610, 0
    %v2640 = vsel %vm1391, %v2611, 0
    %v2643 = vsel %vm1391, %v2612, 0
    %2645 = vmatprep.subr.bf16.mxu0 0
    %2646 = vmatpush1.bf16.msra.mxu0 %v2634
    %2647 = vmatprep.subr.bf16.mxu0 0
    %2648 = vmatpush1.bf16.msra.mxu0 0
    %2649 = vmatprep.subr.bf16.mxu0 0
    %2650 = vmatpush1.bf16.msra.mxu0 0
    %2651 = vmatprep.subr.bf16.mxu0 0
    %2652 = vmatpush1.bf16.msra.mxu0 0
    %2653 = vmatprep.subr.bf16.mxu0 0
    %2654 = vmatpush1.bf16.msra.mxu0 0
    %2655 = vmatprep.subr.bf16.mxu0 0
    %2656 = vmatpush1.bf16.msra.mxu0 0
    %2657 = vmatprep.subr.bf16.mxu0 0
    %2658 = vmatpush1.bf16.msra.mxu0 0
    %2659 = vmatprep.subr.bf16.mxu0 0
    %2660 = vmatpush1.bf16.msra.mxu0 0
    %2661 = vmatprep.subr.bf16.mxu0 0
    %2662 = vmatpush1.bf16.msra.mxu0 0
    %2663 = vmatprep.subr.bf16.mxu0 0
    %2664 = vmatpush1.bf16.msra.mxu0 0
    %2665 = vmatprep.subr.bf16.mxu0 0
    %2666 = vmatpush1.bf16.msra.mxu0 0
    %2667 = vmatprep.subr.bf16.mxu0 0
    %2668 = vmatpush1.bf16.msra.mxu0 0
    %2669 = vmatprep.subr.bf16.mxu0 0
    %2670 = vmatpush1.bf16.msra.mxu0 0
    %2671 = vmatprep.subr.bf16.mxu0 0
    %2672 = vmatpush1.bf16.msra.mxu0 0
    %2673 = vmatprep.subr.bf16.mxu0 0
    %2674 = vmatpush1.bf16.msra.mxu0 0
    %2675 = vmatprep.subr.bf16.mxu0 0
    %2676 = vmatpush1.bf16.msra.mxu0 0
    %2677 = vmatprep.mubr.bf16.mxu0 0
    %2678 = vmatmul.mubr.bf16.gmra.mrb[0].mxu0 %v2637
    %v2679 = vpop.f32.mrb[0].mxu0
    %v2680 = vadd.f32 0.0, %v2679
    %v2681 = vpop.f32.mrb[0].mxu0
    %v2682 = vpop.f32.mrb[0].mxu0
    %v2683 = vadd.f32 0.0, %v2682
    %v2684 = vpop.f32.mrb[0].mxu0
    %2685 = vmatprep.mubr.bf16.mxu0 0
    %2686 = vmatmul.mubr.bf16.gmra.mrb[0].mxu0 %v2640
    %v2687 = vpop.f32.mrb[0].mxu0
    %v2688 = vadd.f32 0.0, %v2687
    %v2689 = vpop.f32.mrb[0].mxu0
    %v2690 = vpop.f32.mrb[0].mxu0
    %v2691 = vadd.f32 0.0, %v2690
    %v2692 = vpop.f32.mrb[0].mxu0
    %2693 = vmatprep.mubr.bf16.mxu0 0
    %2694 = vmatmul.mubr.bf16.gmra.mrb[0].mxu0 %v2643
    %v2695 = vpop.f32.mrb[0].mxu0
    %v2696 = vadd.f32 0.0, %v2695
    %v2697 = vpop.f32.mrb[0].mxu0
    %v2698 = vpop.f32.mrb[0].mxu0
    %v2699 = vadd.f32 0.0, %v2698
    %v2700 = vpop.f32.mrb[0].mxu0
    %2701 = vdwg.mxu0
    %v2704 = vunpack.c.l.b16 %v2624
    %v2705 = vunpack.c.l.b16 %v2625
    %v2706 = vpack.c.b16 %v2705, %v2704
    %v2709 = vsel %vm1391, %v2613, 0
    %v2712 = vsel %vm1391, %v2614, 0
    %v2715 = vsel %vm1391, %v2615, 0
    %2717 = vmatprep.subr.bf16.mxu0 0
    %2718 = vmatpush1.bf16.msra.mxu0 %v2706
    %2719 = vmatprep.subr.bf16.mxu0 0
    %2720 = vmatpush1.bf16.msra.mxu0 0
    %2721 = vmatprep.subr.bf16.mxu0 0
    %2722 = vmatpush1.bf16.msra.mxu0 0
    %2723 = vmatprep.subr.bf16.mxu0 0
    %2724 = vmatpush1.bf16.msra.mxu0 0
    %2725 = vmatprep.subr.bf16.mxu0 0
    %2726 = vmatpush1.bf16.msra.mxu0 0
    %2727 = vmatprep.subr.bf16.mxu0 0
    %2728 = vmatpush1.bf16.msra.mxu0 0
    %2729 = vmatprep.subr.bf16.mxu0 0
    %2730 = vmatpush1.bf16.msra.mxu0 0
    %2731 = vmatprep.subr.bf16.mxu0 0
    %2732 = vmatpush1.bf16.msra.mxu0 0
    %2733 = vmatprep.subr.bf16.mxu0 0
    %2734 = vmatpush1.bf16.msra.mxu0 0
    %2735 = vmatprep.subr.bf16.mxu0 0
    %2736 = vmatpush1.bf16.msra.mxu0 0
    %2737 = vmatprep.subr.bf16.mxu0 0
    %2738 = vmatpush1.bf16.msra.mxu0 0
    %2739 = vmatprep.subr.bf16.mxu0 0
    %2740 = vmatpush1.bf16.msra.mxu0 0
    %2741 = vmatprep.subr.bf16.mxu0 0
    %2742 = vmatpush1.bf16.msra.mxu0 0
    %2743 = vmatprep.subr.bf16.mxu0 0
    %2744 = vmatpush1.bf16.msra.mxu0 0
    %2745 = vmatprep.subr.bf16.mxu0 0
    %2746 = vmatpush1.bf16.msra.mxu0 0
    %2747 = vmatprep.subr.bf16.mxu0 0
    %2748 = vmatpush1.bf16.msra.mxu0 0
    %2749 = vmatprep.mubr.bf16.mxu0 0
    %2750 = vmatmul.mubr.bf16.gmra.mrb[0].mxu0 %v2709
    %v2751 = vpop.f32.mrb[0].mxu0
    %v2752 = vadd.f32 0.0, %v2751
    %v2753 = vpop.f32.mrb[0].mxu0
    %v2754 = vpop.f32.mrb[0].mxu0
    %v2755 = vadd.f32 0.0, %v2754
    %v2756 = vpop.f32.mrb[0].mxu0
    %2757 = vmatprep.mubr.bf16.mxu0 0
    %2758 = vmatmul.mubr.bf16.gmra.mrb[0].mxu0 %v2712
    %v2759 = vpop.f32.mrb[0].mxu0
    %v2760 = vadd.f32 0.0, %v2759
    %v2761 = vpop.f32.mrb[0].mxu0
    %v2762 = vpop.f32.mrb[0].mxu0
    %v2763 = vadd.f32 0.0, %v2762
    %v2764 = vpop.f32.mrb[0].mxu0
    %2765 = vmatprep.mubr.bf16.mxu0 0
    %2766 = vmatmul.mubr.bf16.gmra.mrb[0].mxu0 %v2715
    %v2767 = vpop.f32.mrb[0].mxu0
    %v2768 = vadd.f32 0.0, %v2767
    %v2769 = vpop.f32.mrb[0].mxu0
    %v2770 = vpop.f32.mrb[0].mxu0
    %v2771 = vadd.f32 0.0, %v2770
    %v2772 = vpop.f32.mrb[0].mxu0
    %2773 = vdwg.mxu0
    %v2776 = vunpack.c.l.b16 %v2626
    %v2777 = vunpack.c.l.b16 %v2627
    %v2778 = vpack.c.b16 %v2777, %v2776
    %v2781 = vsel %vm1391, %v2616, 0
    %v2784 = vsel %vm1391, %v2617, 0
    %v2787 = vsel %vm1391, %v2618, 0
    %2789 = vmatprep.subr.bf16.mxu0 0
    %2790 = vmatpush1.bf16.msra.mxu0 %v2778
    %2791 = vmatprep.subr.bf16.mxu0 0
    %2792 = vmatpush1.bf16.msra.mxu0 0
    %2793 = vmatprep.subr.bf16.mxu0 0
    %2794 = vmatpush1.bf16.msra.mxu0 0
    %2795 = vmatprep.subr.bf16.mxu0 0
    %2796 = vmatpush1.bf16.msra.mxu0 0
    %2797 = vmatprep.subr.bf16.mxu0 0
    %2798 = vmatpush1.bf16.msra.mxu0 0
    %2799 = vmatprep.subr.bf16.mxu0 0
    %2800 = vmatpush1.bf16.msra.mxu0 0
    %2801 = vmatprep.subr.bf16.mxu0 0
    %2802 = vmatpush1.bf16.msra.mxu0 0
    %2803 = vmatprep.subr.bf16.mxu0 0
    %2804 = vmatpush1.bf16.msra.mxu0 0
    %2805 = vmatprep.subr.bf16.mxu0 0
    %2806 = vmatpush1.bf16.msra.mxu0 0
    %2807 = vmatprep.subr.bf16.mxu0 0
    %2808 = vmatpush1.bf16.msra.mxu0 0
    %2809 = vmatprep.subr.bf16.mxu0 0
    %2810 = vmatpush1.bf16.msra.mxu0 0
    %2811 = vmatprep.subr.bf16.mxu0 0
    %2812 = vmatpush1.bf16.msra.mxu0 0
    %2813 = vmatprep.subr.bf16.mxu0 0
    %2814 = vmatpush1.bf16.msra.mxu0 0
    %2815 = vmatprep.subr.bf16.mxu0 0
    %2816 = vmatpush1.bf16.msra.mxu0 0
    %2817 = vmatprep.subr.bf16.mxu0 0
    %2818 = vmatpush1.bf16.msra.mxu0 0
    %2819 = vmatprep.subr.bf16.mxu0 0
    %2820 = vmatpush1.bf16.msra.mxu0 0
    %2821 = vmatprep.mubr.bf16.mxu0 0
    %2822 = vmatmul.mubr.bf16.gmra.mrb[0].mxu0 %v2781
    %v2823 = vpop.f32.mrb[0].mxu0
    %v2824 = vadd.f32 0.0, %v2823
    %v2825 = vpop.f32.mrb[0].mxu0
    %v2826 = vpop.f32.mrb[0].mxu0
    %v2827 = vadd.f32 0.0, %v2826
    %v2828 = vpop.f32.mrb[0].mxu0
    %2829 = vmatprep.mubr.bf16.mxu0 0
    %2830 = vmatmul.mubr.bf16.gmra.mrb[0].mxu0 %v2784
    %v2831 = vpop.f32.mrb[0].mxu0
    %v2832 = vadd.f32 0.0, %v2831
    %v2833 = vpop.f32.mrb[0].mxu0
    %v2834 = vpop.f32.mrb[0].mxu0
    %v2835 = vadd.f32 0.0, %v2834
    %v2836 = vpop.f32.mrb[0].mxu0
    %2837 = vmatprep.mubr.bf16.mxu0 0
    %2838 = vmatmul.mubr.bf16.gmra.mrb[0].mxu0 %v2787
    %v2839 = vpop.f32.mrb[0].mxu0
    %v2840 = vadd.f32 0.0, %v2839
    %v2841 = vpop.f32.mrb[0].mxu0
    %v2842 = vpop.f32.mrb[0].mxu0
    %v2843 = vadd.f32 0.0, %v2842
    %v2844 = vpop.f32.mrb[0].mxu0
    %2845 = vdwg.mxu0
    %v2848 = vunpack.c.l.b16 %v2628
    %v2849 = vunpack.c.l.b16 %v2629
    %v2850 = vpack.c.b16 %v2849, %v2848
    %v2853 = vsel %vm1391, %v2619, 0
    %v2856 = vsel %vm1391, %v2620, 0
    %v2859 = vsel %vm1391, %v2621, 0
    %2861 = vmatprep.subr.bf16.mxu0 0
    %2862 = vmatpush1.bf16.msra.mxu0 %v2850
    %2863 = vmatprep.subr.bf16.mxu0 0
    %2864 = vmatpush1.bf16.msra.mxu0 0
    %2865 = vmatprep.subr.bf16.mxu0 0
    %2866 = vmatpush1.bf16.msra.mxu0 0
    %2867 = vmatprep.subr.bf16.mxu0 0
    %2868 = vmatpush1.bf16.msra.mxu0 0
    %2869 = vmatprep.subr.bf16.mxu0 0
    %2870 = vmatpush1.bf16.msra.mxu0 0
    %2871 = vmatprep.subr.bf16.mxu0 0
    %2872 = vmatpush1.bf16.msra.mxu0 0
    %2873 = vmatprep.subr.bf16.mxu0 0
    %2874 = vmatpush1.bf16.msra.mxu0 0
    %2875 = vmatprep.subr.bf16.mxu0 0
    %2876 = vmatpush1.bf16.msra.mxu0 0
    %2877 = vmatprep.subr.bf16.mxu0 0
    %2878 = vmatpush1.bf16.msra.mxu0 0
    %2879 = vmatprep.subr.bf16.mxu0 0
    %2880 = vmatpush1.bf16.msra.mxu0 0
    %2881 = vmatprep.subr.bf16.mxu0 0
    %2882 = vmatpush1.bf16.msra.mxu0 0
    %2883 = vmatprep.subr.bf16.mxu0 0
    %2884 = vmatpush1.bf16.msra.mxu0 0
    %2885 = vmatprep.subr.bf16.mxu0 0
    %2886 = vmatpush1.bf16.msra.mxu0 0
    %2887 = vmatprep.subr.bf16.mxu0 0
    %2888 = vmatpush1.bf16.msra.mxu0 0
    %2889 = vmatprep.subr.bf16.mxu0 0
    %2890 = vmatpush1.bf16.msra.mxu0 0
    %2891 = vmatprep.subr.bf16.mxu0 0
    %2892 = vmatpush1.bf16.msra.mxu0 0
    %2893 = vmatprep.mubr.bf16.mxu0 0
    %2894 = vmatmul.mubr.bf16.gmra.mrb[0].mxu0 %v2853
    %v2895 = vpop.f32.mrb[0].mxu0
    %v2896 = vadd.f32 0.0, %v2895
    %v2897 = vpop.f32.mrb[0].mxu0
    %v2898 = vpop.f32.mrb[0].mxu0
    %v2899 = vadd.f32 0.0, %v2898
    %v2900 = vpop.f32.mrb[0].mxu0
    %2901 = vmatprep.mubr.bf16.mxu0 0
    %2902 = vmatmul.mubr.bf16.gmra.mrb[0].mxu0 %v2856
    %v2903 = vpop.f32.mrb[0].mxu0
    %v2904 = vadd.f32 0.0, %v2903
    %v2905 = vpop.f32.mrb[0].mxu0
    %v2906 = vpop.f32.mrb[0].mxu0
    %v2907 = vadd.f32 0.0, %v2906
    %v2908 = vpop.f32.mrb[0].mxu0
    %2909 = vmatprep.mubr.bf16.mxu0 0
    %2910 = vmatmul.mubr.bf16.gmra.mrb[0].mxu0 %v2859
    %v2911 = vpop.f32.mrb[0].mxu0
    %v2912 = vadd.f32 0.0, %v2911
    %v2913 = vpop.f32.mrb[0].mxu0
    %v2914 = vpop.f32.mrb[0].mxu0
    %v2915 = vadd.f32 0.0, %v2914
    %v2916 = vpop.f32.mrb[0].mxu0
    %2917 = vdwg.mxu0
    %v2918 = vsel %vm163, %v2680, 0.0
    %v2919 = vsel %vm163, %v2752, 0.0
    %v2920 = vadd.f32 %v2918, %v2919
    %v2921 = vsel %vm163, %v2824, 0.0
    %v2922 = vadd.f32 %v2920, %v2921
    %v2923 = vsel %vm163, %v2896, 0.0
    %v2924 = vadd.f32 %v2922, %v2923
    %v2925 = vsel %vm163, %v2683, 0.0
    %v2926 = vsel %vm163, %v2755, 0.0
    %v2927 = vadd.f32 %v2925, %v2926
    %v2928 = vsel %vm163, %v2827, 0.0
    %v2929 = vadd.f32 %v2927, %v2928
    %v2930 = vsel %vm163, %v2899, 0.0
    %v2931 = vadd.f32 %v2929, %v2930
    %v2932 = vsel %vm163, %v2688, 0.0
    %v2933 = vsel %vm163, %v2760, 0.0
    %v2934 = vadd.f32 %v2932, %v2933
    %v2935 = vsel %vm163, %v2832, 0.0
    %v2936 = vadd.f32 %v2934, %v2935
    %v2937 = vsel %vm163, %v2904, 0.0
    %v2938 = vadd.f32 %v2936, %v2937
    %v2939 = vsel %vm163, %v2691, 0.0
    %v2940 = vsel %vm163, %v2763, 0.0
    %v2941 = vadd.f32 %v2939, %v2940
    %v2942 = vsel %vm163, %v2835, 0.0
    %v2943 = vadd.f32 %v2941, %v2942
    %v2944 = vsel %vm163, %v2907, 0.0
    %v2945 = vadd.f32 %v2943, %v2944
    %v2946 = vsel %vm163, %v2696, 0.0
    %v2947 = vsel %vm163, %v2768, 0.0
    %v2948 = vadd.f32 %v2946, %v2947
    %v2949 = vsel %vm163, %v2840, 0.0
    %v2950 = vadd.f32 %v2948, %v2949
    %v2951 = vsel %vm163, %v2912, 0.0
    %v2952 = vadd.f32 %v2950, %v2951
    %v2953 = vsel %vm163, %v2699, 0.0
    %v2954 = vsel %vm163, %v2771, 0.0
    %v2955 = vadd.f32 %v2953, %v2954
    %v2956 = vsel %vm163, %v2843, 0.0
    %v2957 = vadd.f32 %v2955, %v2956
    %v2958 = vsel %vm163, %v2915, 0.0
    %v2959 = vadd.f32 %v2957, %v2958
    %v2960 = vadd.f32 %v152, %v2924
    %v2961 = vadd.f32 %v153, %v2931
    %v2962 = vadd.f32 %v154, %v2938
    %v2963 = vadd.f32 %v155, %v2945
    %v2964 = vadd.f32 %v156, %v2952
    %v2965 = vadd.f32 %v157, %v2959
    %v2966 = vlaneseq
    %v2967 = vshrl.u32 %v2966, 7
    %v2968 = vsub.s32 2, %v2967
    %v2969 = vrot.slane %v162, %v2968
    %v2970 = vadd.f32 %v2960, %v2969
    %v2971 = vadd.f32 %v2961, %v2969
    %v2972 = vadd.f32 %v2962, %v2969
    %v2973 = vadd.f32 %v2963, %v2969
    %v2974 = vadd.f32 %v2964, %v2969
    %v2975 = vadd.f32 %v2965, %v2969
    %v2976 = vsel %vm163, %v2970, 0.0
    %2977 = vadd.xlane.f32.xlu0 %v2976
    %v2978 = vpop.xlane.xlu0 %2977
    %v2979 = vsel %vm163, %v2971, 0.0
    %2980 = vadd.xlane.f32.xlu0 %v2979
    %v2981 = vpop.xlane.xlu0 %2980
    %v2982 = vsel %vm163, %v2972, 0.0
    %2983 = vadd.xlane.f32.xlu0 %v2982
    %v2984 = vpop.xlane.xlu0 %2983
    %v2985 = vsel %vm163, %v2973, 0.0
    %2986 = vadd.xlane.f32.xlu0 %v2985
    %v2987 = vpop.xlane.xlu0 %2986
    %v2988 = vsel %vm163, %v2974, 0.0
    %2989 = vadd.xlane.f32.xlu0 %v2988
    %v2990 = vpop.xlane.xlu0 %2989
    %v2991 = vsel %vm163, %v2975, 0.0
    %2992 = vadd.xlane.f32.xlu0 %v2991
    %v2993 = vpop.xlane.xlu0 %2992
    %v2994 = vmul.f32 %v2978, %v182
    %v2995 = vmul.f32 %v2981, %v182
    %v2996 = vmul.f32 %v2984, %v182
    %v2997 = vmul.f32 %v2987, %v182
    %v2998 = vmul.f32 %v2990, %v182
    %v2999 = vmul.f32 %v2993, %v182
    %v3000 = vsub.f32 %v2970, %v2994
    %v3001 = vsub.f32 %v2971, %v2995
    %v3002 = vsub.f32 %v2972, %v2996
    %v3003 = vsub.f32 %v2973, %v2997
    %v3004 = vsub.f32 %v2974, %v2998
    %v3005 = vsub.f32 %v2975, %v2999
    %v3006 = vmul.f32 %v3000, %v3000
    %v3007 = vmul.f32 %v3001, %v3001
    %v3008 = vmul.f32 %v3002, %v3002
    %v3009 = vmul.f32 %v3003, %v3003
    %v3010 = vmul.f32 %v3004, %v3004
    %v3011 = vmul.f32 %v3005, %v3005
    %v3012 = vsel %vm163, %v3006, 0.0
    %3013 = vadd.xlane.f32.xlu0 %v3012
    %v3014 = vpop.xlane.xlu0 %3013
    %v3015 = vsel %vm163, %v3007, 0.0
    %3016 = vadd.xlane.f32.xlu0 %v3015
    %v3017 = vpop.xlane.xlu0 %3016
    %v3018 = vsel %vm163, %v3008, 0.0
    %3019 = vadd.xlane.f32.xlu0 %v3018
    %v3020 = vpop.xlane.xlu0 %3019
    %v3021 = vsel %vm163, %v3009, 0.0
    %3022 = vadd.xlane.f32.xlu0 %v3021
    %v3023 = vpop.xlane.xlu0 %3022
    %v3024 = vsel %vm163, %v3010, 0.0
    %3025 = vadd.xlane.f32.xlu0 %v3024
    %v3026 = vpop.xlane.xlu0 %3025
    %v3027 = vsel %vm163, %v3011, 0.0
    %3028 = vadd.xlane.f32.xlu0 %v3027
    %v3029 = vpop.xlane.xlu0 %3028
    %v3030 = vmul.f32 %v3014, %v182
    %v3031 = vmul.f32 %v3017, %v182
    %v3032 = vmul.f32 %v3020, %v182
    %v3033 = vmul.f32 %v3023, %v182
    %v3034 = vmul.f32 %v3026, %v182
    %v3035 = vmul.f32 %v3029, %v182
    %v3036 = vadd.f32 %v3030, 1e-05
    %v3037 = vadd.f32 %v3031, 1e-05
    %v3038 = vadd.f32 %v3032, 1e-05
    %v3039 = vadd.f32 %v3033, 1e-05
    %v3040 = vadd.f32 %v3034, 1e-05
    %v3041 = vadd.f32 %v3035, 1e-05
    %v3042 = vrsqrt.pop %v3036
    %v3043 = vrsqrt.pop %v3037
    %v3044 = vrsqrt.pop %v3038
    %v3045 = vrsqrt.pop %v3039
    %v3046 = vrsqrt.pop %v3040
    %v3047 = vrsqrt.pop %v3041
    %v3048 = vmul.f32 %v3000, %v3042
    %v3049 = vmul.f32 %v3001, %v3043
    %v3050 = vmul.f32 %v3002, %v3044
    %v3051 = vmul.f32 %v3003, %v3045
    %v3052 = vmul.f32 %v3004, %v3046
    %v3053 = vmul.f32 %v3005, %v3047
    %v3054 = vlaneseq
    %v3055 = vshrl.u32 %v3054, 7
    %v3056 = vsub.s32 3, %v3055
    %v3057 = vrot.slane %v162, %v3056
    %v3058 = vmul.f32 %v3048, %v3057
    %v3059 = vmul.f32 %v3049, %v3057
    %v3060 = vmul.f32 %v3050, %v3057
    %v3061 = vmul.f32 %v3051, %v3057
    %v3062 = vmul.f32 %v3052, %v3057
    %v3063 = vmul.f32 %v3053, %v3057
    %v3064 = vlaneseq
    %v3065 = vshrl.u32 %v3064, 7
    %v3066 = vsub.s32 4, %v3065
    %v3067 = vrot.slane %v162, %v3066
    %v3068 = vadd.f32 %v3058, %v3067
    %v3069 = vadd.f32 %v3059, %v3067
    %v3070 = vadd.f32 %v3060, %v3067
    %v3071 = vadd.f32 %v3061, %v3067
    %v3072 = vadd.f32 %v3062, %v3067
    %v3073 = vadd.f32 %v3063, %v3067
    %v3074 = vpack.c.bf16 %v3069, %v3068
    %v3075 = vpack.c.bf16 %v3071, %v3070
    %v3076 = vpack.c.bf16 %v3073, %v3072
    %v3077 = vld [vmem:[%s8] sm:$0xf]
    %v3078 = vld [vmem:[%s8 + $0x4] sm:$0xf]
    %v3079 = vld [vmem:[%s8 + $0x8] sm:$0xf]
    %v3080 = vld [vmem:[%s8 + $0xc] sm:$0xf]
    %v3081 = vld [vmem:[%s8 + $0x10] sm:$0xf]
    %v3082 = vld [vmem:[%s8 + $0x14] sm:$0xf]
    %v3083 = vld [vmem:[%s8 + $0x18] sm:$0xf]
    %v3084 = vld [vmem:[%s8 + $0x1c] sm:$0xf]
    %v3085 = vlaneseq
    %v3086 = vshrl.u32 %v3085, 7
    %v3087 = vsub.s32 5, %v3086
    %v3088 = vrot.slane %v162, %v3087
    %v3097 = vunpack.c.l.b16 %v3077
    %v3098 = vunpack.c.l.b16 %v3078
    %v3099 = vunpack.c.l.b16 %v3079
    %v3100 = vunpack.c.l.b16 %v3080
    %v3101 = vunpack.c.l.b16 %v3081
    %v3102 = vunpack.c.l.b16 %v3082
    %v3103 = vunpack.c.l.b16 %v3083
    %v3104 = vunpack.c.l.b16 %v3084
    %v3105 = vpack.c.b16 %v3098, %v3097
    %v3106 = vpack.c.b16 %v3100, %v3099
    %v3107 = vpack.c.b16 %v3102, %v3101
    %v3108 = vpack.c.b16 %v3104, %v3103
    %v3114 = vsel %vm163, %v3074, 0
    %v3117 = vsel %vm163, %v3075, 0
    %v3120 = vsel %vm163, %v3076, 0
    %3122 = vmatprep.subr.bf16.mxu0 0
    %3123 = vmatpush1.bf16.msra.mxu0 %v3105
    %3124 = vmatprep.subr.bf16.mxu0 0
    %3125 = vmatpush1.bf16.msra.mxu0 %v3106
    %3126 = vmatprep.subr.bf16.mxu0 0
    %3127 = vmatpush1.bf16.msra.mxu0 %v3107
    %3128 = vmatprep.subr.bf16.mxu0 0
    %3129 = vmatpush1.bf16.msra.mxu0 %v3108
    %3130 = vmatprep.subr.bf16.mxu0 0
    %3131 = vmatpush1.bf16.msra.mxu0 0
    %3132 = vmatprep.subr.bf16.mxu0 0
    %3133 = vmatpush1.bf16.msra.mxu0 0
    %3134 = vmatprep.subr.bf16.mxu0 0
    %3135 = vmatpush1.bf16.msra.mxu0 0
    %3136 = vmatprep.subr.bf16.mxu0 0
    %3137 = vmatpush1.bf16.msra.mxu0 0
    %3138 = vmatprep.subr.bf16.mxu0 0
    %3139 = vmatpush1.bf16.msra.mxu0 0
    %3140 = vmatprep.subr.bf16.mxu0 0
    %3141 = vmatpush1.bf16.msra.mxu0 0
    %3142 = vmatprep.subr.bf16.mxu0 0
    %3143 = vmatpush1.bf16.msra.mxu0 0
    %3144 = vmatprep.subr.bf16.mxu0 0
    %3145 = vmatpush1.bf16.msra.mxu0 0
    %3146 = vmatprep.subr.bf16.mxu0 0
    %3147 = vmatpush1.bf16.msra.mxu0 0
    %3148 = vmatprep.subr.bf16.mxu0 0
    %3149 = vmatpush1.bf16.msra.mxu0 0
    %3150 = vmatprep.subr.bf16.mxu0 0
    %3151 = vmatpush1.bf16.msra.mxu0 0
    %3152 = vmatprep.subr.bf16.mxu0 0
    %3153 = vmatpush1.bf16.msra.mxu0 0
    %3154 = vmatprep.mubr.bf16.mxu0 0
    %3155 = vmatmul.mubr.bf16.gmra.mrb[0].mxu0 %v3114
    %v3156 = vpop.f32.mrb[0].mxu0
    %v3157 = vadd.f32 %v3088, %v3156
    %v3158 = vpop.f32.mrb[0].mxu0
    %v3159 = vpop.f32.mrb[0].mxu0
    %v3160 = vadd.f32 %v3088, %v3159
    %v3161 = vpop.f32.mrb[0].mxu0
    %3162 = vmatprep.mubr.bf16.mxu0 0
    %3163 = vmatmul.mubr.bf16.gmra.mrb[0].mxu0 %v3117
    %v3164 = vpop.f32.mrb[0].mxu0
    %v3165 = vadd.f32 %v3088, %v3164
    %v3166 = vpop.f32.mrb[0].mxu0
    %v3167 = vpop.f32.mrb[0].mxu0
    %v3168 = vadd.f32 %v3088, %v3167
    %v3169 = vpop.f32.mrb[0].mxu0
    %3170 = vmatprep.mubr.bf16.mxu0 0
    %3171 = vmatmul.mubr.bf16.gmra.mrb[0].mxu0 %v3120
    %v3172 = vpop.f32.mrb[0].mxu0
    %v3173 = vadd.f32 %v3088, %v3172
    %v3174 = vpop.f32.mrb[0].mxu0
    %v3175 = vpop.f32.mrb[0].mxu0
    %v3176 = vadd.f32 %v3088, %v3175
    %v3177 = vpop.f32.mrb[0].mxu0
    %3178 = vdwg.mxu0
    %v3179 = vmul.f32 %v3157, 0.5
    %v3180 = vmul.f32 %v3160, 0.5
    %v3181 = vmul.f32 %v3165, 0.5
    %v3182 = vmul.f32 %v3168, 0.5
    %v3183 = vmul.f32 %v3173, 0.5
    %v3184 = vmul.f32 %v3176, 0.5
    %v3185 = vmul.f32 %v3157, 0.70710677
    %v3186 = vmul.f32 %v3160, 0.70710677
    %v3187 = vmul.f32 %v3165, 0.70710677
    %v3188 = vmul.f32 %v3168, 0.70710677
    %v3189 = vmul.f32 %v3173, 0.70710677
    %v3190 = vmul.f32 %v3176, 0.70710677
    %vm3191 = vcmp.ge.f32.partialorder %v3185, 0.0
    %vm3192 = vcmp.ge.f32.partialorder %v3186, 0.0
    %vm3193 = vcmp.ge.f32.partialorder %v3187, 0.0
    %vm3194 = vcmp.ge.f32.partialorder %v3188, 0.0
    %vm3195 = vcmp.ge.f32.partialorder %v3189, 0.0
    %vm3196 = vcmp.ge.f32.partialorder %v3190, 0.0
    %v3197 = vsel %vm3191, 1.0, -1.0
    %v3198 = vsel %vm3192, 1.0, -1.0
    %v3199 = vsel %vm3193, 1.0, -1.0
    %v3200 = vsel %vm3194, 1.0, -1.0
    %v3201 = vsel %vm3195, 1.0, -1.0
    %v3202 = vsel %vm3196, 1.0, -1.0
    %v3203 = vand.u32 2147483647, %v3185
    %v3204 = vand.u32 2147483647, %v3186
    %v3205 = vand.u32 2147483647, %v3187
    %v3206 = vand.u32 2147483647, %v3188
    %v3207 = vand.u32 2147483647, %v3189
    %v3208 = vand.u32 2147483647, %v3190
    %v3209 = vmul.f32 %v3203, 0.3275911
    %v3210 = vmul.f32 %v3204, 0.3275911
    %v3211 = vmul.f32 %v3205, 0.3275911
    %v3212 = vmul.f32 %v3206, 0.3275911
    %v3213 = vmul.f32 %v3207, 0.3275911
    %v3214 = vmul.f32 %v3208, 0.3275911
    %v3215 = vadd.f32 %v3209, 1.0
    %v3216 = vadd.f32 %v3210, 1.0
    %v3217 = vadd.f32 %v3211, 1.0
    %v3218 = vadd.f32 %v3212, 1.0
    %v3219 = vadd.f32 %v3213, 1.0
    %v3220 = vadd.f32 %v3214, 1.0
    %v3221 = vrcp.pop %v3215
    %v3222 = vmul.f32 1.0, %v3221
    %v3223 = vrcp.pop %v3216
    %v3224 = vmul.f32 1.0, %v3223
    %v3225 = vrcp.pop %v3217
    %v3226 = vmul.f32 1.0, %v3225
    %v3227 = vrcp.pop %v3218
    %v3228 = vmul.f32 1.0, %v3227
    %v3229 = vrcp.pop %v3219
    %v3230 = vmul.f32 1.0, %v3229
    %v3231 = vrcp.pop %v3220
    %v3232 = vmul.f32 1.0, %v3231
    %v3233 = vmul.f32 %v3222, 1.0614054
    %v3234 = vmul.f32 %v3224, 1.0614054
    %v3235 = vmul.f32 %v3226, 1.0614054
    %v3236 = vmul.f32 %v3228, 1.0614054
    %v3237 = vmul.f32 %v3230, 1.0614054
    %v3238 = vmul.f32 %v3232, 1.0614054
    %v3239 = vadd.f32 %v3233, -1.4531521
    %v3240 = vadd.f32 %v3234, -1.4531521
    %v3241 = vadd.f32 %v3235, -1.4531521
    %v3242 = vadd.f32 %v3236, -1.4531521
    %v3243 = vadd.f32 %v3237, -1.4531521
    %v3244 = vadd.f32 %v3238, -1.4531521
    %v3245 = vmul.f32 %v3239, %v3222
    %v3246 = vmul.f32 %v3240, %v3224
    %v3247 = vmul.f32 %v3241, %v3226
    %v3248 = vmul.f32 %v3242, %v3228
    %v3249 = vmul.f32 %v3243, %v3230
    %v3250 = vmul.f32 %v3244, %v3232
    %v3251 = vadd.f32 %v3245, 1.4214138
    %v3252 = vadd.f32 %v3246, 1.4214138
    %v3253 = vadd.f32 %v3247, 1.4214138
    %v3254 = vadd.f32 %v3248, 1.4214138
    %v3255 = vadd.f32 %v3249, 1.4214138
    %v3256 = vadd.f32 %v3250, 1.4214138
    %v3257 = vmul.f32 %v3251, %v3222
    %v3258 = vmul.f32 %v3252, %v3224
    %v3259 = vmul.f32 %v3253, %v3226
    %v3260 = vmul.f32 %v3254, %v3228
    %v3261 = vmul.f32 %v3255, %v3230
    %v3262 = vmul.f32 %v3256, %v3232
    %v3263 = vadd.f32 %v3257, -0.28449672
    %v3264 = vadd.f32 %v3258, -0.28449672
    %v3265 = vadd.f32 %v3259, -0.28449672
    %v3266 = vadd.f32 %v3260, -0.28449672
    %v3267 = vadd.f32 %v3261, -0.28449672
    %v3268 = vadd.f32 %v3262, -0.28449672
    %v3269 = vmul.f32 %v3263, %v3222
    %v3270 = vmul.f32 %v3264, %v3224
    %v3271 = vmul.f32 %v3265, %v3226
    %v3272 = vmul.f32 %v3266, %v3228
    %v3273 = vmul.f32 %v3267, %v3230
    %v3274 = vmul.f32 %v3268, %v3232
    %v3275 = vadd.f32 %v3269, 0.2548296
    %v3276 = vadd.f32 %v3270, 0.2548296
    %v3277 = vadd.f32 %v3271, 0.2548296
    %v3278 = vadd.f32 %v3272, 0.2548296
    %v3279 = vadd.f32 %v3273, 0.2548296
    %v3280 = vadd.f32 %v3274, 0.2548296
    %v3281 = vmul.f32 %v3275, %v3222
    %v3282 = vmul.f32 %v3276, %v3224
    %v3283 = vmul.f32 %v3277, %v3226
    %v3284 = vmul.f32 %v3278, %v3228
    %v3285 = vmul.f32 %v3279, %v3230
    %v3286 = vmul.f32 %v3280, %v3232
    %v3287 = vsub.f32 0.0, %v3203
    %v3288 = vsub.f32 0.0, %v3204
    %v3289 = vsub.f32 0.0, %v3205
    %v3290 = vsub.f32 0.0, %v3206
    %v3291 = vsub.f32 0.0, %v3207
    %v3292 = vsub.f32 0.0, %v3208
    %v3293 = vmul.f32 %v3287, %v3203
    %v3294 = vmul.f32 %v3288, %v3204
    %v3295 = vmul.f32 %v3289, %v3205
    %v3296 = vmul.f32 %v3290, %v3206
    %v3297 = vmul.f32 %v3291, %v3207
    %v3298 = vmul.f32 %v3292, %v3208
    %v3299 = vmul.f32 %v3293, 1.442695
    %v3300 = vpow.pop %v3299
    %v3301 = vmul.f32 %v3294, 1.442695
    %v3302 = vpow.pop %v3301
    %v3303 = vmul.f32 %v3295, 1.442695
    %v3304 = vpow.pop %v3303
    %v3305 = vmul.f32 %v3296, 1.442695
    %v3306 = vpow.pop %v3305
    %v3307 = vmul.f32 %v3297, 1.442695
    %v3308 = vpow.pop %v3307
    %v3309 = vmul.f32 %v3298, 1.442695
    %v3310 = vpow.pop %v3309
    %v3311 = vmul.f32 %v3281, %v3300
    %v3312 = vmul.f32 %v3282, %v3302
    %v3313 = vmul.f32 %v3283, %v3304
    %v3314 = vmul.f32 %v3284, %v3306
    %v3315 = vmul.f32 %v3285, %v3308
    %v3316 = vmul.f32 %v3286, %v3310
    %v3317 = vsub.f32 1.0, %v3311
    %v3318 = vsub.f32 1.0, %v3312
    %v3319 = vsub.f32 1.0, %v3313
    %v3320 = vsub.f32 1.0, %v3314
    %v3321 = vsub.f32 1.0, %v3315
    %v3322 = vsub.f32 1.0, %v3316
    %v3323 = vmul.f32 %v3197, %v3317
    %v3324 = vmul.f32 %v3198, %v3318
    %v3325 = vmul.f32 %v3199, %v3319
    %v3326 = vmul.f32 %v3200, %v3320
    %v3327 = vmul.f32 %v3201, %v3321
    %v3328 = vmul.f32 %v3202, %v3322
    %v3329 = vadd.f32 %v3323, 1.0
    %v3330 = vadd.f32 %v3324, 1.0
    %v3331 = vadd.f32 %v3325, 1.0
    %v3332 = vadd.f32 %v3326, 1.0
    %v3333 = vadd.f32 %v3327, 1.0
    %v3334 = vadd.f32 %v3328, 1.0
    %v3335 = vmul.f32 %v3179, %v3329
    %v3336 = vmul.f32 %v3180, %v3330
    %v3337 = vmul.f32 %v3181, %v3331
    %v3338 = vmul.f32 %v3182, %v3332
    %v3339 = vmul.f32 %v3183, %v3333
    %v3340 = vmul.f32 %v3184, %v3334
    %v3341 = vpack.c.bf16 %v3336, %v3335
    %v3342 = vpack.c.bf16 %v3338, %v3337
    %v3343 = vpack.c.bf16 %v3340, %v3339
    %v3344 = vld [vmem:[%s9] sm:$0xf]
    %v3345 = vld [vmem:[%s9 + $0x4] sm:$0xf]
    %v3346 = vld [vmem:[%s9 + $0x8] sm:$0xf]
    %v3347 = vld [vmem:[%s9 + $0xc] sm:$0xf]
    %v3348 = vld [vmem:[%s9 + $0x10] sm:$0xf]
    %v3349 = vld [vmem:[%s9 + $0x14] sm:$0xf]
    %v3350 = vld [vmem:[%s9 + $0x18] sm:$0xf]
    %v3351 = vld [vmem:[%s9 + $0x1c] sm:$0xf]
    %v3360 = vunpack.c.l.b16 %v3344
    %v3361 = vunpack.c.l.b16 %v3345
    %v3362 = vunpack.c.l.b16 %v3346
    %v3363 = vunpack.c.l.b16 %v3347
    %v3364 = vunpack.c.l.b16 %v3348
    %v3365 = vunpack.c.l.b16 %v3349
    %v3366 = vunpack.c.l.b16 %v3350
    %v3367 = vunpack.c.l.b16 %v3351
    %v3368 = vpack.c.b16 %v3361, %v3360
    %v3369 = vpack.c.b16 %v3363, %v3362
    %v3370 = vpack.c.b16 %v3365, %v3364
    %v3371 = vpack.c.b16 %v3367, %v3366
    %v3377 = vsel %vm163, %v3341, 0
    %v3380 = vsel %vm163, %v3342, 0
    %v3383 = vsel %vm163, %v3343, 0
    %3385 = vmatprep.subr.bf16.mxu0 0
    %3386 = vmatpush1.bf16.msra.mxu0 %v3368
    %3387 = vmatprep.subr.bf16.mxu0 0
    %3388 = vmatpush1.bf16.msra.mxu0 %v3369
    %3389 = vmatprep.subr.bf16.mxu0 0
    %3390 = vmatpush1.bf16.msra.mxu0 %v3370
    %3391 = vmatprep.subr.bf16.mxu0 0
    %3392 = vmatpush1.bf16.msra.mxu0 %v3371
    %3393 = vmatprep.subr.bf16.mxu0 0
    %3394 = vmatpush1.bf16.msra.mxu0 0
    %3395 = vmatprep.subr.bf16.mxu0 0
    %3396 = vmatpush1.bf16.msra.mxu0 0
    %3397 = vmatprep.subr.bf16.mxu0 0
    %3398 = vmatpush1.bf16.msra.mxu0 0
    %3399 = vmatprep.subr.bf16.mxu0 0
    %3400 = vmatpush1.bf16.msra.mxu0 0
    %3401 = vmatprep.subr.bf16.mxu0 0
    %3402 = vmatpush1.bf16.msra.mxu0 0
    %3403 = vmatprep.subr.bf16.mxu0 0
    %3404 = vmatpush1.bf16.msra.mxu0 0
    %3405 = vmatprep.subr.bf16.mxu0 0
    %3406 = vmatpush1.bf16.msra.mxu0 0
    %3407 = vmatprep.subr.bf16.mxu0 0
    %3408 = vmatpush1.bf16.msra.mxu0 0
    %3409 = vmatprep.subr.bf16.mxu0 0
    %3410 = vmatpush1.bf16.msra.mxu0 0
    %3411 = vmatprep.subr.bf16.mxu0 0
    %3412 = vmatpush1.bf16.msra.mxu0 0
    %3413 = vmatprep.subr.bf16.mxu0 0
    %3414 = vmatpush1.bf16.msra.mxu0 0
    %3415 = vmatprep.subr.bf16.mxu0 0
    %3416 = vmatpush1.bf16.msra.mxu0 0
    %3417 = vmatprep.mubr.bf16.mxu0 0
    %3418 = vmatmul.mubr.bf16.gmra.mrb[0].mxu0 %v3377
    %v3419 = vpop.f32.mrb[0].mxu0
    %v3420 = vadd.f32 0.0, %v3419
    %v3421 = vpop.f32.mrb[0].mxu0
    %v3422 = vpop.f32.mrb[0].mxu0
    %v3423 = vadd.f32 0.0, %v3422
    %v3424 = vpop.f32.mrb[0].mxu0
    %3425 = vmatprep.mubr.bf16.mxu0 0
    %3426 = vmatmul.mubr.bf16.gmra.mrb[0].mxu0 %v3380
    %v3427 = vpop.f32.mrb[0].mxu0
    %v3428 = vadd.f32 0.0, %v3427
    %v3429 = vpop.f32.mrb[0].mxu0
    %v3430 = vpop.f32.mrb[0].mxu0
    %v3431 = vadd.f32 0.0, %v3430
    %v3432 = vpop.f32.mrb[0].mxu0
    %3433 = vmatprep.mubr.bf16.mxu0 0
    %3434 = vmatmul.mubr.bf16.gmra.mrb[0].mxu0 %v3383
    %v3435 = vpop.f32.mrb[0].mxu0
    %v3436 = vadd.f32 0.0, %v3435
    %v3437 = vpop.f32.mrb[0].mxu0
    %v3438 = vpop.f32.mrb[0].mxu0
    %v3439 = vadd.f32 0.0, %v3438
    %v3440 = vpop.f32.mrb[0].mxu0
    %3441 = vdwg.mxu0
    %v3442 = vadd.f32 %v2970, %v3420
    %v3443 = vadd.f32 %v2971, %v3423
    %v3444 = vadd.f32 %v2972, %v3428
    %v3445 = vadd.f32 %v2973, %v3431
    %v3446 = vadd.f32 %v2974, %v3436
    %v3447 = vadd.f32 %v2975, %v3439
    %v3448 = vlaneseq
    %v3449 = vshrl.u32 %v3448, 7
    %v3450 = vsub.s32 6, %v3449
    %v3451 = vrot.slane %v162, %v3450
    %v3452 = vadd.f32 %v3442, %v3451
    %v3453 = vadd.f32 %v3443, %v3451
    %v3454 = vadd.f32 %v3444, %v3451
    %v3455 = vadd.f32 %v3445, %v3451
    %v3456 = vadd.f32 %v3446, %v3451
    %v3457 = vadd.f32 %v3447, %v3451
    %s3458 = scalar_lea.vmem %s7, 8
    %v3459 = vld [vmem:[%s3458] sm:$0xff]
    %v3460 = vsel %vm163, %v3452, 0.0
    %3461 = vadd.xlane.f32.xlu0 %v3460
    %v3462 = vpop.xlane.xlu0 %3461
    %v3463 = vsel %vm163, %v3453, 0.0
    %3464 = vadd.xlane.f32.xlu0 %v3463
    %v3465 = vpop.xlane.xlu0 %3464
    %v3466 = vsel %vm163, %v3454, 0.0
    %3467 = vadd.xlane.f32.xlu0 %v3466
    %v3468 = vpop.xlane.xlu0 %3467
    %v3469 = vsel %vm163, %v3455, 0.0
    %3470 = vadd.xlane.f32.xlu0 %v3469
    %v3471 = vpop.xlane.xlu0 %3470
    %v3472 = vsel %vm163, %v3456, 0.0
    %3473 = vadd.xlane.f32.xlu0 %v3472
    %v3474 = vpop.xlane.xlu0 %3473
    %v3475 = vsel %vm163, %v3457, 0.0
    %3476 = vadd.xlane.f32.xlu0 %v3475
    %v3477 = vpop.xlane.xlu0 %3476
    %v3478 = vmul.f32 %v3462, %v182
    %v3479 = vmul.f32 %v3465, %v182
    %v3480 = vmul.f32 %v3468, %v182
    %v3481 = vmul.f32 %v3471, %v182
    %v3482 = vmul.f32 %v3474, %v182
    %v3483 = vmul.f32 %v3477, %v182
    %v3484 = vsub.f32 %v3452, %v3478
    %v3485 = vsub.f32 %v3453, %v3479
    %v3486 = vsub.f32 %v3454, %v3480
    %v3487 = vsub.f32 %v3455, %v3481
    %v3488 = vsub.f32 %v3456, %v3482
    %v3489 = vsub.f32 %v3457, %v3483
    %v3490 = vmul.f32 %v3484, %v3484
    %v3491 = vmul.f32 %v3485, %v3485
    %v3492 = vmul.f32 %v3486, %v3486
    %v3493 = vmul.f32 %v3487, %v3487
    %v3494 = vmul.f32 %v3488, %v3488
    %v3495 = vmul.f32 %v3489, %v3489
    %v3496 = vsel %vm163, %v3490, 0.0
    %3497 = vadd.xlane.f32.xlu0 %v3496
    %v3498 = vpop.xlane.xlu0 %3497
    %v3499 = vsel %vm163, %v3491, 0.0
    %3500 = vadd.xlane.f32.xlu0 %v3499
    %v3501 = vpop.xlane.xlu0 %3500
    %v3502 = vsel %vm163, %v3492, 0.0
    %3503 = vadd.xlane.f32.xlu0 %v3502
    %v3504 = vpop.xlane.xlu0 %3503
    %v3505 = vsel %vm163, %v3493, 0.0
    %3506 = vadd.xlane.f32.xlu0 %v3505
    %v3507 = vpop.xlane.xlu0 %3506
    %v3508 = vsel %vm163, %v3494, 0.0
    %3509 = vadd.xlane.f32.xlu0 %v3508
    %v3510 = vpop.xlane.xlu0 %3509
    %v3511 = vsel %vm163, %v3495, 0.0
    %3512 = vadd.xlane.f32.xlu0 %v3511
    %v3513 = vpop.xlane.xlu0 %3512
    %v3514 = vmul.f32 %v3498, %v182
    %v3515 = vmul.f32 %v3501, %v182
    %v3516 = vmul.f32 %v3504, %v182
    %v3517 = vmul.f32 %v3507, %v182
    %v3518 = vmul.f32 %v3510, %v182
    %v3519 = vmul.f32 %v3513, %v182
    %v3520 = vadd.f32 %v3514, 1e-05
    %v3521 = vadd.f32 %v3515, 1e-05
    %v3522 = vadd.f32 %v3516, 1e-05
    %v3523 = vadd.f32 %v3517, 1e-05
    %v3524 = vadd.f32 %v3518, 1e-05
    %v3525 = vadd.f32 %v3519, 1e-05
    %v3526 = vrsqrt.pop %v3520
    %v3527 = vrsqrt.pop %v3521
    %v3528 = vrsqrt.pop %v3522
    %v3529 = vrsqrt.pop %v3523
    %v3530 = vrsqrt.pop %v3524
    %v3531 = vrsqrt.pop %v3525
    %v3532 = vmul.f32 %v3484, %v3526
    %v3533 = vmul.f32 %v3485, %v3527
    %v3534 = vmul.f32 %v3486, %v3528
    %v3535 = vmul.f32 %v3487, %v3529
    %v3536 = vmul.f32 %v3488, %v3530
    %v3537 = vmul.f32 %v3489, %v3531
    %v3538 = vlaneseq
    %v3539 = vshrl.u32 %v3538, 7
    %v3540 = vsub.s32 0, %v3539
    %v3541 = vrot.slane %v3459, %v3540
    %v3542 = vmul.f32 %v3532, %v3541
    %v3543 = vmul.f32 %v3533, %v3541
    %v3544 = vmul.f32 %v3534, %v3541
    %v3545 = vmul.f32 %v3535, %v3541
    %v3546 = vmul.f32 %v3536, %v3541
    %v3547 = vmul.f32 %v3537, %v3541
    %v3548 = vlaneseq
    %v3549 = vshrl.u32 %v3548, 7
    %v3550 = vsub.s32 1, %v3549
    %v3551 = vrot.slane %v3459, %v3550
    %v3552 = vadd.f32 %v3542, %v3551
    %v3553 = vadd.f32 %v3543, %v3551
    %v3554 = vadd.f32 %v3544, %v3551
    %v3555 = vadd.f32 %v3545, %v3551
    %v3556 = vadd.f32 %v3546, %v3551
    %v3557 = vadd.f32 %v3547, %v3551
    %v3558 = vpack.c.bf16 %v3553, %v3552
    %v3559 = vpack.c.bf16 %v3555, %v3554
    %v3560 = vpack.c.bf16 %v3557, %v3556
    %s3561 = scalar_lea.vmem %s3, 128
    %v3562 = vld [vmem:[%s3561] sm:$0xf]
    %v3563 = vld [vmem:[%s3561 + $0x4] sm:$0xf]
    %v3564 = vld [vmem:[%s3561 + $0x8] sm:$0xf]
    %v3565 = vld [vmem:[%s3561 + $0xc] sm:$0xf]
    %v3566 = vld [vmem:[%s3561 + $0x10] sm:$0xf]
    %v3567 = vld [vmem:[%s3561 + $0x14] sm:$0xf]
    %v3568 = vld [vmem:[%s3561 + $0x18] sm:$0xf]
    %v3569 = vld [vmem:[%s3561 + $0x1c] sm:$0xf]
    %v3570 = vld [vmem:[%s3561 + $0x20] sm:$0xf]
    %v3571 = vld [vmem:[%s3561 + $0x24] sm:$0xf]
    %v3572 = vld [vmem:[%s3561 + $0x28] sm:$0xf]
    %v3573 = vld [vmem:[%s3561 + $0x2c] sm:$0xf]
    %v3574 = vld [vmem:[%s3561 + $0x30] sm:$0xf]
    %v3575 = vld [vmem:[%s3561 + $0x34] sm:$0xf]
    %v3576 = vld [vmem:[%s3561 + $0x38] sm:$0xf]
    %v3577 = vld [vmem:[%s3561 + $0x3c] sm:$0xf]
    %v3578 = vld [vmem:[%s3561 + $0x40] sm:$0xf]
    %v3579 = vld [vmem:[%s3561 + $0x44] sm:$0xf]
    %v3580 = vld [vmem:[%s3561 + $0x48] sm:$0xf]
    %v3581 = vld [vmem:[%s3561 + $0x4c] sm:$0xf]
    %v3582 = vld [vmem:[%s3561 + $0x50] sm:$0xf]
    %v3583 = vld [vmem:[%s3561 + $0x54] sm:$0xf]
    %v3584 = vld [vmem:[%s3561 + $0x58] sm:$0xf]
    %v3585 = vld [vmem:[%s3561 + $0x5c] sm:$0xf]
    %v3586 = vld [vmem:[%s3561 + $0x60] sm:$0xf]
    %v3587 = vld [vmem:[%s3561 + $0x64] sm:$0xf]
    %v3588 = vld [vmem:[%s3561 + $0x68] sm:$0xf]
    %v3589 = vld [vmem:[%s3561 + $0x6c] sm:$0xf]
    %v3590 = vld [vmem:[%s3561 + $0x70] sm:$0xf]
    %v3591 = vld [vmem:[%s3561 + $0x74] sm:$0xf]
    %v3592 = vld [vmem:[%s3561 + $0x78] sm:$0xf]
    %v3593 = vld [vmem:[%s3561 + $0x7c] sm:$0xf]
    %v3602 = vunpack.c.l.b16 %v3562
    %v3603 = vunpack.c.l.b16 %v3563
    %v3604 = vunpack.c.l.b16 %v3564
    %v3605 = vunpack.c.l.b16 %v3565
    %v3606 = vunpack.c.l.b16 %v3566
    %v3607 = vunpack.c.l.b16 %v3567
    %v3608 = vunpack.c.l.b16 %v3568
    %v3609 = vunpack.c.l.b16 %v3569
    %v3610 = vpack.c.b16 %v3603, %v3602
    %v3611 = vpack.c.b16 %v3605, %v3604
    %v3612 = vpack.c.b16 %v3607, %v3606
    %v3613 = vpack.c.b16 %v3609, %v3608
    %v3619 = vsel %vm163, %v3558, 0
    %v3622 = vsel %vm163, %v3559, 0
    %v3625 = vsel %vm163, %v3560, 0
    %3627 = vmatprep.subr.bf16.mxu0 0
    %3628 = vmatpush1.bf16.msra.mxu0 %v3610
    %3629 = vmatprep.subr.bf16.mxu0 0
    %3630 = vmatpush1.bf16.msra.mxu0 %v3611
    %3631 = vmatprep.subr.bf16.mxu0 0
    %3632 = vmatpush1.bf16.msra.mxu0 %v3612
    %3633 = vmatprep.subr.bf16.mxu0 0
    %3634 = vmatpush1.bf16.msra.mxu0 %v3613
    %3635 = vmatprep.subr.bf16.mxu0 0
    %3636 = vmatpush1.bf16.msra.mxu0 0
    %3637 = vmatprep.subr.bf16.mxu0 0
    %3638 = vmatpush1.bf16.msra.mxu0 0
    %3639 = vmatprep.subr.bf16.mxu0 0
    %3640 = vmatpush1.bf16.msra.mxu0 0
    %3641 = vmatprep.subr.bf16.mxu0 0
    %3642 = vmatpush1.bf16.msra.mxu0 0
    %3643 = vmatprep.subr.bf16.mxu0 0
    %3644 = vmatpush1.bf16.msra.mxu0 0
    %3645 = vmatprep.subr.bf16.mxu0 0
    %3646 = vmatpush1.bf16.msra.mxu0 0
    %3647 = vmatprep.subr.bf16.mxu0 0
    %3648 = vmatpush1.bf16.msra.mxu0 0
    %3649 = vmatprep.subr.bf16.mxu0 0
    %3650 = vmatpush1.bf16.msra.mxu0 0
    %3651 = vmatprep.subr.bf16.mxu0 0
    %3652 = vmatpush1.bf16.msra.mxu0 0
    %3653 = vmatprep.subr.bf16.mxu0 0
    %3654 = vmatpush1.bf16.msra.mxu0 0
    %3655 = vmatprep.subr.bf16.mxu0 0
    %3656 = vmatpush1.bf16.msra.mxu0 0
    %3657 = vmatprep.subr.bf16.mxu0 0
    %3658 = vmatpush1.bf16.msra.mxu0 0
    %3659 = vmatprep.mubr.bf16.mxu0 0
    %3660 = vmatmul.mubr.bf16.gmra.mrb[0].mxu0 %v3619
    %v3661 = vpop.f32.mrb[0].mxu0
    %v3662 = vadd.f32 0.0, %v3661
    %v3663 = vpop.f32.mrb[0].mxu0
    %v3664 = vpop.f32.mrb[0].mxu0
    %v3665 = vadd.f32 0.0, %v3664
    %v3666 = vpop.f32.mrb[0].mxu0
    %3667 = vmatprep.mubr.bf16.mxu0 0
    %3668 = vmatmul.mubr.bf16.gmra.mrb[0].mxu0 %v3622
    %v3669 = vpop.f32.mrb[0].mxu0
    %v3670 = vadd.f32 0.0, %v3669
    %v3671 = vpop.f32.mrb[0].mxu0
    %v3672 = vpop.f32.mrb[0].mxu0
    %v3673 = vadd.f32 0.0, %v3672
    %v3674 = vpop.f32.mrb[0].mxu0
    %3675 = vmatprep.mubr.bf16.mxu0 0
    %3676 = vmatmul.mubr.bf16.gmra.mrb[0].mxu0 %v3625
    %v3677 = vpop.f32.mrb[0].mxu0
    %v3678 = vadd.f32 0.0, %v3677
    %v3679 = vpop.f32.mrb[0].mxu0
    %v3680 = vpop.f32.mrb[0].mxu0
    %v3681 = vadd.f32 0.0, %v3680
    %v3682 = vpop.f32.mrb[0].mxu0
    %3683 = vdwg.mxu0
    %v3692 = vunpack.c.l.b16 %v3570
    %v3693 = vunpack.c.l.b16 %v3571
    %v3694 = vunpack.c.l.b16 %v3572
    %v3695 = vunpack.c.l.b16 %v3573
    %v3696 = vunpack.c.l.b16 %v3574
    %v3697 = vunpack.c.l.b16 %v3575
    %v3698 = vunpack.c.l.b16 %v3576
    %v3699 = vunpack.c.l.b16 %v3577
    %v3700 = vpack.c.b16 %v3693, %v3692
    %v3701 = vpack.c.b16 %v3695, %v3694
    %v3702 = vpack.c.b16 %v3697, %v3696
    %v3703 = vpack.c.b16 %v3699, %v3698
    %3708 = vmatprep.subr.bf16.mxu0 0
    %3709 = vmatpush1.bf16.msra.mxu0 %v3700
    %3710 = vmatprep.subr.bf16.mxu0 0
    %3711 = vmatpush1.bf16.msra.mxu0 %v3701
    %3712 = vmatprep.subr.bf16.mxu0 0
    %3713 = vmatpush1.bf16.msra.mxu0 %v3702
    %3714 = vmatprep.subr.bf16.mxu0 0
    %3715 = vmatpush1.bf16.msra.mxu0 %v3703
    %3716 = vmatprep.subr.bf16.mxu0 0
    %3717 = vmatpush1.bf16.msra.mxu0 0
    %3718 = vmatprep.subr.bf16.mxu0 0
    %3719 = vmatpush1.bf16.msra.mxu0 0
    %3720 = vmatprep.subr.bf16.mxu0 0
    %3721 = vmatpush1.bf16.msra.mxu0 0
    %3722 = vmatprep.subr.bf16.mxu0 0
    %3723 = vmatpush1.bf16.msra.mxu0 0
    %3724 = vmatprep.subr.bf16.mxu0 0
    %3725 = vmatpush1.bf16.msra.mxu0 0
    %3726 = vmatprep.subr.bf16.mxu0 0
    %3727 = vmatpush1.bf16.msra.mxu0 0
    %3728 = vmatprep.subr.bf16.mxu0 0
    %3729 = vmatpush1.bf16.msra.mxu0 0
    %3730 = vmatprep.subr.bf16.mxu0 0
    %3731 = vmatpush1.bf16.msra.mxu0 0
    %3732 = vmatprep.subr.bf16.mxu0 0
    %3733 = vmatpush1.bf16.msra.mxu0 0
    %3734 = vmatprep.subr.bf16.mxu0 0
    %3735 = vmatpush1.bf16.msra.mxu0 0
    %3736 = vmatprep.subr.bf16.mxu0 0
    %3737 = vmatpush1.bf16.msra.mxu0 0
    %3738 = vmatprep.subr.bf16.mxu0 0
    %3739 = vmatpush1.bf16.msra.mxu0 0
    %3740 = vmatprep.mubr.bf16.mxu0 0
    %3741 = vmatmul.mubr.bf16.gmra.mrb[0].mxu0 %v3619
    %v3742 = vpop.f32.mrb[0].mxu0
    %v3743 = vadd.f32 0.0, %v3742
    %v3744 = vpop.f32.mrb[0].mxu0
    %v3745 = vpop.f32.mrb[0].mxu0
    %v3746 = vadd.f32 0.0, %v3745
    %v3747 = vpop.f32.mrb[0].mxu0
    %3748 = vmatprep.mubr.bf16.mxu0 0
    %3749 = vmatmul.mubr.bf16.gmra.mrb[0].mxu0 %v3622
    %v3750 = vpop.f32.mrb[0].mxu0
    %v3751 = vadd.f32 0.0, %v3750
    %v3752 = vpop.f32.mrb[0].mxu0
    %v3753 = vpop.f32.mrb[0].mxu0
    %v3754 = vadd.f32 0.0, %v3753
    %v3755 = vpop.f32.mrb[0].mxu0
    %3756 = vmatprep.mubr.bf16.mxu0 0
    %3757 = vmatmul.mubr.bf16.gmra.mrb[0].mxu0 %v3625
    %v3758 = vpop.f32.mrb[0].mxu0
    %v3759 = vadd.f32 0.0, %v3758
    %v3760 = vpop.f32.mrb[0].mxu0
    %v3761 = vpop.f32.mrb[0].mxu0
    %v3762 = vadd.f32 0.0, %v3761
    %v3763 = vpop.f32.mrb[0].mxu0
    %3764 = vdwg.mxu0
    %v3773 = vunpack.c.l.b16 %v3578
    %v3774 = vunpack.c.l.b16 %v3579
    %v3775 = vunpack.c.l.b16 %v3580
    %v3776 = vunpack.c.l.b16 %v3581
    %v3777 = vunpack.c.l.b16 %v3582
    %v3778 = vunpack.c.l.b16 %v3583
    %v3779 = vunpack.c.l.b16 %v3584
    %v3780 = vunpack.c.l.b16 %v3585
    %v3781 = vpack.c.b16 %v3774, %v3773
    %v3782 = vpack.c.b16 %v3776, %v3775
    %v3783 = vpack.c.b16 %v3778, %v3777
    %v3784 = vpack.c.b16 %v3780, %v3779
    %3789 = vmatprep.subr.bf16.mxu0 0
    %3790 = vmatpush1.bf16.msra.mxu0 %v3781
    %3791 = vmatprep.subr.bf16.mxu0 0
    %3792 = vmatpush1.bf16.msra.mxu0 %v3782
    %3793 = vmatprep.subr.bf16.mxu0 0
    %3794 = vmatpush1.bf16.msra.mxu0 %v3783
    %3795 = vmatprep.subr.bf16.mxu0 0
    %3796 = vmatpush1.bf16.msra.mxu0 %v3784
    %3797 = vmatprep.subr.bf16.mxu0 0
    %3798 = vmatpush1.bf16.msra.mxu0 0
    %3799 = vmatprep.subr.bf16.mxu0 0
    %3800 = vmatpush1.bf16.msra.mxu0 0
    %3801 = vmatprep.subr.bf16.mxu0 0
    %3802 = vmatpush1.bf16.msra.mxu0 0
    %3803 = vmatprep.subr.bf16.mxu0 0
    %3804 = vmatpush1.bf16.msra.mxu0 0
    %3805 = vmatprep.subr.bf16.mxu0 0
    %3806 = vmatpush1.bf16.msra.mxu0 0
    %3807 = vmatprep.subr.bf16.mxu0 0
    %3808 = vmatpush1.bf16.msra.mxu0 0
    %3809 = vmatprep.subr.bf16.mxu0 0
    %3810 = vmatpush1.bf16.msra.mxu0 0
    %3811 = vmatprep.subr.bf16.mxu0 0
    %3812 = vmatpush1.bf16.msra.mxu0 0
    %3813 = vmatprep.subr.bf16.mxu0 0
    %3814 = vmatpush1.bf16.msra.mxu0 0
    %3815 = vmatprep.subr.bf16.mxu0 0
    %3816 = vmatpush1.bf16.msra.mxu0 0
    %3817 = vmatprep.subr.bf16.mxu0 0
    %3818 = vmatpush1.bf16.msra.mxu0 0
    %3819 = vmatprep.subr.bf16.mxu0 0
    %3820 = vmatpush1.bf16.msra.mxu0 0
    %3821 = vmatprep.mubr.bf16.mxu0 0
    %3822 = vmatmul.mubr.bf16.gmra.mrb[0].mxu0 %v3619
    %v3823 = vpop.f32.mrb[0].mxu0
    %v3824 = vadd.f32 0.0, %v3823
    %v3825 = vpop.f32.mrb[0].mxu0
    %v3826 = vpop.f32.mrb[0].mxu0
    %v3827 = vadd.f32 0.0, %v3826
    %v3828 = vpop.f32.mrb[0].mxu0
    %3829 = vmatprep.mubr.bf16.mxu0 0
    %3830 = vmatmul.mubr.bf16.gmra.mrb[0].mxu0 %v3622
    %v3831 = vpop.f32.mrb[0].mxu0
    %v3832 = vadd.f32 0.0, %v3831
    %v3833 = vpop.f32.mrb[0].mxu0
    %v3834 = vpop.f32.mrb[0].mxu0
    %v3835 = vadd.f32 0.0, %v3834
    %v3836 = vpop.f32.mrb[0].mxu0
    %3837 = vmatprep.mubr.bf16.mxu0 0
    %3838 = vmatmul.mubr.bf16.gmra.mrb[0].mxu0 %v3625
    %v3839 = vpop.f32.mrb[0].mxu0
    %v3840 = vadd.f32 0.0, %v3839
    %v3841 = vpop.f32.mrb[0].mxu0
    %v3842 = vpop.f32.mrb[0].mxu0
    %v3843 = vadd.f32 0.0, %v3842
    %v3844 = vpop.f32.mrb[0].mxu0
    %3845 = vdwg.mxu0
    %v3854 = vunpack.c.l.b16 %v3586
    %v3855 = vunpack.c.l.b16 %v3587
    %v3856 = vunpack.c.l.b16 %v3588
    %v3857 = vunpack.c.l.b16 %v3589
    %v3858 = vunpack.c.l.b16 %v3590
    %v3859 = vunpack.c.l.b16 %v3591
    %v3860 = vunpack.c.l.b16 %v3592
    %v3861 = vunpack.c.l.b16 %v3593
    %v3862 = vpack.c.b16 %v3855, %v3854
    %v3863 = vpack.c.b16 %v3857, %v3856
    %v3864 = vpack.c.b16 %v3859, %v3858
    %v3865 = vpack.c.b16 %v3861, %v3860
    %3870 = vmatprep.subr.bf16.mxu0 0
    %3871 = vmatpush1.bf16.msra.mxu0 %v3862
    %3872 = vmatprep.subr.bf16.mxu0 0
    %3873 = vmatpush1.bf16.msra.mxu0 %v3863
    %3874 = vmatprep.subr.bf16.mxu0 0
    %3875 = vmatpush1.bf16.msra.mxu0 %v3864
    %3876 = vmatprep.subr.bf16.mxu0 0
    %3877 = vmatpush1.bf16.msra.mxu0 %v3865
    %3878 = vmatprep.subr.bf16.mxu0 0
    %3879 = vmatpush1.bf16.msra.mxu0 0
    %3880 = vmatprep.subr.bf16.mxu0 0
    %3881 = vmatpush1.bf16.msra.mxu0 0
    %3882 = vmatprep.subr.bf16.mxu0 0
    %3883 = vmatpush1.bf16.msra.mxu0 0
    %3884 = vmatprep.subr.bf16.mxu0 0
    %3885 = vmatpush1.bf16.msra.mxu0 0
    %3886 = vmatprep.subr.bf16.mxu0 0
    %3887 = vmatpush1.bf16.msra.mxu0 0
    %3888 = vmatprep.subr.bf16.mxu0 0
    %3889 = vmatpush1.bf16.msra.mxu0 0
    %3890 = vmatprep.subr.bf16.mxu0 0
    %3891 = vmatpush1.bf16.msra.mxu0 0
    %3892 = vmatprep.subr.bf16.mxu0 0
    %3893 = vmatpush1.bf16.msra.mxu0 0
    %3894 = vmatprep.subr.bf16.mxu0 0
    %3895 = vmatpush1.bf16.msra.mxu0 0
    %3896 = vmatprep.subr.bf16.mxu0 0
    %3897 = vmatpush1.bf16.msra.mxu0 0
    %3898 = vmatprep.subr.bf16.mxu0 0
    %3899 = vmatpush1.bf16.msra.mxu0 0
    %3900 = vmatprep.subr.bf16.mxu0 0
    %3901 = vmatpush1.bf16.msra.mxu0 0
    %3902 = vmatprep.mubr.bf16.mxu0 0
    %3903 = vmatmul.mubr.bf16.gmra.mrb[0].mxu0 %v3619
    %v3904 = vpop.f32.mrb[0].mxu0
    %v3905 = vadd.f32 0.0, %v3904
    %v3906 = vpop.f32.mrb[0].mxu0
    %v3907 = vpop.f32.mrb[0].mxu0
    %v3908 = vadd.f32 0.0, %v3907
    %v3909 = vpop.f32.mrb[0].mxu0
    %3910 = vmatprep.mubr.bf16.mxu0 0
    %3911 = vmatmul.mubr.bf16.gmra.mrb[0].mxu0 %v3622
    %v3912 = vpop.f32.mrb[0].mxu0
    %v3913 = vadd.f32 0.0, %v3912
    %v3914 = vpop.f32.mrb[0].mxu0
    %v3915 = vpop.f32.mrb[0].mxu0
    %v3916 = vadd.f32 0.0, %v3915
    %v3917 = vpop.f32.mrb[0].mxu0
    %3918 = vmatprep.mubr.bf16.mxu0 0
    %3919 = vmatmul.mubr.bf16.gmra.mrb[0].mxu0 %v3625
    %v3920 = vpop.f32.mrb[0].mxu0
    %v3921 = vadd.f32 0.0, %v3920
    %v3922 = vpop.f32.mrb[0].mxu0
    %v3923 = vpop.f32.mrb[0].mxu0
    %v3924 = vadd.f32 0.0, %v3923
    %v3925 = vpop.f32.mrb[0].mxu0
    %3926 = vdwg.mxu0
    %s3927 = scalar_lea.vmem %s4, 128
    %v3928 = vld [vmem:[%s3927] sm:$0xf]
    %v3929 = vld [vmem:[%s3927 + $0x4] sm:$0xf]
    %v3930 = vld [vmem:[%s3927 + $0x8] sm:$0xf]
    %v3931 = vld [vmem:[%s3927 + $0xc] sm:$0xf]
    %v3932 = vld [vmem:[%s3927 + $0x10] sm:$0xf]
    %v3933 = vld [vmem:[%s3927 + $0x14] sm:$0xf]
    %v3934 = vld [vmem:[%s3927 + $0x18] sm:$0xf]
    %v3935 = vld [vmem:[%s3927 + $0x1c] sm:$0xf]
    %v3936 = vld [vmem:[%s3927 + $0x20] sm:$0xf]
    %v3937 = vld [vmem:[%s3927 + $0x24] sm:$0xf]
    %v3938 = vld [vmem:[%s3927 + $0x28] sm:$0xf]
    %v3939 = vld [vmem:[%s3927 + $0x2c] sm:$0xf]
    %v3940 = vld [vmem:[%s3927 + $0x30] sm:$0xf]
    %v3941 = vld [vmem:[%s3927 + $0x34] sm:$0xf]
    %v3942 = vld [vmem:[%s3927 + $0x38] sm:$0xf]
    %v3943 = vld [vmem:[%s3927 + $0x3c] sm:$0xf]
    %v3944 = vld [vmem:[%s3927 + $0x40] sm:$0xf]
    %v3945 = vld [vmem:[%s3927 + $0x44] sm:$0xf]
    %v3946 = vld [vmem:[%s3927 + $0x48] sm:$0xf]
    %v3947 = vld [vmem:[%s3927 + $0x4c] sm:$0xf]
    %v3948 = vld [vmem:[%s3927 + $0x50] sm:$0xf]
    %v3949 = vld [vmem:[%s3927 + $0x54] sm:$0xf]
    %v3950 = vld [vmem:[%s3927 + $0x58] sm:$0xf]
    %v3951 = vld [vmem:[%s3927 + $0x5c] sm:$0xf]
    %v3952 = vld [vmem:[%s3927 + $0x60] sm:$0xf]
    %v3953 = vld [vmem:[%s3927 + $0x64] sm:$0xf]
    %v3954 = vld [vmem:[%s3927 + $0x68] sm:$0xf]
    %v3955 = vld [vmem:[%s3927 + $0x6c] sm:$0xf]
    %v3956 = vld [vmem:[%s3927 + $0x70] sm:$0xf]
    %v3957 = vld [vmem:[%s3927 + $0x74] sm:$0xf]
    %v3958 = vld [vmem:[%s3927 + $0x78] sm:$0xf]
    %v3959 = vld [vmem:[%s3927 + $0x7c] sm:$0xf]
    %v3968 = vunpack.c.l.b16 %v3928
    %v3969 = vunpack.c.l.b16 %v3929
    %v3970 = vunpack.c.l.b16 %v3930
    %v3971 = vunpack.c.l.b16 %v3931
    %v3972 = vunpack.c.l.b16 %v3932
    %v3973 = vunpack.c.l.b16 %v3933
    %v3974 = vunpack.c.l.b16 %v3934
    %v3975 = vunpack.c.l.b16 %v3935
    %v3976 = vpack.c.b16 %v3969, %v3968
    %v3977 = vpack.c.b16 %v3971, %v3970
    %v3978 = vpack.c.b16 %v3973, %v3972
    %v3979 = vpack.c.b16 %v3975, %v3974
    %3984 = vmatprep.subr.bf16.mxu0 0
    %3985 = vmatpush1.bf16.msra.mxu0 %v3976
    %3986 = vmatprep.subr.bf16.mxu0 0
    %3987 = vmatpush1.bf16.msra.mxu0 %v3977
    %3988 = vmatprep.subr.bf16.mxu0 0
    %3989 = vmatpush1.bf16.msra.mxu0 %v3978
    %3990 = vmatprep.subr.bf16.mxu0 0
    %3991 = vmatpush1.bf16.msra.mxu0 %v3979
    %3992 = vmatprep.subr.bf16.mxu0 0
    %3993 = vmatpush1.bf16.msra.mxu0 0
    %3994 = vmatprep.subr.bf16.mxu0 0
    %3995 = vmatpush1.bf16.msra.mxu0 0
    %3996 = vmatprep.subr.bf16.mxu0 0
    %3997 = vmatpush1.bf16.msra.mxu0 0
    %3998 = vmatprep.subr.bf16.mxu0 0
    %3999 = vmatpush1.bf16.msra.mxu0 0
    %4000 = vmatprep.subr.bf16.mxu0 0
    %4001 = vmatpush1.bf16.msra.mxu0 0
    %4002 = vmatprep.subr.bf16.mxu0 0
    %4003 = vmatpush1.bf16.msra.mxu0 0
    %4004 = vmatprep.subr.bf16.mxu0 0
    %4005 = vmatpush1.bf16.msra.mxu0 0
    %4006 = vmatprep.subr.bf16.mxu0 0
    %4007 = vmatpush1.bf16.msra.mxu0 0
    %4008 = vmatprep.subr.bf16.mxu0 0
    %4009 = vmatpush1.bf16.msra.mxu0 0
    %4010 = vmatprep.subr.bf16.mxu0 0
    %4011 = vmatpush1.bf16.msra.mxu0 0
    %4012 = vmatprep.subr.bf16.mxu0 0
    %4013 = vmatpush1.bf16.msra.mxu0 0
    %4014 = vmatprep.subr.bf16.mxu0 0
    %4015 = vmatpush1.bf16.msra.mxu0 0
    %4016 = vmatprep.mubr.bf16.mxu0 0
    %4017 = vmatmul.mubr.bf16.gmra.mrb[0].mxu0 %v3619
    %v4018 = vpop.f32.mrb[0].mxu0
    %v4019 = vadd.f32 0.0, %v4018
    %v4020 = vpop.f32.mrb[0].mxu0
    %v4021 = vpop.f32.mrb[0].mxu0
    %v4022 = vadd.f32 0.0, %v4021
    %v4023 = vpop.f32.mrb[0].mxu0
    %4024 = vmatprep.mubr.bf16.mxu0 0
    %4025 = vmatmul.mubr.bf16.gmra.mrb[0].mxu0 %v3622
    %v4026 = vpop.f32.mrb[0].mxu0
    %v4027 = vadd.f32 0.0, %v4026
    %v4028 = vpop.f32.mrb[0].mxu0
    %v4029 = vpop.f32.mrb[0].mxu0
    %v4030 = vadd.f32 0.0, %v4029
    %v4031 = vpop.f32.mrb[0].mxu0
    %4032 = vmatprep.mubr.bf16.mxu0 0
    %4033 = vmatmul.mubr.bf16.gmra.mrb[0].mxu0 %v3625
    %v4034 = vpop.f32.mrb[0].mxu0
    %v4035 = vadd.f32 0.0, %v4034
    %v4036 = vpop.f32.mrb[0].mxu0
    %v4037 = vpop.f32.mrb[0].mxu0
    %v4038 = vadd.f32 0.0, %v4037
    %v4039 = vpop.f32.mrb[0].mxu0
    %4040 = vdwg.mxu0
    %v4049 = vunpack.c.l.b16 %v3936
    %v4050 = vunpack.c.l.b16 %v3937
    %v4051 = vunpack.c.l.b16 %v3938
    %v4052 = vunpack.c.l.b16 %v3939
    %v4053 = vunpack.c.l.b16 %v3940
    %v4054 = vunpack.c.l.b16 %v3941
    %v4055 = vunpack.c.l.b16 %v3942
    %v4056 = vunpack.c.l.b16 %v3943
    %v4057 = vpack.c.b16 %v4050, %v4049
    %v4058 = vpack.c.b16 %v4052, %v4051
    %v4059 = vpack.c.b16 %v4054, %v4053
    %v4060 = vpack.c.b16 %v4056, %v4055
    %4065 = vmatprep.subr.bf16.mxu0 0
    %4066 = vmatpush1.bf16.msra.mxu0 %v4057
    %4067 = vmatprep.subr.bf16.mxu0 0
    %4068 = vmatpush1.bf16.msra.mxu0 %v4058
    %4069 = vmatprep.subr.bf16.mxu0 0
    %4070 = vmatpush1.bf16.msra.mxu0 %v4059
    %4071 = vmatprep.subr.bf16.mxu0 0
    %4072 = vmatpush1.bf16.msra.mxu0 %v4060
    %4073 = vmatprep.subr.bf16.mxu0 0
    %4074 = vmatpush1.bf16.msra.mxu0 0
    %4075 = vmatprep.subr.bf16.mxu0 0
    %4076 = vmatpush1.bf16.msra.mxu0 0
    %4077 = vmatprep.subr.bf16.mxu0 0
    %4078 = vmatpush1.bf16.msra.mxu0 0
    %4079 = vmatprep.subr.bf16.mxu0 0
    %4080 = vmatpush1.bf16.msra.mxu0 0
    %4081 = vmatprep.subr.bf16.mxu0 0
    %4082 = vmatpush1.bf16.msra.mxu0 0
    %4083 = vmatprep.subr.bf16.mxu0 0
    %4084 = vmatpush1.bf16.msra.mxu0 0
    %4085 = vmatprep.subr.bf16.mxu0 0
    %4086 = vmatpush1.bf16.msra.mxu0 0
    %4087 = vmatprep.subr.bf16.mxu0 0
    %4088 = vmatpush1.bf16.msra.mxu0 0
    %4089 = vmatprep.subr.bf16.mxu0 0
    %4090 = vmatpush1.bf16.msra.mxu0 0
    %4091 = vmatprep.subr.bf16.mxu0 0
    %4092 = vmatpush1.bf16.msra.mxu0 0
    %4093 = vmatprep.subr.bf16.mxu0 0
    %4094 = vmatpush1.bf16.msra.mxu0 0
    %4095 = vmatprep.subr.bf16.mxu0 0
    %4096 = vmatpush1.bf16.msra.mxu0 0
    %4097 = vmatprep.mubr.bf16.mxu0 0
    %4098 = vmatmul.mubr.bf16.gmra.mrb[0].mxu0 %v3619
    %v4099 = vpop.f32.mrb[0].mxu0
    %v4100 = vadd.f32 0.0, %v4099
    %v4101 = vpop.f32.mrb[0].mxu0
    %v4102 = vpop.f32.mrb[0].mxu0
    %v4103 = vadd.f32 0.0, %v4102
    %v4104 = vpop.f32.mrb[0].mxu0
    %4105 = vmatprep.mubr.bf16.mxu0 0
    %4106 = vmatmul.mubr.bf16.gmra.mrb[0].mxu0 %v3622
    %v4107 = vpop.f32.mrb[0].mxu0
    %v4108 = vadd.f32 0.0, %v4107
    %v4109 = vpop.f32.mrb[0].mxu0
    %v4110 = vpop.f32.mrb[0].mxu0
    %v4111 = vadd.f32 0.0, %v4110
    %v4112 = vpop.f32.mrb[0].mxu0
    %4113 = vmatprep.mubr.bf16.mxu0 0
    %4114 = vmatmul.mubr.bf16.gmra.mrb[0].mxu0 %v3625
    %v4115 = vpop.f32.mrb[0].mxu0
    %v4116 = vadd.f32 0.0, %v4115
    %v4117 = vpop.f32.mrb[0].mxu0
    %v4118 = vpop.f32.mrb[0].mxu0
    %v4119 = vadd.f32 0.0, %v4118
    %v4120 = vpop.f32.mrb[0].mxu0
    %4121 = vdwg.mxu0
    %v4130 = vunpack.c.l.b16 %v3944
    %v4131 = vunpack.c.l.b16 %v3945
    %v4132 = vunpack.c.l.b16 %v3946
    %v4133 = vunpack.c.l.b16 %v3947
    %v4134 = vunpack.c.l.b16 %v3948
    %v4135 = vunpack.c.l.b16 %v3949
    %v4136 = vunpack.c.l.b16 %v3950
    %v4137 = vunpack.c.l.b16 %v3951
    %v4138 = vpack.c.b16 %v4131, %v4130
    %v4139 = vpack.c.b16 %v4133, %v4132
    %v4140 = vpack.c.b16 %v4135, %v4134
    %v4141 = vpack.c.b16 %v4137, %v4136
    %4146 = vmatprep.subr.bf16.mxu0 0
    %4147 = vmatpush1.bf16.msra.mxu0 %v4138
    %4148 = vmatprep.subr.bf16.mxu0 0
    %4149 = vmatpush1.bf16.msra.mxu0 %v4139
    %4150 = vmatprep.subr.bf16.mxu0 0
    %4151 = vmatpush1.bf16.msra.mxu0 %v4140
    %4152 = vmatprep.subr.bf16.mxu0 0
    %4153 = vmatpush1.bf16.msra.mxu0 %v4141
    %4154 = vmatprep.subr.bf16.mxu0 0
    %4155 = vmatpush1.bf16.msra.mxu0 0
    %4156 = vmatprep.subr.bf16.mxu0 0
    %4157 = vmatpush1.bf16.msra.mxu0 0
    %4158 = vmatprep.subr.bf16.mxu0 0
    %4159 = vmatpush1.bf16.msra.mxu0 0
    %4160 = vmatprep.subr.bf16.mxu0 0
    %4161 = vmatpush1.bf16.msra.mxu0 0
    %4162 = vmatprep.subr.bf16.mxu0 0
    %4163 = vmatpush1.bf16.msra.mxu0 0
    %4164 = vmatprep.subr.bf16.mxu0 0
    %4165 = vmatpush1.bf16.msra.mxu0 0
    %4166 = vmatprep.subr.bf16.mxu0 0
    %4167 = vmatpush1.bf16.msra.mxu0 0
    %4168 = vmatprep.subr.bf16.mxu0 0
    %4169 = vmatpush1.bf16.msra.mxu0 0
    %4170 = vmatprep.subr.bf16.mxu0 0
    %4171 = vmatpush1.bf16.msra.mxu0 0
    %4172 = vmatprep.subr.bf16.mxu0 0
    %4173 = vmatpush1.bf16.msra.mxu0 0
    %4174 = vmatprep.subr.bf16.mxu0 0
    %4175 = vmatpush1.bf16.msra.mxu0 0
    %4176 = vmatprep.subr.bf16.mxu0 0
    %4177 = vmatpush1.bf16.msra.mxu0 0
    %4178 = vmatprep.mubr.bf16.mxu0 0
    %4179 = vmatmul.mubr.bf16.gmra.mrb[0].mxu0 %v3619
    %v4180 = vpop.f32.mrb[0].mxu0
    %v4181 = vadd.f32 0.0, %v4180
    %v4182 = vpop.f32.mrb[0].mxu0
    %v4183 = vpop.f32.mrb[0].mxu0
    %v4184 = vadd.f32 0.0, %v4183
    %v4185 = vpop.f32.mrb[0].mxu0
    %4186 = vmatprep.mubr.bf16.mxu0 0
    %4187 = vmatmul.mubr.bf16.gmra.mrb[0].mxu0 %v3622
    %v4188 = vpop.f32.mrb[0].mxu0
    %v4189 = vadd.f32 0.0, %v4188
    %v4190 = vpop.f32.mrb[0].mxu0
    %v4191 = vpop.f32.mrb[0].mxu0
    %v4192 = vadd.f32 0.0, %v4191
    %v4193 = vpop.f32.mrb[0].mxu0
    %4194 = vmatprep.mubr.bf16.mxu0 0
    %4195 = vmatmul.mubr.bf16.gmra.mrb[0].mxu0 %v3625
    %v4196 = vpop.f32.mrb[0].mxu0
    %v4197 = vadd.f32 0.0, %v4196
    %v4198 = vpop.f32.mrb[0].mxu0
    %v4199 = vpop.f32.mrb[0].mxu0
    %v4200 = vadd.f32 0.0, %v4199
    %v4201 = vpop.f32.mrb[0].mxu0
    %4202 = vdwg.mxu0
    %v4211 = vunpack.c.l.b16 %v3952
    %v4212 = vunpack.c.l.b16 %v3953
    %v4213 = vunpack.c.l.b16 %v3954
    %v4214 = vunpack.c.l.b16 %v3955
    %v4215 = vunpack.c.l.b16 %v3956
    %v4216 = vunpack.c.l.b16 %v3957
    %v4217 = vunpack.c.l.b16 %v3958
    %v4218 = vunpack.c.l.b16 %v3959
    %v4219 = vpack.c.b16 %v4212, %v4211
    %v4220 = vpack.c.b16 %v4214, %v4213
    %v4221 = vpack.c.b16 %v4216, %v4215
    %v4222 = vpack.c.b16 %v4218, %v4217
    %4227 = vmatprep.subr.bf16.mxu0 0
    %4228 = vmatpush1.bf16.msra.mxu0 %v4219
    %4229 = vmatprep.subr.bf16.mxu0 0
    %4230 = vmatpush1.bf16.msra.mxu0 %v4220
    %4231 = vmatprep.subr.bf16.mxu0 0
    %4232 = vmatpush1.bf16.msra.mxu0 %v4221
    %4233 = vmatprep.subr.bf16.mxu0 0
    %4234 = vmatpush1.bf16.msra.mxu0 %v4222
    %4235 = vmatprep.subr.bf16.mxu0 0
    %4236 = vmatpush1.bf16.msra.mxu0 0
    %4237 = vmatprep.subr.bf16.mxu0 0
    %4238 = vmatpush1.bf16.msra.mxu0 0
    %4239 = vmatprep.subr.bf16.mxu0 0
    %4240 = vmatpush1.bf16.msra.mxu0 0
    %4241 = vmatprep.subr.bf16.mxu0 0
    %4242 = vmatpush1.bf16.msra.mxu0 0
    %4243 = vmatprep.subr.bf16.mxu0 0
    %4244 = vmatpush1.bf16.msra.mxu0 0
    %4245 = vmatprep.subr.bf16.mxu0 0
    %4246 = vmatpush1.bf16.msra.mxu0 0
    %4247 = vmatprep.subr.bf16.mxu0 0
    %4248 = vmatpush1.bf16.msra.mxu0 0
    %4249 = vmatprep.subr.bf16.mxu0 0
    %4250 = vmatpush1.bf16.msra.mxu0 0
    %4251 = vmatprep.subr.bf16.mxu0 0
    %4252 = vmatpush1.bf16.msra.mxu0 0
    %4253 = vmatprep.subr.bf16.mxu0 0
    %4254 = vmatpush1.bf16.msra.mxu0 0
    %4255 = vmatprep.subr.bf16.mxu0 0
    %4256 = vmatpush1.bf16.msra.mxu0 0
    %4257 = vmatprep.subr.bf16.mxu0 0
    %4258 = vmatpush1.bf16.msra.mxu0 0
    %4259 = vmatprep.mubr.bf16.mxu0 0
    %4260 = vmatmul.mubr.bf16.gmra.mrb[0].mxu0 %v3619
    %v4261 = vpop.f32.mrb[0].mxu0
    %v4262 = vadd.f32 0.0, %v4261
    %v4263 = vpop.f32.mrb[0].mxu0
    %v4264 = vpop.f32.mrb[0].mxu0
    %v4265 = vadd.f32 0.0, %v4264
    %v4266 = vpop.f32.mrb[0].mxu0
    %4267 = vmatprep.mubr.bf16.mxu0 0
    %4268 = vmatmul.mubr.bf16.gmra.mrb[0].mxu0 %v3622
    %v4269 = vpop.f32.mrb[0].mxu0
    %v4270 = vadd.f32 0.0, %v4269
    %v4271 = vpop.f32.mrb[0].mxu0
    %v4272 = vpop.f32.mrb[0].mxu0
    %v4273 = vadd.f32 0.0, %v4272
    %v4274 = vpop.f32.mrb[0].mxu0
    %4275 = vmatprep.mubr.bf16.mxu0 0
    %4276 = vmatmul.mubr.bf16.gmra.mrb[0].mxu0 %v3625
    %v4277 = vpop.f32.mrb[0].mxu0
    %v4278 = vadd.f32 0.0, %v4277
    %v4279 = vpop.f32.mrb[0].mxu0
    %v4280 = vpop.f32.mrb[0].mxu0
    %v4281 = vadd.f32 0.0, %v4280
    %v4282 = vpop.f32.mrb[0].mxu0
    %4283 = vdwg.mxu0
    %s4284 = scalar_lea.vmem %s5, 128
    %v4285 = vld [vmem:[%s4284] sm:$0xf]
    %v4286 = vld [vmem:[%s4284 + $0x4] sm:$0xf]
    %v4287 = vld [vmem:[%s4284 + $0x8] sm:$0xf]
    %v4288 = vld [vmem:[%s4284 + $0xc] sm:$0xf]
    %v4289 = vld [vmem:[%s4284 + $0x10] sm:$0xf]
    %v4290 = vld [vmem:[%s4284 + $0x14] sm:$0xf]
    %v4291 = vld [vmem:[%s4284 + $0x18] sm:$0xf]
    %v4292 = vld [vmem:[%s4284 + $0x1c] sm:$0xf]
    %v4293 = vld [vmem:[%s4284 + $0x20] sm:$0xf]
    %v4294 = vld [vmem:[%s4284 + $0x24] sm:$0xf]
    %v4295 = vld [vmem:[%s4284 + $0x28] sm:$0xf]
    %v4296 = vld [vmem:[%s4284 + $0x2c] sm:$0xf]
    %v4297 = vld [vmem:[%s4284 + $0x30] sm:$0xf]
    %v4298 = vld [vmem:[%s4284 + $0x34] sm:$0xf]
    %v4299 = vld [vmem:[%s4284 + $0x38] sm:$0xf]
    %v4300 = vld [vmem:[%s4284 + $0x3c] sm:$0xf]
    %v4301 = vld [vmem:[%s4284 + $0x40] sm:$0xf]
    %v4302 = vld [vmem:[%s4284 + $0x44] sm:$0xf]
    %v4303 = vld [vmem:[%s4284 + $0x48] sm:$0xf]
    %v4304 = vld [vmem:[%s4284 + $0x4c] sm:$0xf]
    %v4305 = vld [vmem:[%s4284 + $0x50] sm:$0xf]
    %v4306 = vld [vmem:[%s4284 + $0x54] sm:$0xf]
    %v4307 = vld [vmem:[%s4284 + $0x58] sm:$0xf]
    %v4308 = vld [vmem:[%s4284 + $0x5c] sm:$0xf]
    %v4309 = vld [vmem:[%s4284 + $0x60] sm:$0xf]
    %v4310 = vld [vmem:[%s4284 + $0x64] sm:$0xf]
    %v4311 = vld [vmem:[%s4284 + $0x68] sm:$0xf]
    %v4312 = vld [vmem:[%s4284 + $0x6c] sm:$0xf]
    %v4313 = vld [vmem:[%s4284 + $0x70] sm:$0xf]
    %v4314 = vld [vmem:[%s4284 + $0x74] sm:$0xf]
    %v4315 = vld [vmem:[%s4284 + $0x78] sm:$0xf]
    %v4316 = vld [vmem:[%s4284 + $0x7c] sm:$0xf]
    %v4325 = vunpack.c.l.b16 %v4285
    %v4326 = vunpack.c.l.b16 %v4286
    %v4327 = vunpack.c.l.b16 %v4287
    %v4328 = vunpack.c.l.b16 %v4288
    %v4329 = vunpack.c.l.b16 %v4289
    %v4330 = vunpack.c.l.b16 %v4290
    %v4331 = vunpack.c.l.b16 %v4291
    %v4332 = vunpack.c.l.b16 %v4292
    %v4333 = vpack.c.b16 %v4326, %v4325
    %v4334 = vpack.c.b16 %v4328, %v4327
    %v4335 = vpack.c.b16 %v4330, %v4329
    %v4336 = vpack.c.b16 %v4332, %v4331
    %4341 = vmatprep.subr.bf16.mxu0 0
    %4342 = vmatpush1.bf16.msra.mxu0 %v4333
    %4343 = vmatprep.subr.bf16.mxu0 0
    %4344 = vmatpush1.bf16.msra.mxu0 %v4334
    %4345 = vmatprep.subr.bf16.mxu0 0
    %4346 = vmatpush1.bf16.msra.mxu0 %v4335
    %4347 = vmatprep.subr.bf16.mxu0 0
    %4348 = vmatpush1.bf16.msra.mxu0 %v4336
    %4349 = vmatprep.subr.bf16.mxu0 0
    %4350 = vmatpush1.bf16.msra.mxu0 0
    %4351 = vmatprep.subr.bf16.mxu0 0
    %4352 = vmatpush1.bf16.msra.mxu0 0
    %4353 = vmatprep.subr.bf16.mxu0 0
    %4354 = vmatpush1.bf16.msra.mxu0 0
    %4355 = vmatprep.subr.bf16.mxu0 0
    %4356 = vmatpush1.bf16.msra.mxu0 0
    %4357 = vmatprep.subr.bf16.mxu0 0
    %4358 = vmatpush1.bf16.msra.mxu0 0
    %4359 = vmatprep.subr.bf16.mxu0 0
    %4360 = vmatpush1.bf16.msra.mxu0 0
    %4361 = vmatprep.subr.bf16.mxu0 0
    %4362 = vmatpush1.bf16.msra.mxu0 0
    %4363 = vmatprep.subr.bf16.mxu0 0
    %4364 = vmatpush1.bf16.msra.mxu0 0
    %4365 = vmatprep.subr.bf16.mxu0 0
    %4366 = vmatpush1.bf16.msra.mxu0 0
    %4367 = vmatprep.subr.bf16.mxu0 0
    %4368 = vmatpush1.bf16.msra.mxu0 0
    %4369 = vmatprep.subr.bf16.mxu0 0
    %4370 = vmatpush1.bf16.msra.mxu0 0
    %4371 = vmatprep.subr.bf16.mxu0 0
    %4372 = vmatpush1.bf16.msra.mxu0 0
    %4373 = vmatprep.mubr.bf16.mxu0 0
    %4374 = vmatmul.mubr.bf16.gmra.mrb[0].mxu0 %v3619
    %v4375 = vpop.f32.mrb[0].mxu0
    %v4376 = vadd.f32 0.0, %v4375
    %v4377 = vpop.f32.mrb[0].mxu0
    %v4378 = vpop.f32.mrb[0].mxu0
    %v4379 = vadd.f32 0.0, %v4378
    %v4380 = vpop.f32.mrb[0].mxu0
    %4381 = vmatprep.mubr.bf16.mxu0 0
    %4382 = vmatmul.mubr.bf16.gmra.mrb[0].mxu0 %v3622
    %v4383 = vpop.f32.mrb[0].mxu0
    %v4384 = vadd.f32 0.0, %v4383
    %v4385 = vpop.f32.mrb[0].mxu0
    %v4386 = vpop.f32.mrb[0].mxu0
    %v4387 = vadd.f32 0.0, %v4386
    %v4388 = vpop.f32.mrb[0].mxu0
    %4389 = vmatprep.mubr.bf16.mxu0 0
    %4390 = vmatmul.mubr.bf16.gmra.mrb[0].mxu0 %v3625
    %v4391 = vpop.f32.mrb[0].mxu0
    %v4392 = vadd.f32 0.0, %v4391
    %v4393 = vpop.f32.mrb[0].mxu0
    %v4394 = vpop.f32.mrb[0].mxu0
    %v4395 = vadd.f32 0.0, %v4394
    %v4396 = vpop.f32.mrb[0].mxu0
    %4397 = vdwg.mxu0
    %v4406 = vunpack.c.l.b16 %v4293
    %v4407 = vunpack.c.l.b16 %v4294
    %v4408 = vunpack.c.l.b16 %v4295
    %v4409 = vunpack.c.l.b16 %v4296
    %v4410 = vunpack.c.l.b16 %v4297
    %v4411 = vunpack.c.l.b16 %v4298
    %v4412 = vunpack.c.l.b16 %v4299
    %v4413 = vunpack.c.l.b16 %v4300
    %v4414 = vpack.c.b16 %v4407, %v4406
    %v4415 = vpack.c.b16 %v4409, %v4408
    %v4416 = vpack.c.b16 %v4411, %v4410
    %v4417 = vpack.c.b16 %v4413, %v4412
    %4422 = vmatprep.subr.bf16.mxu0 0
    %4423 = vmatpush1.bf16.msra.mxu0 %v4414
    %4424 = vmatprep.subr.bf16.mxu0 0
    %4425 = vmatpush1.bf16.msra.mxu0 %v4415
    %4426 = vmatprep.subr.bf16.mxu0 0
    %4427 = vmatpush1.bf16.msra.mxu0 %v4416
    %4428 = vmatprep.subr.bf16.mxu0 0
    %4429 = vmatpush1.bf16.msra.mxu0 %v4417
    %4430 = vmatprep.subr.bf16.mxu0 0
    %4431 = vmatpush1.bf16.msra.mxu0 0
    %4432 = vmatprep.subr.bf16.mxu0 0
    %4433 = vmatpush1.bf16.msra.mxu0 0
    %4434 = vmatprep.subr.bf16.mxu0 0
    %4435 = vmatpush1.bf16.msra.mxu0 0
    %4436 = vmatprep.subr.bf16.mxu0 0
    %4437 = vmatpush1.bf16.msra.mxu0 0
    %4438 = vmatprep.subr.bf16.mxu0 0
    %4439 = vmatpush1.bf16.msra.mxu0 0
    %4440 = vmatprep.subr.bf16.mxu0 0
    %4441 = vmatpush1.bf16.msra.mxu0 0
    %4442 = vmatprep.subr.bf16.mxu0 0
    %4443 = vmatpush1.bf16.msra.mxu0 0
    %4444 = vmatprep.subr.bf16.mxu0 0
    %4445 = vmatpush1.bf16.msra.mxu0 0
    %4446 = vmatprep.subr.bf16.mxu0 0
    %4447 = vmatpush1.bf16.msra.mxu0 0
    %4448 = vmatprep.subr.bf16.mxu0 0
    %4449 = vmatpush1.bf16.msra.mxu0 0
    %4450 = vmatprep.subr.bf16.mxu0 0
    %4451 = vmatpush1.bf16.msra.mxu0 0
    %4452 = vmatprep.subr.bf16.mxu0 0
    %4453 = vmatpush1.bf16.msra.mxu0 0
    %4454 = vmatprep.mubr.bf16.mxu0 0
    %4455 = vmatmul.mubr.bf16.gmra.mrb[0].mxu0 %v3619
    %v4456 = vpop.f32.mrb[0].mxu0
    %v4457 = vadd.f32 0.0, %v4456
    %v4458 = vpop.f32.mrb[0].mxu0
    %v4459 = vpop.f32.mrb[0].mxu0
    %v4460 = vadd.f32 0.0, %v4459
    %v4461 = vpop.f32.mrb[0].mxu0
    %4462 = vmatprep.mubr.bf16.mxu0 0
    %4463 = vmatmul.mubr.bf16.gmra.mrb[0].mxu0 %v3622
    %v4464 = vpop.f32.mrb[0].mxu0
    %v4465 = vadd.f32 0.0, %v4464
    %v4466 = vpop.f32.mrb[0].mxu0
    %v4467 = vpop.f32.mrb[0].mxu0
    %v4468 = vadd.f32 0.0, %v4467
    %v4469 = vpop.f32.mrb[0].mxu0
    %4470 = vmatprep.mubr.bf16.mxu0 0
    %4471 = vmatmul.mubr.bf16.gmra.mrb[0].mxu0 %v3625
    %v4472 = vpop.f32.mrb[0].mxu0
    %v4473 = vadd.f32 0.0, %v4472
    %v4474 = vpop.f32.mrb[0].mxu0
    %v4475 = vpop.f32.mrb[0].mxu0
    %v4476 = vadd.f32 0.0, %v4475
    %v4477 = vpop.f32.mrb[0].mxu0
    %4478 = vdwg.mxu0
    %v4487 = vunpack.c.l.b16 %v4301
    %v4488 = vunpack.c.l.b16 %v4302
    %v4489 = vunpack.c.l.b16 %v4303
    %v4490 = vunpack.c.l.b16 %v4304
    %v4491 = vunpack.c.l.b16 %v4305
    %v4492 = vunpack.c.l.b16 %v4306
    %v4493 = vunpack.c.l.b16 %v4307
    %v4494 = vunpack.c.l.b16 %v4308
    %v4495 = vpack.c.b16 %v4488, %v4487
    %v4496 = vpack.c.b16 %v4490, %v4489
    %v4497 = vpack.c.b16 %v4492, %v4491
    %v4498 = vpack.c.b16 %v4494, %v4493
    %4503 = vmatprep.subr.bf16.mxu0 0
    %4504 = vmatpush1.bf16.msra.mxu0 %v4495
    %4505 = vmatprep.subr.bf16.mxu0 0
    %4506 = vmatpush1.bf16.msra.mxu0 %v4496
    %4507 = vmatprep.subr.bf16.mxu0 0
    %4508 = vmatpush1.bf16.msra.mxu0 %v4497
    %4509 = vmatprep.subr.bf16.mxu0 0
    %4510 = vmatpush1.bf16.msra.mxu0 %v4498
    %4511 = vmatprep.subr.bf16.mxu0 0
    %4512 = vmatpush1.bf16.msra.mxu0 0
    %4513 = vmatprep.subr.bf16.mxu0 0
    %4514 = vmatpush1.bf16.msra.mxu0 0
    %4515 = vmatprep.subr.bf16.mxu0 0
    %4516 = vmatpush1.bf16.msra.mxu0 0
    %4517 = vmatprep.subr.bf16.mxu0 0
    %4518 = vmatpush1.bf16.msra.mxu0 0
    %4519 = vmatprep.subr.bf16.mxu0 0
    %4520 = vmatpush1.bf16.msra.mxu0 0
    %4521 = vmatprep.subr.bf16.mxu0 0
    %4522 = vmatpush1.bf16.msra.mxu0 0
    %4523 = vmatprep.subr.bf16.mxu0 0
    %4524 = vmatpush1.bf16.msra.mxu0 0
    %4525 = vmatprep.subr.bf16.mxu0 0
    %4526 = vmatpush1.bf16.msra.mxu0 0
    %4527 = vmatprep.subr.bf16.mxu0 0
    %4528 = vmatpush1.bf16.msra.mxu0 0
    %4529 = vmatprep.subr.bf16.mxu0 0
    %4530 = vmatpush1.bf16.msra.mxu0 0
    %4531 = vmatprep.subr.bf16.mxu0 0
    %4532 = vmatpush1.bf16.msra.mxu0 0
    %4533 = vmatprep.subr.bf16.mxu0 0
    %4534 = vmatpush1.bf16.msra.mxu0 0
    %4535 = vmatprep.mubr.bf16.mxu0 0
    %4536 = vmatmul.mubr.bf16.gmra.mrb[0].mxu0 %v3619
    %v4537 = vpop.f32.mrb[0].mxu0
    %v4538 = vadd.f32 0.0, %v4537
    %v4539 = vpop.f32.mrb[0].mxu0
    %v4540 = vpop.f32.mrb[0].mxu0
    %v4541 = vadd.f32 0.0, %v4540
    %v4542 = vpop.f32.mrb[0].mxu0
    %4543 = vmatprep.mubr.bf16.mxu0 0
    %4544 = vmatmul.mubr.bf16.gmra.mrb[0].mxu0 %v3622
    %v4545 = vpop.f32.mrb[0].mxu0
    %v4546 = vadd.f32 0.0, %v4545
    %v4547 = vpop.f32.mrb[0].mxu0
    %v4548 = vpop.f32.mrb[0].mxu0
    %v4549 = vadd.f32 0.0, %v4548
    %v4550 = vpop.f32.mrb[0].mxu0
    %4551 = vmatprep.mubr.bf16.mxu0 0
    %4552 = vmatmul.mubr.bf16.gmra.mrb[0].mxu0 %v3625
    %v4553 = vpop.f32.mrb[0].mxu0
    %v4554 = vadd.f32 0.0, %v4553
    %v4555 = vpop.f32.mrb[0].mxu0
    %v4556 = vpop.f32.mrb[0].mxu0
    %v4557 = vadd.f32 0.0, %v4556
    %v4558 = vpop.f32.mrb[0].mxu0
    %4559 = vdwg.mxu0
    %v4568 = vunpack.c.l.b16 %v4309
    %v4569 = vunpack.c.l.b16 %v4310
    %v4570 = vunpack.c.l.b16 %v4311
    %v4571 = vunpack.c.l.b16 %v4312
    %v4572 = vunpack.c.l.b16 %v4313
    %v4573 = vunpack.c.l.b16 %v4314
    %v4574 = vunpack.c.l.b16 %v4315
    %v4575 = vunpack.c.l.b16 %v4316
    %v4576 = vpack.c.b16 %v4569, %v4568
    %v4577 = vpack.c.b16 %v4571, %v4570
    %v4578 = vpack.c.b16 %v4573, %v4572
    %v4579 = vpack.c.b16 %v4575, %v4574
    %4584 = vmatprep.subr.bf16.mxu0 0
    %4585 = vmatpush1.bf16.msra.mxu0 %v4576
    %4586 = vmatprep.subr.bf16.mxu0 0
    %4587 = vmatpush1.bf16.msra.mxu0 %v4577
    %4588 = vmatprep.subr.bf16.mxu0 0
    %4589 = vmatpush1.bf16.msra.mxu0 %v4578
    %4590 = vmatprep.subr.bf16.mxu0 0
    %4591 = vmatpush1.bf16.msra.mxu0 %v4579
    %4592 = vmatprep.subr.bf16.mxu0 0
    %4593 = vmatpush1.bf16.msra.mxu0 0
    %4594 = vmatprep.subr.bf16.mxu0 0
    %4595 = vmatpush1.bf16.msra.mxu0 0
    %4596 = vmatprep.subr.bf16.mxu0 0
    %4597 = vmatpush1.bf16.msra.mxu0 0
    %4598 = vmatprep.subr.bf16.mxu0 0
    %4599 = vmatpush1.bf16.msra.mxu0 0
    %4600 = vmatprep.subr.bf16.mxu0 0
    %4601 = vmatpush1.bf16.msra.mxu0 0
    %4602 = vmatprep.subr.bf16.mxu0 0
    %4603 = vmatpush1.bf16.msra.mxu0 0
    %4604 = vmatprep.subr.bf16.mxu0 0
    %4605 = vmatpush1.bf16.msra.mxu0 0
    %4606 = vmatprep.subr.bf16.mxu0 0
    %4607 = vmatpush1.bf16.msra.mxu0 0
    %4608 = vmatprep.subr.bf16.mxu0 0
    %4609 = vmatpush1.bf16.msra.mxu0 0
    %4610 = vmatprep.subr.bf16.mxu0 0
    %4611 = vmatpush1.bf16.msra.mxu0 0
    %4612 = vmatprep.subr.bf16.mxu0 0
    %4613 = vmatpush1.bf16.msra.mxu0 0
    %4614 = vmatprep.subr.bf16.mxu0 0
    %4615 = vmatpush1.bf16.msra.mxu0 0
    %4616 = vmatprep.mubr.bf16.mxu0 0
    %4617 = vmatmul.mubr.bf16.gmra.mrb[0].mxu0 %v3619
    %v4618 = vpop.f32.mrb[0].mxu0
    %v4619 = vadd.f32 0.0, %v4618
    %v4620 = vpop.f32.mrb[0].mxu0
    %v4621 = vpop.f32.mrb[0].mxu0
    %v4622 = vadd.f32 0.0, %v4621
    %v4623 = vpop.f32.mrb[0].mxu0
    %4624 = vmatprep.mubr.bf16.mxu0 0
    %4625 = vmatmul.mubr.bf16.gmra.mrb[0].mxu0 %v3622
    %v4626 = vpop.f32.mrb[0].mxu0
    %v4627 = vadd.f32 0.0, %v4626
    %v4628 = vpop.f32.mrb[0].mxu0
    %v4629 = vpop.f32.mrb[0].mxu0
    %v4630 = vadd.f32 0.0, %v4629
    %v4631 = vpop.f32.mrb[0].mxu0
    %4632 = vmatprep.mubr.bf16.mxu0 0
    %4633 = vmatmul.mubr.bf16.gmra.mrb[0].mxu0 %v3625
    %v4634 = vpop.f32.mrb[0].mxu0
    %v4635 = vadd.f32 0.0, %v4634
    %v4636 = vpop.f32.mrb[0].mxu0
    %v4637 = vpop.f32.mrb[0].mxu0
    %v4638 = vadd.f32 0.0, %v4637
    %v4639 = vpop.f32.mrb[0].mxu0
    %4640 = vdwg.mxu0
    %v4641 = vpack.c.bf16 %v3665, %v3662
    %v4642 = vpack.c.bf16 %v3670, %v3670
    %v4643 = vpack.c.bf16 %v3678, %v3673
    %v4644 = vpack.c.bf16 %v3681, %v3681
    %v4645 = vpack.c.bf16 %v3746, %v3743
    %v4646 = vpack.c.bf16 %v3751, %v3751
    %v4647 = vpack.c.bf16 %v3759, %v3754
    %v4648 = vpack.c.bf16 %v3762, %v3762
    %v4649 = vpack.c.bf16 %v3827, %v3824
    %v4650 = vpack.c.bf16 %v3832, %v3832
    %v4651 = vpack.c.bf16 %v3840, %v3835
    %v4652 = vpack.c.bf16 %v3843, %v3843
    %v4653 = vpack.c.bf16 %v3908, %v3905
    %v4654 = vpack.c.bf16 %v3913, %v3913
    %v4655 = vpack.c.bf16 %v3921, %v3916
    %v4656 = vpack.c.bf16 %v3924, %v3924
    %v4657 = vpack.c.bf16 %v4022, %v4019
    %v4658 = vpack.c.bf16 %v4027, %v4027
    %v4659 = vpack.c.bf16 %v4035, %v4030
    %v4660 = vpack.c.bf16 %v4038, %v4038
    %v4661 = vpack.c.bf16 %v4103, %v4100
    %v4662 = vpack.c.bf16 %v4108, %v4108
    %v4663 = vpack.c.bf16 %v4116, %v4111
    %v4664 = vpack.c.bf16 %v4119, %v4119
    %v4665 = vpack.c.bf16 %v4184, %v4181
    %v4666 = vpack.c.bf16 %v4189, %v4189
    %v4667 = vpack.c.bf16 %v4197, %v4192
    %v4668 = vpack.c.bf16 %v4200, %v4200
    %v4669 = vpack.c.bf16 %v4265, %v4262
    %v4670 = vpack.c.bf16 %v4270, %v4270
    %v4671 = vpack.c.bf16 %v4278, %v4273
    %v4672 = vpack.c.bf16 %v4281, %v4281
    %v4673 = vpack.c.bf16 %v4379, %v4376
    %v4674 = vpack.c.bf16 %v4384, %v4384
    %v4675 = vpack.c.bf16 %v4392, %v4387
    %v4676 = vpack.c.bf16 %v4395, %v4395
    %v4677 = vpack.c.bf16 %v4460, %v4457
    %v4678 = vpack.c.bf16 %v4465, %v4465
    %v4679 = vpack.c.bf16 %v4473, %v4468
    %v4680 = vpack.c.bf16 %v4476, %v4476
    %v4681 = vpack.c.bf16 %v4541, %v4538
    %v4682 = vpack.c.bf16 %v4546, %v4546
    %v4683 = vpack.c.bf16 %v4554, %v4549
    %v4684 = vpack.c.bf16 %v4557, %v4557
    %v4685 = vpack.c.bf16 %v4622, %v4619
    %v4686 = vpack.c.bf16 %v4627, %v4627
    %v4687 = vpack.c.bf16 %v4635, %v4630
    %v4688 = vpack.c.bf16 %v4638, %v4638
    %v4690 = vsel %vm1391, %v4641, 0
    %v4693 = vsel %vm1391, %v4642, 0
    %v4696 = vsel %vm1391, %v4657, 0
    %v4699 = vsel %vm1391, %v4658, 0
    %4701 = vmatprep.subr.bf16.mxu0 0
    %4702 = vmatpush1.bf16.xpose.msra.mxu0 %v4696
    %4703 = vmatprep.subr.bf16.mxu0 0
    %4704 = vmatpush1.bf16.xpose.msra.mxu0 %v4699
    %4705 = vmatprep.subr.bf16.mxu0 0
    %4706 = vmatpush1.bf16.xpose.msra.mxu0 0
    %4707 = vmatprep.subr.bf16.mxu0 0
    %4708 = vmatpush1.bf16.xpose.msra.mxu0 0
    %4709 = vmatprep.subr.bf16.mxu0 0
    %4710 = vmatpush1.bf16.xpose.msra.mxu0 0
    %4711 = vmatprep.subr.bf16.mxu0 0
    %4712 = vmatpush1.bf16.xpose.msra.mxu0 0
    %4713 = vmatprep.subr.bf16.mxu0 0
    %4714 = vmatpush1.bf16.xpose.msra.mxu0 0
    %4715 = vmatprep.subr.bf16.mxu0 0
    %4716 = vmatpush1.bf16.xpose.msra.mxu0 0
    %4717 = vmatprep.subr.bf16.mxu0 0
    %4718 = vmatpush1.bf16.xpose.msra.mxu0 0
    %4719 = vmatprep.subr.bf16.mxu0 0
    %4720 = vmatpush1.bf16.xpose.msra.mxu0 0
    %4721 = vmatprep.subr.bf16.mxu0 0
    %4722 = vmatpush1.bf16.xpose.msra.mxu0 0
    %4723 = vmatprep.subr.bf16.mxu0 0
    %4724 = vmatpush1.bf16.xpose.msra.mxu0 0
    %4725 = vmatprep.subr.bf16.mxu0 0
    %4726 = vmatpush1.bf16.xpose.msra.mxu0 0
    %4727 = vmatprep.subr.bf16.mxu0 0
    %4728 = vmatpush1.bf16.xpose.msra.mxu0 0
    %4729 = vmatprep.subr.bf16.mxu0 0
    %4730 = vmatpush1.bf16.xpose.msra.mxu0 0
    %4731 = vmatprep.subr.bf16.mxu0 0
    %4732 = vmatpush1.bf16.xpose.msra.mxu0 0
    %4733 = vmatprep.mubr.bf16.mxu0 0
    %4734 = vmatmul.mubr.bf16.gmra.mrb[0].mxu0 %v4690
    %v4735 = vpop.f32.mrb[0].mxu0
    %v4736 = vadd.f32 %v161, %v4735
    %v4737 = vpop.f32.mrb[0].mxu0
    %v4738 = vpop.f32.mrb[0].mxu0
    %v4739 = vadd.f32 %v161, %v4738
    %v4740 = vpop.f32.mrb[0].mxu0
    %4741 = vmatprep.mubr.bf16.mxu0 0
    %4742 = vmatmul.mubr.bf16.gmra.mrb[0].mxu0 %v4693
    %v4743 = vpop.f32.mrb[0].mxu0
    %v4744 = vadd.f32 %v161, %v4743
    %v4745 = vpop.f32.mrb[0].mxu0
    %v4746 = vpop.f32.mrb[0].mxu0
    %v4747 = vpop.f32.mrb[0].mxu0
    %4748 = vdwg.mxu0
    %v4750 = vsel %vm1391, %v4643, 0
    %v4753 = vsel %vm1391, %v4644, 0
    %v4756 = vsel %vm1391, %v4659, 0
    %v4759 = vsel %vm1391, %v4660, 0
    %4761 = vmatprep.subr.bf16.mxu0 0
    %4762 = vmatpush1.bf16.xpose.msra.mxu0 %v4756
    %4763 = vmatprep.subr.bf16.mxu0 0
    %4764 = vmatpush1.bf16.xpose.msra.mxu0 %v4759
    %4765 = vmatprep.subr.bf16.mxu0 0
    %4766 = vmatpush1.bf16.xpose.msra.mxu0 0
    %4767 = vmatprep.subr.bf16.mxu0 0
    %4768 = vmatpush1.bf16.xpose.msra.mxu0 0
    %4769 = vmatprep.subr.bf16.mxu0 0
    %4770 = vmatpush1.bf16.xpose.msra.mxu0 0
    %4771 = vmatprep.subr.bf16.mxu0 0
    %4772 = vmatpush1.bf16.xpose.msra.mxu0 0
    %4773 = vmatprep.subr.bf16.mxu0 0
    %4774 = vmatpush1.bf16.xpose.msra.mxu0 0
    %4775 = vmatprep.subr.bf16.mxu0 0
    %4776 = vmatpush1.bf16.xpose.msra.mxu0 0
    %4777 = vmatprep.subr.bf16.mxu0 0
    %4778 = vmatpush1.bf16.xpose.msra.mxu0 0
    %4779 = vmatprep.subr.bf16.mxu0 0
    %4780 = vmatpush1.bf16.xpose.msra.mxu0 0
    %4781 = vmatprep.subr.bf16.mxu0 0
    %4782 = vmatpush1.bf16.xpose.msra.mxu0 0
    %4783 = vmatprep.subr.bf16.mxu0 0
    %4784 = vmatpush1.bf16.xpose.msra.mxu0 0
    %4785 = vmatprep.subr.bf16.mxu0 0
    %4786 = vmatpush1.bf16.xpose.msra.mxu0 0
    %4787 = vmatprep.subr.bf16.mxu0 0
    %4788 = vmatpush1.bf16.xpose.msra.mxu0 0
    %4789 = vmatprep.subr.bf16.mxu0 0
    %4790 = vmatpush1.bf16.xpose.msra.mxu0 0
    %4791 = vmatprep.subr.bf16.mxu0 0
    %4792 = vmatpush1.bf16.xpose.msra.mxu0 0
    %4793 = vmatprep.mubr.bf16.mxu0 0
    %4794 = vmatmul.mubr.bf16.gmra.mrb[0].mxu0 %v4750
    %v4795 = vpop.f32.mrb[0].mxu0
    %v4796 = vadd.f32 %v161, %v4795
    %v4797 = vpop.f32.mrb[0].mxu0
    %v4798 = vpop.f32.mrb[0].mxu0
    %v4799 = vadd.f32 %v161, %v4798
    %v4800 = vpop.f32.mrb[0].mxu0
    %4801 = vmatprep.mubr.bf16.mxu0 0
    %4802 = vmatmul.mubr.bf16.gmra.mrb[0].mxu0 %v4753
    %v4803 = vpop.f32.mrb[0].mxu0
    %v4804 = vadd.f32 %v161, %v4803
    %v4805 = vpop.f32.mrb[0].mxu0
    %v4806 = vpop.f32.mrb[0].mxu0
    %v4807 = vpop.f32.mrb[0].mxu0
    %4808 = vdwg.mxu0
    %v4810 = vsel %vm1391, %v4645, 0
    %v4813 = vsel %vm1391, %v4646, 0
    %v4816 = vsel %vm1391, %v4661, 0
    %v4819 = vsel %vm1391, %v4662, 0
    %4821 = vmatprep.subr.bf16.mxu0 0
    %4822 = vmatpush1.bf16.xpose.msra.mxu0 %v4816
    %4823 = vmatprep.subr.bf16.mxu0 0
    %4824 = vmatpush1.bf16.xpose.msra.mxu0 %v4819
    %4825 = vmatprep.subr.bf16.mxu0 0
    %4826 = vmatpush1.bf16.xpose.msra.mxu0 0
    %4827 = vmatprep.subr.bf16.mxu0 0
    %4828 = vmatpush1.bf16.xpose.msra.mxu0 0
    %4829 = vmatprep.subr.bf16.mxu0 0
    %4830 = vmatpush1.bf16.xpose.msra.mxu0 0
    %4831 = vmatprep.subr.bf16.mxu0 0
    %4832 = vmatpush1.bf16.xpose.msra.mxu0 0
    %4833 = vmatprep.subr.bf16.mxu0 0
    %4834 = vmatpush1.bf16.xpose.msra.mxu0 0
    %4835 = vmatprep.subr.bf16.mxu0 0
    %4836 = vmatpush1.bf16.xpose.msra.mxu0 0
    %4837 = vmatprep.subr.bf16.mxu0 0
    %4838 = vmatpush1.bf16.xpose.msra.mxu0 0
    %4839 = vmatprep.subr.bf16.mxu0 0
    %4840 = vmatpush1.bf16.xpose.msra.mxu0 0
    %4841 = vmatprep.subr.bf16.mxu0 0
    %4842 = vmatpush1.bf16.xpose.msra.mxu0 0
    %4843 = vmatprep.subr.bf16.mxu0 0
    %4844 = vmatpush1.bf16.xpose.msra.mxu0 0
    %4845 = vmatprep.subr.bf16.mxu0 0
    %4846 = vmatpush1.bf16.xpose.msra.mxu0 0
    %4847 = vmatprep.subr.bf16.mxu0 0
    %4848 = vmatpush1.bf16.xpose.msra.mxu0 0
    %4849 = vmatprep.subr.bf16.mxu0 0
    %4850 = vmatpush1.bf16.xpose.msra.mxu0 0
    %4851 = vmatprep.subr.bf16.mxu0 0
    %4852 = vmatpush1.bf16.xpose.msra.mxu0 0
    %4853 = vmatprep.mubr.bf16.mxu0 0
    %4854 = vmatmul.mubr.bf16.gmra.mrb[0].mxu0 %v4810
    %v4855 = vpop.f32.mrb[0].mxu0
    %v4856 = vadd.f32 %v161, %v4855
    %v4857 = vpop.f32.mrb[0].mxu0
    %v4858 = vpop.f32.mrb[0].mxu0
    %v4859 = vadd.f32 %v161, %v4858
    %v4860 = vpop.f32.mrb[0].mxu0
    %4861 = vmatprep.mubr.bf16.mxu0 0
    %4862 = vmatmul.mubr.bf16.gmra.mrb[0].mxu0 %v4813
    %v4863 = vpop.f32.mrb[0].mxu0
    %v4864 = vadd.f32 %v161, %v4863
    %v4865 = vpop.f32.mrb[0].mxu0
    %v4866 = vpop.f32.mrb[0].mxu0
    %v4867 = vpop.f32.mrb[0].mxu0
    %4868 = vdwg.mxu0
    %v4870 = vsel %vm1391, %v4647, 0
    %v4873 = vsel %vm1391, %v4648, 0
    %v4876 = vsel %vm1391, %v4663, 0
    %v4879 = vsel %vm1391, %v4664, 0
    %4881 = vmatprep.subr.bf16.mxu0 0
    %4882 = vmatpush1.bf16.xpose.msra.mxu0 %v4876
    %4883 = vmatprep.subr.bf16.mxu0 0
    %4884 = vmatpush1.bf16.xpose.msra.mxu0 %v4879
    %4885 = vmatprep.subr.bf16.mxu0 0
    %4886 = vmatpush1.bf16.xpose.msra.mxu0 0
    %4887 = vmatprep.subr.bf16.mxu0 0
    %4888 = vmatpush1.bf16.xpose.msra.mxu0 0
    %4889 = vmatprep.subr.bf16.mxu0 0
    %4890 = vmatpush1.bf16.xpose.msra.mxu0 0
    %4891 = vmatprep.subr.bf16.mxu0 0
    %4892 = vmatpush1.bf16.xpose.msra.mxu0 0
    %4893 = vmatprep.subr.bf16.mxu0 0
    %4894 = vmatpush1.bf16.xpose.msra.mxu0 0
    %4895 = vmatprep.subr.bf16.mxu0 0
    %4896 = vmatpush1.bf16.xpose.msra.mxu0 0
    %4897 = vmatprep.subr.bf16.mxu0 0
    %4898 = vmatpush1.bf16.xpose.msra.mxu0 0
    %4899 = vmatprep.subr.bf16.mxu0 0
    %4900 = vmatpush1.bf16.xpose.msra.mxu0 0
    %4901 = vmatprep.subr.bf16.mxu0 0
    %4902 = vmatpush1.bf16.xpose.msra.mxu0 0
    %4903 = vmatprep.subr.bf16.mxu0 0
    %4904 = vmatpush1.bf16.xpose.msra.mxu0 0
    %4905 = vmatprep.subr.bf16.mxu0 0
    %4906 = vmatpush1.bf16.xpose.msra.mxu0 0
    %4907 = vmatprep.subr.bf16.mxu0 0
    %4908 = vmatpush1.bf16.xpose.msra.mxu0 0
    %4909 = vmatprep.subr.bf16.mxu0 0
    %4910 = vmatpush1.bf16.xpose.msra.mxu0 0
    %4911 = vmatprep.subr.bf16.mxu0 0
    %4912 = vmatpush1.bf16.xpose.msra.mxu0 0
    %4913 = vmatprep.mubr.bf16.mxu0 0
    %4914 = vmatmul.mubr.bf16.gmra.mrb[0].mxu0 %v4870
    %v4915 = vpop.f32.mrb[0].mxu0
    %v4916 = vadd.f32 %v161, %v4915
    %v4917 = vpop.f32.mrb[0].mxu0
    %v4918 = vpop.f32.mrb[0].mxu0
    %v4919 = vadd.f32 %v161, %v4918
    %v4920 = vpop.f32.mrb[0].mxu0
    %4921 = vmatprep.mubr.bf16.mxu0 0
    %4922 = vmatmul.mubr.bf16.gmra.mrb[0].mxu0 %v4873
    %v4923 = vpop.f32.mrb[0].mxu0
    %v4924 = vadd.f32 %v161, %v4923
    %v4925 = vpop.f32.mrb[0].mxu0
    %v4926 = vpop.f32.mrb[0].mxu0
    %v4927 = vpop.f32.mrb[0].mxu0
    %4928 = vdwg.mxu0
    %v4930 = vsel %vm1391, %v4649, 0
    %v4933 = vsel %vm1391, %v4650, 0
    %v4936 = vsel %vm1391, %v4665, 0
    %v4939 = vsel %vm1391, %v4666, 0
    %4941 = vmatprep.subr.bf16.mxu0 0
    %4942 = vmatpush1.bf16.xpose.msra.mxu0 %v4936
    %4943 = vmatprep.subr.bf16.mxu0 0
    %4944 = vmatpush1.bf16.xpose.msra.mxu0 %v4939
    %4945 = vmatprep.subr.bf16.mxu0 0
    %4946 = vmatpush1.bf16.xpose.msra.mxu0 0
    %4947 = vmatprep.subr.bf16.mxu0 0
    %4948 = vmatpush1.bf16.xpose.msra.mxu0 0
    %4949 = vmatprep.subr.bf16.mxu0 0
    %4950 = vmatpush1.bf16.xpose.msra.mxu0 0
    %4951 = vmatprep.subr.bf16.mxu0 0
    %4952 = vmatpush1.bf16.xpose.msra.mxu0 0
    %4953 = vmatprep.subr.bf16.mxu0 0
    %4954 = vmatpush1.bf16.xpose.msra.mxu0 0
    %4955 = vmatprep.subr.bf16.mxu0 0
    %4956 = vmatpush1.bf16.xpose.msra.mxu0 0
    %4957 = vmatprep.subr.bf16.mxu0 0
    %4958 = vmatpush1.bf16.xpose.msra.mxu0 0
    %4959 = vmatprep.subr.bf16.mxu0 0
    %4960 = vmatpush1.bf16.xpose.msra.mxu0 0
    %4961 = vmatprep.subr.bf16.mxu0 0
    %4962 = vmatpush1.bf16.xpose.msra.mxu0 0
    %4963 = vmatprep.subr.bf16.mxu0 0
    %4964 = vmatpush1.bf16.xpose.msra.mxu0 0
    %4965 = vmatprep.subr.bf16.mxu0 0
    %4966 = vmatpush1.bf16.xpose.msra.mxu0 0
    %4967 = vmatprep.subr.bf16.mxu0 0
    %4968 = vmatpush1.bf16.xpose.msra.mxu0 0
    %4969 = vmatprep.subr.bf16.mxu0 0
    %4970 = vmatpush1.bf16.xpose.msra.mxu0 0
    %4971 = vmatprep.subr.bf16.mxu0 0
    %4972 = vmatpush1.bf16.xpose.msra.mxu0 0
    %4973 = vmatprep.mubr.bf16.mxu0 0
    %4974 = vmatmul.mubr.bf16.gmra.mrb[0].mxu0 %v4930
    %v4975 = vpop.f32.mrb[0].mxu0
    %v4976 = vadd.f32 %v161, %v4975
    %v4977 = vpop.f32.mrb[0].mxu0
    %v4978 = vpop.f32.mrb[0].mxu0
    %v4979 = vadd.f32 %v161, %v4978
    %v4980 = vpop.f32.mrb[0].mxu0
    %4981 = vmatprep.mubr.bf16.mxu0 0
    %4982 = vmatmul.mubr.bf16.gmra.mrb[0].mxu0 %v4933
    %v4983 = vpop.f32.mrb[0].mxu0
    %v4984 = vadd.f32 %v161, %v4983
    %v4985 = vpop.f32.mrb[0].mxu0
    %v4986 = vpop.f32.mrb[0].mxu0
    %v4987 = vpop.f32.mrb[0].mxu0
    %4988 = vdwg.mxu0
    %v4990 = vsel %vm1391, %v4651, 0
    %v4993 = vsel %vm1391, %v4652, 0
    %v4996 = vsel %vm1391, %v4667, 0
    %v4999 = vsel %vm1391, %v4668, 0
    %5001 = vmatprep.subr.bf16.mxu0 0
    %5002 = vmatpush1.bf16.xpose.msra.mxu0 %v4996
    %5003 = vmatprep.subr.bf16.mxu0 0
    %5004 = vmatpush1.bf16.xpose.msra.mxu0 %v4999
    %5005 = vmatprep.subr.bf16.mxu0 0
    %5006 = vmatpush1.bf16.xpose.msra.mxu0 0
    %5007 = vmatprep.subr.bf16.mxu0 0
    %5008 = vmatpush1.bf16.xpose.msra.mxu0 0
    %5009 = vmatprep.subr.bf16.mxu0 0
    %5010 = vmatpush1.bf16.xpose.msra.mxu0 0
    %5011 = vmatprep.subr.bf16.mxu0 0
    %5012 = vmatpush1.bf16.xpose.msra.mxu0 0
    %5013 = vmatprep.subr.bf16.mxu0 0
    %5014 = vmatpush1.bf16.xpose.msra.mxu0 0
    %5015 = vmatprep.subr.bf16.mxu0 0
    %5016 = vmatpush1.bf16.xpose.msra.mxu0 0
    %5017 = vmatprep.subr.bf16.mxu0 0
    %5018 = vmatpush1.bf16.xpose.msra.mxu0 0
    %5019 = vmatprep.subr.bf16.mxu0 0
    %5020 = vmatpush1.bf16.xpose.msra.mxu0 0
    %5021 = vmatprep.subr.bf16.mxu0 0
    %5022 = vmatpush1.bf16.xpose.msra.mxu0 0
    %5023 = vmatprep.subr.bf16.mxu0 0
    %5024 = vmatpush1.bf16.xpose.msra.mxu0 0
    %5025 = vmatprep.subr.bf16.mxu0 0
    %5026 = vmatpush1.bf16.xpose.msra.mxu0 0
    %5027 = vmatprep.subr.bf16.mxu0 0
    %5028 = vmatpush1.bf16.xpose.msra.mxu0 0
    %5029 = vmatprep.subr.bf16.mxu0 0
    %5030 = vmatpush1.bf16.xpose.msra.mxu0 0
    %5031 = vmatprep.subr.bf16.mxu0 0
    %5032 = vmatpush1.bf16.xpose.msra.mxu0 0
    %5033 = vmatprep.mubr.bf16.mxu0 0
    %5034 = vmatmul.mubr.bf16.gmra.mrb[0].mxu0 %v4990
    %v5035 = vpop.f32.mrb[0].mxu0
    %v5036 = vadd.f32 %v161, %v5035
    %v5037 = vpop.f32.mrb[0].mxu0
    %v5038 = vpop.f32.mrb[0].mxu0
    %v5039 = vadd.f32 %v161, %v5038
    %v5040 = vpop.f32.mrb[0].mxu0
    %5041 = vmatprep.mubr.bf16.mxu0 0
    %5042 = vmatmul.mubr.bf16.gmra.mrb[0].mxu0 %v4993
    %v5043 = vpop.f32.mrb[0].mxu0
    %v5044 = vadd.f32 %v161, %v5043
    %v5045 = vpop.f32.mrb[0].mxu0
    %v5046 = vpop.f32.mrb[0].mxu0
    %v5047 = vpop.f32.mrb[0].mxu0
    %5048 = vdwg.mxu0
    %v5050 = vsel %vm1391, %v4653, 0
    %v5053 = vsel %vm1391, %v4654, 0
    %v5056 = vsel %vm1391, %v4669, 0
    %v5059 = vsel %vm1391, %v4670, 0
    %5061 = vmatprep.subr.bf16.mxu0 0
    %5062 = vmatpush1.bf16.xpose.msra.mxu0 %v5056
    %5063 = vmatprep.subr.bf16.mxu0 0
    %5064 = vmatpush1.bf16.xpose.msra.mxu0 %v5059
    %5065 = vmatprep.subr.bf16.mxu0 0
    %5066 = vmatpush1.bf16.xpose.msra.mxu0 0
    %5067 = vmatprep.subr.bf16.mxu0 0
    %5068 = vmatpush1.bf16.xpose.msra.mxu0 0
    %5069 = vmatprep.subr.bf16.mxu0 0
    %5070 = vmatpush1.bf16.xpose.msra.mxu0 0
    %5071 = vmatprep.subr.bf16.mxu0 0
    %5072 = vmatpush1.bf16.xpose.msra.mxu0 0
    %5073 = vmatprep.subr.bf16.mxu0 0
    %5074 = vmatpush1.bf16.xpose.msra.mxu0 0
    %5075 = vmatprep.subr.bf16.mxu0 0
    %5076 = vmatpush1.bf16.xpose.msra.mxu0 0
    %5077 = vmatprep.subr.bf16.mxu0 0
    %5078 = vmatpush1.bf16.xpose.msra.mxu0 0
    %5079 = vmatprep.subr.bf16.mxu0 0
    %5080 = vmatpush1.bf16.xpose.msra.mxu0 0
    %5081 = vmatprep.subr.bf16.mxu0 0
    %5082 = vmatpush1.bf16.xpose.msra.mxu0 0
    %5083 = vmatprep.subr.bf16.mxu0 0
    %5084 = vmatpush1.bf16.xpose.msra.mxu0 0
    %5085 = vmatprep.subr.bf16.mxu0 0
    %5086 = vmatpush1.bf16.xpose.msra.mxu0 0
    %5087 = vmatprep.subr.bf16.mxu0 0
    %5088 = vmatpush1.bf16.xpose.msra.mxu0 0
    %5089 = vmatprep.subr.bf16.mxu0 0
    %5090 = vmatpush1.bf16.xpose.msra.mxu0 0
    %5091 = vmatprep.subr.bf16.mxu0 0
    %5092 = vmatpush1.bf16.xpose.msra.mxu0 0
    %5093 = vmatprep.mubr.bf16.mxu0 0
    %5094 = vmatmul.mubr.bf16.gmra.mrb[0].mxu0 %v5050
    %v5095 = vpop.f32.mrb[0].mxu0
    %v5096 = vadd.f32 %v161, %v5095
    %v5097 = vpop.f32.mrb[0].mxu0
    %v5098 = vpop.f32.mrb[0].mxu0
    %v5099 = vadd.f32 %v161, %v5098
    %v5100 = vpop.f32.mrb[0].mxu0
    %5101 = vmatprep.mubr.bf16.mxu0 0
    %5102 = vmatmul.mubr.bf16.gmra.mrb[0].mxu0 %v5053
    %v5103 = vpop.f32.mrb[0].mxu0
    %v5104 = vadd.f32 %v161, %v5103
    %v5105 = vpop.f32.mrb[0].mxu0
    %v5106 = vpop.f32.mrb[0].mxu0
    %v5107 = vpop.f32.mrb[0].mxu0
    %5108 = vdwg.mxu0
    %v5110 = vsel %vm1391, %v4655, 0
    %v5113 = vsel %vm1391, %v4656, 0
    %v5116 = vsel %vm1391, %v4671, 0
    %v5119 = vsel %vm1391, %v4672, 0
    %5121 = vmatprep.subr.bf16.mxu0 0
    %5122 = vmatpush1.bf16.xpose.msra.mxu0 %v5116
    %5123 = vmatprep.subr.bf16.mxu0 0
    %5124 = vmatpush1.bf16.xpose.msra.mxu0 %v5119
    %5125 = vmatprep.subr.bf16.mxu0 0
    %5126 = vmatpush1.bf16.xpose.msra.mxu0 0
    %5127 = vmatprep.subr.bf16.mxu0 0
    %5128 = vmatpush1.bf16.xpose.msra.mxu0 0
    %5129 = vmatprep.subr.bf16.mxu0 0
    %5130 = vmatpush1.bf16.xpose.msra.mxu0 0
    %5131 = vmatprep.subr.bf16.mxu0 0
    %5132 = vmatpush1.bf16.xpose.msra.mxu0 0
    %5133 = vmatprep.subr.bf16.mxu0 0
    %5134 = vmatpush1.bf16.xpose.msra.mxu0 0
    %5135 = vmatprep.subr.bf16.mxu0 0
    %5136 = vmatpush1.bf16.xpose.msra.mxu0 0
    %5137 = vmatprep.subr.bf16.mxu0 0
    %5138 = vmatpush1.bf16.xpose.msra.mxu0 0
    %5139 = vmatprep.subr.bf16.mxu0 0
    %5140 = vmatpush1.bf16.xpose.msra.mxu0 0
    %5141 = vmatprep.subr.bf16.mxu0 0
    %5142 = vmatpush1.bf16.xpose.msra.mxu0 0
    %5143 = vmatprep.subr.bf16.mxu0 0
    %5144 = vmatpush1.bf16.xpose.msra.mxu0 0
    %5145 = vmatprep.subr.bf16.mxu0 0
    %5146 = vmatpush1.bf16.xpose.msra.mxu0 0
    %5147 = vmatprep.subr.bf16.mxu0 0
    %5148 = vmatpush1.bf16.xpose.msra.mxu0 0
    %5149 = vmatprep.subr.bf16.mxu0 0
    %5150 = vmatpush1.bf16.xpose.msra.mxu0 0
    %5151 = vmatprep.subr.bf16.mxu0 0
    %5152 = vmatpush1.bf16.xpose.msra.mxu0 0
    %5153 = vmatprep.mubr.bf16.mxu0 0
    %5154 = vmatmul.mubr.bf16.gmra.mrb[0].mxu0 %v5110
    %v5155 = vpop.f32.mrb[0].mxu0
    %v5156 = vadd.f32 %v161, %v5155
    %v5157 = vpop.f32.mrb[0].mxu0
    %v5158 = vpop.f32.mrb[0].mxu0
    %v5159 = vadd.f32 %v161, %v5158
    %v5160 = vpop.f32.mrb[0].mxu0
    %5161 = vmatprep.mubr.bf16.mxu0 0
    %5162 = vmatmul.mubr.bf16.gmra.mrb[0].mxu0 %v5113
    %v5163 = vpop.f32.mrb[0].mxu0
    %v5164 = vadd.f32 %v161, %v5163
    %v5165 = vpop.f32.mrb[0].mxu0
    %v5166 = vpop.f32.mrb[0].mxu0
    %v5167 = vpop.f32.mrb[0].mxu0
    %5168 = vdwg.mxu0
    %v5169 = vsel %vm1872, %v4736, -inf
    %5170 = vmax.xlane.f32.xlu0 %v5169
    %v5171 = vpop.xlane.xlu0 %5170
    %v5172 = vsel %vm1872, %v4739, -inf
    %5173 = vmax.xlane.f32.xlu0 %v5172
    %v5174 = vpop.xlane.xlu0 %5173
    %v5175 = vsel %vm1872, %v4744, -inf
    %5176 = vmax.xlane.f32.xlu0 %v5175
    %v5177 = vpop.xlane.xlu0 %5176
    %v5178 = vsel %vm1872, %v4796, -inf
    %5179 = vmax.xlane.f32.xlu0 %v5178
    %v5180 = vpop.xlane.xlu0 %5179
    %v5181 = vsel %vm1872, %v4799, -inf
    %5182 = vmax.xlane.f32.xlu0 %v5181
    %v5183 = vpop.xlane.xlu0 %5182
    %v5184 = vsel %vm1872, %v4804, -inf
    %5185 = vmax.xlane.f32.xlu0 %v5184
    %v5186 = vpop.xlane.xlu0 %5185
    %v5187 = vsel %vm1872, %v4856, -inf
    %5188 = vmax.xlane.f32.xlu0 %v5187
    %v5189 = vpop.xlane.xlu0 %5188
    %v5190 = vsel %vm1872, %v4859, -inf
    %5191 = vmax.xlane.f32.xlu0 %v5190
    %v5192 = vpop.xlane.xlu0 %5191
    %v5193 = vsel %vm1872, %v4864, -inf
    %5194 = vmax.xlane.f32.xlu0 %v5193
    %v5195 = vpop.xlane.xlu0 %5194
    %v5196 = vsel %vm1872, %v4916, -inf
    %5197 = vmax.xlane.f32.xlu0 %v5196
    %v5198 = vpop.xlane.xlu0 %5197
    %v5199 = vsel %vm1872, %v4919, -inf
    %5200 = vmax.xlane.f32.xlu0 %v5199
    %v5201 = vpop.xlane.xlu0 %5200
    %v5202 = vsel %vm1872, %v4924, -inf
    %5203 = vmax.xlane.f32.xlu0 %v5202
    %v5204 = vpop.xlane.xlu0 %5203
    %v5205 = vsel %vm1872, %v4976, -inf
    %5206 = vmax.xlane.f32.xlu0 %v5205
    %v5207 = vpop.xlane.xlu0 %5206
    %v5208 = vsel %vm1872, %v4979, -inf
    %5209 = vmax.xlane.f32.xlu0 %v5208
    %v5210 = vpop.xlane.xlu0 %5209
    %v5211 = vsel %vm1872, %v4984, -inf
    %5212 = vmax.xlane.f32.xlu0 %v5211
    %v5213 = vpop.xlane.xlu0 %5212
    %v5214 = vsel %vm1872, %v5036, -inf
    %5215 = vmax.xlane.f32.xlu0 %v5214
    %v5216 = vpop.xlane.xlu0 %5215
    %v5217 = vsel %vm1872, %v5039, -inf
    %5218 = vmax.xlane.f32.xlu0 %v5217
    %v5219 = vpop.xlane.xlu0 %5218
    %v5220 = vsel %vm1872, %v5044, -inf
    %5221 = vmax.xlane.f32.xlu0 %v5220
    %v5222 = vpop.xlane.xlu0 %5221
    %v5223 = vsel %vm1872, %v5096, -inf
    %5224 = vmax.xlane.f32.xlu0 %v5223
    %v5225 = vpop.xlane.xlu0 %5224
    %v5226 = vsel %vm1872, %v5099, -inf
    %5227 = vmax.xlane.f32.xlu0 %v5226
    %v5228 = vpop.xlane.xlu0 %5227
    %v5229 = vsel %vm1872, %v5104, -inf
    %5230 = vmax.xlane.f32.xlu0 %v5229
    %v5231 = vpop.xlane.xlu0 %5230
    %v5232 = vsel %vm1872, %v5156, -inf
    %5233 = vmax.xlane.f32.xlu0 %v5232
    %v5234 = vpop.xlane.xlu0 %5233
    %v5235 = vsel %vm1872, %v5159, -inf
    %5236 = vmax.xlane.f32.xlu0 %v5235
    %v5237 = vpop.xlane.xlu0 %5236
    %v5238 = vsel %vm1872, %v5164, -inf
    %5239 = vmax.xlane.f32.xlu0 %v5238
    %v5240 = vpop.xlane.xlu0 %5239
    %v5241 = vsub.f32 %v4736, %v5171
    %v5242 = vsub.f32 %v4739, %v5174
    %v5243 = vsub.f32 %v4744, %v5177
    %v5244 = vsub.f32 %v4796, %v5180
    %v5245 = vsub.f32 %v4799, %v5183
    %v5246 = vsub.f32 %v4804, %v5186
    %v5247 = vsub.f32 %v4856, %v5189
    %v5248 = vsub.f32 %v4859, %v5192
    %v5249 = vsub.f32 %v4864, %v5195
    %v5250 = vsub.f32 %v4916, %v5198
    %v5251 = vsub.f32 %v4919, %v5201
    %v5252 = vsub.f32 %v4924, %v5204
    %v5253 = vsub.f32 %v4976, %v5207
    %v5254 = vsub.f32 %v4979, %v5210
    %v5255 = vsub.f32 %v4984, %v5213
    %v5256 = vsub.f32 %v5036, %v5216
    %v5257 = vsub.f32 %v5039, %v5219
    %v5258 = vsub.f32 %v5044, %v5222
    %v5259 = vsub.f32 %v5096, %v5225
    %v5260 = vsub.f32 %v5099, %v5228
    %v5261 = vsub.f32 %v5104, %v5231
    %v5262 = vsub.f32 %v5156, %v5234
    %v5263 = vsub.f32 %v5159, %v5237
    %v5264 = vsub.f32 %v5164, %v5240
    %v5265 = vmul.f32 %v5241, 1.442695
    %v5266 = vpow.pop %v5265
    %v5267 = vmul.f32 %v5242, 1.442695
    %v5268 = vpow.pop %v5267
    %v5269 = vmul.f32 %v5243, 1.442695
    %v5270 = vpow.pop %v5269
    %v5271 = vmul.f32 %v5244, 1.442695
    %v5272 = vpow.pop %v5271
    %v5273 = vmul.f32 %v5245, 1.442695
    %v5274 = vpow.pop %v5273
    %v5275 = vmul.f32 %v5246, 1.442695
    %v5276 = vpow.pop %v5275
    %v5277 = vmul.f32 %v5247, 1.442695
    %v5278 = vpow.pop %v5277
    %v5279 = vmul.f32 %v5248, 1.442695
    %v5280 = vpow.pop %v5279
    %v5281 = vmul.f32 %v5249, 1.442695
    %v5282 = vpow.pop %v5281
    %v5283 = vmul.f32 %v5250, 1.442695
    %v5284 = vpow.pop %v5283
    %v5285 = vmul.f32 %v5251, 1.442695
    %v5286 = vpow.pop %v5285
    %v5287 = vmul.f32 %v5252, 1.442695
    %v5288 = vpow.pop %v5287
    %v5289 = vmul.f32 %v5253, 1.442695
    %v5290 = vpow.pop %v5289
    %v5291 = vmul.f32 %v5254, 1.442695
    %v5292 = vpow.pop %v5291
    %v5293 = vmul.f32 %v5255, 1.442695
    %v5294 = vpow.pop %v5293
    %v5295 = vmul.f32 %v5256, 1.442695
    %v5296 = vpow.pop %v5295
    %v5297 = vmul.f32 %v5257, 1.442695
    %v5298 = vpow.pop %v5297
    %v5299 = vmul.f32 %v5258, 1.442695
    %v5300 = vpow.pop %v5299
    %v5301 = vmul.f32 %v5259, 1.442695
    %v5302 = vpow.pop %v5301
    %v5303 = vmul.f32 %v5260, 1.442695
    %v5304 = vpow.pop %v5303
    %v5305 = vmul.f32 %v5261, 1.442695
    %v5306 = vpow.pop %v5305
    %v5307 = vmul.f32 %v5262, 1.442695
    %v5308 = vpow.pop %v5307
    %v5309 = vmul.f32 %v5263, 1.442695
    %v5310 = vpow.pop %v5309
    %v5311 = vmul.f32 %v5264, 1.442695
    %v5312 = vpow.pop %v5311
    %v5313 = vsel %vm1872, %v5266, 0.0
    %5314 = vadd.xlane.f32.xlu0 %v5313
    %v5315 = vpop.xlane.xlu0 %5314
    %v5316 = vsel %vm1872, %v5268, 0.0
    %5317 = vadd.xlane.f32.xlu0 %v5316
    %v5318 = vpop.xlane.xlu0 %5317
    %v5319 = vsel %vm1872, %v5270, 0.0
    %5320 = vadd.xlane.f32.xlu0 %v5319
    %v5321 = vpop.xlane.xlu0 %5320
    %v5322 = vsel %vm1872, %v5272, 0.0
    %5323 = vadd.xlane.f32.xlu0 %v5322
    %v5324 = vpop.xlane.xlu0 %5323
    %v5325 = vsel %vm1872, %v5274, 0.0
    %5326 = vadd.xlane.f32.xlu0 %v5325
    %v5327 = vpop.xlane.xlu0 %5326
    %v5328 = vsel %vm1872, %v5276, 0.0
    %5329 = vadd.xlane.f32.xlu0 %v5328
    %v5330 = vpop.xlane.xlu0 %5329
    %v5331 = vsel %vm1872, %v5278, 0.0
    %5332 = vadd.xlane.f32.xlu0 %v5331
    %v5333 = vpop.xlane.xlu0 %5332
    %v5334 = vsel %vm1872, %v5280, 0.0
    %5335 = vadd.xlane.f32.xlu0 %v5334
    %v5336 = vpop.xlane.xlu0 %5335
    %v5337 = vsel %vm1872, %v5282, 0.0
    %5338 = vadd.xlane.f32.xlu0 %v5337
    %v5339 = vpop.xlane.xlu0 %5338
    %v5340 = vsel %vm1872, %v5284, 0.0
    %5341 = vadd.xlane.f32.xlu0 %v5340
    %v5342 = vpop.xlane.xlu0 %5341
    %v5343 = vsel %vm1872, %v5286, 0.0
    %5344 = vadd.xlane.f32.xlu0 %v5343
    %v5345 = vpop.xlane.xlu0 %5344
    %v5346 = vsel %vm1872, %v5288, 0.0
    %5347 = vadd.xlane.f32.xlu0 %v5346
    %v5348 = vpop.xlane.xlu0 %5347
    %v5349 = vsel %vm1872, %v5290, 0.0
    %5350 = vadd.xlane.f32.xlu0 %v5349
    %v5351 = vpop.xlane.xlu0 %5350
    %v5352 = vsel %vm1872, %v5292, 0.0
    %5353 = vadd.xlane.f32.xlu0 %v5352
    %v5354 = vpop.xlane.xlu0 %5353
    %v5355 = vsel %vm1872, %v5294, 0.0
    %5356 = vadd.xlane.f32.xlu0 %v5355
    %v5357 = vpop.xlane.xlu0 %5356
    %v5358 = vsel %vm1872, %v5296, 0.0
    %5359 = vadd.xlane.f32.xlu0 %v5358
    %v5360 = vpop.xlane.xlu0 %5359
    %v5361 = vsel %vm1872, %v5298, 0.0
    %5362 = vadd.xlane.f32.xlu0 %v5361
    %v5363 = vpop.xlane.xlu0 %5362
    %v5364 = vsel %vm1872, %v5300, 0.0
    %5365 = vadd.xlane.f32.xlu0 %v5364
    %v5366 = vpop.xlane.xlu0 %5365
    %v5367 = vsel %vm1872, %v5302, 0.0
    %5368 = vadd.xlane.f32.xlu0 %v5367
    %v5369 = vpop.xlane.xlu0 %5368
    %v5370 = vsel %vm1872, %v5304, 0.0
    %5371 = vadd.xlane.f32.xlu0 %v5370
    %v5372 = vpop.xlane.xlu0 %5371
    %v5373 = vsel %vm1872, %v5306, 0.0
    %5374 = vadd.xlane.f32.xlu0 %v5373
    %v5375 = vpop.xlane.xlu0 %5374
    %v5376 = vsel %vm1872, %v5308, 0.0
    %5377 = vadd.xlane.f32.xlu0 %v5376
    %v5378 = vpop.xlane.xlu0 %5377
    %v5379 = vsel %vm1872, %v5310, 0.0
    %5380 = vadd.xlane.f32.xlu0 %v5379
    %v5381 = vpop.xlane.xlu0 %5380
    %v5382 = vsel %vm1872, %v5312, 0.0
    %5383 = vadd.xlane.f32.xlu0 %v5382
    %v5384 = vpop.xlane.xlu0 %5383
    %v5385 = vrcp.pop %v5315
    %v5386 = vrcp.pop %v5318
    %v5387 = vrcp.pop %v5321
    %v5388 = vrcp.pop %v5324
    %v5389 = vrcp.pop %v5327
    %v5390 = vrcp.pop %v5330
    %v5391 = vrcp.pop %v5333
    %v5392 = vrcp.pop %v5336
    %v5393 = vrcp.pop %v5339
    %v5394 = vrcp.pop %v5342
    %v5395 = vrcp.pop %v5345
    %v5396 = vrcp.pop %v5348
    %v5397 = vrcp.pop %v5351
    %v5398 = vrcp.pop %v5354
    %v5399 = vrcp.pop %v5357
    %v5400 = vrcp.pop %v5360
    %v5401 = vrcp.pop %v5363
    %v5402 = vrcp.pop %v5366
    %v5403 = vrcp.pop %v5369
    %v5404 = vrcp.pop %v5372
    %v5405 = vrcp.pop %v5375
    %v5406 = vrcp.pop %v5378
    %v5407 = vrcp.pop %v5381
    %v5408 = vrcp.pop %v5384
    %v5409 = vmul.f32 %v5266, %v5385
    %v5410 = vmul.f32 %v5268, %v5386
    %v5411 = vmul.f32 %v5270, %v5387
    %v5412 = vmul.f32 %v5272, %v5388
    %v5413 = vmul.f32 %v5274, %v5389
    %v5414 = vmul.f32 %v5276, %v5390
    %v5415 = vmul.f32 %v5278, %v5391
    %v5416 = vmul.f32 %v5280, %v5392
    %v5417 = vmul.f32 %v5282, %v5393
    %v5418 = vmul.f32 %v5284, %v5394
    %v5419 = vmul.f32 %v5286, %v5395
    %v5420 = vmul.f32 %v5288, %v5396
    %v5421 = vmul.f32 %v5290, %v5397
    %v5422 = vmul.f32 %v5292, %v5398
    %v5423 = vmul.f32 %v5294, %v5399
    %v5424 = vmul.f32 %v5296, %v5400
    %v5425 = vmul.f32 %v5298, %v5401
    %v5426 = vmul.f32 %v5300, %v5402
    %v5427 = vmul.f32 %v5302, %v5403
    %v5428 = vmul.f32 %v5304, %v5404
    %v5429 = vmul.f32 %v5306, %v5405
    %v5430 = vmul.f32 %v5308, %v5406
    %v5431 = vmul.f32 %v5310, %v5407
    %v5432 = vmul.f32 %v5312, %v5408
    %v5433 = vpack.c.bf16 %v5410, %v5409
    %v5434 = vpack.c.bf16 %v5411, %v5411
    %v5435 = vpack.c.bf16 %v5413, %v5412
    %v5436 = vpack.c.bf16 %v5414, %v5414
    %v5437 = vpack.c.bf16 %v5416, %v5415
    %v5438 = vpack.c.bf16 %v5417, %v5417
    %v5439 = vpack.c.bf16 %v5419, %v5418
    %v5440 = vpack.c.bf16 %v5420, %v5420
    %v5441 = vpack.c.bf16 %v5422, %v5421
    %v5442 = vpack.c.bf16 %v5423, %v5423
    %v5443 = vpack.c.bf16 %v5425, %v5424
    %v5444 = vpack.c.bf16 %v5426, %v5426
    %v5445 = vpack.c.bf16 %v5428, %v5427
    %v5446 = vpack.c.bf16 %v5429, %v5429
    %v5447 = vpack.c.bf16 %v5431, %v5430
    %v5448 = vpack.c.bf16 %v5432, %v5432
    %v5450 = vsel %vm1872, %v5433, 0
    %v5453 = vsel %vm1872, %v5434, 0
    %v5456 = vsel %vm2159, %v4674, 0
    %5458 = vmatprep.subr.bf16.mxu0 0
    %5459 = vmatpush1.bf16.msra.mxu0 %v4673
    %5460 = vmatprep.subr.bf16.mxu0 0
    %5461 = vmatpush1.bf16.msra.mxu0 %v5456
    %5462 = vmatprep.subr.bf16.mxu0 0
    %5463 = vmatpush1.bf16.msra.mxu0 0
    %5464 = vmatprep.subr.bf16.mxu0 0
    %5465 = vmatpush1.bf16.msra.mxu0 0
    %5466 = vmatprep.subr.bf16.mxu0 0
    %5467 = vmatpush1.bf16.msra.mxu0 0
    %5468 = vmatprep.subr.bf16.mxu0 0
    %5469 = vmatpush1.bf16.msra.mxu0 0
    %5470 = vmatprep.subr.bf16.mxu0 0
    %5471 = vmatpush1.bf16.msra.mxu0 0
    %5472 = vmatprep.subr.bf16.mxu0 0
    %5473 = vmatpush1.bf16.msra.mxu0 0
    %5474 = vmatprep.subr.bf16.mxu0 0
    %5475 = vmatpush1.bf16.msra.mxu0 0
    %5476 = vmatprep.subr.bf16.mxu0 0
    %5477 = vmatpush1.bf16.msra.mxu0 0
    %5478 = vmatprep.subr.bf16.mxu0 0
    %5479 = vmatpush1.bf16.msra.mxu0 0
    %5480 = vmatprep.subr.bf16.mxu0 0
    %5481 = vmatpush1.bf16.msra.mxu0 0
    %5482 = vmatprep.subr.bf16.mxu0 0
    %5483 = vmatpush1.bf16.msra.mxu0 0
    %5484 = vmatprep.subr.bf16.mxu0 0
    %5485 = vmatpush1.bf16.msra.mxu0 0
    %5486 = vmatprep.subr.bf16.mxu0 0
    %5487 = vmatpush1.bf16.msra.mxu0 0
    %5488 = vmatprep.subr.bf16.mxu0 0
    %5489 = vmatpush1.bf16.msra.mxu0 0
    %5490 = vmatprep.mubr.bf16.mxu0 0
    %5491 = vmatmul.mubr.bf16.gmra.mrb[0].mxu0 %v5450
    %v5492 = vpop.f32.mrb[0].mxu0
    %v5493 = vadd.f32 0.0, %v5492
    %v5494 = vpop.f32.mrb[0].mxu0
    %v5495 = vpop.f32.mrb[0].mxu0
    %v5496 = vadd.f32 0.0, %v5495
    %v5497 = vpop.f32.mrb[0].mxu0
    %5498 = vmatprep.mubr.bf16.mxu0 0
    %5499 = vmatmul.mubr.bf16.gmra.mrb[0].mxu0 %v5453
    %v5500 = vpop.f32.mrb[0].mxu0
    %v5501 = vadd.f32 0.0, %v5500
    %v5502 = vpop.f32.mrb[0].mxu0
    %v5503 = vpop.f32.mrb[0].mxu0
    %v5504 = vpop.f32.mrb[0].mxu0
    %5505 = vdwg.mxu0
    %v5507 = vsel %vm1872, %v5435, 0
    %v5510 = vsel %vm1872, %v5436, 0
    %v5513 = vsel %vm2159, %v4676, 0
    %5515 = vmatprep.subr.bf16.mxu0 0
    %5516 = vmatpush1.bf16.msra.mxu0 %v4675
    %5517 = vmatprep.subr.bf16.mxu0 0
    %5518 = vmatpush1.bf16.msra.mxu0 %v5513
    %5519 = vmatprep.subr.bf16.mxu0 0
    %5520 = vmatpush1.bf16.msra.mxu0 0
    %5521 = vmatprep.subr.bf16.mxu0 0
    %5522 = vmatpush1.bf16.msra.mxu0 0
    %5523 = vmatprep.subr.bf16.mxu0 0
    %5524 = vmatpush1.bf16.msra.mxu0 0
    %5525 = vmatprep.subr.bf16.mxu0 0
    %5526 = vmatpush1.bf16.msra.mxu0 0
    %5527 = vmatprep.subr.bf16.mxu0 0
    %5528 = vmatpush1.bf16.msra.mxu0 0
    %5529 = vmatprep.subr.bf16.mxu0 0
    %5530 = vmatpush1.bf16.msra.mxu0 0
    %5531 = vmatprep.subr.bf16.mxu0 0
    %5532 = vmatpush1.bf16.msra.mxu0 0
    %5533 = vmatprep.subr.bf16.mxu0 0
    %5534 = vmatpush1.bf16.msra.mxu0 0
    %5535 = vmatprep.subr.bf16.mxu0 0
    %5536 = vmatpush1.bf16.msra.mxu0 0
    %5537 = vmatprep.subr.bf16.mxu0 0
    %5538 = vmatpush1.bf16.msra.mxu0 0
    %5539 = vmatprep.subr.bf16.mxu0 0
    %5540 = vmatpush1.bf16.msra.mxu0 0
    %5541 = vmatprep.subr.bf16.mxu0 0
    %5542 = vmatpush1.bf16.msra.mxu0 0
    %5543 = vmatprep.subr.bf16.mxu0 0
    %5544 = vmatpush1.bf16.msra.mxu0 0
    %5545 = vmatprep.subr.bf16.mxu0 0
    %5546 = vmatpush1.bf16.msra.mxu0 0
    %5547 = vmatprep.mubr.bf16.mxu0 0
    %5548 = vmatmul.mubr.bf16.gmra.mrb[0].mxu0 %v5507
    %v5549 = vpop.f32.mrb[0].mxu0
    %v5550 = vadd.f32 0.0, %v5549
    %v5551 = vpop.f32.mrb[0].mxu0
    %v5552 = vpop.f32.mrb[0].mxu0
    %v5553 = vadd.f32 0.0, %v5552
    %v5554 = vpop.f32.mrb[0].mxu0
    %5555 = vmatprep.mubr.bf16.mxu0 0
    %5556 = vmatmul.mubr.bf16.gmra.mrb[0].mxu0 %v5510
    %v5557 = vpop.f32.mrb[0].mxu0
    %v5558 = vadd.f32 0.0, %v5557
    %v5559 = vpop.f32.mrb[0].mxu0
    %v5560 = vpop.f32.mrb[0].mxu0
    %v5561 = vpop.f32.mrb[0].mxu0
    %5562 = vdwg.mxu0
    %v5564 = vsel %vm1872, %v5437, 0
    %v5567 = vsel %vm1872, %v5438, 0
    %v5570 = vsel %vm2159, %v4678, 0
    %5572 = vmatprep.subr.bf16.mxu0 0
    %5573 = vmatpush1.bf16.msra.mxu0 %v4677
    %5574 = vmatprep.subr.bf16.mxu0 0
    %5575 = vmatpush1.bf16.msra.mxu0 %v5570
    %5576 = vmatprep.subr.bf16.mxu0 0
    %5577 = vmatpush1.bf16.msra.mxu0 0
    %5578 = vmatprep.subr.bf16.mxu0 0
    %5579 = vmatpush1.bf16.msra.mxu0 0
    %5580 = vmatprep.subr.bf16.mxu0 0
    %5581 = vmatpush1.bf16.msra.mxu0 0
    %5582 = vmatprep.subr.bf16.mxu0 0
    %5583 = vmatpush1.bf16.msra.mxu0 0
    %5584 = vmatprep.subr.bf16.mxu0 0
    %5585 = vmatpush1.bf16.msra.mxu0 0
    %5586 = vmatprep.subr.bf16.mxu0 0
    %5587 = vmatpush1.bf16.msra.mxu0 0
    %5588 = vmatprep.subr.bf16.mxu0 0
    %5589 = vmatpush1.bf16.msra.mxu0 0
    %5590 = vmatprep.subr.bf16.mxu0 0
    %5591 = vmatpush1.bf16.msra.mxu0 0
    %5592 = vmatprep.subr.bf16.mxu0 0
    %5593 = vmatpush1.bf16.msra.mxu0 0
    %5594 = vmatprep.subr.bf16.mxu0 0
    %5595 = vmatpush1.bf16.msra.mxu0 0
    %5596 = vmatprep.subr.bf16.mxu0 0
    %5597 = vmatpush1.bf16.msra.mxu0 0
    %5598 = vmatprep.subr.bf16.mxu0 0
    %5599 = vmatpush1.bf16.msra.mxu0 0
    %5600 = vmatprep.subr.bf16.mxu0 0
    %5601 = vmatpush1.bf16.msra.mxu0 0
    %5602 = vmatprep.subr.bf16.mxu0 0
    %5603 = vmatpush1.bf16.msra.mxu0 0
    %5604 = vmatprep.mubr.bf16.mxu0 0
    %5605 = vmatmul.mubr.bf16.gmra.mrb[0].mxu0 %v5564
    %v5606 = vpop.f32.mrb[0].mxu0
    %v5607 = vadd.f32 0.0, %v5606
    %v5608 = vpop.f32.mrb[0].mxu0
    %v5609 = vpop.f32.mrb[0].mxu0
    %v5610 = vadd.f32 0.0, %v5609
    %v5611 = vpop.f32.mrb[0].mxu0
    %5612 = vmatprep.mubr.bf16.mxu0 0
    %5613 = vmatmul.mubr.bf16.gmra.mrb[0].mxu0 %v5567
    %v5614 = vpop.f32.mrb[0].mxu0
    %v5615 = vadd.f32 0.0, %v5614
    %v5616 = vpop.f32.mrb[0].mxu0
    %v5617 = vpop.f32.mrb[0].mxu0
    %v5618 = vpop.f32.mrb[0].mxu0
    %5619 = vdwg.mxu0
    %v5621 = vsel %vm1872, %v5439, 0
    %v5624 = vsel %vm1872, %v5440, 0
    %v5627 = vsel %vm2159, %v4680, 0
    %5629 = vmatprep.subr.bf16.mxu0 0
    %5630 = vmatpush1.bf16.msra.mxu0 %v4679
    %5631 = vmatprep.subr.bf16.mxu0 0
    %5632 = vmatpush1.bf16.msra.mxu0 %v5627
    %5633 = vmatprep.subr.bf16.mxu0 0
    %5634 = vmatpush1.bf16.msra.mxu0 0
    %5635 = vmatprep.subr.bf16.mxu0 0
    %5636 = vmatpush1.bf16.msra.mxu0 0
    %5637 = vmatprep.subr.bf16.mxu0 0
    %5638 = vmatpush1.bf16.msra.mxu0 0
    %5639 = vmatprep.subr.bf16.mxu0 0
    %5640 = vmatpush1.bf16.msra.mxu0 0
    %5641 = vmatprep.subr.bf16.mxu0 0
    %5642 = vmatpush1.bf16.msra.mxu0 0
    %5643 = vmatprep.subr.bf16.mxu0 0
    %5644 = vmatpush1.bf16.msra.mxu0 0
    %5645 = vmatprep.subr.bf16.mxu0 0
    %5646 = vmatpush1.bf16.msra.mxu0 0
    %5647 = vmatprep.subr.bf16.mxu0 0
    %5648 = vmatpush1.bf16.msra.mxu0 0
    %5649 = vmatprep.subr.bf16.mxu0 0
    %5650 = vmatpush1.bf16.msra.mxu0 0
    %5651 = vmatprep.subr.bf16.mxu0 0
    %5652 = vmatpush1.bf16.msra.mxu0 0
    %5653 = vmatprep.subr.bf16.mxu0 0
    %5654 = vmatpush1.bf16.msra.mxu0 0
    %5655 = vmatprep.subr.bf16.mxu0 0
    %5656 = vmatpush1.bf16.msra.mxu0 0
    %5657 = vmatprep.subr.bf16.mxu0 0
    %5658 = vmatpush1.bf16.msra.mxu0 0
    %5659 = vmatprep.subr.bf16.mxu0 0
    %5660 = vmatpush1.bf16.msra.mxu0 0
    %5661 = vmatprep.mubr.bf16.mxu0 0
    %5662 = vmatmul.mubr.bf16.gmra.mrb[0].mxu0 %v5621
    %v5663 = vpop.f32.mrb[0].mxu0
    %v5664 = vadd.f32 0.0, %v5663
    %v5665 = vpop.f32.mrb[0].mxu0
    %v5666 = vpop.f32.mrb[0].mxu0
    %v5667 = vadd.f32 0.0, %v5666
    %v5668 = vpop.f32.mrb[0].mxu0
    %5669 = vmatprep.mubr.bf16.mxu0 0
    %5670 = vmatmul.mubr.bf16.gmra.mrb[0].mxu0 %v5624
    %v5671 = vpop.f32.mrb[0].mxu0
    %v5672 = vadd.f32 0.0, %v5671
    %v5673 = vpop.f32.mrb[0].mxu0
    %v5674 = vpop.f32.mrb[0].mxu0
    %v5675 = vpop.f32.mrb[0].mxu0
    %5676 = vdwg.mxu0
    %v5678 = vsel %vm1872, %v5441, 0
    %v5681 = vsel %vm1872, %v5442, 0
    %v5684 = vsel %vm2159, %v4682, 0
    %5686 = vmatprep.subr.bf16.mxu0 0
    %5687 = vmatpush1.bf16.msra.mxu0 %v4681
    %5688 = vmatprep.subr.bf16.mxu0 0
    %5689 = vmatpush1.bf16.msra.mxu0 %v5684
    %5690 = vmatprep.subr.bf16.mxu0 0
    %5691 = vmatpush1.bf16.msra.mxu0 0
    %5692 = vmatprep.subr.bf16.mxu0 0
    %5693 = vmatpush1.bf16.msra.mxu0 0
    %5694 = vmatprep.subr.bf16.mxu0 0
    %5695 = vmatpush1.bf16.msra.mxu0 0
    %5696 = vmatprep.subr.bf16.mxu0 0
    %5697 = vmatpush1.bf16.msra.mxu0 0
    %5698 = vmatprep.subr.bf16.mxu0 0
    %5699 = vmatpush1.bf16.msra.mxu0 0
    %5700 = vmatprep.subr.bf16.mxu0 0
    %5701 = vmatpush1.bf16.msra.mxu0 0
    %5702 = vmatprep.subr.bf16.mxu0 0
    %5703 = vmatpush1.bf16.msra.mxu0 0
    %5704 = vmatprep.subr.bf16.mxu0 0
    %5705 = vmatpush1.bf16.msra.mxu0 0
    %5706 = vmatprep.subr.bf16.mxu0 0
    %5707 = vmatpush1.bf16.msra.mxu0 0
    %5708 = vmatprep.subr.bf16.mxu0 0
    %5709 = vmatpush1.bf16.msra.mxu0 0
    %5710 = vmatprep.subr.bf16.mxu0 0
    %5711 = vmatpush1.bf16.msra.mxu0 0
    %5712 = vmatprep.subr.bf16.mxu0 0
    %5713 = vmatpush1.bf16.msra.mxu0 0
    %5714 = vmatprep.subr.bf16.mxu0 0
    %5715 = vmatpush1.bf16.msra.mxu0 0
    %5716 = vmatprep.subr.bf16.mxu0 0
    %5717 = vmatpush1.bf16.msra.mxu0 0
    %5718 = vmatprep.mubr.bf16.mxu0 0
    %5719 = vmatmul.mubr.bf16.gmra.mrb[0].mxu0 %v5678
    %v5720 = vpop.f32.mrb[0].mxu0
    %v5721 = vadd.f32 0.0, %v5720
    %v5722 = vpop.f32.mrb[0].mxu0
    %v5723 = vpop.f32.mrb[0].mxu0
    %v5724 = vadd.f32 0.0, %v5723
    %v5725 = vpop.f32.mrb[0].mxu0
    %5726 = vmatprep.mubr.bf16.mxu0 0
    %5727 = vmatmul.mubr.bf16.gmra.mrb[0].mxu0 %v5681
    %v5728 = vpop.f32.mrb[0].mxu0
    %v5729 = vadd.f32 0.0, %v5728
    %v5730 = vpop.f32.mrb[0].mxu0
    %v5731 = vpop.f32.mrb[0].mxu0
    %v5732 = vpop.f32.mrb[0].mxu0
    %5733 = vdwg.mxu0
    %v5735 = vsel %vm1872, %v5443, 0
    %v5738 = vsel %vm1872, %v5444, 0
    %v5741 = vsel %vm2159, %v4684, 0
    %5743 = vmatprep.subr.bf16.mxu0 0
    %5744 = vmatpush1.bf16.msra.mxu0 %v4683
    %5745 = vmatprep.subr.bf16.mxu0 0
    %5746 = vmatpush1.bf16.msra.mxu0 %v5741
    %5747 = vmatprep.subr.bf16.mxu0 0
    %5748 = vmatpush1.bf16.msra.mxu0 0
    %5749 = vmatprep.subr.bf16.mxu0 0
    %5750 = vmatpush1.bf16.msra.mxu0 0
    %5751 = vmatprep.subr.bf16.mxu0 0
    %5752 = vmatpush1.bf16.msra.mxu0 0
    %5753 = vmatprep.subr.bf16.mxu0 0
    %5754 = vmatpush1.bf16.msra.mxu0 0
    %5755 = vmatprep.subr.bf16.mxu0 0
    %5756 = vmatpush1.bf16.msra.mxu0 0
    %5757 = vmatprep.subr.bf16.mxu0 0
    %5758 = vmatpush1.bf16.msra.mxu0 0
    %5759 = vmatprep.subr.bf16.mxu0 0
    %5760 = vmatpush1.bf16.msra.mxu0 0
    %5761 = vmatprep.subr.bf16.mxu0 0
    %5762 = vmatpush1.bf16.msra.mxu0 0
    %5763 = vmatprep.subr.bf16.mxu0 0
    %5764 = vmatpush1.bf16.msra.mxu0 0
    %5765 = vmatprep.subr.bf16.mxu0 0
    %5766 = vmatpush1.bf16.msra.mxu0 0
    %5767 = vmatprep.subr.bf16.mxu0 0
    %5768 = vmatpush1.bf16.msra.mxu0 0
    %5769 = vmatprep.subr.bf16.mxu0 0
    %5770 = vmatpush1.bf16.msra.mxu0 0
    %5771 = vmatprep.subr.bf16.mxu0 0
    %5772 = vmatpush1.bf16.msra.mxu0 0
    %5773 = vmatprep.subr.bf16.mxu0 0
    %5774 = vmatpush1.bf16.msra.mxu0 0
    %5775 = vmatprep.mubr.bf16.mxu0 0
    %5776 = vmatmul.mubr.bf16.gmra.mrb[0].mxu0 %v5735
    %v5777 = vpop.f32.mrb[0].mxu0
    %v5778 = vadd.f32 0.0, %v5777
    %v5779 = vpop.f32.mrb[0].mxu0
    %v5780 = vpop.f32.mrb[0].mxu0
    %v5781 = vadd.f32 0.0, %v5780
    %v5782 = vpop.f32.mrb[0].mxu0
    %5783 = vmatprep.mubr.bf16.mxu0 0
    %5784 = vmatmul.mubr.bf16.gmra.mrb[0].mxu0 %v5738
    %v5785 = vpop.f32.mrb[0].mxu0
    %v5786 = vadd.f32 0.0, %v5785
    %v5787 = vpop.f32.mrb[0].mxu0
    %v5788 = vpop.f32.mrb[0].mxu0
    %v5789 = vpop.f32.mrb[0].mxu0
    %5790 = vdwg.mxu0
    %v5792 = vsel %vm1872, %v5445, 0
    %v5795 = vsel %vm1872, %v5446, 0
    %v5798 = vsel %vm2159, %v4686, 0
    %5800 = vmatprep.subr.bf16.mxu0 0
    %5801 = vmatpush1.bf16.msra.mxu0 %v4685
    %5802 = vmatprep.subr.bf16.mxu0 0
    %5803 = vmatpush1.bf16.msra.mxu0 %v5798
    %5804 = vmatprep.subr.bf16.mxu0 0
    %5805 = vmatpush1.bf16.msra.mxu0 0
    %5806 = vmatprep.subr.bf16.mxu0 0
    %5807 = vmatpush1.bf16.msra.mxu0 0
    %5808 = vmatprep.subr.bf16.mxu0 0
    %5809 = vmatpush1.bf16.msra.mxu0 0
    %5810 = vmatprep.subr.bf16.mxu0 0
    %5811 = vmatpush1.bf16.msra.mxu0 0
    %5812 = vmatprep.subr.bf16.mxu0 0
    %5813 = vmatpush1.bf16.msra.mxu0 0
    %5814 = vmatprep.subr.bf16.mxu0 0
    %5815 = vmatpush1.bf16.msra.mxu0 0
    %5816 = vmatprep.subr.bf16.mxu0 0
    %5817 = vmatpush1.bf16.msra.mxu0 0
    %5818 = vmatprep.subr.bf16.mxu0 0
    %5819 = vmatpush1.bf16.msra.mxu0 0
    %5820 = vmatprep.subr.bf16.mxu0 0
    %5821 = vmatpush1.bf16.msra.mxu0 0
    %5822 = vmatprep.subr.bf16.mxu0 0
    %5823 = vmatpush1.bf16.msra.mxu0 0
    %5824 = vmatprep.subr.bf16.mxu0 0
    %5825 = vmatpush1.bf16.msra.mxu0 0
    %5826 = vmatprep.subr.bf16.mxu0 0
    %5827 = vmatpush1.bf16.msra.mxu0 0
    %5828 = vmatprep.subr.bf16.mxu0 0
    %5829 = vmatpush1.bf16.msra.mxu0 0
    %5830 = vmatprep.subr.bf16.mxu0 0
    %5831 = vmatpush1.bf16.msra.mxu0 0
    %5832 = vmatprep.mubr.bf16.mxu0 0
    %5833 = vmatmul.mubr.bf16.gmra.mrb[0].mxu0 %v5792
    %v5834 = vpop.f32.mrb[0].mxu0
    %v5835 = vadd.f32 0.0, %v5834
    %v5836 = vpop.f32.mrb[0].mxu0
    %v5837 = vpop.f32.mrb[0].mxu0
    %v5838 = vadd.f32 0.0, %v5837
    %v5839 = vpop.f32.mrb[0].mxu0
    %5840 = vmatprep.mubr.bf16.mxu0 0
    %5841 = vmatmul.mubr.bf16.gmra.mrb[0].mxu0 %v5795
    %v5842 = vpop.f32.mrb[0].mxu0
    %v5843 = vadd.f32 0.0, %v5842
    %v5844 = vpop.f32.mrb[0].mxu0
    %v5845 = vpop.f32.mrb[0].mxu0
    %v5846 = vpop.f32.mrb[0].mxu0
    %5847 = vdwg.mxu0
    %v5849 = vsel %vm1872, %v5447, 0
    %v5852 = vsel %vm1872, %v5448, 0
    %v5855 = vsel %vm2159, %v4688, 0
    %5857 = vmatprep.subr.bf16.mxu0 0
    %5858 = vmatpush1.bf16.msra.mxu0 %v4687
    %5859 = vmatprep.subr.bf16.mxu0 0
    %5860 = vmatpush1.bf16.msra.mxu0 %v5855
    %5861 = vmatprep.subr.bf16.mxu0 0
    %5862 = vmatpush1.bf16.msra.mxu0 0
    %5863 = vmatprep.subr.bf16.mxu0 0
    %5864 = vmatpush1.bf16.msra.mxu0 0
    %5865 = vmatprep.subr.bf16.mxu0 0
    %5866 = vmatpush1.bf16.msra.mxu0 0
    %5867 = vmatprep.subr.bf16.mxu0 0
    %5868 = vmatpush1.bf16.msra.mxu0 0
    %5869 = vmatprep.subr.bf16.mxu0 0
    %5870 = vmatpush1.bf16.msra.mxu0 0
    %5871 = vmatprep.subr.bf16.mxu0 0
    %5872 = vmatpush1.bf16.msra.mxu0 0
    %5873 = vmatprep.subr.bf16.mxu0 0
    %5874 = vmatpush1.bf16.msra.mxu0 0
    %5875 = vmatprep.subr.bf16.mxu0 0
    %5876 = vmatpush1.bf16.msra.mxu0 0
    %5877 = vmatprep.subr.bf16.mxu0 0
    %5878 = vmatpush1.bf16.msra.mxu0 0
    %5879 = vmatprep.subr.bf16.mxu0 0
    %5880 = vmatpush1.bf16.msra.mxu0 0
    %5881 = vmatprep.subr.bf16.mxu0 0
    %5882 = vmatpush1.bf16.msra.mxu0 0
    %5883 = vmatprep.subr.bf16.mxu0 0
    %5884 = vmatpush1.bf16.msra.mxu0 0
    %5885 = vmatprep.subr.bf16.mxu0 0
    %5886 = vmatpush1.bf16.msra.mxu0 0
    %5887 = vmatprep.subr.bf16.mxu0 0
    %5888 = vmatpush1.bf16.msra.mxu0 0
    %5889 = vmatprep.mubr.bf16.mxu0 0
    %5890 = vmatmul.mubr.bf16.gmra.mrb[0].mxu0 %v5849
    %v5891 = vpop.f32.mrb[0].mxu0
    %v5892 = vadd.f32 0.0, %v5891
    %v5893 = vpop.f32.mrb[0].mxu0
    %v5894 = vpop.f32.mrb[0].mxu0
    %v5895 = vadd.f32 0.0, %v5894
    %v5896 = vpop.f32.mrb[0].mxu0
    %5897 = vmatprep.mubr.bf16.mxu0 0
    %5898 = vmatmul.mubr.bf16.gmra.mrb[0].mxu0 %v5852
    %v5899 = vpop.f32.mrb[0].mxu0
    %v5900 = vadd.f32 0.0, %v5899
    %v5901 = vpop.f32.mrb[0].mxu0
    %v5902 = vpop.f32.mrb[0].mxu0
    %v5903 = vpop.f32.mrb[0].mxu0
    %5904 = vdwg.mxu0
    %v5905 = vpack.c.bf16 %v5496, %v5493
    %v5906 = vpack.c.bf16 %v5550, %v5501
    %v5907 = vpack.c.bf16 %v5558, %v5553
    %v5908 = vpack.c.bf16 %v5610, %v5607
    %v5909 = vpack.c.bf16 %v5664, %v5615
    %v5910 = vpack.c.bf16 %v5672, %v5667
    %v5911 = vpack.c.bf16 %v5724, %v5721
    %v5912 = vpack.c.bf16 %v5778, %v5729
    %v5913 = vpack.c.bf16 %v5786, %v5781
    %v5914 = vpack.c.bf16 %v5838, %v5835
    %v5915 = vpack.c.bf16 %v5892, %v5843
    %v5916 = vpack.c.bf16 %v5900, %v5895
    %s5917 = scalar_lea.vmem %s6, 32
    %v5918 = vld [vmem:[%s5917] sm:$0xf]
    %v5919 = vld [vmem:[%s5917 + $0x4] sm:$0xf]
    %v5920 = vld [vmem:[%s5917 + $0x8] sm:$0xf]
    %v5921 = vld [vmem:[%s5917 + $0xc] sm:$0xf]
    %v5922 = vld [vmem:[%s5917 + $0x10] sm:$0xf]
    %v5923 = vld [vmem:[%s5917 + $0x14] sm:$0xf]
    %v5924 = vld [vmem:[%s5917 + $0x18] sm:$0xf]
    %v5925 = vld [vmem:[%s5917 + $0x1c] sm:$0xf]
    %v5928 = vunpack.c.l.b16 %v5918
    %v5929 = vunpack.c.l.b16 %v5919
    %v5930 = vpack.c.b16 %v5929, %v5928
    %v5933 = vsel %vm1391, %v5905, 0
    %v5936 = vsel %vm1391, %v5906, 0
    %v5939 = vsel %vm1391, %v5907, 0
    %5941 = vmatprep.subr.bf16.mxu0 0
    %5942 = vmatpush1.bf16.msra.mxu0 %v5930
    %5943 = vmatprep.subr.bf16.mxu0 0
    %5944 = vmatpush1.bf16.msra.mxu0 0
    %5945 = vmatprep.subr.bf16.mxu0 0
    %5946 = vmatpush1.bf16.msra.mxu0 0
    %5947 = vmatprep.subr.bf16.mxu0 0
    %5948 = vmatpush1.bf16.msra.mxu0 0
    %5949 = vmatprep.subr.bf16.mxu0 0
    %5950 = vmatpush1.bf16.msra.mxu0 0
    %5951 = vmatprep.subr.bf16.mxu0 0
    %5952 = vmatpush1.bf16.msra.mxu0 0
    %5953 = vmatprep.subr.bf16.mxu0 0
    %5954 = vmatpush1.bf16.msra.mxu0 0
    %5955 = vmatprep.subr.bf16.mxu0 0
    %5956 = vmatpush1.bf16.msra.mxu0 0
    %5957 = vmatprep.subr.bf16.mxu0 0
    %5958 = vmatpush1.bf16.msra.mxu0 0
    %5959 = vmatprep.subr.bf16.mxu0 0
    %5960 = vmatpush1.bf16.msra.mxu0 0
    %5961 = vmatprep.subr.bf16.mxu0 0
    %5962 = vmatpush1.bf16.msra.mxu0 0
    %5963 = vmatprep.subr.bf16.mxu0 0
    %5964 = vmatpush1.bf16.msra.mxu0 0
    %5965 = vmatprep.subr.bf16.mxu0 0
    %5966 = vmatpush1.bf16.msra.mxu0 0
    %5967 = vmatprep.subr.bf16.mxu0 0
    %5968 = vmatpush1.bf16.msra.mxu0 0
    %5969 = vmatprep.subr.bf16.mxu0 0
    %5970 = vmatpush1.bf16.msra.mxu0 0
    %5971 = vmatprep.subr.bf16.mxu0 0
    %5972 = vmatpush1.bf16.msra.mxu0 0
    %5973 = vmatprep.mubr.bf16.mxu0 0
    %5974 = vmatmul.mubr.bf16.gmra.mrb[0].mxu0 %v5933
    %v5975 = vpop.f32.mrb[0].mxu0
    %v5976 = vadd.f32 0.0, %v5975
    %v5977 = vpop.f32.mrb[0].mxu0
    %v5978 = vpop.f32.mrb[0].mxu0
    %v5979 = vadd.f32 0.0, %v5978
    %v5980 = vpop.f32.mrb[0].mxu0
    %5981 = vmatprep.mubr.bf16.mxu0 0
    %5982 = vmatmul.mubr.bf16.gmra.mrb[0].mxu0 %v5936
    %v5983 = vpop.f32.mrb[0].mxu0
    %v5984 = vadd.f32 0.0, %v5983
    %v5985 = vpop.f32.mrb[0].mxu0
    %v5986 = vpop.f32.mrb[0].mxu0
    %v5987 = vadd.f32 0.0, %v5986
    %v5988 = vpop.f32.mrb[0].mxu0
    %5989 = vmatprep.mubr.bf16.mxu0 0
    %5990 = vmatmul.mubr.bf16.gmra.mrb[0].mxu0 %v5939
    %v5991 = vpop.f32.mrb[0].mxu0
    %v5992 = vadd.f32 0.0, %v5991
    %v5993 = vpop.f32.mrb[0].mxu0
    %v5994 = vpop.f32.mrb[0].mxu0
    %v5995 = vadd.f32 0.0, %v5994
    %v5996 = vpop.f32.mrb[0].mxu0
    %5997 = vdwg.mxu0
    %v6000 = vunpack.c.l.b16 %v5920
    %v6001 = vunpack.c.l.b16 %v5921
    %v6002 = vpack.c.b16 %v6001, %v6000
    %v6005 = vsel %vm1391, %v5908, 0
    %v6008 = vsel %vm1391, %v5909, 0
    %v6011 = vsel %vm1391, %v5910, 0
    %6013 = vmatprep.subr.bf16.mxu0 0
    %6014 = vmatpush1.bf16.msra.mxu0 %v6002
    %6015 = vmatprep.subr.bf16.mxu0 0
    %6016 = vmatpush1.bf16.msra.mxu0 0
    %6017 = vmatprep.subr.bf16.mxu0 0
    %6018 = vmatpush1.bf16.msra.mxu0 0
    %6019 = vmatprep.subr.bf16.mxu0 0
    %6020 = vmatpush1.bf16.msra.mxu0 0
    %6021 = vmatprep.subr.bf16.mxu0 0
    %6022 = vmatpush1.bf16.msra.mxu0 0
    %6023 = vmatprep.subr.bf16.mxu0 0
    %6024 = vmatpush1.bf16.msra.mxu0 0
    %6025 = vmatprep.subr.bf16.mxu0 0
    %6026 = vmatpush1.bf16.msra.mxu0 0
    %6027 = vmatprep.subr.bf16.mxu0 0
    %6028 = vmatpush1.bf16.msra.mxu0 0
    %6029 = vmatprep.subr.bf16.mxu0 0
    %6030 = vmatpush1.bf16.msra.mxu0 0
    %6031 = vmatprep.subr.bf16.mxu0 0
    %6032 = vmatpush1.bf16.msra.mxu0 0
    %6033 = vmatprep.subr.bf16.mxu0 0
    %6034 = vmatpush1.bf16.msra.mxu0 0
    %6035 = vmatprep.subr.bf16.mxu0 0
    %6036 = vmatpush1.bf16.msra.mxu0 0
    %6037 = vmatprep.subr.bf16.mxu0 0
    %6038 = vmatpush1.bf16.msra.mxu0 0
    %6039 = vmatprep.subr.bf16.mxu0 0
    %6040 = vmatpush1.bf16.msra.mxu0 0
    %6041 = vmatprep.subr.bf16.mxu0 0
    %6042 = vmatpush1.bf16.msra.mxu0 0
    %6043 = vmatprep.subr.bf16.mxu0 0
    %6044 = vmatpush1.bf16.msra.mxu0 0
    %6045 = vmatprep.mubr.bf16.mxu0 0
    %6046 = vmatmul.mubr.bf16.gmra.mrb[0].mxu0 %v6005
    %v6047 = vpop.f32.mrb[0].mxu0
    %v6048 = vadd.f32 0.0, %v6047
    %v6049 = vpop.f32.mrb[0].mxu0
    %v6050 = vpop.f32.mrb[0].mxu0
    %v6051 = vadd.f32 0.0, %v6050
    %v6052 = vpop.f32.mrb[0].mxu0
    %6053 = vmatprep.mubr.bf16.mxu0 0
    %6054 = vmatmul.mubr.bf16.gmra.mrb[0].mxu0 %v6008
    %v6055 = vpop.f32.mrb[0].mxu0
    %v6056 = vadd.f32 0.0, %v6055
    %v6057 = vpop.f32.mrb[0].mxu0
    %v6058 = vpop.f32.mrb[0].mxu0
    %v6059 = vadd.f32 0.0, %v6058
    %v6060 = vpop.f32.mrb[0].mxu0
    %6061 = vmatprep.mubr.bf16.mxu0 0
    %6062 = vmatmul.mubr.bf16.gmra.mrb[0].mxu0 %v6011
    %v6063 = vpop.f32.mrb[0].mxu0
    %v6064 = vadd.f32 0.0, %v6063
    %v6065 = vpop.f32.mrb[0].mxu0
    %v6066 = vpop.f32.mrb[0].mxu0
    %v6067 = vadd.f32 0.0, %v6066
    %v6068 = vpop.f32.mrb[0].mxu0
    %6069 = vdwg.mxu0
    %v6072 = vunpack.c.l.b16 %v5922
    %v6073 = vunpack.c.l.b16 %v5923
    %v6074 = vpack.c.b16 %v6073, %v6072
    %v6077 = vsel %vm1391, %v5911, 0
    %v6080 = vsel %vm1391, %v5912, 0
    %v6083 = vsel %vm1391, %v5913, 0
    %6085 = vmatprep.subr.bf16.mxu0 0
    %6086 = vmatpush1.bf16.msra.mxu0 %v6074
    %6087 = vmatprep.subr.bf16.mxu0 0
    %6088 = vmatpush1.bf16.msra.mxu0 0
    %6089 = vmatprep.subr.bf16.mxu0 0
    %6090 = vmatpush1.bf16.msra.mxu0 0
    %6091 = vmatprep.subr.bf16.mxu0 0
    %6092 = vmatpush1.bf16.msra.mxu0 0
    %6093 = vmatprep.subr.bf16.mxu0 0
    %6094 = vmatpush1.bf16.msra.mxu0 0
    %6095 = vmatprep.subr.bf16.mxu0 0
    %6096 = vmatpush1.bf16.msra.mxu0 0
    %6097 = vmatprep.subr.bf16.mxu0 0
    %6098 = vmatpush1.bf16.msra.mxu0 0
    %6099 = vmatprep.subr.bf16.mxu0 0
    %6100 = vmatpush1.bf16.msra.mxu0 0
    %6101 = vmatprep.subr.bf16.mxu0 0
    %6102 = vmatpush1.bf16.msra.mxu0 0
    %6103 = vmatprep.subr.bf16.mxu0 0
    %6104 = vmatpush1.bf16.msra.mxu0 0
    %6105 = vmatprep.subr.bf16.mxu0 0
    %6106 = vmatpush1.bf16.msra.mxu0 0
    %6107 = vmatprep.subr.bf16.mxu0 0
    %6108 = vmatpush1.bf16.msra.mxu0 0
    %6109 = vmatprep.subr.bf16.mxu0 0
    %6110 = vmatpush1.bf16.msra.mxu0 0
    %6111 = vmatprep.subr.bf16.mxu0 0
    %6112 = vmatpush1.bf16.msra.mxu0 0
    %6113 = vmatprep.subr.bf16.mxu0 0
    %6114 = vmatpush1.bf16.msra.mxu0 0
    %6115 = vmatprep.subr.bf16.mxu0 0
    %6116 = vmatpush1.bf16.msra.mxu0 0
    %6117 = vmatprep.mubr.bf16.mxu0 0
    %6118 = vmatmul.mubr.bf16.gmra.mrb[0].mxu0 %v6077
    %v6119 = vpop.f32.mrb[0].mxu0
    %v6120 = vadd.f32 0.0, %v6119
    %v6121 = vpop.f32.mrb[0].mxu0
    %v6122 = vpop.f32.mrb[0].mxu0
    %v6123 = vadd.f32 0.0, %v6122
    %v6124 = vpop.f32.mrb[0].mxu0
    %6125 = vmatprep.mubr.bf16.mxu0 0
    %6126 = vmatmul.mubr.bf16.gmra.mrb[0].mxu0 %v6080
    %v6127 = vpop.f32.mrb[0].mxu0
    %v6128 = vadd.f32 0.0, %v6127
    %v6129 = vpop.f32.mrb[0].mxu0
    %v6130 = vpop.f32.mrb[0].mxu0
    %v6131 = vadd.f32 0.0, %v6130
    %v6132 = vpop.f32.mrb[0].mxu0
    %6133 = vmatprep.mubr.bf16.mxu0 0
    %6134 = vmatmul.mubr.bf16.gmra.mrb[0].mxu0 %v6083
    %v6135 = vpop.f32.mrb[0].mxu0
    %v6136 = vadd.f32 0.0, %v6135
    %v6137 = vpop.f32.mrb[0].mxu0
    %v6138 = vpop.f32.mrb[0].mxu0
    %v6139 = vadd.f32 0.0, %v6138
    %v6140 = vpop.f32.mrb[0].mxu0
    %6141 = vdwg.mxu0
    %v6144 = vunpack.c.l.b16 %v5924
    %v6145 = vunpack.c.l.b16 %v5925
    %v6146 = vpack.c.b16 %v6145, %v6144
    %v6149 = vsel %vm1391, %v5914, 0
    %v6152 = vsel %vm1391, %v5915, 0
    %v6155 = vsel %vm1391, %v5916, 0
    %6157 = vmatprep.subr.bf16.mxu0 0
    %6158 = vmatpush1.bf16.msra.mxu0 %v6146
    %6159 = vmatprep.subr.bf16.mxu0 0
    %6160 = vmatpush1.bf16.msra.mxu0 0
    %6161 = vmatprep.subr.bf16.mxu0 0
    %6162 = vmatpush1.bf16.msra.mxu0 0
    %6163 = vmatprep.subr.bf16.mxu0 0
    %6164 = vmatpush1.bf16.msra.mxu0 0
    %6165 = vmatprep.subr.bf16.mxu0 0
    %6166 = vmatpush1.bf16.msra.mxu0 0
    %6167 = vmatprep.subr.bf16.mxu0 0
    %6168 = vmatpush1.bf16.msra.mxu0 0
    %6169 = vmatprep.subr.bf16.mxu0 0
    %6170 = vmatpush1.bf16.msra.mxu0 0
    %6171 = vmatprep.subr.bf16.mxu0 0
    %6172 = vmatpush1.bf16.msra.mxu0 0
    %6173 = vmatprep.subr.bf16.mxu0 0
    %6174 = vmatpush1.bf16.msra.mxu0 0
    %6175 = vmatprep.subr.bf16.mxu0 0
    %6176 = vmatpush1.bf16.msra.mxu0 0
    %6177 = vmatprep.subr.bf16.mxu0 0
    %6178 = vmatpush1.bf16.msra.mxu0 0
    %6179 = vmatprep.subr.bf16.mxu0 0
    %6180 = vmatpush1.bf16.msra.mxu0 0
    %6181 = vmatprep.subr.bf16.mxu0 0
    %6182 = vmatpush1.bf16.msra.mxu0 0
    %6183 = vmatprep.subr.bf16.mxu0 0
    %6184 = vmatpush1.bf16.msra.mxu0 0
    %6185 = vmatprep.subr.bf16.mxu0 0
    %6186 = vmatpush1.bf16.msra.mxu0 0
    %6187 = vmatprep.subr.bf16.mxu0 0
    %6188 = vmatpush1.bf16.msra.mxu0 0
    %6189 = vmatprep.mubr.bf16.mxu0 0
    %6190 = vmatmul.mubr.bf16.gmra.mrb[0].mxu0 %v6149
    %v6191 = vpop.f32.mrb[0].mxu0
    %v6192 = vadd.f32 0.0, %v6191
    %v6193 = vpop.f32.mrb[0].mxu0
    %v6194 = vpop.f32.mrb[0].mxu0
    %v6195 = vadd.f32 0.0, %v6194
    %v6196 = vpop.f32.mrb[0].mxu0
    %6197 = vmatprep.mubr.bf16.mxu0 0
    %6198 = vmatmul.mubr.bf16.gmra.mrb[0].mxu0 %v6152
    %v6199 = vpop.f32.mrb[0].mxu0
    %v6200 = vadd.f32 0.0, %v6199
    %v6201 = vpop.f32.mrb[0].mxu0
    %v6202 = vpop.f32.mrb[0].mxu0
    %v6203 = vadd.f32 0.0, %v6202
    %v6204 = vpop.f32.mrb[0].mxu0
    %6205 = vmatprep.mubr.bf16.mxu0 0
    %6206 = vmatmul.mubr.bf16.gmra.mrb[0].mxu0 %v6155
    %v6207 = vpop.f32.mrb[0].mxu0
    %v6208 = vadd.f32 0.0, %v6207
    %v6209 = vpop.f32.mrb[0].mxu0
    %v6210 = vpop.f32.mrb[0].mxu0
    %v6211 = vadd.f32 0.0, %v6210
    %v6212 = vpop.f32.mrb[0].mxu0
    %6213 = vdwg.mxu0
    %v6214 = vsel %vm163, %v5976, 0.0
    %v6215 = vsel %vm163, %v6048, 0.0
    %v6216 = vadd.f32 %v6214, %v6215
    %v6217 = vsel %vm163, %v6120, 0.0
    %v6218 = vadd.f32 %v6216, %v6217
    %v6219 = vsel %vm163, %v6192, 0.0
    %v6220 = vadd.f32 %v6218, %v6219
    %v6221 = vsel %vm163, %v5979, 0.0
    %v6222 = vsel %vm163, %v6051, 0.0
    %v6223 = vadd.f32 %v6221, %v6222
    %v6224 = vsel %vm163, %v6123, 0.0
    %v6225 = vadd.f32 %v6223, %v6224
    %v6226 = vsel %vm163, %v6195, 0.0
    %v6227 = vadd.f32 %v6225, %v6226
    %v6228 = vsel %vm163, %v5984, 0.0
    %v6229 = vsel %vm163, %v6056, 0.0
    %v6230 = vadd.f32 %v6228, %v6229
    %v6231 = vsel %vm163, %v6128, 0.0
    %v6232 = vadd.f32 %v6230, %v6231
    %v6233 = vsel %vm163, %v6200, 0.0
    %v6234 = vadd.f32 %v6232, %v6233
    %v6235 = vsel %vm163, %v5987, 0.0
    %v6236 = vsel %vm163, %v6059, 0.0
    %v6237 = vadd.f32 %v6235, %v6236
    %v6238 = vsel %vm163, %v6131, 0.0
    %v6239 = vadd.f32 %v6237, %v6238
    %v6240 = vsel %vm163, %v6203, 0.0
    %v6241 = vadd.f32 %v6239, %v6240
    %v6242 = vsel %vm163, %v5992, 0.0
    %v6243 = vsel %vm163, %v6064, 0.0
    %v6244 = vadd.f32 %v6242, %v6243
    %v6245 = vsel %vm163, %v6136, 0.0
    %v6246 = vadd.f32 %v6244, %v6245
    %v6247 = vsel %vm163, %v6208, 0.0
    %v6248 = vadd.f32 %v6246, %v6247
    %v6249 = vsel %vm163, %v5995, 0.0
    %v6250 = vsel %vm163, %v6067, 0.0
    %v6251 = vadd.f32 %v6249, %v6250
    %v6252 = vsel %vm163, %v6139, 0.0
    %v6253 = vadd.f32 %v6251, %v6252
    %v6254 = vsel %vm163, %v6211, 0.0
    %v6255 = vadd.f32 %v6253, %v6254
    %v6256 = vadd.f32 %v3452, %v6220
    %v6257 = vadd.f32 %v3453, %v6227
    %v6258 = vadd.f32 %v3454, %v6234
    %v6259 = vadd.f32 %v3455, %v6241
    %v6260 = vadd.f32 %v3456, %v6248
    %v6261 = vadd.f32 %v3457, %v6255
    %v6262 = vlaneseq
    %v6263 = vshrl.u32 %v6262, 7
    %v6264 = vsub.s32 2, %v6263
    %v6265 = vrot.slane %v3459, %v6264
    %v6266 = vadd.f32 %v6256, %v6265
    %v6267 = vadd.f32 %v6257, %v6265
    %v6268 = vadd.f32 %v6258, %v6265
    %v6269 = vadd.f32 %v6259, %v6265
    %v6270 = vadd.f32 %v6260, %v6265
    %v6271 = vadd.f32 %v6261, %v6265
    %v6272 = vsel %vm163, %v6266, 0.0
    %6273 = vadd.xlane.f32.xlu0 %v6272
    %v6274 = vpop.xlane.xlu0 %6273
    %v6275 = vsel %vm163, %v6267, 0.0
    %6276 = vadd.xlane.f32.xlu0 %v6275
    %v6277 = vpop.xlane.xlu0 %6276
    %v6278 = vsel %vm163, %v6268, 0.0
    %6279 = vadd.xlane.f32.xlu0 %v6278
    %v6280 = vpop.xlane.xlu0 %6279
    %v6281 = vsel %vm163, %v6269, 0.0
    %6282 = vadd.xlane.f32.xlu0 %v6281
    %v6283 = vpop.xlane.xlu0 %6282
    %v6284 = vsel %vm163, %v6270, 0.0
    %6285 = vadd.xlane.f32.xlu0 %v6284
    %v6286 = vpop.xlane.xlu0 %6285
    %v6287 = vsel %vm163, %v6271, 0.0
    %6288 = vadd.xlane.f32.xlu0 %v6287
    %v6289 = vpop.xlane.xlu0 %6288
    %v6290 = vmul.f32 %v6274, %v182
    %v6291 = vmul.f32 %v6277, %v182
    %v6292 = vmul.f32 %v6280, %v182
    %v6293 = vmul.f32 %v6283, %v182
    %v6294 = vmul.f32 %v6286, %v182
    %v6295 = vmul.f32 %v6289, %v182
    %v6296 = vsub.f32 %v6266, %v6290
    %v6297 = vsub.f32 %v6267, %v6291
    %v6298 = vsub.f32 %v6268, %v6292
    %v6299 = vsub.f32 %v6269, %v6293
    %v6300 = vsub.f32 %v6270, %v6294
    %v6301 = vsub.f32 %v6271, %v6295
    %v6302 = vmul.f32 %v6296, %v6296
    %v6303 = vmul.f32 %v6297, %v6297
    %v6304 = vmul.f32 %v6298, %v6298
    %v6305 = vmul.f32 %v6299, %v6299
    %v6306 = vmul.f32 %v6300, %v6300
    %v6307 = vmul.f32 %v6301, %v6301
    %v6308 = vsel %vm163, %v6302, 0.0
    %6309 = vadd.xlane.f32.xlu0 %v6308
    %v6310 = vpop.xlane.xlu0 %6309
    %v6311 = vsel %vm163, %v6303, 0.0
    %6312 = vadd.xlane.f32.xlu0 %v6311
    %v6313 = vpop.xlane.xlu0 %6312
    %v6314 = vsel %vm163, %v6304, 0.0
    %6315 = vadd.xlane.f32.xlu0 %v6314
    %v6316 = vpop.xlane.xlu0 %6315
    %v6317 = vsel %vm163, %v6305, 0.0
    %6318 = vadd.xlane.f32.xlu0 %v6317
    %v6319 = vpop.xlane.xlu0 %6318
    %v6320 = vsel %vm163, %v6306, 0.0
    %6321 = vadd.xlane.f32.xlu0 %v6320
    %v6322 = vpop.xlane.xlu0 %6321
    %v6323 = vsel %vm163, %v6307, 0.0
    %6324 = vadd.xlane.f32.xlu0 %v6323
    %v6325 = vpop.xlane.xlu0 %6324
    %v6326 = vmul.f32 %v6310, %v182
    %v6327 = vmul.f32 %v6313, %v182
    %v6328 = vmul.f32 %v6316, %v182
    %v6329 = vmul.f32 %v6319, %v182
    %v6330 = vmul.f32 %v6322, %v182
    %v6331 = vmul.f32 %v6325, %v182
    %v6332 = vadd.f32 %v6326, 1e-05
    %v6333 = vadd.f32 %v6327, 1e-05
    %v6334 = vadd.f32 %v6328, 1e-05
    %v6335 = vadd.f32 %v6329, 1e-05
    %v6336 = vadd.f32 %v6330, 1e-05
    %v6337 = vadd.f32 %v6331, 1e-05
    %v6338 = vrsqrt.pop %v6332
    %v6339 = vrsqrt.pop %v6333
    %v6340 = vrsqrt.pop %v6334
    %v6341 = vrsqrt.pop %v6335
    %v6342 = vrsqrt.pop %v6336
    %v6343 = vrsqrt.pop %v6337
    %v6344 = vmul.f32 %v6296, %v6338
    %v6345 = vmul.f32 %v6297, %v6339
    %v6346 = vmul.f32 %v6298, %v6340
    %v6347 = vmul.f32 %v6299, %v6341
    %v6348 = vmul.f32 %v6300, %v6342
    %v6349 = vmul.f32 %v6301, %v6343
    %v6350 = vlaneseq
    %v6351 = vshrl.u32 %v6350, 7
    %v6352 = vsub.s32 3, %v6351
    %v6353 = vrot.slane %v3459, %v6352
    %v6354 = vmul.f32 %v6344, %v6353
    %v6355 = vmul.f32 %v6345, %v6353
    %v6356 = vmul.f32 %v6346, %v6353
    %v6357 = vmul.f32 %v6347, %v6353
    %v6358 = vmul.f32 %v6348, %v6353
    %v6359 = vmul.f32 %v6349, %v6353
    %v6360 = vlaneseq
    %v6361 = vshrl.u32 %v6360, 7
    %v6362 = vsub.s32 4, %v6361
    %v6363 = vrot.slane %v3459, %v6362
    %v6364 = vadd.f32 %v6354, %v6363
    %v6365 = vadd.f32 %v6355, %v6363
    %v6366 = vadd.f32 %v6356, %v6363
    %v6367 = vadd.f32 %v6357, %v6363
    %v6368 = vadd.f32 %v6358, %v6363
    %v6369 = vadd.f32 %v6359, %v6363
    %v6370 = vpack.c.bf16 %v6365, %v6364
    %v6371 = vpack.c.bf16 %v6367, %v6366
    %v6372 = vpack.c.bf16 %v6369, %v6368
    %s6373 = scalar_lea.vmem %s8, 32
    %v6374 = vld [vmem:[%s6373] sm:$0xf]
    %v6375 = vld [vmem:[%s6373 + $0x4] sm:$0xf]
    %v6376 = vld [vmem:[%s6373 + $0x8] sm:$0xf]
    %v6377 = vld [vmem:[%s6373 + $0xc] sm:$0xf]
    %v6378 = vld [vmem:[%s6373 + $0x10] sm:$0xf]
    %v6379 = vld [vmem:[%s6373 + $0x14] sm:$0xf]
    %v6380 = vld [vmem:[%s6373 + $0x18] sm:$0xf]
    %v6381 = vld [vmem:[%s6373 + $0x1c] sm:$0xf]
    %v6382 = vlaneseq
    %v6383 = vshrl.u32 %v6382, 7
    %v6384 = vsub.s32 5, %v6383
    %v6385 = vrot.slane %v3459, %v6384
    %v6394 = vunpack.c.l.b16 %v6374
    %v6395 = vunpack.c.l.b16 %v6375
    %v6396 = vunpack.c.l.b16 %v6376
    %v6397 = vunpack.c.l.b16 %v6377
    %v6398 = vunpack.c.l.b16 %v6378
    %v6399 = vunpack.c.l.b16 %v6379
    %v6400 = vunpack.c.l.b16 %v6380
    %v6401 = vunpack.c.l.b16 %v6381
    %v6402 = vpack.c.b16 %v6395, %v6394
    %v6403 = vpack.c.b16 %v6397, %v6396
    %v6404 = vpack.c.b16 %v6399, %v6398
    %v6405 = vpack.c.b16 %v6401, %v6400
    %v6411 = vsel %vm163, %v6370, 0
    %v6414 = vsel %vm163, %v6371, 0
    %v6417 = vsel %vm163, %v6372, 0
    %6419 = vmatprep.subr.bf16.mxu0 0
    %6420 = vmatpush1.bf16.msra.mxu0 %v6402
    %6421 = vmatprep.subr.bf16.mxu0 0
    %6422 = vmatpush1.bf16.msra.mxu0 %v6403
    %6423 = vmatprep.subr.bf16.mxu0 0
    %6424 = vmatpush1.bf16.msra.mxu0 %v6404
    %6425 = vmatprep.subr.bf16.mxu0 0
    %6426 = vmatpush1.bf16.msra.mxu0 %v6405
    %6427 = vmatprep.subr.bf16.mxu0 0
    %6428 = vmatpush1.bf16.msra.mxu0 0
    %6429 = vmatprep.subr.bf16.mxu0 0
    %6430 = vmatpush1.bf16.msra.mxu0 0
    %6431 = vmatprep.subr.bf16.mxu0 0
    %6432 = vmatpush1.bf16.msra.mxu0 0
    %6433 = vmatprep.subr.bf16.mxu0 0
    %6434 = vmatpush1.bf16.msra.mxu0 0
    %6435 = vmatprep.subr.bf16.mxu0 0
    %6436 = vmatpush1.bf16.msra.mxu0 0
    %6437 = vmatprep.subr.bf16.mxu0 0
    %6438 = vmatpush1.bf16.msra.mxu0 0
    %6439 = vmatprep.subr.bf16.mxu0 0
    %6440 = vmatpush1.bf16.msra.mxu0 0
    %6441 = vmatprep.subr.bf16.mxu0 0
    %6442 = vmatpush1.bf16.msra.mxu0 0
    %6443 = vmatprep.subr.bf16.mxu0 0
    %6444 = vmatpush1.bf16.msra.mxu0 0
    %6445 = vmatprep.subr.bf16.mxu0 0
    %6446 = vmatpush1.bf16.msra.mxu0 0
    %6447 = vmatprep.subr.bf16.mxu0 0
    %6448 = vmatpush1.bf16.msra.mxu0 0
    %6449 = vmatprep.subr.bf16.mxu0 0
    %6450 = vmatpush1.bf16.msra.mxu0 0
    %6451 = vmatprep.mubr.bf16.mxu0 0
    %6452 = vmatmul.mubr.bf16.gmra.mrb[0].mxu0 %v6411
    %v6453 = vpop.f32.mrb[0].mxu0
    %v6454 = vadd.f32 %v6385, %v6453
    %v6455 = vpop.f32.mrb[0].mxu0
    %v6456 = vpop.f32.mrb[0].mxu0
    %v6457 = vadd.f32 %v6385, %v6456
    %v6458 = vpop.f32.mrb[0].mxu0
    %6459 = vmatprep.mubr.bf16.mxu0 0
    %6460 = vmatmul.mubr.bf16.gmra.mrb[0].mxu0 %v6414
    %v6461 = vpop.f32.mrb[0].mxu0
    %v6462 = vadd.f32 %v6385, %v6461
    %v6463 = vpop.f32.mrb[0].mxu0
    %v6464 = vpop.f32.mrb[0].mxu0
    %v6465 = vadd.f32 %v6385, %v6464
    %v6466 = vpop.f32.mrb[0].mxu0
    %6467 = vmatprep.mubr.bf16.mxu0 0
    %6468 = vmatmul.mubr.bf16.gmra.mrb[0].mxu0 %v6417
    %v6469 = vpop.f32.mrb[0].mxu0
    %v6470 = vadd.f32 %v6385, %v6469
    %v6471 = vpop.f32.mrb[0].mxu0
    %v6472 = vpop.f32.mrb[0].mxu0
    %v6473 = vadd.f32 %v6385, %v6472
    %v6474 = vpop.f32.mrb[0].mxu0
    %6475 = vdwg.mxu0
    %v6476 = vmul.f32 %v6454, 0.5
    %v6477 = vmul.f32 %v6457, 0.5
    %v6478 = vmul.f32 %v6462, 0.5
    %v6479 = vmul.f32 %v6465, 0.5
    %v6480 = vmul.f32 %v6470, 0.5
    %v6481 = vmul.f32 %v6473, 0.5
    %v6482 = vmul.f32 %v6454, 0.70710677
    %v6483 = vmul.f32 %v6457, 0.70710677
    %v6484 = vmul.f32 %v6462, 0.70710677
    %v6485 = vmul.f32 %v6465, 0.70710677
    %v6486 = vmul.f32 %v6470, 0.70710677
    %v6487 = vmul.f32 %v6473, 0.70710677
    %vm6488 = vcmp.ge.f32.partialorder %v6482, 0.0
    %vm6489 = vcmp.ge.f32.partialorder %v6483, 0.0
    %vm6490 = vcmp.ge.f32.partialorder %v6484, 0.0
    %vm6491 = vcmp.ge.f32.partialorder %v6485, 0.0
    %vm6492 = vcmp.ge.f32.partialorder %v6486, 0.0
    %vm6493 = vcmp.ge.f32.partialorder %v6487, 0.0
    %v6494 = vsel %vm6488, 1.0, -1.0
    %v6495 = vsel %vm6489, 1.0, -1.0
    %v6496 = vsel %vm6490, 1.0, -1.0
    %v6497 = vsel %vm6491, 1.0, -1.0
    %v6498 = vsel %vm6492, 1.0, -1.0
    %v6499 = vsel %vm6493, 1.0, -1.0
    %v6500 = vand.u32 2147483647, %v6482
    %v6501 = vand.u32 2147483647, %v6483
    %v6502 = vand.u32 2147483647, %v6484
    %v6503 = vand.u32 2147483647, %v6485
    %v6504 = vand.u32 2147483647, %v6486
    %v6505 = vand.u32 2147483647, %v6487
    %v6506 = vmul.f32 %v6500, 0.3275911
    %v6507 = vmul.f32 %v6501, 0.3275911
    %v6508 = vmul.f32 %v6502, 0.3275911
    %v6509 = vmul.f32 %v6503, 0.3275911
    %v6510 = vmul.f32 %v6504, 0.3275911
    %v6511 = vmul.f32 %v6505, 0.3275911
    %v6512 = vadd.f32 %v6506, 1.0
    %v6513 = vadd.f32 %v6507, 1.0
    %v6514 = vadd.f32 %v6508, 1.0
    %v6515 = vadd.f32 %v6509, 1.0
    %v6516 = vadd.f32 %v6510, 1.0
    %v6517 = vadd.f32 %v6511, 1.0
    %v6518 = vrcp.pop %v6512
    %v6519 = vmul.f32 1.0, %v6518
    %v6520 = vrcp.pop %v6513
    %v6521 = vmul.f32 1.0, %v6520
    %v6522 = vrcp.pop %v6514
    %v6523 = vmul.f32 1.0, %v6522
    %v6524 = vrcp.pop %v6515
    %v6525 = vmul.f32 1.0, %v6524
    %v6526 = vrcp.pop %v6516
    %v6527 = vmul.f32 1.0, %v6526
    %v6528 = vrcp.pop %v6517
    %v6529 = vmul.f32 1.0, %v6528
    %v6530 = vmul.f32 %v6519, 1.0614054
    %v6531 = vmul.f32 %v6521, 1.0614054
    %v6532 = vmul.f32 %v6523, 1.0614054
    %v6533 = vmul.f32 %v6525, 1.0614054
    %v6534 = vmul.f32 %v6527, 1.0614054
    %v6535 = vmul.f32 %v6529, 1.0614054
    %v6536 = vadd.f32 %v6530, -1.4531521
    %v6537 = vadd.f32 %v6531, -1.4531521
    %v6538 = vadd.f32 %v6532, -1.4531521
    %v6539 = vadd.f32 %v6533, -1.4531521
    %v6540 = vadd.f32 %v6534, -1.4531521
    %v6541 = vadd.f32 %v6535, -1.4531521
    %v6542 = vmul.f32 %v6536, %v6519
    %v6543 = vmul.f32 %v6537, %v6521
    %v6544 = vmul.f32 %v6538, %v6523
    %v6545 = vmul.f32 %v6539, %v6525
    %v6546 = vmul.f32 %v6540, %v6527
    %v6547 = vmul.f32 %v6541, %v6529
    %v6548 = vadd.f32 %v6542, 1.4214138
    %v6549 = vadd.f32 %v6543, 1.4214138
    %v6550 = vadd.f32 %v6544, 1.4214138
    %v6551 = vadd.f32 %v6545, 1.4214138
    %v6552 = vadd.f32 %v6546, 1.4214138
    %v6553 = vadd.f32 %v6547, 1.4214138
    %v6554 = vmul.f32 %v6548, %v6519
    %v6555 = vmul.f32 %v6549, %v6521
    %v6556 = vmul.f32 %v6550, %v6523
    %v6557 = vmul.f32 %v6551, %v6525
    %v6558 = vmul.f32 %v6552, %v6527
    %v6559 = vmul.f32 %v6553, %v6529
    %v6560 = vadd.f32 %v6554, -0.28449672
    %v6561 = vadd.f32 %v6555, -0.28449672
    %v6562 = vadd.f32 %v6556, -0.28449672
    %v6563 = vadd.f32 %v6557, -0.28449672
    %v6564 = vadd.f32 %v6558, -0.28449672
    %v6565 = vadd.f32 %v6559, -0.28449672
    %v6566 = vmul.f32 %v6560, %v6519
    %v6567 = vmul.f32 %v6561, %v6521
    %v6568 = vmul.f32 %v6562, %v6523
    %v6569 = vmul.f32 %v6563, %v6525
    %v6570 = vmul.f32 %v6564, %v6527
    %v6571 = vmul.f32 %v6565, %v6529
    %v6572 = vadd.f32 %v6566, 0.2548296
    %v6573 = vadd.f32 %v6567, 0.2548296
    %v6574 = vadd.f32 %v6568, 0.2548296
    %v6575 = vadd.f32 %v6569, 0.2548296
    %v6576 = vadd.f32 %v6570, 0.2548296
    %v6577 = vadd.f32 %v6571, 0.2548296
    %v6578 = vmul.f32 %v6572, %v6519
    %v6579 = vmul.f32 %v6573, %v6521
    %v6580 = vmul.f32 %v6574, %v6523
    %v6581 = vmul.f32 %v6575, %v6525
    %v6582 = vmul.f32 %v6576, %v6527
    %v6583 = vmul.f32 %v6577, %v6529
    %v6584 = vsub.f32 0.0, %v6500
    %v6585 = vsub.f32 0.0, %v6501
    %v6586 = vsub.f32 0.0, %v6502
    %v6587 = vsub.f32 0.0, %v6503
    %v6588 = vsub.f32 0.0, %v6504
    %v6589 = vsub.f32 0.0, %v6505
    %v6590 = vmul.f32 %v6584, %v6500
    %v6591 = vmul.f32 %v6585, %v6501
    %v6592 = vmul.f32 %v6586, %v6502
    %v6593 = vmul.f32 %v6587, %v6503
    %v6594 = vmul.f32 %v6588, %v6504
    %v6595 = vmul.f32 %v6589, %v6505
    %v6596 = vmul.f32 %v6590, 1.442695
    %v6597 = vpow.pop %v6596
    %v6598 = vmul.f32 %v6591, 1.442695
    %v6599 = vpow.pop %v6598
    %v6600 = vmul.f32 %v6592, 1.442695
    %v6601 = vpow.pop %v6600
    %v6602 = vmul.f32 %v6593, 1.442695
    %v6603 = vpow.pop %v6602
    %v6604 = vmul.f32 %v6594, 1.442695
    %v6605 = vpow.pop %v6604
    %v6606 = vmul.f32 %v6595, 1.442695
    %v6607 = vpow.pop %v6606
    %v6608 = vmul.f32 %v6578, %v6597
    %v6609 = vmul.f32 %v6579, %v6599
    %v6610 = vmul.f32 %v6580, %v6601
    %v6611 = vmul.f32 %v6581, %v6603
    %v6612 = vmul.f32 %v6582, %v6605
    %v6613 = vmul.f32 %v6583, %v6607
    %v6614 = vsub.f32 1.0, %v6608
    %v6615 = vsub.f32 1.0, %v6609
    %v6616 = vsub.f32 1.0, %v6610
    %v6617 = vsub.f32 1.0, %v6611
    %v6618 = vsub.f32 1.0, %v6612
    %v6619 = vsub.f32 1.0, %v6613
    %v6620 = vmul.f32 %v6494, %v6614
    %v6621 = vmul.f32 %v6495, %v6615
    %v6622 = vmul.f32 %v6496, %v6616
    %v6623 = vmul.f32 %v6497, %v6617
    %v6624 = vmul.f32 %v6498, %v6618
    %v6625 = vmul.f32 %v6499, %v6619
    %v6626 = vadd.f32 %v6620, 1.0
    %v6627 = vadd.f32 %v6621, 1.0
    %v6628 = vadd.f32 %v6622, 1.0
    %v6629 = vadd.f32 %v6623, 1.0
    %v6630 = vadd.f32 %v6624, 1.0
    %v6631 = vadd.f32 %v6625, 1.0
    %v6632 = vmul.f32 %v6476, %v6626
    %v6633 = vmul.f32 %v6477, %v6627
    %v6634 = vmul.f32 %v6478, %v6628
    %v6635 = vmul.f32 %v6479, %v6629
    %v6636 = vmul.f32 %v6480, %v6630
    %v6637 = vmul.f32 %v6481, %v6631
    %v6638 = vpack.c.bf16 %v6633, %v6632
    %v6639 = vpack.c.bf16 %v6635, %v6634
    %v6640 = vpack.c.bf16 %v6637, %v6636
    %s6641 = scalar_lea.vmem %s9, 32
    %v6642 = vld [vmem:[%s6641] sm:$0xf]
    %v6643 = vld [vmem:[%s6641 + $0x4] sm:$0xf]
    %v6644 = vld [vmem:[%s6641 + $0x8] sm:$0xf]
    %v6645 = vld [vmem:[%s6641 + $0xc] sm:$0xf]
    %v6646 = vld [vmem:[%s6641 + $0x10] sm:$0xf]
    %v6647 = vld [vmem:[%s6641 + $0x14] sm:$0xf]
    %v6648 = vld [vmem:[%s6641 + $0x18] sm:$0xf]
    %v6649 = vld [vmem:[%s6641 + $0x1c] sm:$0xf]
    %v6658 = vunpack.c.l.b16 %v6642
    %v6659 = vunpack.c.l.b16 %v6643
    %v6660 = vunpack.c.l.b16 %v6644
    %v6661 = vunpack.c.l.b16 %v6645
    %v6662 = vunpack.c.l.b16 %v6646
    %v6663 = vunpack.c.l.b16 %v6647
    %v6664 = vunpack.c.l.b16 %v6648
    %v6665 = vunpack.c.l.b16 %v6649
    %v6666 = vpack.c.b16 %v6659, %v6658
    %v6667 = vpack.c.b16 %v6661, %v6660
    %v6668 = vpack.c.b16 %v6663, %v6662
    %v6669 = vpack.c.b16 %v6665, %v6664
    %v6675 = vsel %vm163, %v6638, 0
    %v6678 = vsel %vm163, %v6639, 0
    %v6681 = vsel %vm163, %v6640, 0
    %6683 = vmatprep.subr.bf16.mxu0 0
    %6684 = vmatpush1.bf16.msra.mxu0 %v6666
    %6685 = vmatprep.subr.bf16.mxu0 0
    %6686 = vmatpush1.bf16.msra.mxu0 %v6667
    %6687 = vmatprep.subr.bf16.mxu0 0
    %6688 = vmatpush1.bf16.msra.mxu0 %v6668
    %6689 = vmatprep.subr.bf16.mxu0 0
    %6690 = vmatpush1.bf16.msra.mxu0 %v6669
    %6691 = vmatprep.subr.bf16.mxu0 0
    %6692 = vmatpush1.bf16.msra.mxu0 0
    %6693 = vmatprep.subr.bf16.mxu0 0
    %6694 = vmatpush1.bf16.msra.mxu0 0
    %6695 = vmatprep.subr.bf16.mxu0 0
    %6696 = vmatpush1.bf16.msra.mxu0 0
    %6697 = vmatprep.subr.bf16.mxu0 0
    %6698 = vmatpush1.bf16.msra.mxu0 0
    %6699 = vmatprep.subr.bf16.mxu0 0
    %6700 = vmatpush1.bf16.msra.mxu0 0
    %6701 = vmatprep.subr.bf16.mxu0 0
    %6702 = vmatpush1.bf16.msra.mxu0 0
    %6703 = vmatprep.subr.bf16.mxu0 0
    %6704 = vmatpush1.bf16.msra.mxu0 0
    %6705 = vmatprep.subr.bf16.mxu0 0
    %6706 = vmatpush1.bf16.msra.mxu0 0
    %6707 = vmatprep.subr.bf16.mxu0 0
    %6708 = vmatpush1.bf16.msra.mxu0 0
    %6709 = vmatprep.subr.bf16.mxu0 0
    %6710 = vmatpush1.bf16.msra.mxu0 0
    %6711 = vmatprep.subr.bf16.mxu0 0
    %6712 = vmatpush1.bf16.msra.mxu0 0
    %6713 = vmatprep.subr.bf16.mxu0 0
    %6714 = vmatpush1.bf16.msra.mxu0 0
    %6715 = vmatprep.mubr.bf16.mxu0 0
    %6716 = vmatmul.mubr.bf16.gmra.mrb[0].mxu0 %v6675
    %v6717 = vpop.f32.mrb[0].mxu0
    %v6718 = vadd.f32 0.0, %v6717
    %v6719 = vpop.f32.mrb[0].mxu0
    %v6720 = vpop.f32.mrb[0].mxu0
    %v6721 = vadd.f32 0.0, %v6720
    %v6722 = vpop.f32.mrb[0].mxu0
    %6723 = vmatprep.mubr.bf16.mxu0 0
    %6724 = vmatmul.mubr.bf16.gmra.mrb[0].mxu0 %v6678
    %v6725 = vpop.f32.mrb[0].mxu0
    %v6726 = vadd.f32 0.0, %v6725
    %v6727 = vpop.f32.mrb[0].mxu0
    %v6728 = vpop.f32.mrb[0].mxu0
    %v6729 = vadd.f32 0.0, %v6728
    %v6730 = vpop.f32.mrb[0].mxu0
    %6731 = vmatprep.mubr.bf16.mxu0 0
    %6732 = vmatmul.mubr.bf16.gmra.mrb[0].mxu0 %v6681
    %v6733 = vpop.f32.mrb[0].mxu0
    %v6734 = vadd.f32 0.0, %v6733
    %v6735 = vpop.f32.mrb[0].mxu0
    %v6736 = vpop.f32.mrb[0].mxu0
    %v6737 = vadd.f32 0.0, %v6736
    %v6738 = vpop.f32.mrb[0].mxu0
    %6739 = vdwg.mxu0
    %v6740 = vadd.f32 %v6266, %v6718
    %v6741 = vadd.f32 %v6267, %v6721
    %v6742 = vadd.f32 %v6268, %v6726
    %v6743 = vadd.f32 %v6269, %v6729
    %v6744 = vadd.f32 %v6270, %v6734
    %v6745 = vadd.f32 %v6271, %v6737
    %v6746 = vlaneseq
    %v6747 = vshrl.u32 %v6746, 7
    %v6748 = vsub.s32 6, %v6747
    %v6749 = vrot.slane %v3459, %v6748
    %v6750 = vadd.f32 %v6740, %v6749
    %v6751 = vadd.f32 %v6741, %v6749
    %v6752 = vadd.f32 %v6742, %v6749
    %v6753 = vadd.f32 %v6743, %v6749
    %v6754 = vadd.f32 %v6744, %v6749
    %v6755 = vadd.f32 %v6745, %v6749
    %v6756 = vlaneseq
    %v6757 = vshrl.u32 %v6756, 7
    %v6758 = vadd.s32 %v6757, 8
    %v6759 = vadd.s32 %v6757, 16
    %vm6760 = vcmp.lt.s32.totalorder %v6757, 17
    %vm6761 = vcmp.lt.s32.totalorder %v6758, 17
    %vm6762 = vcmp.lt.s32.totalorder %v6759, 17
    %v6763 = vsel %vm6760, 1, 0
    %v6764 = vsel %vm6761, 1, 0
    %v6765 = vsel %vm6762, 1, 0
    %v6766 = vcvt.s32.f32 %v6763
    %v6767 = vcvt.s32.f32 %v6764
    %v6768 = vcvt.s32.f32 %v6765
    %v6769 = vmul.f32 %v6750, %v6766
    %v6770 = vmul.f32 %v6751, %v6767
    %v6771 = vmul.f32 %v6752, %v6768
    %v6772 = vmul.f32 %v6753, %v6766
    %v6773 = vmul.f32 %v6754, %v6767
    %v6774 = vmul.f32 %v6755, %v6768
    %v6775 = vsel %vm163, %v6769, 0.0
    %v6776 = vsel %vm163, %v6770, 0.0
    %v6777 = vadd.f32 %v6775, %v6776
    %v6778 = vsel %vm163, %v6771, 0.0
    %v6779 = vadd.f32 %v6777, %v6778
    %v6780 = vrot.slane %v6779, 4
    %v6781 = vadd.f32 %v6779, %v6780
    %v6782 = vrot.slane %v6781, 2
    %v6783 = vadd.f32 %v6781, %v6782
    %v6784 = vrot.slane %v6783, 1
    %v6785 = vadd.f32 %v6783, %v6784
    %v6786 = vsel %vm163, %v6772, 0.0
    %v6787 = vsel %vm163, %v6773, 0.0
    %v6788 = vadd.f32 %v6786, %v6787
    %v6789 = vsel %vm163, %v6774, 0.0
    %v6790 = vadd.f32 %v6788, %v6789
    %v6791 = vrot.slane %v6790, 4
    %v6792 = vadd.f32 %v6790, %v6791
    %v6793 = vrot.slane %v6792, 2
    %v6794 = vadd.f32 %v6792, %v6793
    %v6795 = vrot.slane %v6794, 1
    %v6796 = vadd.f32 %v6794, %v6795
    %v6797 = vmul.f32 %v6785, 0.05882353
    %v6798 = vmul.f32 %v6796, 0.05882353
    %vm6801 = vcmask 1041409
    %v6802 = vsel %vm6801, %v6798, %v6797
    %vm6804 = vcmask 517120
    %6805 = vst.msk [vmem:[#allocation2] sm:$0x3] %vm6804, %v6802
    // Predicated region
    $region42: #{vit_backbone_forward.1} parent=1 // pred_check
      _
    $region43: #{vit_backbone_forward.1} parent=1 // pred_check_branch
      %6807 = sbr.rel (0) target = $region45
    $region44: #{vit_backbone_forward.1} parent=1 // pred_region
      %s6809 = ssub.s32 32, 32
      %6810 = vsyncadd [#allocation3], %s6809
      %s6812 = sshll.u32 [#allocation2], 4
      %s6813 = int_to_ptr.vmem [resolvable:$true] %s6812
      %6815 = dma.vmem_to_hbm [thread:$0]  %s6813, 32, %s10, [#allocation3]
    $region45: #{vit_backbone_forward.1} parent=1 // pred_fallthru
      _
    // Predicated region
    $region46: #{vit_backbone_forward.1} parent=1 // pred_check
      _
    $region47: #{vit_backbone_forward.1} parent=1 // pred_check_branch
      %6817 = sbr.rel (0) target = $region49
    $region48: #{vit_backbone_forward.1} parent=1 // pred_region
      %6818 = dma.done [#allocation3], 32
    $region49: #{vit_backbone_forward.1} parent=1 // pred_fallthru
      _
    %6819 = vsyncpa [#allocation3], 1

</llo_original>
